<compile_context>
chip_gen: v7x
topology: tpu7x:2x2x1
jax: 0.10.0
libtpu: 0.0.40
codegen_flags: <defaults>
</compile_context>

<pallas_src>
import functools
import math

import jax
import jax.numpy as jnp
from jax.experimental import pallas as pl
from jax.experimental.pallas import tpu as pltpu

BN_EPS = 1e-5
BN_SCALE = 1.0 / math.sqrt(1.0 + BN_EPS)  # gamma / sqrt(running_var + eps)

STEM_K, STEM_STRIDE, STEM_PAD = 15, 2, 7
POOL_K, POOL_STRIDE, POOL_PAD = 3, 2, 1

PAD_OFF = 8          # activation rows start at an 8-aligned sublane offset
SCRATCH_ROWS = 48    # >= PAD_OFF + max_length(32) + 1
SCRATCH_COLS = 512   # widest channel count


# ---------------------------------------------------------------------------
# In-kernel helpers (all shapes / loop bounds are static Python ints)
# ---------------------------------------------------------------------------
def _select_rows(y, n_out, stride):
    """Rows 0, stride, 2*stride, ... of y via an exact 0/1 selection matmul
    (avoids strided loads; 0/1 products are exact so no precision loss)."""
    j = y.shape[0]
    rows = jax.lax.broadcasted_iota(jnp.int32, (n_out, j), 0)
    cols = jax.lax.broadcasted_iota(jnp.int32, (n_out, j), 1)
    sel = (cols == stride * rows).astype(jnp.float32)
    return jnp.dot(sel, y, preferred_element_type=jnp.float32)


def _write_padded(x, length, channels, scratch):
    """Write x into VMEM scratch rows [PAD_OFF, PAD_OFF+length) with one zero
    row on each side (padding=1).  Bulk store is sublane-aligned; the two pad
    rows are single-row stores."""
    zero_row = jnp.zeros((1, channels), jnp.float32)
    scratch[PAD_OFF - 1:PAD_OFF, 0:channels] = zero_row
    scratch[PAD_OFF + length:PAD_OFF + length + 1, 0:channels] = zero_row
    scratch[PAD_OFF:PAD_OFF + length, 0:channels] = x


def _conv3_bn(x, w_ref, cin, cout, length, stride, scratch):
    """Conv1d(k=3, padding=1, bias=False) with BN scale pre-folded into w.
    In-kernel im2col: three shifted VMEM windows, each a (J,Cin)x(Cin,Cout)
    bf16 matmul with f32 accumulation; stride-2 via row-selection matmul."""
    l_out = (length - 1) // stride + 1
    j = stride * (l_out - 1) + 1
    _write_padded(x, length, cin, scratch)
    acc = jnp.zeros((j, cout), jnp.float32)
    for k in range(3):
        start = PAD_OFF - 1 + k
        tap = scratch[start:start + j, 0:cin].astype(jnp.bfloat16)
        acc = acc + jnp.dot(tap, w_ref[k], preferred_element_type=jnp.float32)
    if stride > 1:
        acc = _select_rows(acc, l_out, stride)
    return acc, l_out


def _maxpool_k3_s2(x, length, channels, scratch):
    """MaxPool1d(kernel=3, stride=2, padding=1).  Zero padding is equivalent to
    -inf padding here because the input is post-ReLU (non-negative)."""
    l_out = (length + 2 * POOL_PAD - POOL_K) // POOL_STRIDE + 1
    j = POOL_STRIDE * (l_out - 1) + 1
    _write_padded(x, length, channels, scratch)
    m = scratch[PAD_OFF - 1:PAD_OFF - 1 + j, 0:channels]
    m = jnp.maximum(m, scratch[PAD_OFF:PAD_OFF + j, 0:channels])
    m = jnp.maximum(m, scratch[PAD_OFF + 1:PAD_OFF + 1 + j, 0:channels])
    return _select_rows(m, l_out, POOL_STRIDE), l_out


def _stem_conv(x_ref, w_ref, b_ref, l_out):
    """Conv1d(Cin=1 -> 64, k=15, s=2, p=7) + folded BN + ReLU.  Cin == 1, so
    each tap is a cheap f32 VPU broadcast multiply (no K=1 MXU matmul)."""
    cout = w_ref.shape[2]
    j = STEM_STRIDE * (l_out - 1) + 1
    acc = jnp.zeros((j, cout), jnp.float32)
    for k in range(STEM_K):
        tap = x_ref[0, k:k + j, :]             # (j, 1) f32, static ref slice
        acc = acc + tap * w_ref[k]             # (j, 1) * (1, cout) broadcast
    acc = jnp.maximum(acc + b_ref[...], 0.0)
    return _select_rows(acc, l_out, STEM_STRIDE)


# ---------------------------------------------------------------------------
# The fused whole-network kernel (one grid step == one batch example)
# ---------------------------------------------------------------------------
def _resnet_kernel(*refs, block_cfgs, stem_l_out):
    it = iter(refs)
    x_ref, ag_ref = next(it), next(it)
    stem_w, stem_b = next(it), next(it)
    blocks = []
    for cfg in block_cfgs:
        cin, cout, stride, down = cfg
        w1, w2 = next(it), next(it)
        wd = next(it) if down else None
        blocks.append((cin, cout, stride, w1, w2, wd))
    sfc_w, sfc_b = next(it), next(it)
    fcw_ag, fcw_feat, fc_b = next(it), next(it), next(it)
    o_ref = next(it)
    scratch = next(it)

    # stem conv + BN + ReLU, then maxpool
    y = _stem_conv(x_ref, stem_w, stem_b, stem_l_out)
    length = stem_l_out
    y, length = _maxpool_k3_s2(y, length, stem_w.shape[2], scratch)

    # residual BasicBlocks; intermediates never leave VMEM / vregs
    for cin, cout, stride, w1, w2, wd in blocks:
        out1, l_out = _conv3_bn(y, w1, cin, cout, length, stride, scratch)
        out1 = jnp.maximum(out1, 0.0)
        out2, _ = _conv3_bn(out1, w2, cout, cout, l_out, 1, scratch)
        if wd is not None:  # 1x1 strided downsample + folded BN
            idn = jnp.dot(y.astype(jnp.bfloat16), wd[...],
                          preferred_element_type=jnp.float32)
            if stride > 1:
                idn = _select_rows(idn, l_out, stride)
        else:
            idn = y
        y = jnp.maximum(out2 + idn, 0.0)
        length = l_out

    # global average pool + both FC heads (f32 epilogue, v5e-safe)
    feat = jnp.mean(y, axis=0, keepdims=True)                       # (1, 512)
    ag_fc = jnp.dot(ag_ref[0], sfc_w[...],
                    preferred_element_type=jnp.float32) + sfc_b[...]
    out = (jnp.dot(ag_fc, fcw_ag[...], preferred_element_type=jnp.float32)
           + jnp.dot(feat, fcw_feat[...], preferred_element_type=jnp.float32)
           + fc_b[...])
    o_ref[0] = out


# ---------------------------------------------------------------------------
# Wrapper
# ---------------------------------------------------------------------------
def resnet_forward(flat_weights, block_cfgs, x_ncl, ag):
    """x_ncl: (N, Cin, L) like the PyTorch module, ag: (N, 5) -> (N, out)."""
    n, _, length = x_ncl.shape
    x_nlc = jnp.transpose(x_ncl, (0, 2, 1)).astype(jnp.float32)      # NCL -> NLC
    x_pad = jnp.pad(x_nlc, ((0, 0), (STEM_PAD, STEM_PAD), (0, 0)))   # stem pad
    ag3 = ag.astype(jnp.float32).reshape(n, 1, ag.shape[-1])

    stem_l_out = (length + 2 * STEM_PAD - STEM_K) // STEM_STRIDE + 1
    out_dim = flat_weights[-1].shape[-1]

    def batch_spec(shape):
        nd = len(shape)
        return pl.BlockSpec((1,) + tuple(shape[1:]),
                            lambda b, _nd=nd: (b,) + (0,) * (_nd - 1))

    def const_spec(shape):
        nd = len(shape)
        return pl.BlockSpec(tuple(shape), lambda b, _nd=nd: (0,) * _nd)

    in_specs = ([batch_spec(x_pad.shape), batch_spec(ag3.shape)]
                + [const_spec(w.shape) for w in flat_weights])

    kernel = functools.partial(_resnet_kernel, block_cfgs=block_cfgs,
                               stem_l_out=stem_l_out)
    out = pl.pallas_call(
        kernel,
        grid=(n,),
        in_specs=in_specs,
        out_specs=pl.BlockSpec((1, 1, out_dim), lambda b: (b, 0, 0)),
        out_shape=jax.ShapeDtypeStruct((n, 1, out_dim), jnp.float32),
        scratch_shapes=[pltpu.VMEM((SCRATCH_ROWS, SCRATCH_COLS), jnp.float32)],
        compiler_params=pltpu.CompilerParams(
            dimension_semantics=("parallel",)),  # batch shards over v7x's 2 TCs
    )(x_pad, ag3, *flat_weights)
    return out[:, 0, :]


# ---------------------------------------------------------------------------
# Parameter construction (deterministic, synthetic) + one-time folding
# ---------------------------------------------------------------------------
def _kaiming(key, shape, fan_out):
    return math.sqrt(2.0 / fan_out) * jax.random.normal(key, shape, jnp.float32)


def _linear_init(key, fan_in, fan_out):
    kw, kb = jax.random.split(key)
    bound = 1.0 / math.sqrt(fan_in)
    w = jax.random.uniform(kw, (fan_in, fan_out), jnp.float32, -bound, bound)
    b = jax.random.uniform(kb, (fan_out,), jnp.float32, -bound, bound)
    return w, b


def _make_block_params(keys, in_planes, planes, stride):
    p = {"stride": stride, "planes": planes, "in_planes": in_planes}
    p["conv1_w"] = _kaiming(next(keys), (3, in_planes, planes), planes * 3)
    p["conv2_w"] = _kaiming(next(keys), (3, planes, planes), planes * 3)
    if stride != 1 or in_planes != planes:
        p["down_w"] = _kaiming(next(keys), (1, in_planes, planes), planes)
    return p


def init_params(key, in_channel=1, out_channel=10, num_blocks=(1, 1, 1, 1)):
    keys = iter(jax.random.split(key, 256))
    params = {}
    # stem: Conv1d(in_channel, 64, k=15, s=2, p=7) (bias=True) + BN1d(64)
    params["conv1_w"] = _kaiming(next(keys), (STEM_K, in_channel, 64), 64 * STEM_K)
    bound = 1.0 / math.sqrt(in_channel * STEM_K)
    params["conv1_b"] = jax.random.uniform(next(keys), (64,), jnp.float32,
                                           -bound, bound)
    layer_cfg = [(64, num_blocks[0], 1), (128, num_blocks[1], 2),
                 (256, num_blocks[2], 2), (512, num_blocks[3], 2)]
    in_planes, layers = 64, []
    for planes, nblk, stride in layer_cfg:
        blocks = [_make_block_params(keys, in_planes, planes, stride)]
        in_planes = planes
        for _ in range(1, nblk):
            blocks.append(_make_block_params(keys, in_planes, planes, 1))
        layers.append(blocks)
    params["layers"] = layers
    params["small_fc_w"], params["small_fc_b"] = _linear_init(next(keys), 5, 10)
    params["fc_w"], params["fc_b"] = _linear_init(next(keys), 512 + 10, out_channel)
    return params


def fold_params(params):
    """One-time transform: fold BN scale into conv weights, cast block conv
    weights to bf16, split the final FC into (ag, feature) parts, and flatten
    into the fixed kernel argument order plus static per-block configs."""
    flat = [(params["conv1_w"] * BN_SCALE).astype(jnp.float32),        # (15,1,64)
            (params["conv1_b"] * BN_SCALE).reshape(1, -1).astype(jnp.float32)]
    cfgs = []
    for layer in params["layers"]:
        for blk in layer:
            cin, cout, stride = blk["in_planes"], blk["planes"], blk["stride"]
            down = "down_w" in blk
            flat.append((blk["conv1_w"] * BN_SCALE).astype(jnp.bfloat16))
            flat.append((blk["conv2_w"] * BN_SCALE).astype(jnp.bfloat16))
            if down:
                flat.append((blk["down_w"][0] * BN_SCALE).astype(jnp.bfloat16))
            cfgs.append((cin, cout, stride, down))
    flat.append(params["small_fc_w"].astype(jnp.float32))              # (5, 10)
    flat.append(params["small_fc_b"].reshape(1, -1).astype(jnp.float32))
    flat.append(params["fc_w"][:10].astype(jnp.float32))               # ag part
    flat.append(params["fc_w"][10:].astype(jnp.float32))               # feat part
    flat.append(params["fc_b"].reshape(1, -1).astype(jnp.float32))
    return flat, tuple(cfgs)


# ---------------------------------------------------------------------------
if __name__ == "__main__":
    key = jax.random.PRNGKey(0)
    pkey, xkey, agkey = jax.random.split(key, 3)

    params = init_params(pkey, in_channel=1, out_channel=10,
                         num_blocks=(1, 1, 1, 1))
    flat_weights, block_cfgs = fold_params(params)

    batch, in_channel, length = 2, 1, 64
    x = jax.random.normal(xkey, (batch, in_channel, length), jnp.float32)  # NCL
    ag = jax.random.normal(agkey, (batch, 5), jnp.float32)

    fwd = jax.jit(resnet_forward, static_argnums=(1,))
    out = fwd(flat_weights, block_cfgs, x, ag)
    out = jax.block_until_ready(out)
    assert out.shape == (batch, 10), out.shape
    assert bool(jnp.all(jnp.isfinite(out)))
    print("KERNEL_OK")
</pallas_src>

<mosaic_0001>
module attributes {stable_mosaic.version = 11 : i64} {
  func.func @_resnet_kernel(%arg0: i32, %arg1: memref<1x78x1xf32, #tpu.memory_space<vmem>>, %arg2: memref<1x1x5xf32, #tpu.memory_space<vmem>>, %arg3: memref<15x1x64xf32, #tpu.memory_space<vmem>>, %arg4: memref<1x64xf32, #tpu.memory_space<vmem>>, %arg5: memref<3x64x64xbf16, #tpu.memory_space<vmem>>, %arg6: memref<3x64x64xbf16, #tpu.memory_space<vmem>>, %arg7: memref<3x64x128xbf16, #tpu.memory_space<vmem>>, %arg8: memref<3x128x128xbf16, #tpu.memory_space<vmem>>, %arg9: memref<64x128xbf16, #tpu.memory_space<vmem>>, %arg10: memref<3x128x256xbf16, #tpu.memory_space<vmem>>, %arg11: memref<3x256x256xbf16, #tpu.memory_space<vmem>>, %arg12: memref<128x256xbf16, #tpu.memory_space<vmem>>, %arg13: memref<3x256x512xbf16, #tpu.memory_space<vmem>>, %arg14: memref<3x512x512xbf16, #tpu.memory_space<vmem>>, %arg15: memref<256x512xbf16, #tpu.memory_space<vmem>>, %arg16: memref<5x10xf32, #tpu.memory_space<vmem>>, %arg17: memref<1x10xf32, #tpu.memory_space<vmem>>, %arg18: memref<10x10xf32, #tpu.memory_space<vmem>>, %arg19: memref<512x10xf32, #tpu.memory_space<vmem>>, %arg20: memref<1x10xf32, #tpu.memory_space<vmem>>, %arg21: memref<1x1x10xf32, #tpu.memory_space<vmem>>, %arg22: memref<48x512xf32, #tpu.memory_space<vmem>>) attributes {dimension_semantics = [#tpu.dimension_semantics<parallel>], iteration_bounds = array<i64: 2>, scalar_prefetch = 0 : i64, scratch_operands = 1 : i64, tpu.core_type = #tpu.core_type<tc>, window_params = [{transform_indices = @transform_0, window_bounds = array<i64: 1, 78, 1>}, {transform_indices = @transform_1, window_bounds = array<i64: 1, 1, 5>}, {pipeline_mode = #tpu.pipeline_mode<synchronous>, transform_indices = @transform_2, window_bounds = array<i64: 15, 1, 64>}, {pipeline_mode = #tpu.pipeline_mode<synchronous>, transform_indices = @transform_3, window_bounds = array<i64: 1, 64>}, {pipeline_mode = #tpu.pipeline_mode<synchronous>, transform_indices = @transform_4, window_bounds = array<i64: 3, 64, 64>}, {pipeline_mode = #tpu.pipeline_mode<synchronous>, transform_indices = @transform_5, window_bounds = array<i64: 3, 64, 64>}, {pipeline_mode = #tpu.pipeline_mode<synchronous>, transform_indices = @transform_6, window_bounds = array<i64: 3, 64, 128>}, {pipeline_mode = #tpu.pipeline_mode<synchronous>, transform_indices = @transform_7, window_bounds = array<i64: 3, 128, 128>}, {pipeline_mode = #tpu.pipeline_mode<synchronous>, transform_indices = @transform_8, window_bounds = array<i64: 64, 128>}, {pipeline_mode = #tpu.pipeline_mode<synchronous>, transform_indices = @transform_9, window_bounds = array<i64: 3, 128, 256>}, {pipeline_mode = #tpu.pipeline_mode<synchronous>, transform_indices = @transform_10, window_bounds = array<i64: 3, 256, 256>}, {pipeline_mode = #tpu.pipeline_mode<synchronous>, transform_indices = @transform_11, window_bounds = array<i64: 128, 256>}, {pipeline_mode = #tpu.pipeline_mode<synchronous>, transform_indices = @transform_12, window_bounds = array<i64: 3, 256, 512>}, {pipeline_mode = #tpu.pipeline_mode<synchronous>, transform_indices = @transform_13, window_bounds = array<i64: 3, 512, 512>}, {pipeline_mode = #tpu.pipeline_mode<synchronous>, transform_indices = @transform_14, window_bounds = array<i64: 256, 512>}, {pipeline_mode = #tpu.pipeline_mode<synchronous>, transform_indices = @transform_15, window_bounds = array<i64: 5, 10>}, {pipeline_mode = #tpu.pipeline_mode<synchronous>, transform_indices = @transform_16, window_bounds = array<i64: 1, 10>}, {pipeline_mode = #tpu.pipeline_mode<synchronous>, transform_indices = @transform_17, window_bounds = array<i64: 10, 10>}, {pipeline_mode = #tpu.pipeline_mode<synchronous>, transform_indices = @transform_18, window_bounds = array<i64: 512, 10>}, {pipeline_mode = #tpu.pipeline_mode<synchronous>, transform_indices = @transform_19, window_bounds = array<i64: 1, 10>}, {transform_indices = @transform_20, window_bounds = array<i64: 1, 1, 10>}]} {
    %cst = arith.constant 0.000000e+00 : f32
    %0 = vector.broadcast %cst : f32 to vector<63x64xf32>
    %c0 = arith.constant 0 : index
    %c0_0 = arith.constant 0 : index
    %c0_1 = arith.constant 0 : index
    %1 = vector.load %arg1[%c0, %c0_0, %c0_1] : memref<1x78x1xf32, #tpu.memory_space<vmem>>, vector<1x63x1xf32>
    %2 = vector.shape_cast %1 : vector<1x63x1xf32> to vector<63x1xf32>
    %c0_2 = arith.constant 0 : index
    %c0_3 = arith.constant 0 : index
    %c0_4 = arith.constant 0 : index
    %3 = vector.load %arg3[%c0_2, %c0_3, %c0_4] : memref<15x1x64xf32, #tpu.memory_space<vmem>>, vector<1x1x64xf32>
    %4 = vector.shape_cast %3 : vector<1x1x64xf32> to vector<1x64xf32>
    %5 = vector.broadcast %2 : vector<63x1xf32> to vector<63x64xf32>
    %6 = vector.broadcast %4 : vector<1x64xf32> to vector<63x64xf32>
    %7 = arith.mulf %5, %6 : vector<63x64xf32>
    %8 = arith.addf %0, %7 : vector<63x64xf32>
    %c0_5 = arith.constant 0 : index
    %c1 = arith.constant 1 : index
    %c0_6 = arith.constant 0 : index
    %9 = vector.load %arg1[%c0_5, %c1, %c0_6] : memref<1x78x1xf32, #tpu.memory_space<vmem>>, vector<1x63x1xf32>
    %10 = vector.shape_cast %9 : vector<1x63x1xf32> to vector<63x1xf32>
    %c1_7 = arith.constant 1 : index
    %c0_8 = arith.constant 0 : index
    %c0_9 = arith.constant 0 : index
    %11 = vector.load %arg3[%c1_7, %c0_8, %c0_9] : memref<15x1x64xf32, #tpu.memory_space<vmem>>, vector<1x1x64xf32>
    %12 = vector.shape_cast %11 : vector<1x1x64xf32> to vector<1x64xf32>
    %13 = vector.broadcast %10 : vector<63x1xf32> to vector<63x64xf32>
    %14 = vector.broadcast %12 : vector<1x64xf32> to vector<63x64xf32>
    %15 = arith.mulf %13, %14 : vector<63x64xf32>
    %16 = arith.addf %8, %15 : vector<63x64xf32>
    %c0_10 = arith.constant 0 : index
    %c2 = arith.constant 2 : index
    %c0_11 = arith.constant 0 : index
    %17 = vector.load %arg1[%c0_10, %c2, %c0_11] : memref<1x78x1xf32, #tpu.memory_space<vmem>>, vector<1x63x1xf32>
    %18 = vector.shape_cast %17 : vector<1x63x1xf32> to vector<63x1xf32>
    %c2_12 = arith.constant 2 : index
    %c0_13 = arith.constant 0 : index
    %c0_14 = arith.constant 0 : index
    %19 = vector.load %arg3[%c2_12, %c0_13, %c0_14] : memref<15x1x64xf32, #tpu.memory_space<vmem>>, vector<1x1x64xf32>
    %20 = vector.shape_cast %19 : vector<1x1x64xf32> to vector<1x64xf32>
    %21 = vector.broadcast %18 : vector<63x1xf32> to vector<63x64xf32>
    %22 = vector.broadcast %20 : vector<1x64xf32> to vector<63x64xf32>
    %23 = arith.mulf %21, %22 : vector<63x64xf32>
    %24 = arith.addf %16, %23 : vector<63x64xf32>
    %c0_15 = arith.constant 0 : index
    %c3 = arith.constant 3 : index
    %c0_16 = arith.constant 0 : index
    %25 = vector.load %arg1[%c0_15, %c3, %c0_16] : memref<1x78x1xf32, #tpu.memory_space<vmem>>, vector<1x63x1xf32>
    %26 = vector.shape_cast %25 : vector<1x63x1xf32> to vector<63x1xf32>
    %c3_17 = arith.constant 3 : index
    %c0_18 = arith.constant 0 : index
    %c0_19 = arith.constant 0 : index
    %27 = vector.load %arg3[%c3_17, %c0_18, %c0_19] : memref<15x1x64xf32, #tpu.memory_space<vmem>>, vector<1x1x64xf32>
    %28 = vector.shape_cast %27 : vector<1x1x64xf32> to vector<1x64xf32>
    %29 = vector.broadcast %26 : vector<63x1xf32> to vector<63x64xf32>
    %30 = vector.broadcast %28 : vector<1x64xf32> to vector<63x64xf32>
    %31 = arith.mulf %29, %30 : vector<63x64xf32>
    %32 = arith.addf %24, %31 : vector<63x64xf32>
    %c0_20 = arith.constant 0 : index
    %c4 = arith.constant 4 : index
    %c0_21 = arith.constant 0 : index
    %33 = vector.load %arg1[%c0_20, %c4, %c0_21] : memref<1x78x1xf32, #tpu.memory_space<vmem>>, vector<1x63x1xf32>
    %34 = vector.shape_cast %33 : vector<1x63x1xf32> to vector<63x1xf32>
    %c4_22 = arith.constant 4 : index
    %c0_23 = arith.constant 0 : index
    %c0_24 = arith.constant 0 : index
    %35 = vector.load %arg3[%c4_22, %c0_23, %c0_24] : memref<15x1x64xf32, #tpu.memory_space<vmem>>, vector<1x1x64xf32>
    %36 = vector.shape_cast %35 : vector<1x1x64xf32> to vector<1x64xf32>
    %37 = vector.broadcast %34 : vector<63x1xf32> to vector<63x64xf32>
    %38 = vector.broadcast %36 : vector<1x64xf32> to vector<63x64xf32>
    %39 = arith.mulf %37, %38 : vector<63x64xf32>
    %40 = arith.addf %32, %39 : vector<63x64xf32>
    %c0_25 = arith.constant 0 : index
    %c5 = arith.constant 5 : index
    %c0_26 = arith.constant 0 : index
    %41 = vector.load %arg1[%c0_25, %c5, %c0_26] : memref<1x78x1xf32, #tpu.memory_space<vmem>>, vector<1x63x1xf32>
    %42 = vector.shape_cast %41 : vector<1x63x1xf32> to vector<63x1xf32>
    %c5_27 = arith.constant 5 : index
    %c0_28 = arith.constant 0 : index
    %c0_29 = arith.constant 0 : index
    %43 = vector.load %arg3[%c5_27, %c0_28, %c0_29] : memref<15x1x64xf32, #tpu.memory_space<vmem>>, vector<1x1x64xf32>
    %44 = vector.shape_cast %43 : vector<1x1x64xf32> to vector<1x64xf32>
    %45 = vector.broadcast %42 : vector<63x1xf32> to vector<63x64xf32>
    %46 = vector.broadcast %44 : vector<1x64xf32> to vector<63x64xf32>
    %47 = arith.mulf %45, %46 : vector<63x64xf32>
    %48 = arith.addf %40, %47 : vector<63x64xf32>
    %c0_30 = arith.constant 0 : index
    %c6 = arith.constant 6 : index
    %c0_31 = arith.constant 0 : index
    %49 = vector.load %arg1[%c0_30, %c6, %c0_31] : memref<1x78x1xf32, #tpu.memory_space<vmem>>, vector<1x63x1xf32>
    %50 = vector.shape_cast %49 : vector<1x63x1xf32> to vector<63x1xf32>
    %c6_32 = arith.constant 6 : index
    %c0_33 = arith.constant 0 : index
    %c0_34 = arith.constant 0 : index
    %51 = vector.load %arg3[%c6_32, %c0_33, %c0_34] : memref<15x1x64xf32, #tpu.memory_space<vmem>>, vector<1x1x64xf32>
    %52 = vector.shape_cast %51 : vector<1x1x64xf32> to vector<1x64xf32>
    %53 = vector.broadcast %50 : vector<63x1xf32> to vector<63x64xf32>
    %54 = vector.broadcast %52 : vector<1x64xf32> to vector<63x64xf32>
    %55 = arith.mulf %53, %54 : vector<63x64xf32>
    %56 = arith.addf %48, %55 : vector<63x64xf32>
    %c0_35 = arith.constant 0 : index
    %c7 = arith.constant 7 : index
    %c0_36 = arith.constant 0 : index
    %57 = vector.load %arg1[%c0_35, %c7, %c0_36] : memref<1x78x1xf32, #tpu.memory_space<vmem>>, vector<1x63x1xf32>
    %58 = vector.shape_cast %57 : vector<1x63x1xf32> to vector<63x1xf32>
    %c7_37 = arith.constant 7 : index
    %c0_38 = arith.constant 0 : index
    %c0_39 = arith.constant 0 : index
    %59 = vector.load %arg3[%c7_37, %c0_38, %c0_39] : memref<15x1x64xf32, #tpu.memory_space<vmem>>, vector<1x1x64xf32>
    %60 = vector.shape_cast %59 : vector<1x1x64xf32> to vector<1x64xf32>
    %61 = vector.broadcast %58 : vector<63x1xf32> to vector<63x64xf32>
    %62 = vector.broadcast %60 : vector<1x64xf32> to vector<63x64xf32>
    %63 = arith.mulf %61, %62 : vector<63x64xf32>
    %64 = arith.addf %56, %63 : vector<63x64xf32>
    %c0_40 = arith.constant 0 : index
    %c8 = arith.constant 8 : index
    %c0_41 = arith.constant 0 : index
    %65 = vector.load %arg1[%c0_40, %c8, %c0_41] : memref<1x78x1xf32, #tpu.memory_space<vmem>>, vector<1x63x1xf32>
    %66 = vector.shape_cast %65 : vector<1x63x1xf32> to vector<63x1xf32>
    %c8_42 = arith.constant 8 : index
    %c0_43 = arith.constant 0 : index
    %c0_44 = arith.constant 0 : index
    %67 = vector.load %arg3[%c8_42, %c0_43, %c0_44] : memref<15x1x64xf32, #tpu.memory_space<vmem>>, vector<1x1x64xf32>
    %68 = vector.shape_cast %67 : vector<1x1x64xf32> to vector<1x64xf32>
    %69 = vector.broadcast %66 : vector<63x1xf32> to vector<63x64xf32>
    %70 = vector.broadcast %68 : vector<1x64xf32> to vector<63x64xf32>
    %71 = arith.mulf %69, %70 : vector<63x64xf32>
    %72 = arith.addf %64, %71 : vector<63x64xf32>
    %c0_45 = arith.constant 0 : index
    %c9 = arith.constant 9 : index
    %c0_46 = arith.constant 0 : index
    %73 = vector.load %arg1[%c0_45, %c9, %c0_46] : memref<1x78x1xf32, #tpu.memory_space<vmem>>, vector<1x63x1xf32>
    %74 = vector.shape_cast %73 : vector<1x63x1xf32> to vector<63x1xf32>
    %c9_47 = arith.constant 9 : index
    %c0_48 = arith.constant 0 : index
    %c0_49 = arith.constant 0 : index
    %75 = vector.load %arg3[%c9_47, %c0_48, %c0_49] : memref<15x1x64xf32, #tpu.memory_space<vmem>>, vector<1x1x64xf32>
    %76 = vector.shape_cast %75 : vector<1x1x64xf32> to vector<1x64xf32>
    %77 = vector.broadcast %74 : vector<63x1xf32> to vector<63x64xf32>
    %78 = vector.broadcast %76 : vector<1x64xf32> to vector<63x64xf32>
    %79 = arith.mulf %77, %78 : vector<63x64xf32>
    %80 = arith.addf %72, %79 : vector<63x64xf32>
    %c0_50 = arith.constant 0 : index
    %c10 = arith.constant 10 : index
    %c0_51 = arith.constant 0 : index
    %81 = vector.load %arg1[%c0_50, %c10, %c0_51] : memref<1x78x1xf32, #tpu.memory_space<vmem>>, vector<1x63x1xf32>
    %82 = vector.shape_cast %81 : vector<1x63x1xf32> to vector<63x1xf32>
    %c10_52 = arith.constant 10 : index
    %c0_53 = arith.constant 0 : index
    %c0_54 = arith.constant 0 : index
    %83 = vector.load %arg3[%c10_52, %c0_53, %c0_54] : memref<15x1x64xf32, #tpu.memory_space<vmem>>, vector<1x1x64xf32>
    %84 = vector.shape_cast %83 : vector<1x1x64xf32> to vector<1x64xf32>
    %85 = vector.broadcast %82 : vector<63x1xf32> to vector<63x64xf32>
    %86 = vector.broadcast %84 : vector<1x64xf32> to vector<63x64xf32>
    %87 = arith.mulf %85, %86 : vector<63x64xf32>
    %88 = arith.addf %80, %87 : vector<63x64xf32>
    %c0_55 = arith.constant 0 : index
    %c11 = arith.constant 11 : index
    %c0_56 = arith.constant 0 : index
    %89 = vector.load %arg1[%c0_55, %c11, %c0_56] : memref<1x78x1xf32, #tpu.memory_space<vmem>>, vector<1x63x1xf32>
    %90 = vector.shape_cast %89 : vector<1x63x1xf32> to vector<63x1xf32>
    %c11_57 = arith.constant 11 : index
    %c0_58 = arith.constant 0 : index
    %c0_59 = arith.constant 0 : index
    %91 = vector.load %arg3[%c11_57, %c0_58, %c0_59] : memref<15x1x64xf32, #tpu.memory_space<vmem>>, vector<1x1x64xf32>
    %92 = vector.shape_cast %91 : vector<1x1x64xf32> to vector<1x64xf32>
    %93 = vector.broadcast %90 : vector<63x1xf32> to vector<63x64xf32>
    %94 = vector.broadcast %92 : vector<1x64xf32> to vector<63x64xf32>
    %95 = arith.mulf %93, %94 : vector<63x64xf32>
    %96 = arith.addf %88, %95 : vector<63x64xf32>
    %c0_60 = arith.constant 0 : index
    %c12 = arith.constant 12 : index
    %c0_61 = arith.constant 0 : index
    %97 = vector.load %arg1[%c0_60, %c12, %c0_61] : memref<1x78x1xf32, #tpu.memory_space<vmem>>, vector<1x63x1xf32>
    %98 = vector.shape_cast %97 : vector<1x63x1xf32> to vector<63x1xf32>
    %c12_62 = arith.constant 12 : index
    %c0_63 = arith.constant 0 : index
    %c0_64 = arith.constant 0 : index
    %99 = vector.load %arg3[%c12_62, %c0_63, %c0_64] : memref<15x1x64xf32, #tpu.memory_space<vmem>>, vector<1x1x64xf32>
    %100 = vector.shape_cast %99 : vector<1x1x64xf32> to vector<1x64xf32>
    %101 = vector.broadcast %98 : vector<63x1xf32> to vector<63x64xf32>
    %102 = vector.broadcast %100 : vector<1x64xf32> to vector<63x64xf32>
    %103 = arith.mulf %101, %102 : vector<63x64xf32>
    %104 = arith.addf %96, %103 : vector<63x64xf32>
    %c0_65 = arith.constant 0 : index
    %c13 = arith.constant 13 : index
    %c0_66 = arith.constant 0 : index
    %105 = vector.load %arg1[%c0_65, %c13, %c0_66] : memref<1x78x1xf32, #tpu.memory_space<vmem>>, vector<1x63x1xf32>
    %106 = vector.shape_cast %105 : vector<1x63x1xf32> to vector<63x1xf32>
    %c13_67 = arith.constant 13 : index
    %c0_68 = arith.constant 0 : index
    %c0_69 = arith.constant 0 : index
    %107 = vector.load %arg3[%c13_67, %c0_68, %c0_69] : memref<15x1x64xf32, #tpu.memory_space<vmem>>, vector<1x1x64xf32>
    %108 = vector.shape_cast %107 : vector<1x1x64xf32> to vector<1x64xf32>
    %109 = vector.broadcast %106 : vector<63x1xf32> to vector<63x64xf32>
    %110 = vector.broadcast %108 : vector<1x64xf32> to vector<63x64xf32>
    %111 = arith.mulf %109, %110 : vector<63x64xf32>
    %112 = arith.addf %104, %111 : vector<63x64xf32>
    %c0_70 = arith.constant 0 : index
    %c14 = arith.constant 14 : index
    %c0_71 = arith.constant 0 : index
    %113 = vector.load %arg1[%c0_70, %c14, %c0_71] : memref<1x78x1xf32, #tpu.memory_space<vmem>>, vector<1x63x1xf32>
    %114 = vector.shape_cast %113 : vector<1x63x1xf32> to vector<63x1xf32>
    %c14_72 = arith.constant 14 : index
    %c0_73 = arith.constant 0 : index
    %c0_74 = arith.constant 0 : index
    %115 = vector.load %arg3[%c14_72, %c0_73, %c0_74] : memref<15x1x64xf32, #tpu.memory_space<vmem>>, vector<1x1x64xf32>
    %116 = vector.shape_cast %115 : vector<1x1x64xf32> to vector<1x64xf32>
    %117 = vector.broadcast %114 : vector<63x1xf32> to vector<63x64xf32>
    %118 = vector.broadcast %116 : vector<1x64xf32> to vector<63x64xf32>
    %119 = arith.mulf %117, %118 : vector<63x64xf32>
    %120 = arith.addf %112, %119 : vector<63x64xf32>
    %c0_75 = arith.constant 0 : index
    %c0_76 = arith.constant 0 : index
    %121 = vector.load %arg4[%c0_75, %c0_76] : memref<1x64xf32, #tpu.memory_space<vmem>>, vector<1x64xf32>
    %122 = vector.broadcast %121 : vector<1x64xf32> to vector<63x64xf32>
    %123 = arith.addf %120, %122 : vector<63x64xf32>
    %cst_77 = arith.constant 0.000000e+00 : f32
    %124 = vector.broadcast %cst_77 : f32 to vector<63x64xf32>
    %125 = arith.maximumf %123, %124 : vector<63x64xf32>
    %126 = tpu.iota {dimensions = array<i32: 0>} : vector<32x63xi32>
    %127 = tpu.iota {dimensions = array<i32: 1>} : vector<32x63xi32>
    %c2_i32 = arith.constant 2 : i32
    %128 = vector.broadcast %c2_i32 : i32 to vector<32x63xi32>
    %129 = arith.muli %128, %126 : vector<32x63xi32>
    %130 = arith.cmpi eq, %127, %129 : vector<32x63xi32>
    %131 = arith.extui %130 : vector<32x63xi1> to vector<32x63xi32>
    %132 = arith.sitofp %131 : vector<32x63xi32> to vector<32x63xf32>
    %cst_78 = arith.constant dense<0.000000e+00> : vector<32x64xf32>
    %133 = tpu.matmul %132, %125, %cst_78 {dimension_numbers = #tpu.dot_dimension_numbers<[1], [0], [0], [1], [0, 0, 1, 1], [], []>} : vector<32x63xf32>, vector<63x64xf32>, vector<32x64xf32> -> vector<32x64xf32>
    %cst_79 = arith.constant 0.000000e+00 : f32
    %134 = vector.broadcast %cst_79 : f32 to vector<1x64xf32>
    %c7_80 = arith.constant 7 : index
    %c0_81 = arith.constant 0 : index
    %135 = vector.load %arg22[%c7_80, %c0_81] : memref<48x512xf32, #tpu.memory_space<vmem>>, vector<1x64xf32>
    tpu.vector_store %arg22[%c7_80, %c0_81], %134 {strides = array<i32>} : memref<48x512xf32, #tpu.memory_space<vmem>>, vector<1x64xf32>,
    %c40 = arith.constant 40 : index
    %c0_82 = arith.constant 0 : index
    %136 = vector.load %arg22[%c40, %c0_82] : memref<48x512xf32, #tpu.memory_space<vmem>>, vector<1x64xf32>
    tpu.vector_store %arg22[%c40, %c0_82], %134 {strides = array<i32>} : memref<48x512xf32, #tpu.memory_space<vmem>>, vector<1x64xf32>,
    %c8_83 = arith.constant 8 : index
    %c0_84 = arith.constant 0 : index
    %137 = vector.load %arg22[%c8_83, %c0_84] : memref<48x512xf32, #tpu.memory_space<vmem>>, vector<32x64xf32>
    tpu.vector_store %arg22[%c8_83, %c0_84], %133 {strides = array<i32>} : memref<48x512xf32, #tpu.memory_space<vmem>>, vector<32x64xf32>,
    %c7_85 = arith.constant 7 : index
    %c0_86 = arith.constant 0 : index
    %138 = vector.load %arg22[%c7_85, %c0_86] : memref<48x512xf32, #tpu.memory_space<vmem>>, vector<31x64xf32>
    %c8_87 = arith.constant 8 : index
    %c0_88 = arith.constant 0 : index
    %139 = vector.load %arg22[%c8_87, %c0_88] : memref<48x512xf32, #tpu.memory_space<vmem>>, vector<31x64xf32>
    %140 = arith.maximumf %138, %139 : vector<31x64xf32>
    %c9_89 = arith.constant 9 : index
    %c0_90 = arith.constant 0 : index
    %141 = vector.load %arg22[%c9_89, %c0_90] : memref<48x512xf32, #tpu.memory_space<vmem>>, vector<31x64xf32>
    %142 = arith.maximumf %140, %141 : vector<31x64xf32>
    %143 = tpu.iota {dimensions = array<i32: 0>} : vector<16x31xi32>
    %144 = tpu.iota {dimensions = array<i32: 1>} : vector<16x31xi32>
    %c2_i32_91 = arith.constant 2 : i32
    %145 = vector.broadcast %c2_i32_91 : i32 to vector<16x31xi32>
    %146 = arith.muli %145, %143 : vector<16x31xi32>
    %147 = arith.cmpi eq, %144, %146 : vector<16x31xi32>
    %148 = arith.extui %147 : vector<16x31xi1> to vector<16x31xi32>
    %149 = arith.sitofp %148 : vector<16x31xi32> to vector<16x31xf32>
    %cst_92 = arith.constant dense<0.000000e+00> : vector<16x64xf32>
    %150 = tpu.matmul %149, %142, %cst_92 {dimension_numbers = #tpu.dot_dimension_numbers<[1], [0], [0], [1], [0, 0, 1, 1], [], []>} : vector<16x31xf32>, vector<31x64xf32>, vector<16x64xf32> -> vector<16x64xf32>
    %cst_93 = arith.constant 0.000000e+00 : f32
    %151 = vector.broadcast %cst_93 : f32 to vector<1x64xf32>
    %c7_94 = arith.constant 7 : index
    %c0_95 = arith.constant 0 : index
    %152 = vector.load %arg22[%c7_94, %c0_95] : memref<48x512xf32, #tpu.memory_space<vmem>>, vector<1x64xf32>
    tpu.vector_store %arg22[%c7_94, %c0_95], %151 {strides = array<i32>} : memref<48x512xf32, #tpu.memory_space<vmem>>, vector<1x64xf32>,
    %c24 = arith.constant 24 : index
    %c0_96 = arith.constant 0 : index
    %153 = vector.load %arg22[%c24, %c0_96] : memref<48x512xf32, #tpu.memory_space<vmem>>, vector<1x64xf32>
    tpu.vector_store %arg22[%c24, %c0_96], %151 {strides = array<i32>} : memref<48x512xf32, #tpu.memory_space<vmem>>, vector<1x64xf32>,
    %c8_97 = arith.constant 8 : index
    %c0_98 = arith.constant 0 : index
    %154 = vector.load %arg22[%c8_97, %c0_98] : memref<48x512xf32, #tpu.memory_space<vmem>>, vector<16x64xf32>
    tpu.vector_store %arg22[%c8_97, %c0_98], %150 {strides = array<i32>} : memref<48x512xf32, #tpu.memory_space<vmem>>, vector<16x64xf32>,
    %cst_99 = arith.constant 0.000000e+00 : f32
    %155 = vector.broadcast %cst_99 : f32 to vector<16x64xf32>
    %c7_100 = arith.constant 7 : index
    %c0_101 = arith.constant 0 : index
    %156 = vector.load %arg22[%c7_100, %c0_101] : memref<48x512xf32, #tpu.memory_space<vmem>>, vector<16x64xf32>
    %157 = arith.truncf %156 : vector<16x64xf32> to vector<16x64xbf16>
    %c0_102 = arith.constant 0 : index
    %c0_103 = arith.constant 0 : index
    %c0_104 = arith.constant 0 : index
    %158 = vector.load %arg5[%c0_102, %c0_103, %c0_104] : memref<3x64x64xbf16, #tpu.memory_space<vmem>>, vector<1x64x64xbf16>
    %159 = vector.shape_cast %158 : vector<1x64x64xbf16> to vector<64x64xbf16>
    %cst_105 = arith.constant dense<0.000000e+00> : vector<16x64xf32>
    %160 = tpu.matmul %157, %159, %cst_105 {dimension_numbers = #tpu.dot_dimension_numbers<[1], [0], [0], [1], [0, 0, 1, 1], [], []>} : vector<16x64xbf16>, vector<64x64xbf16>, vector<16x64xf32> -> vector<16x64xf32>
    %161 = arith.addf %155, %160 : vector<16x64xf32>
    %c8_106 = arith.constant 8 : index
    %c0_107 = arith.constant 0 : index
    %162 = vector.load %arg22[%c8_106, %c0_107] : memref<48x512xf32, #tpu.memory_space<vmem>>, vector<16x64xf32>
    %163 = arith.truncf %162 : vector<16x64xf32> to vector<16x64xbf16>
    %c1_108 = arith.constant 1 : index
    %c0_109 = arith.constant 0 : index
    %c0_110 = arith.constant 0 : index
    %164 = vector.load %arg5[%c1_108, %c0_109, %c0_110] : memref<3x64x64xbf16, #tpu.memory_space<vmem>>, vector<1x64x64xbf16>
    %165 = vector.shape_cast %164 : vector<1x64x64xbf16> to vector<64x64xbf16>
    %cst_111 = arith.constant dense<0.000000e+00> : vector<16x64xf32>
    %166 = tpu.matmul %163, %165, %cst_111 {dimension_numbers = #tpu.dot_dimension_numbers<[1], [0], [0], [1], [0, 0, 1, 1], [], []>} : vector<16x64xbf16>, vector<64x64xbf16>, vector<16x64xf32> -> vector<16x64xf32>
    %167 = arith.addf %161, %166 : vector<16x64xf32>
    %c9_112 = arith.constant 9 : index
    %c0_113 = arith.constant 0 : index
    %168 = vector.load %arg22[%c9_112, %c0_113] : memref<48x512xf32, #tpu.memory_space<vmem>>, vector<16x64xf32>
    %169 = arith.truncf %168 : vector<16x64xf32> to vector<16x64xbf16>
    %c2_114 = arith.constant 2 : index
    %c0_115 = arith.constant 0 : index
    %c0_116 = arith.constant 0 : index
    %170 = vector.load %arg5[%c2_114, %c0_115, %c0_116] : memref<3x64x64xbf16, #tpu.memory_space<vmem>>, vector<1x64x64xbf16>
    %171 = vector.shape_cast %170 : vector<1x64x64xbf16> to vector<64x64xbf16>
    %cst_117 = arith.constant dense<0.000000e+00> : vector<16x64xf32>
    %172 = tpu.matmul %169, %171, %cst_117 {dimension_numbers = #tpu.dot_dimension_numbers<[1], [0], [0], [1], [0, 0, 1, 1], [], []>} : vector<16x64xbf16>, vector<64x64xbf16>, vector<16x64xf32> -> vector<16x64xf32>
    %173 = arith.addf %167, %172 : vector<16x64xf32>
    %cst_118 = arith.constant 0.000000e+00 : f32
    %174 = vector.broadcast %cst_118 : f32 to vector<16x64xf32>
    %175 = arith.maximumf %173, %174 : vector<16x64xf32>
    %cst_119 = arith.constant 0.000000e+00 : f32
    %176 = vector.broadcast %cst_119 : f32 to vector<1x64xf32>
    %c7_120 = arith.constant 7 : index
    %c0_121 = arith.constant 0 : index
    %177 = vector.load %arg22[%c7_120, %c0_121] : memref<48x512xf32, #tpu.memory_space<vmem>>, vector<1x64xf32>
    tpu.vector_store %arg22[%c7_120, %c0_121], %176 {strides = array<i32>} : memref<48x512xf32, #tpu.memory_space<vmem>>, vector<1x64xf32>,
    %c24_122 = arith.constant 24 : index
    %c0_123 = arith.constant 0 : index
    %178 = vector.load %arg22[%c24_122, %c0_123] : memref<48x512xf32, #tpu.memory_space<vmem>>, vector<1x64xf32>
    tpu.vector_store %arg22[%c24_122, %c0_123], %176 {strides = array<i32>} : memref<48x512xf32, #tpu.memory_space<vmem>>, vector<1x64xf32>,
    %c8_124 = arith.constant 8 : index
    %c0_125 = arith.constant 0 : index
    %179 = vector.load %arg22[%c8_124, %c0_125] : memref<48x512xf32, #tpu.memory_space<vmem>>, vector<16x64xf32>
    tpu.vector_store %arg22[%c8_124, %c0_125], %175 {strides = array<i32>} : memref<48x512xf32, #tpu.memory_space<vmem>>, vector<16x64xf32>,
    %cst_126 = arith.constant 0.000000e+00 : f32
    %180 = vector.broadcast %cst_126 : f32 to vector<16x64xf32>
    %c7_127 = arith.constant 7 : index
    %c0_128 = arith.constant 0 : index
    %181 = vector.load %arg22[%c7_127, %c0_128] : memref<48x512xf32, #tpu.memory_space<vmem>>, vector<16x64xf32>
    %182 = arith.truncf %181 : vector<16x64xf32> to vector<16x64xbf16>
    %c0_129 = arith.constant 0 : index
    %c0_130 = arith.constant 0 : index
    %c0_131 = arith.constant 0 : index
    %183 = vector.load %arg6[%c0_129, %c0_130, %c0_131] : memref<3x64x64xbf16, #tpu.memory_space<vmem>>, vector<1x64x64xbf16>
    %184 = vector.shape_cast %183 : vector<1x64x64xbf16> to vector<64x64xbf16>
    %cst_132 = arith.constant dense<0.000000e+00> : vector<16x64xf32>
    %185 = tpu.matmul %182, %184, %cst_132 {dimension_numbers = #tpu.dot_dimension_numbers<[1], [0], [0], [1], [0, 0, 1, 1], [], []>} : vector<16x64xbf16>, vector<64x64xbf16>, vector<16x64xf32> -> vector<16x64xf32>
    %186 = arith.addf %180, %185 : vector<16x64xf32>
    %c8_133 = arith.constant 8 : index
    %c0_134 = arith.constant 0 : index
    %187 = vector.load %arg22[%c8_133, %c0_134] : memref<48x512xf32, #tpu.memory_space<vmem>>, vector<16x64xf32>
    %188 = arith.truncf %187 : vector<16x64xf32> to vector<16x64xbf16>
    %c1_135 = arith.constant 1 : index
    %c0_136 = arith.constant 0 : index
    %c0_137 = arith.constant 0 : index
    %189 = vector.load %arg6[%c1_135, %c0_136, %c0_137] : memref<3x64x64xbf16, #tpu.memory_space<vmem>>, vector<1x64x64xbf16>
    %190 = vector.shape_cast %189 : vector<1x64x64xbf16> to vector<64x64xbf16>
    %cst_138 = arith.constant dense<0.000000e+00> : vector<16x64xf32>
    %191 = tpu.matmul %188, %190, %cst_138 {dimension_numbers = #tpu.dot_dimension_numbers<[1], [0], [0], [1], [0, 0, 1, 1], [], []>} : vector<16x64xbf16>, vector<64x64xbf16>, vector<16x64xf32> -> vector<16x64xf32>
    %192 = arith.addf %186, %191 : vector<16x64xf32>
    %c9_139 = arith.constant 9 : index
    %c0_140 = arith.constant 0 : index
    %193 = vector.load %arg22[%c9_139, %c0_140] : memref<48x512xf32, #tpu.memory_space<vmem>>, vector<16x64xf32>
    %194 = arith.truncf %193 : vector<16x64xf32> to vector<16x64xbf16>
    %c2_141 = arith.constant 2 : index
    %c0_142 = arith.constant 0 : index
    %c0_143 = arith.constant 0 : index
    %195 = vector.load %arg6[%c2_141, %c0_142, %c0_143] : memref<3x64x64xbf16, #tpu.memory_space<vmem>>, vector<1x64x64xbf16>
    %196 = vector.shape_cast %195 : vector<1x64x64xbf16> to vector<64x64xbf16>
    %cst_144 = arith.constant dense<0.000000e+00> : vector<16x64xf32>
    %197 = tpu.matmul %194, %196, %cst_144 {dimension_numbers = #tpu.dot_dimension_numbers<[1], [0], [0], [1], [0, 0, 1, 1], [], []>} : vector<16x64xbf16>, vector<64x64xbf16>, vector<16x64xf32> -> vector<16x64xf32>
    %198 = arith.addf %192, %197 : vector<16x64xf32>
    %199 = arith.addf %198, %150 : vector<16x64xf32>
    %cst_145 = arith.constant 0.000000e+00 : f32
    %200 = vector.broadcast %cst_145 : f32 to vector<16x64xf32>
    %201 = arith.maximumf %199, %200 : vector<16x64xf32>
    %cst_146 = arith.constant 0.000000e+00 : f32
    %202 = vector.broadcast %cst_146 : f32 to vector<1x64xf32>
    %c7_147 = arith.constant 7 : index
    %c0_148 = arith.constant 0 : index
    %203 = vector.load %arg22[%c7_147, %c0_148] : memref<48x512xf32, #tpu.memory_space<vmem>>, vector<1x64xf32>
    tpu.vector_store %arg22[%c7_147, %c0_148], %202 {strides = array<i32>} : memref<48x512xf32, #tpu.memory_space<vmem>>, vector<1x64xf32>,
    %c24_149 = arith.constant 24 : index
    %c0_150 = arith.constant 0 : index
    %204 = vector.load %arg22[%c24_149, %c0_150] : memref<48x512xf32, #tpu.memory_space<vmem>>, vector<1x64xf32>
    tpu.vector_store %arg22[%c24_149, %c0_150], %202 {strides = array<i32>} : memref<48x512xf32, #tpu.memory_space<vmem>>, vector<1x64xf32>,
    %c8_151 = arith.constant 8 : index
    %c0_152 = arith.constant 0 : index
    %205 = vector.load %arg22[%c8_151, %c0_152] : memref<48x512xf32, #tpu.memory_space<vmem>>, vector<16x64xf32>
    tpu.vector_store %arg22[%c8_151, %c0_152], %201 {strides = array<i32>} : memref<48x512xf32, #tpu.memory_space<vmem>>, vector<16x64xf32>,
    %cst_153 = arith.constant 0.000000e+00 : f32
    %206 = vector.broadcast %cst_153 : f32 to vector<15x128xf32>
    %c7_154 = arith.constant 7 : index
    %c0_155 = arith.constant 0 : index
    %207 = vector.load %arg22[%c7_154, %c0_155] : memref<48x512xf32, #tpu.memory_space<vmem>>, vector<15x64xf32>
    %208 = arith.truncf %207 : vector<15x64xf32> to vector<15x64xbf16>
    %c0_156 = arith.constant 0 : index
    %c0_157 = arith.constant 0 : index
    %c0_158 = arith.constant 0 : index
    %209 = vector.load %arg7[%c0_156, %c0_157, %c0_158] : memref<3x64x128xbf16, #tpu.memory_space<vmem>>, vector<1x64x128xbf16>
    %210 = vector.shape_cast %209 : vector<1x64x128xbf16> to vector<64x128xbf16>
    %cst_159 = arith.constant dense<0.000000e+00> : vector<15x128xf32>
    %211 = tpu.matmul %208, %210, %cst_159 {dimension_numbers = #tpu.dot_dimension_numbers<[1], [0], [0], [1], [0, 0, 1, 1], [], []>} : vector<15x64xbf16>, vector<64x128xbf16>, vector<15x128xf32> -> vector<15x128xf32>
    %212 = arith.addf %206, %211 : vector<15x128xf32>
    %c8_160 = arith.constant 8 : index
    %c0_161 = arith.constant 0 : index
    %213 = vector.load %arg22[%c8_160, %c0_161] : memref<48x512xf32, #tpu.memory_space<vmem>>, vector<15x64xf32>
    %214 = arith.truncf %213 : vector<15x64xf32> to vector<15x64xbf16>
    %c1_162 = arith.constant 1 : index
    %c0_163 = arith.constant 0 : index
    %c0_164 = arith.constant 0 : index
    %215 = vector.load %arg7[%c1_162, %c0_163, %c0_164] : memref<3x64x128xbf16, #tpu.memory_space<vmem>>, vector<1x64x128xbf16>
    %216 = vector.shape_cast %215 : vector<1x64x128xbf16> to vector<64x128xbf16>
    %cst_165 = arith.constant dense<0.000000e+00> : vector<15x128xf32>
    %217 = tpu.matmul %214, %216, %cst_165 {dimension_numbers = #tpu.dot_dimension_numbers<[1], [0], [0], [1], [0, 0, 1, 1], [], []>} : vector<15x64xbf16>, vector<64x128xbf16>, vector<15x128xf32> -> vector<15x128xf32>
    %218 = arith.addf %212, %217 : vector<15x128xf32>
    %c9_166 = arith.constant 9 : index
    %c0_167 = arith.constant 0 : index
    %219 = vector.load %arg22[%c9_166, %c0_167] : memref<48x512xf32, #tpu.memory_space<vmem>>, vector<15x64xf32>
    %220 = arith.truncf %219 : vector<15x64xf32> to vector<15x64xbf16>
    %c2_168 = arith.constant 2 : index
    %c0_169 = arith.constant 0 : index
    %c0_170 = arith.constant 0 : index
    %221 = vector.load %arg7[%c2_168, %c0_169, %c0_170] : memref<3x64x128xbf16, #tpu.memory_space<vmem>>, vector<1x64x128xbf16>
    %222 = vector.shape_cast %221 : vector<1x64x128xbf16> to vector<64x128xbf16>
    %cst_171 = arith.constant dense<0.000000e+00> : vector<15x128xf32>
    %223 = tpu.matmul %220, %222, %cst_171 {dimension_numbers = #tpu.dot_dimension_numbers<[1], [0], [0], [1], [0, 0, 1, 1], [], []>} : vector<15x64xbf16>, vector<64x128xbf16>, vector<15x128xf32> -> vector<15x128xf32>
    %224 = arith.addf %218, %223 : vector<15x128xf32>
    %225 = tpu.iota {dimensions = array<i32: 0>} : vector<8x15xi32>
    %226 = tpu.iota {dimensions = array<i32: 1>} : vector<8x15xi32>
    %c2_i32_172 = arith.constant 2 : i32
    %227 = vector.broadcast %c2_i32_172 : i32 to vector<8x15xi32>
    %228 = arith.muli %227, %225 : vector<8x15xi32>
    %229 = arith.cmpi eq, %226, %228 : vector<8x15xi32>
    %230 = arith.extui %229 : vector<8x15xi1> to vector<8x15xi32>
    %231 = arith.sitofp %230 : vector<8x15xi32> to vector<8x15xf32>
    %cst_173 = arith.constant dense<0.000000e+00> : vector<8x128xf32>
    %232 = tpu.matmul %231, %224, %cst_173 {dimension_numbers = #tpu.dot_dimension_numbers<[1], [0], [0], [1], [0, 0, 1, 1], [], []>} : vector<8x15xf32>, vector<15x128xf32>, vector<8x128xf32> -> vector<8x128xf32>
    %cst_174 = arith.constant 0.000000e+00 : f32
    %233 = vector.broadcast %cst_174 : f32 to vector<8x128xf32>
    %234 = arith.maximumf %232, %233 : vector<8x128xf32>
    %cst_175 = arith.constant 0.000000e+00 : f32
    %235 = vector.broadcast %cst_175 : f32 to vector<1x128xf32>
    %c7_176 = arith.constant 7 : index
    %c0_177 = arith.constant 0 : index
    %236 = vector.load %arg22[%c7_176, %c0_177] : memref<48x512xf32, #tpu.memory_space<vmem>>, vector<1x128xf32>
    tpu.vector_store %arg22[%c7_176, %c0_177], %235 {strides = array<i32>} : memref<48x512xf32, #tpu.memory_space<vmem>>, vector<1x128xf32>,
    %c16 = arith.constant 16 : index
    %c0_178 = arith.constant 0 : index
    %237 = vector.load %arg22[%c16, %c0_178] : memref<48x512xf32, #tpu.memory_space<vmem>>, vector<1x128xf32>
    tpu.vector_store %arg22[%c16, %c0_178], %235 {strides = array<i32>} : memref<48x512xf32, #tpu.memory_space<vmem>>, vector<1x128xf32>,
    %c8_179 = arith.constant 8 : index
    %c0_180 = arith.constant 0 : index
    %238 = vector.load %arg22[%c8_179, %c0_180] : memref<48x512xf32, #tpu.memory_space<vmem>>, vector<8x128xf32>
    tpu.vector_store %arg22[%c8_179, %c0_180], %234 {strides = array<i32>} : memref<48x512xf32, #tpu.memory_space<vmem>>, vector<8x128xf32>,
    %cst_181 = arith.constant 0.000000e+00 : f32
    %239 = vector.broadcast %cst_181 : f32 to vector<8x128xf32>
    %c7_182 = arith.constant 7 : index
    %c0_183 = arith.constant 0 : index
    %240 = vector.load %arg22[%c7_182, %c0_183] : memref<48x512xf32, #tpu.memory_space<vmem>>, vector<8x128xf32>
    %241 = arith.truncf %240 : vector<8x128xf32> to vector<8x128xbf16>
    %c0_184 = arith.constant 0 : index
    %c0_185 = arith.constant 0 : index
    %c0_186 = arith.constant 0 : index
    %242 = vector.load %arg8[%c0_184, %c0_185, %c0_186] : memref<3x128x128xbf16, #tpu.memory_space<vmem>>, vector<1x128x128xbf16>
    %243 = vector.shape_cast %242 : vector<1x128x128xbf16> to vector<128x128xbf16>
    %cst_187 = arith.constant dense<0.000000e+00> : vector<8x128xf32>
    %244 = tpu.matmul %241, %243, %cst_187 {dimension_numbers = #tpu.dot_dimension_numbers<[1], [0], [0], [1], [0, 0, 1, 1], [], []>} : vector<8x128xbf16>, vector<128x128xbf16>, vector<8x128xf32> -> vector<8x128xf32>
    %245 = arith.addf %239, %244 : vector<8x128xf32>
    %c8_188 = arith.constant 8 : index
    %c0_189 = arith.constant 0 : index
    %246 = vector.load %arg22[%c8_188, %c0_189] : memref<48x512xf32, #tpu.memory_space<vmem>>, vector<8x128xf32>
    %247 = arith.truncf %246 : vector<8x128xf32> to vector<8x128xbf16>
    %c1_190 = arith.constant 1 : index
    %c0_191 = arith.constant 0 : index
    %c0_192 = arith.constant 0 : index
    %248 = vector.load %arg8[%c1_190, %c0_191, %c0_192] : memref<3x128x128xbf16, #tpu.memory_space<vmem>>, vector<1x128x128xbf16>
    %249 = vector.shape_cast %248 : vector<1x128x128xbf16> to vector<128x128xbf16>
    %cst_193 = arith.constant dense<0.000000e+00> : vector<8x128xf32>
    %250 = tpu.matmul %247, %249, %cst_193 {dimension_numbers = #tpu.dot_dimension_numbers<[1], [0], [0], [1], [0, 0, 1, 1], [], []>} : vector<8x128xbf16>, vector<128x128xbf16>, vector<8x128xf32> -> vector<8x128xf32>
    %251 = arith.addf %245, %250 : vector<8x128xf32>
    %c9_194 = arith.constant 9 : index
    %c0_195 = arith.constant 0 : index
    %252 = vector.load %arg22[%c9_194, %c0_195] : memref<48x512xf32, #tpu.memory_space<vmem>>, vector<8x128xf32>
    %253 = arith.truncf %252 : vector<8x128xf32> to vector<8x128xbf16>
    %c2_196 = arith.constant 2 : index
    %c0_197 = arith.constant 0 : index
    %c0_198 = arith.constant 0 : index
    %254 = vector.load %arg8[%c2_196, %c0_197, %c0_198] : memref<3x128x128xbf16, #tpu.memory_space<vmem>>, vector<1x128x128xbf16>
    %255 = vector.shape_cast %254 : vector<1x128x128xbf16> to vector<128x128xbf16>
    %cst_199 = arith.constant dense<0.000000e+00> : vector<8x128xf32>
    %256 = tpu.matmul %253, %255, %cst_199 {dimension_numbers = #tpu.dot_dimension_numbers<[1], [0], [0], [1], [0, 0, 1, 1], [], []>} : vector<8x128xbf16>, vector<128x128xbf16>, vector<8x128xf32> -> vector<8x128xf32>
    %257 = arith.addf %251, %256 : vector<8x128xf32>
    %258 = arith.truncf %201 : vector<16x64xf32> to vector<16x64xbf16>
    %c0_200 = arith.constant 0 : index
    %c0_201 = arith.constant 0 : index
    %259 = vector.load %arg9[%c0_200, %c0_201] : memref<64x128xbf16, #tpu.memory_space<vmem>>, vector<64x128xbf16>
    %cst_202 = arith.constant dense<0.000000e+00> : vector<16x128xf32>
    %260 = tpu.matmul %258, %259, %cst_202 {dimension_numbers = #tpu.dot_dimension_numbers<[1], [0], [0], [1], [0, 0, 1, 1], [], []>} : vector<16x64xbf16>, vector<64x128xbf16>, vector<16x128xf32> -> vector<16x128xf32>
    %261 = tpu.iota {dimensions = array<i32: 0>} : vector<8x16xi32>
    %262 = tpu.iota {dimensions = array<i32: 1>} : vector<8x16xi32>
    %c2_i32_203 = arith.constant 2 : i32
    %263 = vector.broadcast %c2_i32_203 : i32 to vector<8x16xi32>
    %264 = arith.muli %263, %261 : vector<8x16xi32>
    %265 = arith.cmpi eq, %262, %264 : vector<8x16xi32>
    %266 = arith.extui %265 : vector<8x16xi1> to vector<8x16xi32>
    %267 = arith.sitofp %266 : vector<8x16xi32> to vector<8x16xf32>
    %cst_204 = arith.constant dense<0.000000e+00> : vector<8x128xf32>
    %268 = tpu.matmul %267, %260, %cst_204 {dimension_numbers = #tpu.dot_dimension_numbers<[1], [0], [0], [1], [0, 0, 1, 1], [], []>} : vector<8x16xf32>, vector<16x128xf32>, vector<8x128xf32> -> vector<8x128xf32>
    %269 = arith.addf %257, %268 : vector<8x128xf32>
    %cst_205 = arith.constant 0.000000e+00 : f32
    %270 = vector.broadcast %cst_205 : f32 to vector<8x128xf32>
    %271 = arith.maximumf %269, %270 : vector<8x128xf32>
    %cst_206 = arith.constant 0.000000e+00 : f32
    %272 = vector.broadcast %cst_206 : f32 to vector<1x128xf32>
    %c7_207 = arith.constant 7 : index
    %c0_208 = arith.constant 0 : index
    %273 = vector.load %arg22[%c7_207, %c0_208] : memref<48x512xf32, #tpu.memory_space<vmem>>, vector<1x128xf32>
    tpu.vector_store %arg22[%c7_207, %c0_208], %272 {strides = array<i32>} : memref<48x512xf32, #tpu.memory_space<vmem>>, vector<1x128xf32>,
    %c16_209 = arith.constant 16 : index
    %c0_210 = arith.constant 0 : index
    %274 = vector.load %arg22[%c16_209, %c0_210] : memref<48x512xf32, #tpu.memory_space<vmem>>, vector<1x128xf32>
    tpu.vector_store %arg22[%c16_209, %c0_210], %272 {strides = array<i32>} : memref<48x512xf32, #tpu.memory_space<vmem>>, vector<1x128xf32>,
    %c8_211 = arith.constant 8 : index
    %c0_212 = arith.constant 0 : index
    %275 = vector.load %arg22[%c8_211, %c0_212] : memref<48x512xf32, #tpu.memory_space<vmem>>, vector<8x128xf32>
    tpu.vector_store %arg22[%c8_211, %c0_212], %271 {strides = array<i32>} : memref<48x512xf32, #tpu.memory_space<vmem>>, vector<8x128xf32>,
    %cst_213 = arith.constant 0.000000e+00 : f32
    %276 = vector.broadcast %cst_213 : f32 to vector<7x256xf32>
    %c7_214 = arith.constant 7 : index
    %c0_215 = arith.constant 0 : index
    %277 = vector.load %arg22[%c7_214, %c0_215] : memref<48x512xf32, #tpu.memory_space<vmem>>, vector<7x128xf32>
    %278 = arith.truncf %277 : vector<7x128xf32> to vector<7x128xbf16>
    %c0_216 = arith.constant 0 : index
    %c0_217 = arith.constant 0 : index
    %c0_218 = arith.constant 0 : index
    %279 = vector.load %arg10[%c0_216, %c0_217, %c0_218] : memref<3x128x256xbf16, #tpu.memory_space<vmem>>, vector<1x128x256xbf16>
    %280 = vector.shape_cast %279 : vector<1x128x256xbf16> to vector<128x256xbf16>
    %cst_219 = arith.constant dense<0.000000e+00> : vector<7x256xf32>
    %281 = tpu.matmul %278, %280, %cst_219 {dimension_numbers = #tpu.dot_dimension_numbers<[1], [0], [0], [1], [0, 0, 1, 1], [], []>} : vector<7x128xbf16>, vector<128x256xbf16>, vector<7x256xf32> -> vector<7x256xf32>
    %282 = arith.addf %276, %281 : vector<7x256xf32>
    %c8_220 = arith.constant 8 : index
    %c0_221 = arith.constant 0 : index
    %283 = vector.load %arg22[%c8_220, %c0_221] : memref<48x512xf32, #tpu.memory_space<vmem>>, vector<7x128xf32>
    %284 = arith.truncf %283 : vector<7x128xf32> to vector<7x128xbf16>
    %c1_222 = arith.constant 1 : index
    %c0_223 = arith.constant 0 : index
    %c0_224 = arith.constant 0 : index
    %285 = vector.load %arg10[%c1_222, %c0_223, %c0_224] : memref<3x128x256xbf16, #tpu.memory_space<vmem>>, vector<1x128x256xbf16>
    %286 = vector.shape_cast %285 : vector<1x128x256xbf16> to vector<128x256xbf16>
    %cst_225 = arith.constant dense<0.000000e+00> : vector<7x256xf32>
    %287 = tpu.matmul %284, %286, %cst_225 {dimension_numbers = #tpu.dot_dimension_numbers<[1], [0], [0], [1], [0, 0, 1, 1], [], []>} : vector<7x128xbf16>, vector<128x256xbf16>, vector<7x256xf32> -> vector<7x256xf32>
    %288 = arith.addf %282, %287 : vector<7x256xf32>
    %c9_226 = arith.constant 9 : index
    %c0_227 = arith.constant 0 : index
    %289 = vector.load %arg22[%c9_226, %c0_227] : memref<48x512xf32, #tpu.memory_space<vmem>>, vector<7x128xf32>
    %290 = arith.truncf %289 : vector<7x128xf32> to vector<7x128xbf16>
    %c2_228 = arith.constant 2 : index
    %c0_229 = arith.constant 0 : index
    %c0_230 = arith.constant 0 : index
    %291 = vector.load %arg10[%c2_228, %c0_229, %c0_230] : memref<3x128x256xbf16, #tpu.memory_space<vmem>>, vector<1x128x256xbf16>
    %292 = vector.shape_cast %291 : vector<1x128x256xbf16> to vector<128x256xbf16>
    %cst_231 = arith.constant dense<0.000000e+00> : vector<7x256xf32>
    %293 = tpu.matmul %290, %292, %cst_231 {dimension_numbers = #tpu.dot_dimension_numbers<[1], [0], [0], [1], [0, 0, 1, 1], [], []>} : vector<7x128xbf16>, vector<128x256xbf16>, vector<7x256xf32> -> vector<7x256xf32>
    %294 = arith.addf %288, %293 : vector<7x256xf32>
    %295 = tpu.iota {dimensions = array<i32: 0>} : vector<4x7xi32>
    %296 = tpu.iota {dimensions = array<i32: 1>} : vector<4x7xi32>
    %c2_i32_232 = arith.constant 2 : i32
    %297 = vector.broadcast %c2_i32_232 : i32 to vector<4x7xi32>
    %298 = arith.muli %297, %295 : vector<4x7xi32>
    %299 = arith.cmpi eq, %296, %298 : vector<4x7xi32>
    %300 = arith.extui %299 : vector<4x7xi1> to vector<4x7xi32>
    %301 = arith.sitofp %300 : vector<4x7xi32> to vector<4x7xf32>
    %cst_233 = arith.constant dense<0.000000e+00> : vector<4x256xf32>
    %302 = tpu.matmul %301, %294, %cst_233 {dimension_numbers = #tpu.dot_dimension_numbers<[1], [0], [0], [1], [0, 0, 1, 1], [], []>} : vector<4x7xf32>, vector<7x256xf32>, vector<4x256xf32> -> vector<4x256xf32>
    %cst_234 = arith.constant 0.000000e+00 : f32
    %303 = vector.broadcast %cst_234 : f32 to vector<4x256xf32>
    %304 = arith.maximumf %302, %303 : vector<4x256xf32>
    %cst_235 = arith.constant 0.000000e+00 : f32
    %305 = vector.broadcast %cst_235 : f32 to vector<1x256xf32>
    %c7_236 = arith.constant 7 : index
    %c0_237 = arith.constant 0 : index
    %306 = vector.load %arg22[%c7_236, %c0_237] : memref<48x512xf32, #tpu.memory_space<vmem>>, vector<1x256xf32>
    tpu.vector_store %arg22[%c7_236, %c0_237], %305 {strides = array<i32>} : memref<48x512xf32, #tpu.memory_space<vmem>>, vector<1x256xf32>,
    %c12_238 = arith.constant 12 : index
    %c0_239 = arith.constant 0 : index
    %307 = vector.load %arg22[%c12_238, %c0_239] : memref<48x512xf32, #tpu.memory_space<vmem>>, vector<1x256xf32>
    tpu.vector_store %arg22[%c12_238, %c0_239], %305 {strides = array<i32>} : memref<48x512xf32, #tpu.memory_space<vmem>>, vector<1x256xf32>,
    %c8_240 = arith.constant 8 : index
    %c0_241 = arith.constant 0 : index
    %308 = vector.load %arg22[%c8_240, %c0_241] : memref<48x512xf32, #tpu.memory_space<vmem>>, vector<4x256xf32>
    tpu.vector_store %arg22[%c8_240, %c0_241], %304 {strides = array<i32>} : memref<48x512xf32, #tpu.memory_space<vmem>>, vector<4x256xf32>,
    %cst_242 = arith.constant 0.000000e+00 : f32
    %309 = vector.broadcast %cst_242 : f32 to vector<4x256xf32>
    %c7_243 = arith.constant 7 : index
    %c0_244 = arith.constant 0 : index
    %310 = vector.load %arg22[%c7_243, %c0_244] : memref<48x512xf32, #tpu.memory_space<vmem>>, vector<4x256xf32>
    %311 = arith.truncf %310 : vector<4x256xf32> to vector<4x256xbf16>
    %c0_245 = arith.constant 0 : index
    %c0_246 = arith.constant 0 : index
    %c0_247 = arith.constant 0 : index
    %312 = vector.load %arg11[%c0_245, %c0_246, %c0_247] : memref<3x256x256xbf16, #tpu.memory_space<vmem>>, vector<1x256x256xbf16>
    %313 = vector.shape_cast %312 : vector<1x256x256xbf16> to vector<256x256xbf16>
    %cst_248 = arith.constant dense<0.000000e+00> : vector<4x256xf32>
    %314 = tpu.matmul %311, %313, %cst_248 {dimension_numbers = #tpu.dot_dimension_numbers<[1], [0], [0], [1], [0, 0, 1, 1], [], []>} : vector<4x256xbf16>, vector<256x256xbf16>, vector<4x256xf32> -> vector<4x256xf32>
    %315 = arith.addf %309, %314 : vector<4x256xf32>
    %c8_249 = arith.constant 8 : index
    %c0_250 = arith.constant 0 : index
    %316 = vector.load %arg22[%c8_249, %c0_250] : memref<48x512xf32, #tpu.memory_space<vmem>>, vector<4x256xf32>
    %317 = arith.truncf %316 : vector<4x256xf32> to vector<4x256xbf16>
    %c1_251 = arith.constant 1 : index
    %c0_252 = arith.constant 0 : index
    %c0_253 = arith.constant 0 : index
    %318 = vector.load %arg11[%c1_251, %c0_252, %c0_253] : memref<3x256x256xbf16, #tpu.memory_space<vmem>>, vector<1x256x256xbf16>
    %319 = vector.shape_cast %318 : vector<1x256x256xbf16> to vector<256x256xbf16>
    %cst_254 = arith.constant dense<0.000000e+00> : vector<4x256xf32>
    %320 = tpu.matmul %317, %319, %cst_254 {dimension_numbers = #tpu.dot_dimension_numbers<[1], [0], [0], [1], [0, 0, 1, 1], [], []>} : vector<4x256xbf16>, vector<256x256xbf16>, vector<4x256xf32> -> vector<4x256xf32>
    %321 = arith.addf %315, %320 : vector<4x256xf32>
    %c9_255 = arith.constant 9 : index
    %c0_256 = arith.constant 0 : index
    %322 = vector.load %arg22[%c9_255, %c0_256] : memref<48x512xf32, #tpu.memory_space<vmem>>, vector<4x256xf32>
    %323 = arith.truncf %322 : vector<4x256xf32> to vector<4x256xbf16>
    %c2_257 = arith.constant 2 : index
    %c0_258 = arith.constant 0 : index
    %c0_259 = arith.constant 0 : index
    %324 = vector.load %arg11[%c2_257, %c0_258, %c0_259] : memref<3x256x256xbf16, #tpu.memory_space<vmem>>, vector<1x256x256xbf16>
    %325 = vector.shape_cast %324 : vector<1x256x256xbf16> to vector<256x256xbf16>
    %cst_260 = arith.constant dense<0.000000e+00> : vector<4x256xf32>
    %326 = tpu.matmul %323, %325, %cst_260 {dimension_numbers = #tpu.dot_dimension_numbers<[1], [0], [0], [1], [0, 0, 1, 1], [], []>} : vector<4x256xbf16>, vector<256x256xbf16>, vector<4x256xf32> -> vector<4x256xf32>
    %327 = arith.addf %321, %326 : vector<4x256xf32>
    %328 = arith.truncf %271 : vector<8x128xf32> to vector<8x128xbf16>
    %c0_261 = arith.constant 0 : index
    %c0_262 = arith.constant 0 : index
    %329 = vector.load %arg12[%c0_261, %c0_262] : memref<128x256xbf16, #tpu.memory_space<vmem>>, vector<128x256xbf16>
    %cst_263 = arith.constant dense<0.000000e+00> : vector<8x256xf32>
    %330 = tpu.matmul %328, %329, %cst_263 {dimension_numbers = #tpu.dot_dimension_numbers<[1], [0], [0], [1], [0, 0, 1, 1], [], []>} : vector<8x128xbf16>, vector<128x256xbf16>, vector<8x256xf32> -> vector<8x256xf32>
    %331 = tpu.iota {dimensions = array<i32: 0>} : vector<4x8xi32>
    %332 = tpu.iota {dimensions = array<i32: 1>} : vector<4x8xi32>
    %c2_i32_264 = arith.constant 2 : i32
    %333 = vector.broadcast %c2_i32_264 : i32 to vector<4x8xi32>
    %334 = arith.muli %333, %331 : vector<4x8xi32>
    %335 = arith.cmpi eq, %332, %334 : vector<4x8xi32>
    %336 = arith.extui %335 : vector<4x8xi1> to vector<4x8xi32>
    %337 = arith.sitofp %336 : vector<4x8xi32> to vector<4x8xf32>
    %cst_265 = arith.constant dense<0.000000e+00> : vector<4x256xf32>
    %338 = tpu.matmul %337, %330, %cst_265 {dimension_numbers = #tpu.dot_dimension_numbers<[1], [0], [0], [1], [0, 0, 1, 1], [], []>} : vector<4x8xf32>, vector<8x256xf32>, vector<4x256xf32> -> vector<4x256xf32>
    %339 = arith.addf %327, %338 : vector<4x256xf32>
    %cst_266 = arith.constant 0.000000e+00 : f32
    %340 = vector.broadcast %cst_266 : f32 to vector<4x256xf32>
    %341 = arith.maximumf %339, %340 : vector<4x256xf32>
    %cst_267 = arith.constant 0.000000e+00 : f32
    %342 = vector.broadcast %cst_267 : f32 to vector<1x256xf32>
    %c7_268 = arith.constant 7 : index
    %c0_269 = arith.constant 0 : index
    %343 = vector.load %arg22[%c7_268, %c0_269] : memref<48x512xf32, #tpu.memory_space<vmem>>, vector<1x256xf32>
    tpu.vector_store %arg22[%c7_268, %c0_269], %342 {strides = array<i32>} : memref<48x512xf32, #tpu.memory_space<vmem>>, vector<1x256xf32>,
    %c12_270 = arith.constant 12 : index
    %c0_271 = arith.constant 0 : index
    %344 = vector.load %arg22[%c12_270, %c0_271] : memref<48x512xf32, #tpu.memory_space<vmem>>, vector<1x256xf32>
    tpu.vector_store %arg22[%c12_270, %c0_271], %342 {strides = array<i32>} : memref<48x512xf32, #tpu.memory_space<vmem>>, vector<1x256xf32>,
    %c8_272 = arith.constant 8 : index
    %c0_273 = arith.constant 0 : index
    %345 = vector.load %arg22[%c8_272, %c0_273] : memref<48x512xf32, #tpu.memory_space<vmem>>, vector<4x256xf32>
    tpu.vector_store %arg22[%c8_272, %c0_273], %341 {strides = array<i32>} : memref<48x512xf32, #tpu.memory_space<vmem>>, vector<4x256xf32>,
    %cst_274 = arith.constant 0.000000e+00 : f32
    %346 = vector.broadcast %cst_274 : f32 to vector<3x512xf32>
    %c7_275 = arith.constant 7 : index
    %c0_276 = arith.constant 0 : index
    %347 = vector.load %arg22[%c7_275, %c0_276] : memref<48x512xf32, #tpu.memory_space<vmem>>, vector<3x256xf32>
    %348 = arith.truncf %347 : vector<3x256xf32> to vector<3x256xbf16>
    %c0_277 = arith.constant 0 : index
    %c0_278 = arith.constant 0 : index
    %c0_279 = arith.constant 0 : index
    %349 = vector.load %arg13[%c0_277, %c0_278, %c0_279] : memref<3x256x512xbf16, #tpu.memory_space<vmem>>, vector<1x256x512xbf16>
    %350 = vector.shape_cast %349 : vector<1x256x512xbf16> to vector<256x512xbf16>
    %cst_280 = arith.constant dense<0.000000e+00> : vector<3x512xf32>
    %351 = tpu.matmul %348, %350, %cst_280 {dimension_numbers = #tpu.dot_dimension_numbers<[1], [0], [0], [1], [0, 0, 1, 1], [], []>} : vector<3x256xbf16>, vector<256x512xbf16>, vector<3x512xf32> -> vector<3x512xf32>
    %352 = arith.addf %346, %351 : vector<3x512xf32>
    %c8_281 = arith.constant 8 : index
    %c0_282 = arith.constant 0 : index
    %353 = vector.load %arg22[%c8_281, %c0_282] : memref<48x512xf32, #tpu.memory_space<vmem>>, vector<3x256xf32>
    %354 = arith.truncf %353 : vector<3x256xf32> to vector<3x256xbf16>
    %c1_283 = arith.constant 1 : index
    %c0_284 = arith.constant 0 : index
    %c0_285 = arith.constant 0 : index
    %355 = vector.load %arg13[%c1_283, %c0_284, %c0_285] : memref<3x256x512xbf16, #tpu.memory_space<vmem>>, vector<1x256x512xbf16>
    %356 = vector.shape_cast %355 : vector<1x256x512xbf16> to vector<256x512xbf16>
    %cst_286 = arith.constant dense<0.000000e+00> : vector<3x512xf32>
    %357 = tpu.matmul %354, %356, %cst_286 {dimension_numbers = #tpu.dot_dimension_numbers<[1], [0], [0], [1], [0, 0, 1, 1], [], []>} : vector<3x256xbf16>, vector<256x512xbf16>, vector<3x512xf32> -> vector<3x512xf32>
    %358 = arith.addf %352, %357 : vector<3x512xf32>
    %c9_287 = arith.constant 9 : index
    %c0_288 = arith.constant 0 : index
    %359 = vector.load %arg22[%c9_287, %c0_288] : memref<48x512xf32, #tpu.memory_space<vmem>>, vector<3x256xf32>
    %360 = arith.truncf %359 : vector<3x256xf32> to vector<3x256xbf16>
    %c2_289 = arith.constant 2 : index
    %c0_290 = arith.constant 0 : index
    %c0_291 = arith.constant 0 : index
    %361 = vector.load %arg13[%c2_289, %c0_290, %c0_291] : memref<3x256x512xbf16, #tpu.memory_space<vmem>>, vector<1x256x512xbf16>
    %362 = vector.shape_cast %361 : vector<1x256x512xbf16> to vector<256x512xbf16>
    %cst_292 = arith.constant dense<0.000000e+00> : vector<3x512xf32>
    %363 = tpu.matmul %360, %362, %cst_292 {dimension_numbers = #tpu.dot_dimension_numbers<[1], [0], [0], [1], [0, 0, 1, 1], [], []>} : vector<3x256xbf16>, vector<256x512xbf16>, vector<3x512xf32> -> vector<3x512xf32>
    %364 = arith.addf %358, %363 : vector<3x512xf32>
    %365 = tpu.iota {dimensions = array<i32: 0>} : vector<2x3xi32>
    %366 = tpu.iota {dimensions = array<i32: 1>} : vector<2x3xi32>
    %c2_i32_293 = arith.constant 2 : i32
    %367 = vector.broadcast %c2_i32_293 : i32 to vector<2x3xi32>
    %368 = arith.muli %367, %365 : vector<2x3xi32>
    %369 = arith.cmpi eq, %366, %368 : vector<2x3xi32>
    %370 = arith.extui %369 : vector<2x3xi1> to vector<2x3xi32>
    %371 = arith.sitofp %370 : vector<2x3xi32> to vector<2x3xf32>
    %cst_294 = arith.constant dense<0.000000e+00> : vector<2x512xf32>
    %372 = tpu.matmul %371, %364, %cst_294 {dimension_numbers = #tpu.dot_dimension_numbers<[1], [0], [0], [1], [0, 0, 1, 1], [], []>} : vector<2x3xf32>, vector<3x512xf32>, vector<2x512xf32> -> vector<2x512xf32>
    %cst_295 = arith.constant 0.000000e+00 : f32
    %373 = vector.broadcast %cst_295 : f32 to vector<2x512xf32>
    %374 = arith.maximumf %372, %373 : vector<2x512xf32>
    %cst_296 = arith.constant 0.000000e+00 : f32
    %375 = vector.broadcast %cst_296 : f32 to vector<1x512xf32>
    %c7_297 = arith.constant 7 : index
    %c0_298 = arith.constant 0 : index
    %376 = vector.load %arg22[%c7_297, %c0_298] : memref<48x512xf32, #tpu.memory_space<vmem>>, vector<1x512xf32>
    tpu.vector_store %arg22[%c7_297, %c0_298], %375 {strides = array<i32>} : memref<48x512xf32, #tpu.memory_space<vmem>>, vector<1x512xf32>,
    %c10_299 = arith.constant 10 : index
    %c0_300 = arith.constant 0 : index
    %377 = vector.load %arg22[%c10_299, %c0_300] : memref<48x512xf32, #tpu.memory_space<vmem>>, vector<1x512xf32>
    tpu.vector_store %arg22[%c10_299, %c0_300], %375 {strides = array<i32>} : memref<48x512xf32, #tpu.memory_space<vmem>>, vector<1x512xf32>,
    %c8_301 = arith.constant 8 : index
    %c0_302 = arith.constant 0 : index
    %378 = vector.load %arg22[%c8_301, %c0_302] : memref<48x512xf32, #tpu.memory_space<vmem>>, vector<2x512xf32>
    tpu.vector_store %arg22[%c8_301, %c0_302], %374 {strides = array<i32>} : memref<48x512xf32, #tpu.memory_space<vmem>>, vector<2x512xf32>,
    %cst_303 = arith.constant 0.000000e+00 : f32
    %379 = vector.broadcast %cst_303 : f32 to vector<2x512xf32>
    %c7_304 = arith.constant 7 : index
    %c0_305 = arith.constant 0 : index
    %380 = vector.load %arg22[%c7_304, %c0_305] : memref<48x512xf32, #tpu.memory_space<vmem>>, vector<2x512xf32>
    %381 = arith.truncf %380 : vector<2x512xf32> to vector<2x512xbf16>
    %c0_306 = arith.constant 0 : index
    %c0_307 = arith.constant 0 : index
    %c0_308 = arith.constant 0 : index
    %382 = vector.load %arg14[%c0_306, %c0_307, %c0_308] : memref<3x512x512xbf16, #tpu.memory_space<vmem>>, vector<1x512x512xbf16>
    %383 = vector.shape_cast %382 : vector<1x512x512xbf16> to vector<512x512xbf16>
    %cst_309 = arith.constant dense<0.000000e+00> : vector<2x512xf32>
    %384 = tpu.matmul %381, %383, %cst_309 {dimension_numbers = #tpu.dot_dimension_numbers<[1], [0], [0], [1], [0, 0, 1, 1], [], []>} : vector<2x512xbf16>, vector<512x512xbf16>, vector<2x512xf32> -> vector<2x512xf32>
    %385 = arith.addf %379, %384 : vector<2x512xf32>
    %c8_310 = arith.constant 8 : index
    %c0_311 = arith.constant 0 : index
    %386 = vector.load %arg22[%c8_310, %c0_311] : memref<48x512xf32, #tpu.memory_space<vmem>>, vector<2x512xf32>
    %387 = arith.truncf %386 : vector<2x512xf32> to vector<2x512xbf16>
    %c1_312 = arith.constant 1 : index
    %c0_313 = arith.constant 0 : index
    %c0_314 = arith.constant 0 : index
    %388 = vector.load %arg14[%c1_312, %c0_313, %c0_314] : memref<3x512x512xbf16, #tpu.memory_space<vmem>>, vector<1x512x512xbf16>
    %389 = vector.shape_cast %388 : vector<1x512x512xbf16> to vector<512x512xbf16>
    %cst_315 = arith.constant dense<0.000000e+00> : vector<2x512xf32>
    %390 = tpu.matmul %387, %389, %cst_315 {dimension_numbers = #tpu.dot_dimension_numbers<[1], [0], [0], [1], [0, 0, 1, 1], [], []>} : vector<2x512xbf16>, vector<512x512xbf16>, vector<2x512xf32> -> vector<2x512xf32>
    %391 = arith.addf %385, %390 : vector<2x512xf32>
    %c9_316 = arith.constant 9 : index
    %c0_317 = arith.constant 0 : index
    %392 = vector.load %arg22[%c9_316, %c0_317] : memref<48x512xf32, #tpu.memory_space<vmem>>, vector<2x512xf32>
    %393 = arith.truncf %392 : vector<2x512xf32> to vector<2x512xbf16>
    %c2_318 = arith.constant 2 : index
    %c0_319 = arith.constant 0 : index
    %c0_320 = arith.constant 0 : index
    %394 = vector.load %arg14[%c2_318, %c0_319, %c0_320] : memref<3x512x512xbf16, #tpu.memory_space<vmem>>, vector<1x512x512xbf16>
    %395 = vector.shape_cast %394 : vector<1x512x512xbf16> to vector<512x512xbf16>
    %cst_321 = arith.constant dense<0.000000e+00> : vector<2x512xf32>
    %396 = tpu.matmul %393, %395, %cst_321 {dimension_numbers = #tpu.dot_dimension_numbers<[1], [0], [0], [1], [0, 0, 1, 1], [], []>} : vector<2x512xbf16>, vector<512x512xbf16>, vector<2x512xf32> -> vector<2x512xf32>
    %397 = arith.addf %391, %396 : vector<2x512xf32>
    %398 = arith.truncf %341 : vector<4x256xf32> to vector<4x256xbf16>
    %c0_322 = arith.constant 0 : index
    %c0_323 = arith.constant 0 : index
    %399 = vector.load %arg15[%c0_322, %c0_323] : memref<256x512xbf16, #tpu.memory_space<vmem>>, vector<256x512xbf16>
    %cst_324 = arith.constant dense<0.000000e+00> : vector<4x512xf32>
    %400 = tpu.matmul %398, %399, %cst_324 {dimension_numbers = #tpu.dot_dimension_numbers<[1], [0], [0], [1], [0, 0, 1, 1], [], []>} : vector<4x256xbf16>, vector<256x512xbf16>, vector<4x512xf32> -> vector<4x512xf32>
    %401 = tpu.iota {dimensions = array<i32: 0>} : vector<2x4xi32>
    %402 = tpu.iota {dimensions = array<i32: 1>} : vector<2x4xi32>
    %c2_i32_325 = arith.constant 2 : i32
    %403 = vector.broadcast %c2_i32_325 : i32 to vector<2x4xi32>
    %404 = arith.muli %403, %401 : vector<2x4xi32>
    %405 = arith.cmpi eq, %402, %404 : vector<2x4xi32>
    %406 = arith.extui %405 : vector<2x4xi1> to vector<2x4xi32>
    %407 = arith.sitofp %406 : vector<2x4xi32> to vector<2x4xf32>
    %cst_326 = arith.constant dense<0.000000e+00> : vector<2x512xf32>
    %408 = tpu.matmul %407, %400, %cst_326 {dimension_numbers = #tpu.dot_dimension_numbers<[1], [0], [0], [1], [0, 0, 1, 1], [], []>} : vector<2x4xf32>, vector<4x512xf32>, vector<2x512xf32> -> vector<2x512xf32>
    %409 = arith.addf %397, %408 : vector<2x512xf32>
    %cst_327 = arith.constant 0.000000e+00 : f32
    %410 = vector.broadcast %cst_327 : f32 to vector<2x512xf32>
    %411 = arith.maximumf %409, %410 : vector<2x512xf32>
    %cst_328 = arith.constant dense<0.000000e+00> : vector<512xf32>
    %412 = vector.multi_reduction <add>, %411, %cst_328 [0] : vector<2x512xf32> to vector<512xf32>
    %413 = vector.shape_cast %412 : vector<512xf32> to vector<1x512xf32>
    %cst_329 = arith.constant 2.000000e+00 : f32
    %414 = vector.broadcast %cst_329 : f32 to vector<1x512xf32>
    %415 = arith.divf %413, %414 : vector<1x512xf32>
    %c0_330 = arith.constant 0 : index
    %c0_331 = arith.constant 0 : index
    %c0_332 = arith.constant 0 : index
    %416 = vector.load %arg2[%c0_330, %c0_331, %c0_332] : memref<1x1x5xf32, #tpu.memory_space<vmem>>, vector<1x1x5xf32>
    %417 = vector.shape_cast %416 : vector<1x1x5xf32> to vector<1x5xf32>
    %c0_333 = arith.constant 0 : index
    %c0_334 = arith.constant 0 : index
    %418 = vector.load %arg16[%c0_333, %c0_334] : memref<5x10xf32, #tpu.memory_space<vmem>>, vector<5x10xf32>
    %cst_335 = arith.constant dense<0.000000e+00> : vector<1x10xf32>
    %419 = tpu.matmul %417, %418, %cst_335 {dimension_numbers = #tpu.dot_dimension_numbers<[1], [0], [0], [1], [0, 0, 1, 1], [], []>} : vector<1x5xf32>, vector<5x10xf32>, vector<1x10xf32> -> vector<1x10xf32>
    %c0_336 = arith.constant 0 : index
    %c0_337 = arith.constant 0 : index
    %420 = vector.load %arg17[%c0_336, %c0_337] : memref<1x10xf32, #tpu.memory_space<vmem>>, vector<1x10xf32>
    %421 = arith.addf %419, %420 : vector<1x10xf32>
    %c0_338 = arith.constant 0 : index
    %c0_339 = arith.constant 0 : index
    %422 = vector.load %arg18[%c0_338, %c0_339] : memref<10x10xf32, #tpu.memory_space<vmem>>, vector<10x10xf32>
    %cst_340 = arith.constant dense<0.000000e+00> : vector<1x10xf32>
    %423 = tpu.matmul %421, %422, %cst_340 {dimension_numbers = #tpu.dot_dimension_numbers<[1], [0], [0], [1], [0, 0, 1, 1], [], []>} : vector<1x10xf32>, vector<10x10xf32>, vector<1x10xf32> -> vector<1x10xf32>
    %c0_341 = arith.constant 0 : index
    %c0_342 = arith.constant 0 : index
    %424 = vector.load %arg19[%c0_341, %c0_342] : memref<512x10xf32, #tpu.memory_space<vmem>>, vector<512x10xf32>
    %cst_343 = arith.constant dense<0.000000e+00> : vector<1x10xf32>
    %425 = tpu.matmul %415, %424, %cst_343 {dimension_numbers = #tpu.dot_dimension_numbers<[1], [0], [0], [1], [0, 0, 1, 1], [], []>} : vector<1x512xf32>, vector<512x10xf32>, vector<1x10xf32> -> vector<1x10xf32>
    %426 = arith.addf %423, %425 : vector<1x10xf32>
    %c0_344 = arith.constant 0 : index
    %c0_345 = arith.constant 0 : index
    %427 = vector.load %arg20[%c0_344, %c0_345] : memref<1x10xf32, #tpu.memory_space<vmem>>, vector<1x10xf32>
    %428 = arith.addf %426, %427 : vector<1x10xf32>
    %c0_346 = arith.constant 0 : index
    %c0_347 = arith.constant 0 : index
    %c0_348 = arith.constant 0 : index
    %429 = vector.load %arg21[%c0_346, %c0_347, %c0_348] : memref<1x1x10xf32, #tpu.memory_space<vmem>>, vector<1x1x10xf32>
    %430 = vector.shape_cast %429 : vector<1x1x10xf32> to vector<1x10xf32>
    %431 = vector.shape_cast %428 : vector<1x10xf32> to vector<1x1x10xf32>
    tpu.vector_store %arg21[%c0_346, %c0_347, %c0_348], %431 {strides = array<i32>} : memref<1x1x10xf32, #tpu.memory_space<vmem>>, vector<1x1x10xf32>,
    return
  }
  func.func @transform_0(%arg0: i32) -> (i32, i32, i32) {
    %c0_i32 = arith.constant 0 : i32
    %c0_i32_0 = arith.constant 0 : i32
    %c0_i32_1 = arith.constant 0 : i32
    return %arg0, %c0_i32, %c0_i32_0 : i32, i32, i32
  }
  func.func @transform_1(%arg0: i32) -> (i32, i32, i32) {
    %c0_i32 = arith.constant 0 : i32
    %c0_i32_0 = arith.constant 0 : i32
    %c0_i32_1 = arith.constant 0 : i32
    return %arg0, %c0_i32, %c0_i32_0 : i32, i32, i32
  }
  func.func @transform_2(%arg0: i32) -> (i32, i32, i32) {
    %c0_i32 = arith.constant 0 : i32
    %c0_i32_0 = arith.constant 0 : i32
    %c0_i32_1 = arith.constant 0 : i32
    %c0_i32_2 = arith.constant 0 : i32
    return %c0_i32, %c0_i32_0, %c0_i32_1 : i32, i32, i32
  }
  func.func @transform_3(%arg0: i32) -> (i32, i32) {
    %c0_i32 = arith.constant 0 : i32
    %c0_i32_0 = arith.constant 0 : i32
    %c0_i32_1 = arith.constant 0 : i32
    return %c0_i32, %c0_i32_0 : i32, i32
  }
  func.func @transform_4(%arg0: i32) -> (i32, i32, i32) {
    %c0_i32 = arith.constant 0 : i32
    %c0_i32_0 = arith.constant 0 : i32
    %c0_i32_1 = arith.constant 0 : i32
    %c0_i32_2 = arith.constant 0 : i32
    return %c0_i32, %c0_i32_0, %c0_i32_1 : i32, i32, i32
  }
  func.func @transform_5(%arg0: i32) -> (i32, i32, i32) {
    %c0_i32 = arith.constant 0 : i32
    %c0_i32_0 = arith.constant 0 : i32
    %c0_i32_1 = arith.constant 0 : i32
    %c0_i32_2 = arith.constant 0 : i32
    return %c0_i32, %c0_i32_0, %c0_i32_1 : i32, i32, i32
  }
  func.func @transform_6(%arg0: i32) -> (i32, i32, i32) {
    %c0_i32 = arith.constant 0 : i32
    %c0_i32_0 = arith.constant 0 : i32
    %c0_i32_1 = arith.constant 0 : i32
    %c0_i32_2 = arith.constant 0 : i32
    return %c0_i32, %c0_i32_0, %c0_i32_1 : i32, i32, i32
  }
  func.func @transform_7(%arg0: i32) -> (i32, i32, i32) {
    %c0_i32 = arith.constant 0 : i32
    %c0_i32_0 = arith.constant 0 : i32
    %c0_i32_1 = arith.constant 0 : i32
    %c0_i32_2 = arith.constant 0 : i32
    return %c0_i32, %c0_i32_0, %c0_i32_1 : i32, i32, i32
  }
  func.func @transform_8(%arg0: i32) -> (i32, i32) {
    %c0_i32 = arith.constant 0 : i32
    %c0_i32_0 = arith.constant 0 : i32
    %c0_i32_1 = arith.constant 0 : i32
    return %c0_i32, %c0_i32_0 : i32, i32
  }
  func.func @transform_9(%arg0: i32) -> (i32, i32, i32) {
    %c0_i32 = arith.constant 0 : i32
    %c0_i32_0 = arith.constant 0 : i32
    %c0_i32_1 = arith.constant 0 : i32
    %c0_i32_2 = arith.constant 0 : i32
    return %c0_i32, %c0_i32_0, %c0_i32_1 : i32, i32, i32
  }
  func.func @transform_10(%arg0: i32) -> (i32, i32, i32) {
    %c0_i32 = arith.constant 0 : i32
    %c0_i32_0 = arith.constant 0 : i32
    %c0_i32_1 = arith.constant 0 : i32
    %c0_i32_2 = arith.constant 0 : i32
    return %c0_i32, %c0_i32_0, %c0_i32_1 : i32, i32, i32
  }
  func.func @transform_11(%arg0: i32) -> (i32, i32) {
    %c0_i32 = arith.constant 0 : i32
    %c0_i32_0 = arith.constant 0 : i32
    %c0_i32_1 = arith.constant 0 : i32
    return %c0_i32, %c0_i32_0 : i32, i32
  }
  func.func @transform_12(%arg0: i32) -> (i32, i32, i32) {
    %c0_i32 = arith.constant 0 : i32
    %c0_i32_0 = arith.constant 0 : i32
    %c0_i32_1 = arith.constant 0 : i32
    %c0_i32_2 = arith.constant 0 : i32
    return %c0_i32, %c0_i32_0, %c0_i32_1 : i32, i32, i32
  }
  func.func @transform_13(%arg0: i32) -> (i32, i32, i32) {
    %c0_i32 = arith.constant 0 : i32
    %c0_i32_0 = arith.constant 0 : i32
    %c0_i32_1 = arith.constant 0 : i32
    %c0_i32_2 = arith.constant 0 : i32
    return %c0_i32, %c0_i32_0, %c0_i32_1 : i32, i32, i32
  }
  func.func @transform_14(%arg0: i32) -> (i32, i32) {
    %c0_i32 = arith.constant 0 : i32
    %c0_i32_0 = arith.constant 0 : i32
    %c0_i32_1 = arith.constant 0 : i32
    return %c0_i32, %c0_i32_0 : i32, i32
  }
  func.func @transform_15(%arg0: i32) -> (i32, i32) {
    %c0_i32 = arith.constant 0 : i32
    %c0_i32_0 = arith.constant 0 : i32
    %c0_i32_1 = arith.constant 0 : i32
    return %c0_i32, %c0_i32_0 : i32, i32
  }
  func.func @transform_16(%arg0: i32) -> (i32, i32) {
    %c0_i32 = arith.constant 0 : i32
    %c0_i32_0 = arith.constant 0 : i32
    %c0_i32_1 = arith.constant 0 : i32
    return %c0_i32, %c0_i32_0 : i32, i32
  }
  func.func @transform_17(%arg0: i32) -> (i32, i32) {
    %c0_i32 = arith.constant 0 : i32
    %c0_i32_0 = arith.constant 0 : i32
    %c0_i32_1 = arith.constant 0 : i32
    return %c0_i32, %c0_i32_0 : i32, i32
  }
  func.func @transform_18(%arg0: i32) -> (i32, i32) {
    %c0_i32 = arith.constant 0 : i32
    %c0_i32_0 = arith.constant 0 : i32
    %c0_i32_1 = arith.constant 0 : i32
    return %c0_i32, %c0_i32_0 : i32, i32
  }
  func.func @transform_19(%arg0: i32) -> (i32, i32) {
    %c0_i32 = arith.constant 0 : i32
    %c0_i32_0 = arith.constant 0 : i32
    %c0_i32_1 = arith.constant 0 : i32
    return %c0_i32, %c0_i32_0 : i32, i32
  }
  func.func @transform_20(%arg0: i32) -> (i32, i32, i32) {
    %c0_i32 = arith.constant 0 : i32
    %c0_i32_0 = arith.constant 0 : i32
    %c0_i32_1 = arith.constant 0 : i32
    return %arg0, %c0_i32, %c0_i32_0 : i32, i32, i32
  }
}

</mosaic_0001>

<llo_original>
// kernel: resnet_forward.1
$region0: #{resnet_forward.1}
  #allocation0 [shape = 'u32[]', space=smem, size = 0x4, offset = 0x4, fixed_abs, tag = 'smem constant byte address 0x4 - core index']
  #allocation1 [shape = 'u32[144,128]{1,0:T(1,128)}', space=vmem, size = 0x12000, scoped, tag = 'internal scratch']
  #allocation2 [shape = 'f32[48,512]{1,0:T(8,128)}', space=vmem, size = 0x18000, scoped, tag = 'scratch operand']
  %s0 = inlined_call_operand.vmem [shape: f32[2,78,1], index: 0, kind: input, shape index: {}]
  %s1 = inlined_call_operand.hbm [shape: f32[2,1,5], index: 1, kind: input, shape index: {}]
  %s2 = inlined_call_operand.hbm [shape: f32[15,1,64], index: 2, kind: input, shape index: {}]
  %s3 = inlined_call_operand.hbm [shape: f32[1,64], index: 3, kind: input, shape index: {}]
  %s4 = inlined_call_operand.hbm [shape: bf16[3,64,64], index: 4, kind: input, shape index: {}]
  %s5 = inlined_call_operand.hbm [shape: bf16[3,64,64], index: 5, kind: input, shape index: {}]
  %s6 = inlined_call_operand.hbm [shape: bf16[3,64,128], index: 6, kind: input, shape index: {}]
  %s7 = inlined_call_operand.hbm [shape: bf16[3,128,128], index: 7, kind: input, shape index: {}]
  %s8 = inlined_call_operand.hbm [shape: bf16[64,128], index: 8, kind: input, shape index: {}]
  %s9 = inlined_call_operand.hbm [shape: bf16[3,128,256], index: 9, kind: input, shape index: {}]
  %s10 = inlined_call_operand.hbm [shape: bf16[3,256,256], index: 10, kind: input, shape index: {}]
  %s11 = inlined_call_operand.hbm [shape: bf16[128,256], index: 11, kind: input, shape index: {}]
  %s12 = inlined_call_operand.hbm [shape: bf16[3,256,512], index: 12, kind: input, shape index: {}]
  %s13 = inlined_call_operand.hbm [shape: bf16[3,512,512], index: 13, kind: input, shape index: {}]
  %s14 = inlined_call_operand.hbm [shape: bf16[256,512], index: 14, kind: input, shape index: {}]
  %s15 = inlined_call_operand.hbm [shape: f32[5,10], index: 15, kind: input, shape index: {}]
  %s16 = inlined_call_operand.hbm [shape: f32[1,10], index: 16, kind: input, shape index: {}]
  %s17 = inlined_call_operand.hbm [shape: f32[10,10], index: 17, kind: input, shape index: {}]
  %s18 = inlined_call_operand.vmem [shape: f32[512,10], index: 18, kind: input, shape index: {}]
  %s19 = inlined_call_operand.hbm [shape: f32[1,10], index: 19, kind: input, shape index: {}]
  %s20 = inlined_call_operand.hbm [shape: f32[2,1,10], index: 20, kind: output, shape index: {}]
  %s21 = sld [smem:[#allocation0]]
  $region185: #{resnet_forward.1} parent=0
    _
  %s23 = ssub.s32 1, %s21
  %s24 = scalar_select 0, %s23, %s21
  $region1: #{resnet_forward.1} parent=0
    #allocation3 [shape = 'u8[1024]{0}', space=vmem, size = 0x400, scoped, tag = 'input window, operand 1']
    #allocation4 [shape = 's32[2]{0}', space=sflag, size = 0x8, scoped, tag = 'scoped memory for resnet_forward.1']
    #allocation5 [shape = 's32[2]{0}', space=sflag, size = 0x8, scoped, tag = 'scoped memory for resnet_forward.1']
    #allocation6 [shape = 'u8[7680]{0}', space=vmem, size = 0x2000, scoped, tag = 'input window, operand 2, single buffered']
    #allocation7 [shape = 's32[1]{0}', space=sflag, size = 0x4, scoped, tag = 'scoped memory for resnet_forward.1']
    #allocation8 [shape = 'u8[512]{0}', space=vmem, size = 0x400, scoped, tag = 'input window, operand 3, single buffered']
    #allocation9 [shape = 'u8[49152]{0}', space=vmem, size = 0xc000, scoped, tag = 'input window, operand 4, single buffered']
    #allocation10 [shape = 's32[1]{0}', space=sflag, size = 0x4, scoped, tag = 'scoped memory for resnet_forward.1']
    #allocation11 [shape = 'u8[49152]{0}', space=vmem, size = 0xc000, scoped, tag = 'input window, operand 5, single buffered']
    #allocation12 [shape = 'u8[49152]{0}', space=vmem, size = 0xc000, scoped, tag = 'input window, operand 6, single buffered']
    #allocation13 [shape = 's32[1]{0}', space=sflag, size = 0x4, scoped, tag = 'scoped memory for resnet_forward.1']
    #allocation14 [shape = 'u8[98304]{0}', space=vmem, size = 0x18000, scoped, tag = 'input window, operand 7, single buffered']
    #allocation15 [shape = 'u8[16384]{0}', space=vmem, size = 0x4000, scoped, tag = 'input window, operand 8, single buffered']
    #allocation16 [shape = 's32[1]{0}', space=sflag, size = 0x4, scoped, tag = 'scoped memory for resnet_forward.1']
    #allocation17 [shape = 'u8[196608]{0}', space=vmem, size = 0x30000, scoped, tag = 'input window, operand 9, single buffered']
    #allocation18 [shape = 'u8[393216]{0}', space=vmem, size = 0x60000, scoped, tag = 'input window, operand 10, single buffered']
    #allocation19 [shape = 's32[1]{0}', space=sflag, size = 0x4, scoped, tag = 'scoped memory for resnet_forward.1']
    #allocation20 [shape = 'u8[65536]{0}', space=vmem, size = 0x10000, scoped, tag = 'input window, operand 11, single buffered']
    #allocation21 [shape = 'u8[786432]{0}', space=vmem, size = 0xc0000, scoped, tag = 'input window, operand 12, single buffered']
    #allocation22 [shape = 's32[1]{0}', space=sflag, size = 0x4, scoped, tag = 'scoped memory for resnet_forward.1']
    #allocation23 [shape = 'u8[1572864]{0}', space=vmem, size = 0x180000, scoped, tag = 'input window, operand 13, single buffered']
    #allocation24 [shape = 'u8[262144]{0}', space=vmem, size = 0x40000, scoped, tag = 'input window, operand 14, single buffered']
    #allocation25 [shape = 's32[1]{0}', space=sflag, size = 0x4, scoped, tag = 'scoped memory for resnet_forward.1']
    #allocation26 [shape = 'u8[4096]{0}', space=vmem, size = 0x1000, scoped, tag = 'input window, operand 15, single buffered']
    #allocation27 [shape = 'u8[512]{0}', space=vmem, size = 0x400, scoped, tag = 'input window, operand 16, single buffered']
    #allocation28 [shape = 's32[1]{0}', space=sflag, size = 0x4, scoped, tag = 'scoped memory for resnet_forward.1']
    #allocation29 [shape = 'u8[8192]{0}', space=vmem, size = 0x2000, scoped, tag = 'input window, operand 17, single buffered']
    #allocation30 [shape = 'u8[512]{0}', space=vmem, size = 0x400, scoped, tag = 'input window, operand 19, single buffered']
    #allocation31 [shape = 's32[1]{0}', space=sflag, size = 0x4, scoped, tag = 'scoped memory for resnet_forward.1']
    #allocation32 [shape = 'u8[1024]{0}', space=vmem, size = 0x400, scoped, tag = 'output window, operand 0']
    %25 = vsyncpa [#allocation4], 0
    %s26 = scalar_lea.sflag [#allocation4], 1
    %27 = vsyncpa %s26, 0
    %28 = vsyncpa [#allocation7], 0
    %29 = vsyncpa [#allocation10], 0
    %30 = vsyncpa [#allocation13], 0
    %31 = vsyncpa [#allocation16], 0
    %32 = vsyncpa [#allocation19], 0
    %33 = vsyncpa [#allocation22], 0
    %34 = vsyncpa [#allocation25], 0
    %35 = vsyncpa [#allocation28], 0
    %36 = vsyncpa [#allocation31], 0
    %37 = vsyncpa [#allocation5], 0
    %s38 = scalar_lea.sflag [#allocation5], 1
    %39 = vsyncpa %s38, 0
    loop: start=0, step=1, limit=4
    $region2: #{resnet_forward.1} parent=1 // loop_pre_header
      _
    $region3: #{resnet_forward.1} parent=1 // loop_header
      %s41 = sphi 0, %s45
      %p42 = scmp.ge.s32.totalorder %s41, 4
      %s51 = sphi 0, %s53
      %s54 = sphi 0, %s51
      %s55 = sphi 0, %s54
      %s71 = sphi 0, %s55
      %s77 = sphi 0, %s79
      %s80 = sphi 0, %s77
      %s81 = sphi 0, %s80
      %s97 = sphi 0, %s81
      %s101 = sphi 0, %s101
      %s103 = sphi 0, %s101
      %s104 = sphi 0, %s103
      %s118 = sphi 0, %s104
      %s122 = sphi 0, %s122
      %s124 = sphi 0, %s122
      %s125 = sphi 0, %s124
      %s139 = sphi 0, %s125
      %s143 = sphi 0, %s143
      %s145 = sphi 0, %s143
      %s146 = sphi 0, %s145
      %s160 = sphi 0, %s146
      %s164 = sphi 0, %s164
      %s166 = sphi 0, %s164
      %s167 = sphi 0, %s166
      %s181 = sphi 0, %s167
      %s185 = sphi 0, %s185
      %s187 = sphi 0, %s185
      %s188 = sphi 0, %s187
      %s202 = sphi 0, %s188
      %s206 = sphi 0, %s206
      %s208 = sphi 0, %s206
      %s209 = sphi 0, %s208
      %s223 = sphi 0, %s209
      %s227 = sphi 0, %s227
      %s229 = sphi 0, %s227
      %s230 = sphi 0, %s229
      %s244 = sphi 0, %s230
      %s248 = sphi 0, %s248
      %s250 = sphi 0, %s248
      %s251 = sphi 0, %s250
      %s265 = sphi 0, %s251
      %s269 = sphi 0, %s269
      %s271 = sphi 0, %s269
      %s272 = sphi 0, %s271
      %s286 = sphi 0, %s272
      %s290 = sphi 0, %s290
      %s292 = sphi 0, %s290
      %s293 = sphi 0, %s292
      %s307 = sphi 0, %s293
      %s311 = sphi 0, %s311
      %s313 = sphi 0, %s311
      %s314 = sphi 0, %s313
      %s328 = sphi 0, %s314
      %s332 = sphi 0, %s332
      %s334 = sphi 0, %s332
      %s335 = sphi 0, %s334
      %s349 = sphi 0, %s335
      %s353 = sphi 0, %s353
      %s355 = sphi 0, %s353
      %s356 = sphi 0, %s355
      %s370 = sphi 0, %s356
      %s374 = sphi 0, %s374
      %s376 = sphi 0, %s374
      %s377 = sphi 0, %s376
      %s391 = sphi 0, %s377
      %s395 = sphi 0, %s395
      %s397 = sphi 0, %s395
      %s398 = sphi 0, %s397
      %s412 = sphi 0, %s398
      %s416 = sphi 0, %s416
      %s418 = sphi 0, %s416
      %s419 = sphi 0, %s418
      %s433 = sphi 0, %s419
      %s437 = sphi 0, %s437
      %s439 = sphi 0, %s437
      %s440 = sphi 0, %s439
      %s454 = sphi 0, %s440
      %s458 = sphi 0, %s458
      %s460 = sphi 0, %s458
      %s461 = sphi 0, %s460
      %s475 = sphi 0, %s461
      %s481 = sphi 0, %s483
      %s484 = sphi 0, %s481
      %s485 = sphi 0, %s484
      %s501 = sphi 0, %s485
    $region4: #{resnet_forward.1} parent=1 // loop_header_branch
      %44 = sbr.rel (%p42) target = $region8
    $region5: #{resnet_forward.1} parent=1 // loop_body
      %s46 = ssub.s32 %s41, 1
      %s47 = ssub.s32 %s41, 2
      %s48 = sadd.s32 %s41, 1
      %s49 = ssub.s32 %s41, %s48
      %p50 = scmp.eq.s32.totalorder %s49, 0
      %s52 = sadd.s32 %s51, 1
      %s53 = scalar_select %p50, %s51, %s52
      %p56 = pneg %p50
      %p57 = scmp.eq.s32.totalorder %s41, 1
      %p58 = por %p56, %p57
      %p59 = scmp.ne.s32.totalorder %s51, %s54
      %p60 = scmp.eq.s32.totalorder %s41, 0
      %p61 = por %p59, %p60
      %p62 = scmp.ne.s32.totalorder %s51, %s54
      %p63 = scmp.eq.s32.totalorder %s46, 1
      %p64 = por %p62, %p63
      %p65 = scmp.ne.s32.totalorder %s54, %s55
      %p66 = scmp.eq.s32.totalorder %s46, 0
      %p67 = por %p65, %p66
      %p68 = scmp.ne.s32.totalorder %s54, %s55
      %p69 = scmp.eq.s32.totalorder %s47, 1
      %p70 = por %p68, %p69
      %p72 = scmp.ne.s32.totalorder %s55, %s71
      %p73 = scmp.eq.s32.totalorder %s47, 0
      %p74 = por %p72, %p73
      %s75 = ssub.s32 %s41, %s48
      %p76 = scmp.eq.s32.totalorder %s75, 0
      %s78 = sadd.s32 %s77, 1
      %s79 = scalar_select %p76, %s77, %s78
      %p82 = pneg %p76
      %p83 = scmp.eq.s32.totalorder %s41, 1
      %p84 = por %p82, %p83
      %p85 = scmp.ne.s32.totalorder %s77, %s80
      %p86 = scmp.eq.s32.totalorder %s41, 0
      %p87 = por %p85, %p86
      %p88 = scmp.ne.s32.totalorder %s77, %s80
      %p89 = scmp.eq.s32.totalorder %s46, 1
      %p90 = por %p88, %p89
      %p91 = scmp.ne.s32.totalorder %s80, %s81
      %p92 = scmp.eq.s32.totalorder %s46, 0
      %p93 = por %p91, %p92
      %p94 = scmp.ne.s32.totalorder %s80, %s81
      %p95 = scmp.eq.s32.totalorder %s47, 1
      %p96 = por %p94, %p95
      %p98 = scmp.ne.s32.totalorder %s81, %s97
      %p99 = scmp.eq.s32.totalorder %s47, 0
      %p100 = por %p98, %p99
      %s102 = sadd.s32 %s101, 1
      %p105 = scmp.eq.s32.totalorder %s41, 1
      %p106 = scmp.ne.s32.totalorder %s101, %s103
      %p107 = scmp.eq.s32.totalorder %s41, 0
      %p108 = por %p106, %p107
      %p109 = scmp.ne.s32.totalorder %s101, %s103
      %p110 = scmp.eq.s32.totalorder %s46, 1
      %p111 = por %p109, %p110
      %p112 = scmp.ne.s32.totalorder %s103, %s104
      %p113 = scmp.eq.s32.totalorder %s46, 0
      %p114 = por %p112, %p113
      %p115 = scmp.ne.s32.totalorder %s103, %s104
      %p116 = scmp.eq.s32.totalorder %s47, 1
      %p117 = por %p115, %p116
      %p119 = scmp.ne.s32.totalorder %s104, %s118
      %p120 = scmp.eq.s32.totalorder %s47, 0
      %p121 = por %p119, %p120
      %s123 = sadd.s32 %s122, 1
      %p126 = scmp.eq.s32.totalorder %s41, 1
      %p127 = scmp.ne.s32.totalorder %s122, %s124
      %p128 = scmp.eq.s32.totalorder %s41, 0
      %p129 = por %p127, %p128
      %p130 = scmp.ne.s32.totalorder %s122, %s124
      %p131 = scmp.eq.s32.totalorder %s46, 1
      %p132 = por %p130, %p131
      %p133 = scmp.ne.s32.totalorder %s124, %s125
      %p134 = scmp.eq.s32.totalorder %s46, 0
      %p135 = por %p133, %p134
      %p136 = scmp.ne.s32.totalorder %s124, %s125
      %p137 = scmp.eq.s32.totalorder %s47, 1
      %p138 = por %p136, %p137
      %p140 = scmp.ne.s32.totalorder %s125, %s139
      %p141 = scmp.eq.s32.totalorder %s47, 0
      %p142 = por %p140, %p141
      %s144 = sadd.s32 %s143, 1
      %p147 = scmp.eq.s32.totalorder %s41, 1
      %p148 = scmp.ne.s32.totalorder %s143, %s145
      %p149 = scmp.eq.s32.totalorder %s41, 0
      %p150 = por %p148, %p149
      %p151 = scmp.ne.s32.totalorder %s143, %s145
      %p152 = scmp.eq.s32.totalorder %s46, 1
      %p153 = por %p151, %p152
      %p154 = scmp.ne.s32.totalorder %s145, %s146
      %p155 = scmp.eq.s32.totalorder %s46, 0
      %p156 = por %p154, %p155
      %p157 = scmp.ne.s32.totalorder %s145, %s146
      %p158 = scmp.eq.s32.totalorder %s47, 1
      %p159 = por %p157, %p158
      %p161 = scmp.ne.s32.totalorder %s146, %s160
      %p162 = scmp.eq.s32.totalorder %s47, 0
      %p163 = por %p161, %p162
      %s165 = sadd.s32 %s164, 1
      %p168 = scmp.eq.s32.totalorder %s41, 1
      %p169 = scmp.ne.s32.totalorder %s164, %s166
      %p170 = scmp.eq.s32.totalorder %s41, 0
      %p171 = por %p169, %p170
      %p172 = scmp.ne.s32.totalorder %s164, %s166
      %p173 = scmp.eq.s32.totalorder %s46, 1
      %p174 = por %p172, %p173
      %p175 = scmp.ne.s32.totalorder %s166, %s167
      %p176 = scmp.eq.s32.totalorder %s46, 0
      %p177 = por %p175, %p176
      %p178 = scmp.ne.s32.totalorder %s166, %s167
      %p179 = scmp.eq.s32.totalorder %s47, 1
      %p180 = por %p178, %p179
      %p182 = scmp.ne.s32.totalorder %s167, %s181
      %p183 = scmp.eq.s32.totalorder %s47, 0
      %p184 = por %p182, %p183
      %s186 = sadd.s32 %s185, 1
      %p189 = scmp.eq.s32.totalorder %s41, 1
      %p190 = scmp.ne.s32.totalorder %s185, %s187
      %p191 = scmp.eq.s32.totalorder %s41, 0
      %p192 = por %p190, %p191
      %p193 = scmp.ne.s32.totalorder %s185, %s187
      %p194 = scmp.eq.s32.totalorder %s46, 1
      %p195 = por %p193, %p194
      %p196 = scmp.ne.s32.totalorder %s187, %s188
      %p197 = scmp.eq.s32.totalorder %s46, 0
      %p198 = por %p196, %p197
      %p199 = scmp.ne.s32.totalorder %s187, %s188
      %p200 = scmp.eq.s32.totalorder %s47, 1
      %p201 = por %p199, %p200
      %p203 = scmp.ne.s32.totalorder %s188, %s202
      %p204 = scmp.eq.s32.totalorder %s47, 0
      %p205 = por %p203, %p204
      %s207 = sadd.s32 %s206, 1
      %p210 = scmp.eq.s32.totalorder %s41, 1
      %p211 = scmp.ne.s32.totalorder %s206, %s208
      %p212 = scmp.eq.s32.totalorder %s41, 0
      %p213 = por %p211, %p212
      %p214 = scmp.ne.s32.totalorder %s206, %s208
      %p215 = scmp.eq.s32.totalorder %s46, 1
      %p216 = por %p214, %p215
      %p217 = scmp.ne.s32.totalorder %s208, %s209
      %p218 = scmp.eq.s32.totalorder %s46, 0
      %p219 = por %p217, %p218
      %p220 = scmp.ne.s32.totalorder %s208, %s209
      %p221 = scmp.eq.s32.totalorder %s47, 1
      %p222 = por %p220, %p221
      %p224 = scmp.ne.s32.totalorder %s209, %s223
      %p225 = scmp.eq.s32.totalorder %s47, 0
      %p226 = por %p224, %p225
      %s228 = sadd.s32 %s227, 1
      %p231 = scmp.eq.s32.totalorder %s41, 1
      %p232 = scmp.ne.s32.totalorder %s227, %s229
      %p233 = scmp.eq.s32.totalorder %s41, 0
      %p234 = por %p232, %p233
      %p235 = scmp.ne.s32.totalorder %s227, %s229
      %p236 = scmp.eq.s32.totalorder %s46, 1
      %p237 = por %p235, %p236
      %p238 = scmp.ne.s32.totalorder %s229, %s230
      %p239 = scmp.eq.s32.totalorder %s46, 0
      %p240 = por %p238, %p239
      %p241 = scmp.ne.s32.totalorder %s229, %s230
      %p242 = scmp.eq.s32.totalorder %s47, 1
      %p243 = por %p241, %p242
      %p245 = scmp.ne.s32.totalorder %s230, %s244
      %p246 = scmp.eq.s32.totalorder %s47, 0
      %p247 = por %p245, %p246
      %s249 = sadd.s32 %s248, 1
      %p252 = scmp.eq.s32.totalorder %s41, 1
      %p253 = scmp.ne.s32.totalorder %s248, %s250
      %p254 = scmp.eq.s32.totalorder %s41, 0
      %p255 = por %p253, %p254
      %p256 = scmp.ne.s32.totalorder %s248, %s250
      %p257 = scmp.eq.s32.totalorder %s46, 1
      %p258 = por %p256, %p257
      %p259 = scmp.ne.s32.totalorder %s250, %s251
      %p260 = scmp.eq.s32.totalorder %s46, 0
      %p261 = por %p259, %p260
      %p262 = scmp.ne.s32.totalorder %s250, %s251
      %p263 = scmp.eq.s32.totalorder %s47, 1
      %p264 = por %p262, %p263
      %p266 = scmp.ne.s32.totalorder %s251, %s265
      %p267 = scmp.eq.s32.totalorder %s47, 0
      %p268 = por %p266, %p267
      %s270 = sadd.s32 %s269, 1
      %p273 = scmp.eq.s32.totalorder %s41, 1
      %p274 = scmp.ne.s32.totalorder %s269, %s271
      %p275 = scmp.eq.s32.totalorder %s41, 0
      %p276 = por %p274, %p275
      %p277 = scmp.ne.s32.totalorder %s269, %s271
      %p278 = scmp.eq.s32.totalorder %s46, 1
      %p279 = por %p277, %p278
      %p280 = scmp.ne.s32.totalorder %s271, %s272
      %p281 = scmp.eq.s32.totalorder %s46, 0
      %p282 = por %p280, %p281
      %p283 = scmp.ne.s32.totalorder %s271, %s272
      %p284 = scmp.eq.s32.totalorder %s47, 1
      %p285 = por %p283, %p284
      %p287 = scmp.ne.s32.totalorder %s272, %s286
      %p288 = scmp.eq.s32.totalorder %s47, 0
      %p289 = por %p287, %p288
      %s291 = sadd.s32 %s290, 1
      %p294 = scmp.eq.s32.totalorder %s41, 1
      %p295 = scmp.ne.s32.totalorder %s290, %s292
      %p296 = scmp.eq.s32.totalorder %s41, 0
      %p297 = por %p295, %p296
      %p298 = scmp.ne.s32.totalorder %s290, %s292
      %p299 = scmp.eq.s32.totalorder %s46, 1
      %p300 = por %p298, %p299
      %p301 = scmp.ne.s32.totalorder %s292, %s293
      %p302 = scmp.eq.s32.totalorder %s46, 0
      %p303 = por %p301, %p302
      %p304 = scmp.ne.s32.totalorder %s292, %s293
      %p305 = scmp.eq.s32.totalorder %s47, 1
      %p306 = por %p304, %p305
      %p308 = scmp.ne.s32.totalorder %s293, %s307
      %p309 = scmp.eq.s32.totalorder %s47, 0
      %p310 = por %p308, %p309
      %s312 = sadd.s32 %s311, 1
      %p315 = scmp.eq.s32.totalorder %s41, 1
      %p316 = scmp.ne.s32.totalorder %s311, %s313
      %p317 = scmp.eq.s32.totalorder %s41, 0
      %p318 = por %p316, %p317
      %p319 = scmp.ne.s32.totalorder %s311, %s313
      %p320 = scmp.eq.s32.totalorder %s46, 1
      %p321 = por %p319, %p320
      %p322 = scmp.ne.s32.totalorder %s313, %s314
      %p323 = scmp.eq.s32.totalorder %s46, 0
      %p324 = por %p322, %p323
      %p325 = scmp.ne.s32.totalorder %s313, %s314
      %p326 = scmp.eq.s32.totalorder %s47, 1
      %p327 = por %p325, %p326
      %p329 = scmp.ne.s32.totalorder %s314, %s328
      %p330 = scmp.eq.s32.totalorder %s47, 0
      %p331 = por %p329, %p330
      %s333 = sadd.s32 %s332, 1
      %p336 = scmp.eq.s32.totalorder %s41, 1
      %p337 = scmp.ne.s32.totalorder %s332, %s334
      %p338 = scmp.eq.s32.totalorder %s41, 0
      %p339 = por %p337, %p338
      %p340 = scmp.ne.s32.totalorder %s332, %s334
      %p341 = scmp.eq.s32.totalorder %s46, 1
      %p342 = por %p340, %p341
      %p343 = scmp.ne.s32.totalorder %s334, %s335
      %p344 = scmp.eq.s32.totalorder %s46, 0
      %p345 = por %p343, %p344
      %p346 = scmp.ne.s32.totalorder %s334, %s335
      %p347 = scmp.eq.s32.totalorder %s47, 1
      %p348 = por %p346, %p347
      %p350 = scmp.ne.s32.totalorder %s335, %s349
      %p351 = scmp.eq.s32.totalorder %s47, 0
      %p352 = por %p350, %p351
      %s354 = sadd.s32 %s353, 1
      %p357 = scmp.eq.s32.totalorder %s41, 1
      %p358 = scmp.ne.s32.totalorder %s353, %s355
      %p359 = scmp.eq.s32.totalorder %s41, 0
      %p360 = por %p358, %p359
      %p361 = scmp.ne.s32.totalorder %s353, %s355
      %p362 = scmp.eq.s32.totalorder %s46, 1
      %p363 = por %p361, %p362
      %p364 = scmp.ne.s32.totalorder %s355, %s356
      %p365 = scmp.eq.s32.totalorder %s46, 0
      %p366 = por %p364, %p365
      %p367 = scmp.ne.s32.totalorder %s355, %s356
      %p368 = scmp.eq.s32.totalorder %s47, 1
      %p369 = por %p367, %p368
      %p371 = scmp.ne.s32.totalorder %s356, %s370
      %p372 = scmp.eq.s32.totalorder %s47, 0
      %p373 = por %p371, %p372
      %s375 = sadd.s32 %s374, 1
      %p378 = scmp.eq.s32.totalorder %s41, 1
      %p379 = scmp.ne.s32.totalorder %s374, %s376
      %p380 = scmp.eq.s32.totalorder %s41, 0
      %p381 = por %p379, %p380
      %p382 = scmp.ne.s32.totalorder %s374, %s376
      %p383 = scmp.eq.s32.totalorder %s46, 1
      %p384 = por %p382, %p383
      %p385 = scmp.ne.s32.totalorder %s376, %s377
      %p386 = scmp.eq.s32.totalorder %s46, 0
      %p387 = por %p385, %p386
      %p388 = scmp.ne.s32.totalorder %s376, %s377
      %p389 = scmp.eq.s32.totalorder %s47, 1
      %p390 = por %p388, %p389
      %p392 = scmp.ne.s32.totalorder %s377, %s391
      %p393 = scmp.eq.s32.totalorder %s47, 0
      %p394 = por %p392, %p393
      %s396 = sadd.s32 %s395, 1
      %p399 = scmp.eq.s32.totalorder %s41, 1
      %p400 = scmp.ne.s32.totalorder %s395, %s397
      %p401 = scmp.eq.s32.totalorder %s41, 0
      %p402 = por %p400, %p401
      %p403 = scmp.ne.s32.totalorder %s395, %s397
      %p404 = scmp.eq.s32.totalorder %s46, 1
      %p405 = por %p403, %p404
      %p406 = scmp.ne.s32.totalorder %s397, %s398
      %p407 = scmp.eq.s32.totalorder %s46, 0
      %p408 = por %p406, %p407
      %p409 = scmp.ne.s32.totalorder %s397, %s398
      %p410 = scmp.eq.s32.totalorder %s47, 1
      %p411 = por %p409, %p410
      %p413 = scmp.ne.s32.totalorder %s398, %s412
      %p414 = scmp.eq.s32.totalorder %s47, 0
      %p415 = por %p413, %p414
      %s417 = sadd.s32 %s416, 1
      %p420 = scmp.eq.s32.totalorder %s41, 1
      %p421 = scmp.ne.s32.totalorder %s416, %s418
      %p422 = scmp.eq.s32.totalorder %s41, 0
      %p423 = por %p421, %p422
      %p424 = scmp.ne.s32.totalorder %s416, %s418
      %p425 = scmp.eq.s32.totalorder %s46, 1
      %p426 = por %p424, %p425
      %p427 = scmp.ne.s32.totalorder %s418, %s419
      %p428 = scmp.eq.s32.totalorder %s46, 0
      %p429 = por %p427, %p428
      %p430 = scmp.ne.s32.totalorder %s418, %s419
      %p431 = scmp.eq.s32.totalorder %s47, 1
      %p432 = por %p430, %p431
      %p434 = scmp.ne.s32.totalorder %s419, %s433
      %p435 = scmp.eq.s32.totalorder %s47, 0
      %p436 = por %p434, %p435
      %s438 = sadd.s32 %s437, 1
      %p441 = scmp.eq.s32.totalorder %s41, 1
      %p442 = scmp.ne.s32.totalorder %s437, %s439
      %p443 = scmp.eq.s32.totalorder %s41, 0
      %p444 = por %p442, %p443
      %p445 = scmp.ne.s32.totalorder %s437, %s439
      %p446 = scmp.eq.s32.totalorder %s46, 1
      %p447 = por %p445, %p446
      %p448 = scmp.ne.s32.totalorder %s439, %s440
      %p449 = scmp.eq.s32.totalorder %s46, 0
      %p450 = por %p448, %p449
      %p451 = scmp.ne.s32.totalorder %s439, %s440
      %p452 = scmp.eq.s32.totalorder %s47, 1
      %p453 = por %p451, %p452
      %p455 = scmp.ne.s32.totalorder %s440, %s454
      %p456 = scmp.eq.s32.totalorder %s47, 0
      %p457 = por %p455, %p456
      %s459 = sadd.s32 %s458, 1
      %p462 = scmp.eq.s32.totalorder %s41, 1
      %p463 = scmp.ne.s32.totalorder %s458, %s460
      %p464 = scmp.eq.s32.totalorder %s41, 0
      %p465 = por %p463, %p464
      %p466 = scmp.ne.s32.totalorder %s458, %s460
      %p467 = scmp.eq.s32.totalorder %s46, 1
      %p468 = por %p466, %p467
      %p469 = scmp.ne.s32.totalorder %s460, %s461
      %p470 = scmp.eq.s32.totalorder %s46, 0
      %p471 = por %p469, %p470
      %p472 = scmp.ne.s32.totalorder %s460, %s461
      %p473 = scmp.eq.s32.totalorder %s47, 1
      %p474 = por %p472, %p473
      %p476 = scmp.ne.s32.totalorder %s461, %s475
      %p477 = scmp.eq.s32.totalorder %s47, 0
      %p478 = por %p476, %p477
      %s479 = ssub.s32 %s41, %s48
      %p480 = scmp.eq.s32.totalorder %s479, 0
      %s482 = sadd.s32 %s481, 1
      %s483 = scalar_select %p480, %s481, %s482
      %p486 = pneg %p480
      %p487 = scmp.eq.s32.totalorder %s41, 1
      %p488 = por %p486, %p487
      %p489 = scmp.ne.s32.totalorder %s481, %s484
      %p490 = scmp.eq.s32.totalorder %s41, 0
      %p491 = por %p489, %p490
      %p492 = scmp.ne.s32.totalorder %s481, %s484
      %p493 = scmp.eq.s32.totalorder %s46, 1
      %p494 = por %p492, %p493
      %p495 = scmp.ne.s32.totalorder %s484, %s485
      %p496 = scmp.eq.s32.totalorder %s46, 0
      %p497 = por %p495, %p496
      %p498 = scmp.ne.s32.totalorder %s484, %s485
      %p499 = scmp.eq.s32.totalorder %s47, 1
      %p500 = por %p498, %p499
      %p502 = scmp.ne.s32.totalorder %s485, %s501
      %p503 = scmp.eq.s32.totalorder %s47, 0
      %p504 = por %p502, %p503
      %p505 = scmp.le.s32.totalorder 1, %s41
      %p506 = scmp.lt.s32.totalorder %s41, 3
      %p507 = pnand %p505, %p506
      %p508 = pneg %p507
      // Predicated region
      $region9: #{resnet_forward.1} parent=5 // pred_check
        _
      $region10: #{resnet_forward.1} parent=5 // pred_check_branch
        %510 = sbr.rel (%p507) target = $region12
      $region11: #{resnet_forward.1} parent=5 // pred_region
        %s511 = ssub.s32 %s41, 1
        // Predicated region
        $region13: #{resnet_forward.1} parent=11 // pred_check
          %p512 = pneg %p114
        $region14: #{resnet_forward.1} parent=11 // pred_check_branch
          %514 = sbr.rel (%p512) target = $region16
        $region15: #{resnet_forward.1} parent=11 // pred_region
          %s516 = ssub.s32 240, 240
          %517 = vsyncadd [#allocation7], %s516
          %s518 = sshll.u32 [#allocation6], 4
          %s519 = int_to_ptr.vmem [resolvable:$true] %s518
          %524 = dma.hbm_to_vmem [thread:$0]  %s2, 240, %s519, [#allocation7], 16, 16, 1
        $region16: #{resnet_forward.1} parent=11 // pred_fallthru
          _
        // Predicated region
        $region17: #{resnet_forward.1} parent=11 // pred_check
          %p525 = pneg %p135
        $region18: #{resnet_forward.1} parent=11 // pred_check_branch
          %527 = sbr.rel (%p525) target = $region20
        $region19: #{resnet_forward.1} parent=11 // pred_region
          %s529 = ssub.s32 16, 16
          %530 = vsyncadd [#allocation7], %s529
          %s532 = sshll.u32 [#allocation8], 4
          %s533 = int_to_ptr.vmem [resolvable:$true] %s532
          %535 = dma.hbm_to_vmem [thread:$0]  %s3, 16, %s533, [#allocation7]
        $region20: #{resnet_forward.1} parent=11 // pred_fallthru
          _
        // Predicated region
        $region21: #{resnet_forward.1} parent=11 // pred_check
          %p536 = pneg %p156
        $region22: #{resnet_forward.1} parent=11 // pred_check_branch
          %538 = sbr.rel (%p536) target = $region24
        $region23: #{resnet_forward.1} parent=11 // pred_region
          %s540 = ssub.s32 1536, 1536
          %541 = vsyncadd [#allocation10], %s540
          %s542 = sshll.u32 [#allocation9], 4
          %s543 = int_to_ptr.vmem [resolvable:$true] %s542
          %548 = dma.hbm_to_vmem [thread:$0]  %s4, 1536, %s543, [#allocation10], 64, 64, 4
        $region24: #{resnet_forward.1} parent=11 // pred_fallthru
          _
        // Predicated region
        $region25: #{resnet_forward.1} parent=11 // pred_check
          %p549 = pneg %p177
        $region26: #{resnet_forward.1} parent=11 // pred_check_branch
          %551 = sbr.rel (%p549) target = $region28
        $region27: #{resnet_forward.1} parent=11 // pred_region
          %s553 = ssub.s32 1536, 1536
          %554 = vsyncadd [#allocation10], %s553
          %s555 = sshll.u32 [#allocation11], 4
          %s556 = int_to_ptr.vmem [resolvable:$true] %s555
          %561 = dma.hbm_to_vmem [thread:$0]  %s5, 1536, %s556, [#allocation10], 64, 64, 4
        $region28: #{resnet_forward.1} parent=11 // pred_fallthru
          _
        // Predicated region
        $region29: #{resnet_forward.1} parent=11 // pred_check
          %p562 = pneg %p198
        $region30: #{resnet_forward.1} parent=11 // pred_check_branch
          %564 = sbr.rel (%p562) target = $region32
        $region31: #{resnet_forward.1} parent=11 // pred_region
          %s566 = ssub.s32 1536, 1536
          %567 = vsyncadd [#allocation13], %s566
          %s568 = sshll.u32 [#allocation12], 4
          %s569 = int_to_ptr.vmem [resolvable:$true] %s568
          %574 = dma.hbm_to_vmem [thread:$0]  %s6, 1536, %s569, [#allocation13], 64, 64, 4
        $region32: #{resnet_forward.1} parent=11 // pred_fallthru
          _
        // Predicated region
        $region33: #{resnet_forward.1} parent=11 // pred_check
          %p575 = pneg %p219
        $region34: #{resnet_forward.1} parent=11 // pred_check_branch
          %577 = sbr.rel (%p575) target = $region36
        $region35: #{resnet_forward.1} parent=11 // pred_region
          %s579 = ssub.s32 3072, 3072
          %580 = vsyncadd [#allocation13], %s579
          %s581 = sshll.u32 [#allocation14], 4
          %s582 = int_to_ptr.vmem [resolvable:$true] %s581
          %587 = dma.hbm_to_vmem [thread:$0]  %s7, 3072, %s582, [#allocation13], 64, 64, 4
        $region36: #{resnet_forward.1} parent=11 // pred_fallthru
          _
        // Predicated region
        $region37: #{resnet_forward.1} parent=11 // pred_check
          %p588 = pneg %p240
        $region38: #{resnet_forward.1} parent=11 // pred_check_branch
          %590 = sbr.rel (%p588) target = $region40
        $region39: #{resnet_forward.1} parent=11 // pred_region
          %s592 = ssub.s32 512, 512
          %593 = vsyncadd [#allocation16], %s592
          %s594 = sshll.u32 [#allocation15], 4
          %s595 = int_to_ptr.vmem [resolvable:$true] %s594
          %600 = dma.hbm_to_vmem [thread:$0]  %s8, 512, %s595, [#allocation16], 64, 64, 4
        $region40: #{resnet_forward.1} parent=11 // pred_fallthru
          _
        // Predicated region
        $region41: #{resnet_forward.1} parent=11 // pred_check
          %p601 = pneg %p261
        $region42: #{resnet_forward.1} parent=11 // pred_check_branch
          %603 = sbr.rel (%p601) target = $region44
        $region43: #{resnet_forward.1} parent=11 // pred_region
          %s605 = ssub.s32 6144, 6144
          %606 = vsyncadd [#allocation16], %s605
          %s607 = sshll.u32 [#allocation17], 4
          %s608 = int_to_ptr.vmem [resolvable:$true] %s607
          %613 = dma.hbm_to_vmem [thread:$0]  %s9, 6144, %s608, [#allocation16], 128, 128, 8
        $region44: #{resnet_forward.1} parent=11 // pred_fallthru
          _
        // Predicated region
        $region45: #{resnet_forward.1} parent=11 // pred_check
          %p614 = pneg %p282
        $region46: #{resnet_forward.1} parent=11 // pred_check_branch
          %616 = sbr.rel (%p614) target = $region48
        $region47: #{resnet_forward.1} parent=11 // pred_region
          %s618 = ssub.s32 12288, 12288
          %619 = vsyncadd [#allocation19], %s618
          %s620 = sshll.u32 [#allocation18], 4
          %s621 = int_to_ptr.vmem [resolvable:$true] %s620
          %626 = dma.hbm_to_vmem [thread:$0]  %s10, 12288, %s621, [#allocation19], 128, 128, 8
        $region48: #{resnet_forward.1} parent=11 // pred_fallthru
          _
        // Predicated region
        $region49: #{resnet_forward.1} parent=11 // pred_check
          %p627 = pneg %p303
        $region50: #{resnet_forward.1} parent=11 // pred_check_branch
          %629 = sbr.rel (%p627) target = $region52
        $region51: #{resnet_forward.1} parent=11 // pred_region
          %s631 = ssub.s32 2048, 2048
          %632 = vsyncadd [#allocation19], %s631
          %s633 = sshll.u32 [#allocation20], 4
          %s634 = int_to_ptr.vmem [resolvable:$true] %s633
          %639 = dma.hbm_to_vmem [thread:$0]  %s11, 2048, %s634, [#allocation19], 128, 128, 8
        $region52: #{resnet_forward.1} parent=11 // pred_fallthru
          _
        // Predicated region
        $region53: #{resnet_forward.1} parent=11 // pred_check
          %p640 = pneg %p324
        $region54: #{resnet_forward.1} parent=11 // pred_check_branch
          %642 = sbr.rel (%p640) target = $region56
        $region55: #{resnet_forward.1} parent=11 // pred_region
          %s644 = ssub.s32 24576, 24576
          %645 = vsyncadd [#allocation22], %s644
          %s646 = sshll.u32 [#allocation21], 4
          %s647 = int_to_ptr.vmem [resolvable:$true] %s646
          %652 = dma.hbm_to_vmem [thread:$0]  %s12, 24576, %s647, [#allocation22], 256, 256, 16
        $region56: #{resnet_forward.1} parent=11 // pred_fallthru
          _
        // Predicated region
        $region57: #{resnet_forward.1} parent=11 // pred_check
          %p653 = pneg %p345
        $region58: #{resnet_forward.1} parent=11 // pred_check_branch
          %655 = sbr.rel (%p653) target = $region60
        $region59: #{resnet_forward.1} parent=11 // pred_region
          %s657 = ssub.s32 49152, 49152
          %658 = vsyncadd [#allocation22], %s657
          %s659 = sshll.u32 [#allocation23], 4
          %s660 = int_to_ptr.vmem [resolvable:$true] %s659
          %665 = dma.hbm_to_vmem [thread:$0]  %s13, 49152, %s660, [#allocation22], 256, 256, 16
        $region60: #{resnet_forward.1} parent=11 // pred_fallthru
          _
        // Predicated region
        $region61: #{resnet_forward.1} parent=11 // pred_check
          %p666 = pneg %p366
        $region62: #{resnet_forward.1} parent=11 // pred_check_branch
          %668 = sbr.rel (%p666) target = $region64
        $region63: #{resnet_forward.1} parent=11 // pred_region
          %s670 = ssub.s32 8192, 8192
          %671 = vsyncadd [#allocation25], %s670
          %s672 = sshll.u32 [#allocation24], 4
          %s673 = int_to_ptr.vmem [resolvable:$true] %s672
          %678 = dma.hbm_to_vmem [thread:$0]  %s14, 8192, %s673, [#allocation25], 256, 256, 16
        $region64: #{resnet_forward.1} parent=11 // pred_fallthru
          _
        // Predicated region
        $region65: #{resnet_forward.1} parent=11 // pred_check
          %p679 = pneg %p387
        $region66: #{resnet_forward.1} parent=11 // pred_check_branch
          %681 = sbr.rel (%p679) target = $region68
        $region67: #{resnet_forward.1} parent=11 // pred_region
          %s683 = ssub.s32 128, 128
          %684 = vsyncadd [#allocation25], %s683
          %s686 = sshll.u32 [#allocation26], 4
          %s687 = int_to_ptr.vmem [resolvable:$true] %s686
          %689 = dma.hbm_to_vmem [thread:$0]  %s15, 128, %s687, [#allocation25]
        $region68: #{resnet_forward.1} parent=11 // pred_fallthru
          _
        // Predicated region
        $region69: #{resnet_forward.1} parent=11 // pred_check
          %p690 = pneg %p408
        $region70: #{resnet_forward.1} parent=11 // pred_check_branch
          %692 = sbr.rel (%p690) target = $region72
        $region71: #{resnet_forward.1} parent=11 // pred_region
          %s694 = ssub.s32 16, 16
          %695 = vsyncadd [#allocation28], %s694
          %s697 = sshll.u32 [#allocation27], 4
          %s698 = int_to_ptr.vmem [resolvable:$true] %s697
          %700 = dma.hbm_to_vmem [thread:$0]  %s16, 16, %s698, [#allocation28]
        $region72: #{resnet_forward.1} parent=11 // pred_fallthru
          _
        // Predicated region
        $region73: #{resnet_forward.1} parent=11 // pred_check
          %p701 = pneg %p429
        $region74: #{resnet_forward.1} parent=11 // pred_check_branch
          %703 = sbr.rel (%p701) target = $region76
        $region75: #{resnet_forward.1} parent=11 // pred_region
          %s705 = ssub.s32 256, 256
          %706 = vsyncadd [#allocation28], %s705
          %s707 = sshll.u32 [#allocation29], 4
          %s708 = int_to_ptr.vmem [resolvable:$true] %s707
          %713 = dma.hbm_to_vmem [thread:$0]  %s17, 256, %s708, [#allocation28], 128, 128, 8
        $region76: #{resnet_forward.1} parent=11 // pred_fallthru
          _
        // Predicated region
        $region77: #{resnet_forward.1} parent=11 // pred_check
          %p714 = pneg %p450
        $region78: #{resnet_forward.1} parent=11 // pred_check_branch
          %716 = sbr.rel (%p714) target = $region80
        $region79: #{resnet_forward.1} parent=11 // pred_region
          _
        $region80: #{resnet_forward.1} parent=11 // pred_fallthru
          _
        // Predicated region
        $region81: #{resnet_forward.1} parent=11 // pred_check
          %p717 = pneg %p471
        $region82: #{resnet_forward.1} parent=11 // pred_check_branch
          %719 = sbr.rel (%p717) target = $region84
        $region83: #{resnet_forward.1} parent=11 // pred_region
          %s721 = ssub.s32 16, 16
          %722 = vsyncadd [#allocation31], %s721
          %s724 = sshll.u32 [#allocation30], 4
          %s725 = int_to_ptr.vmem [resolvable:$true] %s724
          %727 = dma.hbm_to_vmem [thread:$0]  %s19, 16, %s725, [#allocation31]
        $region84: #{resnet_forward.1} parent=11 // pred_fallthru
          _
      $region12: #{resnet_forward.1} parent=5 // pred_fallthru
        _
      %p728 = scmp.lt.s32.totalorder %s41, 2
      // Predicated region
      $region85: #{resnet_forward.1} parent=5 // pred_check
        %p729 = pneg %p728
      $region86: #{resnet_forward.1} parent=5 // pred_check_branch
        %731 = sbr.rel (%p729) target = $region88
      $region87: #{resnet_forward.1} parent=5 // pred_region
        // Predicated region
        $region89: #{resnet_forward.1} parent=87 // pred_check
          %p732 = pneg %p61
        $region90: #{resnet_forward.1} parent=87 // pred_check_branch
          %734 = sbr.rel (%p732) target = $region92
        $region91: #{resnet_forward.1} parent=87 // pred_region
          %p735 = scmp.lt.s32.totalorder %s41, 1
          %s736 = scalar_select %p735, %s41, 1
          %s737 = smul.addr %s736, 10
          %s738 = smul.addr %s737, 8
          %s739 = scalar_lea.vmem %s0, %s738
        $region92: #{resnet_forward.1} parent=87 // pred_fallthru
          _
        // Predicated region
        $region93: #{resnet_forward.1} parent=87 // pred_check
          %p740 = pneg %p87
        $region94: #{resnet_forward.1} parent=87 // pred_check_branch
          %742 = sbr.rel (%p740) target = $region96
        $region95: #{resnet_forward.1} parent=87 // pred_region
          %s743 = sand.u32 %s77, 1
          %s744 = scalar_lea.sflag [#allocation4], %s743
          %s745 = sand.u32 %s77, 1
          %s746 = scalar_lea.vmem [#allocation3], %s745
          %s748 = ssub.s32 16, 16
          %749 = vsyncadd %s744, %s748
          %s750 = smul.addr %s41, 16
          %s751 = scalar_lea.hbm %s1, %s750
          %s753 = sshll.u32 %s746, 4
          %s754 = int_to_ptr.vmem [resolvable:$true] %s753
          %756 = dma.hbm_to_vmem [thread:$0]  %s751, 16, %s754, %s744
        $region96: #{resnet_forward.1} parent=87 // pred_fallthru
          _
      $region88: #{resnet_forward.1} parent=5 // pred_fallthru
        _
      %p757 = scmp.le.s32.totalorder 1, %s41
      %p758 = scmp.lt.s32.totalorder %s41, 3
      %p759 = pnand %p757, %p758
      %p760 = pneg %p759
      // Predicated region
      $region97: #{resnet_forward.1} parent=5 // pred_check
        _
      $region98: #{resnet_forward.1} parent=5 // pred_check_branch
        %762 = sbr.rel (%p759) target = $region100
      $region99: #{resnet_forward.1} parent=5 // pred_region
        %s763 = ssub.s32 %s41, 1
        %s764 = sand.u32 %s80, 1
        %s765 = scalar_lea.sflag [#allocation4], %s764
        %s766 = sand.u32 %s80, 1
        %s767 = scalar_lea.vmem [#allocation3], %s766
        // Predicated region
        $region101: #{resnet_forward.1} parent=99 // pred_check
          %p768 = pneg %p93
        $region102: #{resnet_forward.1} parent=99 // pred_check_branch
          %770 = sbr.rel (%p768) target = $region104
        $region103: #{resnet_forward.1} parent=99 // pred_region
          %771 = dma.done %s765, 16
        $region104: #{resnet_forward.1} parent=99 // pred_fallthru
          _
        // Predicated region
        $region105: #{resnet_forward.1} parent=99 // pred_check
          %p772 = pneg %p114
        $region106: #{resnet_forward.1} parent=99 // pred_check_branch
          %774 = sbr.rel (%p772) target = $region108
        $region107: #{resnet_forward.1} parent=99 // pred_region
          %775 = dma.done [#allocation7], 240
        $region108: #{resnet_forward.1} parent=99 // pred_fallthru
          _
        // Predicated region
        $region109: #{resnet_forward.1} parent=99 // pred_check
          %p776 = pneg %p135
        $region110: #{resnet_forward.1} parent=99 // pred_check_branch
          %778 = sbr.rel (%p776) target = $region112
        $region111: #{resnet_forward.1} parent=99 // pred_region
          %779 = dma.done [#allocation7], 16
        $region112: #{resnet_forward.1} parent=99 // pred_fallthru
          _
        // Predicated region
        $region113: #{resnet_forward.1} parent=99 // pred_check
          %p780 = pneg %p156
        $region114: #{resnet_forward.1} parent=99 // pred_check_branch
          %782 = sbr.rel (%p780) target = $region116
        $region115: #{resnet_forward.1} parent=99 // pred_region
          %783 = dma.done [#allocation10], 1536
        $region116: #{resnet_forward.1} parent=99 // pred_fallthru
          _
        // Predicated region
        $region117: #{resnet_forward.1} parent=99 // pred_check
          %p784 = pneg %p177
        $region118: #{resnet_forward.1} parent=99 // pred_check_branch
          %786 = sbr.rel (%p784) target = $region120
        $region119: #{resnet_forward.1} parent=99 // pred_region
          %787 = dma.done [#allocation10], 1536
        $region120: #{resnet_forward.1} parent=99 // pred_fallthru
          _
        // Predicated region
        $region121: #{resnet_forward.1} parent=99 // pred_check
          %p788 = pneg %p198
        $region122: #{resnet_forward.1} parent=99 // pred_check_branch
          %790 = sbr.rel (%p788) target = $region124
        $region123: #{resnet_forward.1} parent=99 // pred_region
          %791 = dma.done [#allocation13], 1536
        $region124: #{resnet_forward.1} parent=99 // pred_fallthru
          _
        // Predicated region
        $region125: #{resnet_forward.1} parent=99 // pred_check
          %p792 = pneg %p219
        $region126: #{resnet_forward.1} parent=99 // pred_check_branch
          %794 = sbr.rel (%p792) target = $region128
        $region127: #{resnet_forward.1} parent=99 // pred_region
          %795 = dma.done [#allocation13], 3072
        $region128: #{resnet_forward.1} parent=99 // pred_fallthru
          _
        // Predicated region
        $region129: #{resnet_forward.1} parent=99 // pred_check
          %p796 = pneg %p240
        $region130: #{resnet_forward.1} parent=99 // pred_check_branch
          %798 = sbr.rel (%p796) target = $region132
        $region131: #{resnet_forward.1} parent=99 // pred_region
          %799 = dma.done [#allocation16], 512
        $region132: #{resnet_forward.1} parent=99 // pred_fallthru
          _
        // Predicated region
        $region133: #{resnet_forward.1} parent=99 // pred_check
          %p800 = pneg %p261
        $region134: #{resnet_forward.1} parent=99 // pred_check_branch
          %802 = sbr.rel (%p800) target = $region136
        $region135: #{resnet_forward.1} parent=99 // pred_region
          %803 = dma.done [#allocation16], 6144
        $region136: #{resnet_forward.1} parent=99 // pred_fallthru
          _
        // Predicated region
        $region137: #{resnet_forward.1} parent=99 // pred_check
          %p804 = pneg %p282
        $region138: #{resnet_forward.1} parent=99 // pred_check_branch
          %806 = sbr.rel (%p804) target = $region140
        $region139: #{resnet_forward.1} parent=99 // pred_region
          %807 = dma.done [#allocation19], 12288
        $region140: #{resnet_forward.1} parent=99 // pred_fallthru
          _
        // Predicated region
        $region141: #{resnet_forward.1} parent=99 // pred_check
          %p808 = pneg %p303
        $region142: #{resnet_forward.1} parent=99 // pred_check_branch
          %810 = sbr.rel (%p808) target = $region144
        $region143: #{resnet_forward.1} parent=99 // pred_region
          %811 = dma.done [#allocation19], 2048
        $region144: #{resnet_forward.1} parent=99 // pred_fallthru
          _
        // Predicated region
        $region145: #{resnet_forward.1} parent=99 // pred_check
          %p812 = pneg %p324
        $region146: #{resnet_forward.1} parent=99 // pred_check_branch
          %814 = sbr.rel (%p812) target = $region148
        $region147: #{resnet_forward.1} parent=99 // pred_region
          %815 = dma.done [#allocation22], 24576
        $region148: #{resnet_forward.1} parent=99 // pred_fallthru
          _
        // Predicated region
        $region149: #{resnet_forward.1} parent=99 // pred_check
          %p816 = pneg %p345
        $region150: #{resnet_forward.1} parent=99 // pred_check_branch
          %818 = sbr.rel (%p816) target = $region152
        $region151: #{resnet_forward.1} parent=99 // pred_region
          %819 = dma.done [#allocation22], 49152
        $region152: #{resnet_forward.1} parent=99 // pred_fallthru
          _
        // Predicated region
        $region153: #{resnet_forward.1} parent=99 // pred_check
          %p820 = pneg %p366
        $region154: #{resnet_forward.1} parent=99 // pred_check_branch
          %822 = sbr.rel (%p820) target = $region156
        $region155: #{resnet_forward.1} parent=99 // pred_region
          %823 = dma.done [#allocation25], 8192
        $region156: #{resnet_forward.1} parent=99 // pred_fallthru
          _
        // Predicated region
        $region157: #{resnet_forward.1} parent=99 // pred_check
          %p824 = pneg %p387
        $region158: #{resnet_forward.1} parent=99 // pred_check_branch
          %826 = sbr.rel (%p824) target = $region160
        $region159: #{resnet_forward.1} parent=99 // pred_region
          %827 = dma.done [#allocation25], 128
        $region160: #{resnet_forward.1} parent=99 // pred_fallthru
          _
        // Predicated region
        $region161: #{resnet_forward.1} parent=99 // pred_check
          %p828 = pneg %p408
        $region162: #{resnet_forward.1} parent=99 // pred_check_branch
          %830 = sbr.rel (%p828) target = $region164
        $region163: #{resnet_forward.1} parent=99 // pred_region
          %831 = dma.done [#allocation28], 16
        $region164: #{resnet_forward.1} parent=99 // pred_fallthru
          _
        // Predicated region
        $region165: #{resnet_forward.1} parent=99 // pred_check
          %p832 = pneg %p429
        $region166: #{resnet_forward.1} parent=99 // pred_check_branch
          %834 = sbr.rel (%p832) target = $region168
        $region167: #{resnet_forward.1} parent=99 // pred_region
          %835 = dma.done [#allocation28], 256
        $region168: #{resnet_forward.1} parent=99 // pred_fallthru
          _
        // Predicated region
        $region169: #{resnet_forward.1} parent=99 // pred_check
          %p836 = pneg %p471
        $region170: #{resnet_forward.1} parent=99 // pred_check_branch
          %838 = sbr.rel (%p836) target = $region172
        $region171: #{resnet_forward.1} parent=99 // pred_region
          %839 = dma.done [#allocation31], 16
        $region172: #{resnet_forward.1} parent=99 // pred_fallthru
          _
        %p840 = scmp.lt.s32.totalorder %s46, 1
        %s841 = scalar_select %p840, %s46, 1
        %s842 = smul.addr %s841, 10
        %s843 = smul.addr %s842, 8
        %s844 = scalar_lea.vmem %s0, %s843
        %p845 = pneg %p67
        %p846 = pneg %p64
        %s847 = sand.u32 %s80, 1
        %s848 = scalar_lea.sflag [#allocation4], %s847
        %s849 = sand.u32 %s80, 1
        %s850 = scalar_lea.vmem [#allocation3], %s849
        %p851 = pneg %p93
        %p852 = pneg %p90
        %p853 = pneg %p114
        %p854 = pneg %p111
        %p855 = pneg %p135
        %p856 = pneg %p132
        %p857 = pneg %p156
        %p858 = pneg %p153
        %p859 = pneg %p177
        %p860 = pneg %p174
        %p861 = pneg %p198
        %p862 = pneg %p195
        %p863 = pneg %p219
        %p864 = pneg %p216
        %p865 = pneg %p240
        %p866 = pneg %p237
        %p867 = pneg %p261
        %p868 = pneg %p258
        %p869 = pneg %p282
        %p870 = pneg %p279
        %p871 = pneg %p303
        %p872 = pneg %p300
        %p873 = pneg %p324
        %p874 = pneg %p321
        %p875 = pneg %p345
        %p876 = pneg %p342
        %p877 = pneg %p366
        %p878 = pneg %p363
        %p879 = pneg %p387
        %p880 = pneg %p384
        %p881 = pneg %p408
        %p882 = pneg %p405
        %p883 = pneg %p429
        %p884 = pneg %p426
        %p885 = pneg %p450
        %p886 = pneg %p447
        %p887 = pneg %p471
        %p888 = pneg %p468
        %p889 = pneg %p497
        %p890 = pneg %p494
        %s891 = sand.u32 %s484, 1
        %s892 = scalar_lea.sflag [#allocation5], %s891
        %s893 = sand.u32 %s484, 1
        %s894 = scalar_lea.vmem [#allocation32], %s893
        %p895 = scmp.lt.s32.totalorder %s46, 1
        %s896 = scalar_select %p895, %s46, 1
        %s897 = smul.addr %s896, 10
        %s898 = smul.addr %s897, 8
        %s899 = scalar_lea.vmem %s0, %s898
        %v901 = vld [vmem:[%s899] sm:$0xff]
        %v902 = vld [vmem:[%s899 + $0x8] sm:$0xff]
        %v903 = vld [vmem:[%s899 + $0x10] sm:$0xff]
        %v904 = vld [vmem:[%s899 + $0x18] sm:$0xff]
        %v905 = vld [vmem:[%s899 + $0x20] sm:$0xff]
        %v906 = vld [vmem:[%s899 + $0x28] sm:$0xff]
        %v907 = vld [vmem:[%s899 + $0x30] sm:$0xff]
        %v908 = vld [vmem:[%s899 + $0x38] sm:$0x7f]
        %v909 = vld [vmem:[#allocation6] sm:$0x1]
        %911 = vset.pattern.permute.xlu0 0
        %912 = vperm.xlu0 %911, %v901
        %v913 = vpop.permute.xlu0 %912
        %916 = vset.pattern.permute.xlu0 0
        %917 = vperm.xlu0 %916, %v902
        %v918 = vpop.permute.xlu0 %917
        %921 = vset.pattern.permute.xlu0 0
        %922 = vperm.xlu0 %921, %v903
        %v923 = vpop.permute.xlu0 %922
        %926 = vset.pattern.permute.xlu0 0
        %927 = vperm.xlu0 %926, %v904
        %v928 = vpop.permute.xlu0 %927
        %931 = vset.pattern.permute.xlu0 0
        %932 = vperm.xlu0 %931, %v905
        %v933 = vpop.permute.xlu0 %932
        %936 = vset.pattern.permute.xlu0 0
        %937 = vperm.xlu0 %936, %v906
        %v938 = vpop.permute.xlu0 %937
        %941 = vset.pattern.permute.xlu0 0
        %942 = vperm.xlu0 %941, %v907
        %v943 = vpop.permute.xlu0 %942
        %946 = vset.pattern.permute.xlu0 0
        %947 = vperm.xlu0 %946, %v908
        %v948 = vpop.permute.xlu0 %947
        %v951 = vlaneseq
        %v952 = vshrl.u32 %v951, 7
        %v953 = vsub.s32 0, %v952
        %v954 = vrot.slane %v909, %v953
        %v956 = vmul.f32 %v913, %v954
        %v957 = vmul.f32 %v918, %v954
        %v958 = vmul.f32 %v923, %v954
        %v959 = vmul.f32 %v928, %v954
        %v960 = vmul.f32 %v933, %v954
        %v961 = vmul.f32 %v938, %v954
        %v962 = vmul.f32 %v943, %v954
        %v963 = vmul.f32 %v948, %v954
        %v964 = vadd.f32 %v956, 0.0
        %v965 = vadd.f32 %v957, 0.0
        %v966 = vadd.f32 %v958, 0.0
        %v967 = vadd.f32 %v959, 0.0
        %v968 = vadd.f32 %v960, 0.0
        %v969 = vadd.f32 %v961, 0.0
        %v970 = vadd.f32 %v962, 0.0
        %v971 = vadd.f32 %v963, 0.0
        %v972 = vld [vmem:[%s899 + $0x1] sm:$0xff]
        %v973 = vld [vmem:[%s899 + $0x9] sm:$0xff]
        %v974 = vld [vmem:[%s899 + $0x11] sm:$0xff]
        %v975 = vld [vmem:[%s899 + $0x19] sm:$0xff]
        %v976 = vld [vmem:[%s899 + $0x21] sm:$0xff]
        %v977 = vld [vmem:[%s899 + $0x29] sm:$0xff]
        %v978 = vld [vmem:[%s899 + $0x31] sm:$0xff]
        %v979 = vld [vmem:[%s899 + $0x39] sm:$0x7f]
        %s980 = scalar_lea.vmem [#allocation6], 1
        %v981 = vld [vmem:[%s980] sm:$0x1]
        %983 = vset.pattern.permute.xlu0 0
        %984 = vperm.xlu0 %983, %v972
        %v985 = vpop.permute.xlu0 %984
        %988 = vset.pattern.permute.xlu0 0
        %989 = vperm.xlu0 %988, %v973
        %v990 = vpop.permute.xlu0 %989
        %993 = vset.pattern.permute.xlu0 0
        %994 = vperm.xlu0 %993, %v974
        %v995 = vpop.permute.xlu0 %994
        %998 = vset.pattern.permute.xlu0 0
        %999 = vperm.xlu0 %998, %v975
        %v1000 = vpop.permute.xlu0 %999
        %1003 = vset.pattern.permute.xlu0 0
        %1004 = vperm.xlu0 %1003, %v976
        %v1005 = vpop.permute.xlu0 %1004
        %1008 = vset.pattern.permute.xlu0 0
        %1009 = vperm.xlu0 %1008, %v977
        %v1010 = vpop.permute.xlu0 %1009
        %1013 = vset.pattern.permute.xlu0 0
        %1014 = vperm.xlu0 %1013, %v978
        %v1015 = vpop.permute.xlu0 %1014
        %1018 = vset.pattern.permute.xlu0 0
        %1019 = vperm.xlu0 %1018, %v979
        %v1020 = vpop.permute.xlu0 %1019
        %v1023 = vlaneseq
        %v1024 = vshrl.u32 %v1023, 7
        %v1025 = vsub.s32 0, %v1024
        %v1026 = vrot.slane %v981, %v1025
        %v1028 = vmul.f32 %v985, %v1026
        %v1029 = vmul.f32 %v990, %v1026
        %v1030 = vmul.f32 %v995, %v1026
        %v1031 = vmul.f32 %v1000, %v1026
        %v1032 = vmul.f32 %v1005, %v1026
        %v1033 = vmul.f32 %v1010, %v1026
        %v1034 = vmul.f32 %v1015, %v1026
        %v1035 = vmul.f32 %v1020, %v1026
        %v1036 = vadd.f32 %v964, %v1028
        %v1037 = vadd.f32 %v965, %v1029
        %v1038 = vadd.f32 %v966, %v1030
        %v1039 = vadd.f32 %v967, %v1031
        %v1040 = vadd.f32 %v968, %v1032
        %v1041 = vadd.f32 %v969, %v1033
        %v1042 = vadd.f32 %v970, %v1034
        %v1043 = vadd.f32 %v971, %v1035
        %v1044 = vld [vmem:[%s899 + $0x2] sm:$0xff]
        %v1045 = vld [vmem:[%s899 + $0xa] sm:$0xff]
        %v1046 = vld [vmem:[%s899 + $0x12] sm:$0xff]
        %v1047 = vld [vmem:[%s899 + $0x1a] sm:$0xff]
        %v1048 = vld [vmem:[%s899 + $0x22] sm:$0xff]
        %v1049 = vld [vmem:[%s899 + $0x2a] sm:$0xff]
        %v1050 = vld [vmem:[%s899 + $0x32] sm:$0xff]
        %v1051 = vld [vmem:[%s899 + $0x3a] sm:$0x7f]
        %s1052 = scalar_lea.vmem [#allocation6], 2
        %v1053 = vld [vmem:[%s1052] sm:$0x1]
        %1055 = vset.pattern.permute.xlu0 0
        %1056 = vperm.xlu0 %1055, %v1044
        %v1057 = vpop.permute.xlu0 %1056
        %1060 = vset.pattern.permute.xlu0 0
        %1061 = vperm.xlu0 %1060, %v1045
        %v1062 = vpop.permute.xlu0 %1061
        %1065 = vset.pattern.permute.xlu0 0
        %1066 = vperm.xlu0 %1065, %v1046
        %v1067 = vpop.permute.xlu0 %1066
        %1070 = vset.pattern.permute.xlu0 0
        %1071 = vperm.xlu0 %1070, %v1047
        %v1072 = vpop.permute.xlu0 %1071
        %1075 = vset.pattern.permute.xlu0 0
        %1076 = vperm.xlu0 %1075, %v1048
        %v1077 = vpop.permute.xlu0 %1076
        %1080 = vset.pattern.permute.xlu0 0
        %1081 = vperm.xlu0 %1080, %v1049
        %v1082 = vpop.permute.xlu0 %1081
        %1085 = vset.pattern.permute.xlu0 0
        %1086 = vperm.xlu0 %1085, %v1050
        %v1087 = vpop.permute.xlu0 %1086
        %1090 = vset.pattern.permute.xlu0 0
        %1091 = vperm.xlu0 %1090, %v1051
        %v1092 = vpop.permute.xlu0 %1091
        %v1095 = vlaneseq
        %v1096 = vshrl.u32 %v1095, 7
        %v1097 = vsub.s32 0, %v1096
        %v1098 = vrot.slane %v1053, %v1097
        %v1100 = vmul.f32 %v1057, %v1098
        %v1101 = vmul.f32 %v1062, %v1098
        %v1102 = vmul.f32 %v1067, %v1098
        %v1103 = vmul.f32 %v1072, %v1098
        %v1104 = vmul.f32 %v1077, %v1098
        %v1105 = vmul.f32 %v1082, %v1098
        %v1106 = vmul.f32 %v1087, %v1098
        %v1107 = vmul.f32 %v1092, %v1098
        %v1108 = vadd.f32 %v1036, %v1100
        %v1109 = vadd.f32 %v1037, %v1101
        %v1110 = vadd.f32 %v1038, %v1102
        %v1111 = vadd.f32 %v1039, %v1103
        %v1112 = vadd.f32 %v1040, %v1104
        %v1113 = vadd.f32 %v1041, %v1105
        %v1114 = vadd.f32 %v1042, %v1106
        %v1115 = vadd.f32 %v1043, %v1107
        %v1116 = vld [vmem:[%s899 + $0x3] sm:$0xff]
        %v1117 = vld [vmem:[%s899 + $0xb] sm:$0xff]
        %v1118 = vld [vmem:[%s899 + $0x13] sm:$0xff]
        %v1119 = vld [vmem:[%s899 + $0x1b] sm:$0xff]
        %v1120 = vld [vmem:[%s899 + $0x23] sm:$0xff]
        %v1121 = vld [vmem:[%s899 + $0x2b] sm:$0xff]
        %v1122 = vld [vmem:[%s899 + $0x33] sm:$0xff]
        %v1123 = vld [vmem:[%s899 + $0x3b] sm:$0x7f]
        %s1124 = scalar_lea.vmem [#allocation6], 3
        %v1125 = vld [vmem:[%s1124] sm:$0x1]
        %1127 = vset.pattern.permute.xlu0 0
        %1128 = vperm.xlu0 %1127, %v1116
        %v1129 = vpop.permute.xlu0 %1128
        %1132 = vset.pattern.permute.xlu0 0
        %1133 = vperm.xlu0 %1132, %v1117
        %v1134 = vpop.permute.xlu0 %1133
        %1137 = vset.pattern.permute.xlu0 0
        %1138 = vperm.xlu0 %1137, %v1118
        %v1139 = vpop.permute.xlu0 %1138
        %1142 = vset.pattern.permute.xlu0 0
        %1143 = vperm.xlu0 %1142, %v1119
        %v1144 = vpop.permute.xlu0 %1143
        %1147 = vset.pattern.permute.xlu0 0
        %1148 = vperm.xlu0 %1147, %v1120
        %v1149 = vpop.permute.xlu0 %1148
        %1152 = vset.pattern.permute.xlu0 0
        %1153 = vperm.xlu0 %1152, %v1121
        %v1154 = vpop.permute.xlu0 %1153
        %1157 = vset.pattern.permute.xlu0 0
        %1158 = vperm.xlu0 %1157, %v1122
        %v1159 = vpop.permute.xlu0 %1158
        %1162 = vset.pattern.permute.xlu0 0
        %1163 = vperm.xlu0 %1162, %v1123
        %v1164 = vpop.permute.xlu0 %1163
        %v1167 = vlaneseq
        %v1168 = vshrl.u32 %v1167, 7
        %v1169 = vsub.s32 0, %v1168
        %v1170 = vrot.slane %v1125, %v1169
        %v1172 = vmul.f32 %v1129, %v1170
        %v1173 = vmul.f32 %v1134, %v1170
        %v1174 = vmul.f32 %v1139, %v1170
        %v1175 = vmul.f32 %v1144, %v1170
        %v1176 = vmul.f32 %v1149, %v1170
        %v1177 = vmul.f32 %v1154, %v1170
        %v1178 = vmul.f32 %v1159, %v1170
        %v1179 = vmul.f32 %v1164, %v1170
        %v1180 = vadd.f32 %v1108, %v1172
        %v1181 = vadd.f32 %v1109, %v1173
        %v1182 = vadd.f32 %v1110, %v1174
        %v1183 = vadd.f32 %v1111, %v1175
        %v1184 = vadd.f32 %v1112, %v1176
        %v1185 = vadd.f32 %v1113, %v1177
        %v1186 = vadd.f32 %v1114, %v1178
        %v1187 = vadd.f32 %v1115, %v1179
        %v1188 = vld [vmem:[%s899 + $0x4] sm:$0xff]
        %v1189 = vld [vmem:[%s899 + $0xc] sm:$0xff]
        %v1190 = vld [vmem:[%s899 + $0x14] sm:$0xff]
        %v1191 = vld [vmem:[%s899 + $0x1c] sm:$0xff]
        %v1192 = vld [vmem:[%s899 + $0x24] sm:$0xff]
        %v1193 = vld [vmem:[%s899 + $0x2c] sm:$0xff]
        %v1194 = vld [vmem:[%s899 + $0x34] sm:$0xff]
        %v1195 = vld [vmem:[%s899 + $0x3c] sm:$0x7f]
        %s1196 = scalar_lea.vmem [#allocation6], 4
        %v1197 = vld [vmem:[%s1196] sm:$0x1]
        %1199 = vset.pattern.permute.xlu0 0
        %1200 = vperm.xlu0 %1199, %v1188
        %v1201 = vpop.permute.xlu0 %1200
        %1204 = vset.pattern.permute.xlu0 0
        %1205 = vperm.xlu0 %1204, %v1189
        %v1206 = vpop.permute.xlu0 %1205
        %1209 = vset.pattern.permute.xlu0 0
        %1210 = vperm.xlu0 %1209, %v1190
        %v1211 = vpop.permute.xlu0 %1210
        %1214 = vset.pattern.permute.xlu0 0
        %1215 = vperm.xlu0 %1214, %v1191
        %v1216 = vpop.permute.xlu0 %1215
        %1219 = vset.pattern.permute.xlu0 0
        %1220 = vperm.xlu0 %1219, %v1192
        %v1221 = vpop.permute.xlu0 %1220
        %1224 = vset.pattern.permute.xlu0 0
        %1225 = vperm.xlu0 %1224, %v1193
        %v1226 = vpop.permute.xlu0 %1225
        %1229 = vset.pattern.permute.xlu0 0
        %1230 = vperm.xlu0 %1229, %v1194
        %v1231 = vpop.permute.xlu0 %1230
        %1234 = vset.pattern.permute.xlu0 0
        %1235 = vperm.xlu0 %1234, %v1195
        %v1236 = vpop.permute.xlu0 %1235
        %v1239 = vlaneseq
        %v1240 = vshrl.u32 %v1239, 7
        %v1241 = vsub.s32 0, %v1240
        %v1242 = vrot.slane %v1197, %v1241
        %v1244 = vmul.f32 %v1201, %v1242
        %v1245 = vmul.f32 %v1206, %v1242
        %v1246 = vmul.f32 %v1211, %v1242
        %v1247 = vmul.f32 %v1216, %v1242
        %v1248 = vmul.f32 %v1221, %v1242
        %v1249 = vmul.f32 %v1226, %v1242
        %v1250 = vmul.f32 %v1231, %v1242
        %v1251 = vmul.f32 %v1236, %v1242
        %v1252 = vadd.f32 %v1180, %v1244
        %v1253 = vadd.f32 %v1181, %v1245
        %v1254 = vadd.f32 %v1182, %v1246
        %v1255 = vadd.f32 %v1183, %v1247
        %v1256 = vadd.f32 %v1184, %v1248
        %v1257 = vadd.f32 %v1185, %v1249
        %v1258 = vadd.f32 %v1186, %v1250
        %v1259 = vadd.f32 %v1187, %v1251
        %v1260 = vld [vmem:[%s899 + $0x5] sm:$0xff]
        %v1261 = vld [vmem:[%s899 + $0xd] sm:$0xff]
        %v1262 = vld [vmem:[%s899 + $0x15] sm:$0xff]
        %v1263 = vld [vmem:[%s899 + $0x1d] sm:$0xff]
        %v1264 = vld [vmem:[%s899 + $0x25] sm:$0xff]
        %v1265 = vld [vmem:[%s899 + $0x2d] sm:$0xff]
        %v1266 = vld [vmem:[%s899 + $0x35] sm:$0xff]
        %v1267 = vld [vmem:[%s899 + $0x3d] sm:$0x7f]
        %s1268 = scalar_lea.vmem [#allocation6], 5
        %v1269 = vld [vmem:[%s1268] sm:$0x1]
        %1271 = vset.pattern.permute.xlu0 0
        %1272 = vperm.xlu0 %1271, %v1260
        %v1273 = vpop.permute.xlu0 %1272
        %1276 = vset.pattern.permute.xlu0 0
        %1277 = vperm.xlu0 %1276, %v1261
        %v1278 = vpop.permute.xlu0 %1277
        %1281 = vset.pattern.permute.xlu0 0
        %1282 = vperm.xlu0 %1281, %v1262
        %v1283 = vpop.permute.xlu0 %1282
        %1286 = vset.pattern.permute.xlu0 0
        %1287 = vperm.xlu0 %1286, %v1263
        %v1288 = vpop.permute.xlu0 %1287
        %1291 = vset.pattern.permute.xlu0 0
        %1292 = vperm.xlu0 %1291, %v1264
        %v1293 = vpop.permute.xlu0 %1292
        %1296 = vset.pattern.permute.xlu0 0
        %1297 = vperm.xlu0 %1296, %v1265
        %v1298 = vpop.permute.xlu0 %1297
        %1301 = vset.pattern.permute.xlu0 0
        %1302 = vperm.xlu0 %1301, %v1266
        %v1303 = vpop.permute.xlu0 %1302
        %1306 = vset.pattern.permute.xlu0 0
        %1307 = vperm.xlu0 %1306, %v1267
        %v1308 = vpop.permute.xlu0 %1307
        %v1311 = vlaneseq
        %v1312 = vshrl.u32 %v1311, 7
        %v1313 = vsub.s32 0, %v1312
        %v1314 = vrot.slane %v1269, %v1313
        %v1316 = vmul.f32 %v1273, %v1314
        %v1317 = vmul.f32 %v1278, %v1314
        %v1318 = vmul.f32 %v1283, %v1314
        %v1319 = vmul.f32 %v1288, %v1314
        %v1320 = vmul.f32 %v1293, %v1314
        %v1321 = vmul.f32 %v1298, %v1314
        %v1322 = vmul.f32 %v1303, %v1314
        %v1323 = vmul.f32 %v1308, %v1314
        %v1324 = vadd.f32 %v1252, %v1316
        %v1325 = vadd.f32 %v1253, %v1317
        %v1326 = vadd.f32 %v1254, %v1318
        %v1327 = vadd.f32 %v1255, %v1319
        %v1328 = vadd.f32 %v1256, %v1320
        %v1329 = vadd.f32 %v1257, %v1321
        %v1330 = vadd.f32 %v1258, %v1322
        %v1331 = vadd.f32 %v1259, %v1323
        %v1332 = vld [vmem:[%s899 + $0x6] sm:$0xff]
        %v1333 = vld [vmem:[%s899 + $0xe] sm:$0xff]
        %v1334 = vld [vmem:[%s899 + $0x16] sm:$0xff]
        %v1335 = vld [vmem:[%s899 + $0x1e] sm:$0xff]
        %v1336 = vld [vmem:[%s899 + $0x26] sm:$0xff]
        %v1337 = vld [vmem:[%s899 + $0x2e] sm:$0xff]
        %v1338 = vld [vmem:[%s899 + $0x36] sm:$0xff]
        %v1339 = vld [vmem:[%s899 + $0x3e] sm:$0x7f]
        %s1340 = scalar_lea.vmem [#allocation6], 6
        %v1341 = vld [vmem:[%s1340] sm:$0x1]
        %1343 = vset.pattern.permute.xlu0 0
        %1344 = vperm.xlu0 %1343, %v1332
        %v1345 = vpop.permute.xlu0 %1344
        %1348 = vset.pattern.permute.xlu0 0
        %1349 = vperm.xlu0 %1348, %v1333
        %v1350 = vpop.permute.xlu0 %1349
        %1353 = vset.pattern.permute.xlu0 0
        %1354 = vperm.xlu0 %1353, %v1334
        %v1355 = vpop.permute.xlu0 %1354
        %1358 = vset.pattern.permute.xlu0 0
        %1359 = vperm.xlu0 %1358, %v1335
        %v1360 = vpop.permute.xlu0 %1359
        %1363 = vset.pattern.permute.xlu0 0
        %1364 = vperm.xlu0 %1363, %v1336
        %v1365 = vpop.permute.xlu0 %1364
        %1368 = vset.pattern.permute.xlu0 0
        %1369 = vperm.xlu0 %1368, %v1337
        %v1370 = vpop.permute.xlu0 %1369
        %1373 = vset.pattern.permute.xlu0 0
        %1374 = vperm.xlu0 %1373, %v1338
        %v1375 = vpop.permute.xlu0 %1374
        %1378 = vset.pattern.permute.xlu0 0
        %1379 = vperm.xlu0 %1378, %v1339
        %v1380 = vpop.permute.xlu0 %1379
        %v1383 = vlaneseq
        %v1384 = vshrl.u32 %v1383, 7
        %v1385 = vsub.s32 0, %v1384
        %v1386 = vrot.slane %v1341, %v1385
        %v1388 = vmul.f32 %v1345, %v1386
        %v1389 = vmul.f32 %v1350, %v1386
        %v1390 = vmul.f32 %v1355, %v1386
        %v1391 = vmul.f32 %v1360, %v1386
        %v1392 = vmul.f32 %v1365, %v1386
        %v1393 = vmul.f32 %v1370, %v1386
        %v1394 = vmul.f32 %v1375, %v1386
        %v1395 = vmul.f32 %v1380, %v1386
        %v1396 = vadd.f32 %v1324, %v1388
        %v1397 = vadd.f32 %v1325, %v1389
        %v1398 = vadd.f32 %v1326, %v1390
        %v1399 = vadd.f32 %v1327, %v1391
        %v1400 = vadd.f32 %v1328, %v1392
        %v1401 = vadd.f32 %v1329, %v1393
        %v1402 = vadd.f32 %v1330, %v1394
        %v1403 = vadd.f32 %v1331, %v1395
        %v1404 = vld [vmem:[%s899 + $0x7] sm:$0xff]
        %v1405 = vld [vmem:[%s899 + $0xf] sm:$0xff]
        %v1406 = vld [vmem:[%s899 + $0x17] sm:$0xff]
        %v1407 = vld [vmem:[%s899 + $0x1f] sm:$0xff]
        %v1408 = vld [vmem:[%s899 + $0x27] sm:$0xff]
        %v1409 = vld [vmem:[%s899 + $0x2f] sm:$0xff]
        %v1410 = vld [vmem:[%s899 + $0x37] sm:$0xff]
        %v1411 = vld [vmem:[%s899 + $0x3f] sm:$0x7f]
        %s1412 = scalar_lea.vmem [#allocation6], 7
        %v1413 = vld [vmem:[%s1412] sm:$0x1]
        %1415 = vset.pattern.permute.xlu0 0
        %1416 = vperm.xlu0 %1415, %v1404
        %v1417 = vpop.permute.xlu0 %1416
        %1420 = vset.pattern.permute.xlu0 0
        %1421 = vperm.xlu0 %1420, %v1405
        %v1422 = vpop.permute.xlu0 %1421
        %1425 = vset.pattern.permute.xlu0 0
        %1426 = vperm.xlu0 %1425, %v1406
        %v1427 = vpop.permute.xlu0 %1426
        %1430 = vset.pattern.permute.xlu0 0
        %1431 = vperm.xlu0 %1430, %v1407
        %v1432 = vpop.permute.xlu0 %1431
        %1435 = vset.pattern.permute.xlu0 0
        %1436 = vperm.xlu0 %1435, %v1408
        %v1437 = vpop.permute.xlu0 %1436
        %1440 = vset.pattern.permute.xlu0 0
        %1441 = vperm.xlu0 %1440, %v1409
        %v1442 = vpop.permute.xlu0 %1441
        %1445 = vset.pattern.permute.xlu0 0
        %1446 = vperm.xlu0 %1445, %v1410
        %v1447 = vpop.permute.xlu0 %1446
        %1450 = vset.pattern.permute.xlu0 0
        %1451 = vperm.xlu0 %1450, %v1411
        %v1452 = vpop.permute.xlu0 %1451
        %v1455 = vlaneseq
        %v1456 = vshrl.u32 %v1455, 7
        %v1457 = vsub.s32 0, %v1456
        %v1458 = vrot.slane %v1413, %v1457
        %v1460 = vmul.f32 %v1417, %v1458
        %v1461 = vmul.f32 %v1422, %v1458
        %v1462 = vmul.f32 %v1427, %v1458
        %v1463 = vmul.f32 %v1432, %v1458
        %v1464 = vmul.f32 %v1437, %v1458
        %v1465 = vmul.f32 %v1442, %v1458
        %v1466 = vmul.f32 %v1447, %v1458
        %v1467 = vmul.f32 %v1452, %v1458
        %v1468 = vadd.f32 %v1396, %v1460
        %v1469 = vadd.f32 %v1397, %v1461
        %v1470 = vadd.f32 %v1398, %v1462
        %v1471 = vadd.f32 %v1399, %v1463
        %v1472 = vadd.f32 %v1400, %v1464
        %v1473 = vadd.f32 %v1401, %v1465
        %v1474 = vadd.f32 %v1402, %v1466
        %v1475 = vadd.f32 %v1403, %v1467
        %v1476 = vld [vmem:[%s899 + $0x8] sm:$0xff]
        %v1477 = vld [vmem:[%s899 + $0x10] sm:$0xff]
        %v1478 = vld [vmem:[%s899 + $0x18] sm:$0xff]
        %v1479 = vld [vmem:[%s899 + $0x20] sm:$0xff]
        %v1480 = vld [vmem:[%s899 + $0x28] sm:$0xff]
        %v1481 = vld [vmem:[%s899 + $0x30] sm:$0xff]
        %v1482 = vld [vmem:[%s899 + $0x38] sm:$0xff]
        %v1483 = vld [vmem:[%s899 + $0x40] sm:$0x7f]
        %s1484 = scalar_lea.vmem [#allocation6], 8
        %v1485 = vld [vmem:[%s1484] sm:$0x1]
        %1487 = vset.pattern.permute.xlu0 0
        %1488 = vperm.xlu0 %1487, %v1476
        %v1489 = vpop.permute.xlu0 %1488
        %1492 = vset.pattern.permute.xlu0 0
        %1493 = vperm.xlu0 %1492, %v1477
        %v1494 = vpop.permute.xlu0 %1493
        %1497 = vset.pattern.permute.xlu0 0
        %1498 = vperm.xlu0 %1497, %v1478
        %v1499 = vpop.permute.xlu0 %1498
        %1502 = vset.pattern.permute.xlu0 0
        %1503 = vperm.xlu0 %1502, %v1479
        %v1504 = vpop.permute.xlu0 %1503
        %1507 = vset.pattern.permute.xlu0 0
        %1508 = vperm.xlu0 %1507, %v1480
        %v1509 = vpop.permute.xlu0 %1508
        %1512 = vset.pattern.permute.xlu0 0
        %1513 = vperm.xlu0 %1512, %v1481
        %v1514 = vpop.permute.xlu0 %1513
        %1517 = vset.pattern.permute.xlu0 0
        %1518 = vperm.xlu0 %1517, %v1482
        %v1519 = vpop.permute.xlu0 %1518
        %1522 = vset.pattern.permute.xlu0 0
        %1523 = vperm.xlu0 %1522, %v1483
        %v1524 = vpop.permute.xlu0 %1523
        %v1527 = vlaneseq
        %v1528 = vshrl.u32 %v1527, 7
        %v1529 = vsub.s32 0, %v1528
        %v1530 = vrot.slane %v1485, %v1529
        %v1532 = vmul.f32 %v1489, %v1530
        %v1533 = vmul.f32 %v1494, %v1530
        %v1534 = vmul.f32 %v1499, %v1530
        %v1535 = vmul.f32 %v1504, %v1530
        %v1536 = vmul.f32 %v1509, %v1530
        %v1537 = vmul.f32 %v1514, %v1530
        %v1538 = vmul.f32 %v1519, %v1530
        %v1539 = vmul.f32 %v1524, %v1530
        %v1540 = vadd.f32 %v1468, %v1532
        %v1541 = vadd.f32 %v1469, %v1533
        %v1542 = vadd.f32 %v1470, %v1534
        %v1543 = vadd.f32 %v1471, %v1535
        %v1544 = vadd.f32 %v1472, %v1536
        %v1545 = vadd.f32 %v1473, %v1537
        %v1546 = vadd.f32 %v1474, %v1538
        %v1547 = vadd.f32 %v1475, %v1539
        %v1548 = vld [vmem:[%s899 + $0x9] sm:$0xff]
        %v1549 = vld [vmem:[%s899 + $0x11] sm:$0xff]
        %v1550 = vld [vmem:[%s899 + $0x19] sm:$0xff]
        %v1551 = vld [vmem:[%s899 + $0x21] sm:$0xff]
        %v1552 = vld [vmem:[%s899 + $0x29] sm:$0xff]
        %v1553 = vld [vmem:[%s899 + $0x31] sm:$0xff]
        %v1554 = vld [vmem:[%s899 + $0x39] sm:$0xff]
        %v1555 = vld [vmem:[%s899 + $0x41] sm:$0x7f]
        %s1556 = scalar_lea.vmem [#allocation6], 9
        %v1557 = vld [vmem:[%s1556] sm:$0x1]
        %1559 = vset.pattern.permute.xlu0 0
        %1560 = vperm.xlu0 %1559, %v1548
        %v1561 = vpop.permute.xlu0 %1560
        %1564 = vset.pattern.permute.xlu0 0
        %1565 = vperm.xlu0 %1564, %v1549
        %v1566 = vpop.permute.xlu0 %1565
        %1569 = vset.pattern.permute.xlu0 0
        %1570 = vperm.xlu0 %1569, %v1550
        %v1571 = vpop.permute.xlu0 %1570
        %1574 = vset.pattern.permute.xlu0 0
        %1575 = vperm.xlu0 %1574, %v1551
        %v1576 = vpop.permute.xlu0 %1575
        %1579 = vset.pattern.permute.xlu0 0
        %1580 = vperm.xlu0 %1579, %v1552
        %v1581 = vpop.permute.xlu0 %1580
        %1584 = vset.pattern.permute.xlu0 0
        %1585 = vperm.xlu0 %1584, %v1553
        %v1586 = vpop.permute.xlu0 %1585
        %1589 = vset.pattern.permute.xlu0 0
        %1590 = vperm.xlu0 %1589, %v1554
        %v1591 = vpop.permute.xlu0 %1590
        %1594 = vset.pattern.permute.xlu0 0
        %1595 = vperm.xlu0 %1594, %v1555
        %v1596 = vpop.permute.xlu0 %1595
        %v1599 = vlaneseq
        %v1600 = vshrl.u32 %v1599, 7
        %v1601 = vsub.s32 0, %v1600
        %v1602 = vrot.slane %v1557, %v1601
        %v1604 = vmul.f32 %v1561, %v1602
        %v1605 = vmul.f32 %v1566, %v1602
        %v1606 = vmul.f32 %v1571, %v1602
        %v1607 = vmul.f32 %v1576, %v1602
        %v1608 = vmul.f32 %v1581, %v1602
        %v1609 = vmul.f32 %v1586, %v1602
        %v1610 = vmul.f32 %v1591, %v1602
        %v1611 = vmul.f32 %v1596, %v1602
        %v1612 = vadd.f32 %v1540, %v1604
        %v1613 = vadd.f32 %v1541, %v1605
        %v1614 = vadd.f32 %v1542, %v1606
        %v1615 = vadd.f32 %v1543, %v1607
        %v1616 = vadd.f32 %v1544, %v1608
        %v1617 = vadd.f32 %v1545, %v1609
        %v1618 = vadd.f32 %v1546, %v1610
        %v1619 = vadd.f32 %v1547, %v1611
        %v1620 = vld [vmem:[%s899 + $0xa] sm:$0xff]
        %v1621 = vld [vmem:[%s899 + $0x12] sm:$0xff]
        %v1622 = vld [vmem:[%s899 + $0x1a] sm:$0xff]
        %v1623 = vld [vmem:[%s899 + $0x22] sm:$0xff]
        %v1624 = vld [vmem:[%s899 + $0x2a] sm:$0xff]
        %v1625 = vld [vmem:[%s899 + $0x32] sm:$0xff]
        %v1626 = vld [vmem:[%s899 + $0x3a] sm:$0xff]
        %v1627 = vld [vmem:[%s899 + $0x42] sm:$0x7f]
        %s1628 = scalar_lea.vmem [#allocation6], 10
        %v1629 = vld [vmem:[%s1628] sm:$0x1]
        %1631 = vset.pattern.permute.xlu0 0
        %1632 = vperm.xlu0 %1631, %v1620
        %v1633 = vpop.permute.xlu0 %1632
        %1636 = vset.pattern.permute.xlu0 0
        %1637 = vperm.xlu0 %1636, %v1621
        %v1638 = vpop.permute.xlu0 %1637
        %1641 = vset.pattern.permute.xlu0 0
        %1642 = vperm.xlu0 %1641, %v1622
        %v1643 = vpop.permute.xlu0 %1642
        %1646 = vset.pattern.permute.xlu0 0
        %1647 = vperm.xlu0 %1646, %v1623
        %v1648 = vpop.permute.xlu0 %1647
        %1651 = vset.pattern.permute.xlu0 0
        %1652 = vperm.xlu0 %1651, %v1624
        %v1653 = vpop.permute.xlu0 %1652
        %1656 = vset.pattern.permute.xlu0 0
        %1657 = vperm.xlu0 %1656, %v1625
        %v1658 = vpop.permute.xlu0 %1657
        %1661 = vset.pattern.permute.xlu0 0
        %1662 = vperm.xlu0 %1661, %v1626
        %v1663 = vpop.permute.xlu0 %1662
        %1666 = vset.pattern.permute.xlu0 0
        %1667 = vperm.xlu0 %1666, %v1627
        %v1668 = vpop.permute.xlu0 %1667
        %v1671 = vlaneseq
        %v1672 = vshrl.u32 %v1671, 7
        %v1673 = vsub.s32 0, %v1672
        %v1674 = vrot.slane %v1629, %v1673
        %v1676 = vmul.f32 %v1633, %v1674
        %v1677 = vmul.f32 %v1638, %v1674
        %v1678 = vmul.f32 %v1643, %v1674
        %v1679 = vmul.f32 %v1648, %v1674
        %v1680 = vmul.f32 %v1653, %v1674
        %v1681 = vmul.f32 %v1658, %v1674
        %v1682 = vmul.f32 %v1663, %v1674
        %v1683 = vmul.f32 %v1668, %v1674
        %v1684 = vadd.f32 %v1612, %v1676
        %v1685 = vadd.f32 %v1613, %v1677
        %v1686 = vadd.f32 %v1614, %v1678
        %v1687 = vadd.f32 %v1615, %v1679
        %v1688 = vadd.f32 %v1616, %v1680
        %v1689 = vadd.f32 %v1617, %v1681
        %v1690 = vadd.f32 %v1618, %v1682
        %v1691 = vadd.f32 %v1619, %v1683
        %v1692 = vld [vmem:[%s899 + $0xb] sm:$0xff]
        %v1693 = vld [vmem:[%s899 + $0x13] sm:$0xff]
        %v1694 = vld [vmem:[%s899 + $0x1b] sm:$0xff]
        %v1695 = vld [vmem:[%s899 + $0x23] sm:$0xff]
        %v1696 = vld [vmem:[%s899 + $0x2b] sm:$0xff]
        %v1697 = vld [vmem:[%s899 + $0x33] sm:$0xff]
        %v1698 = vld [vmem:[%s899 + $0x3b] sm:$0xff]
        %v1699 = vld [vmem:[%s899 + $0x43] sm:$0x7f]
        %s1700 = scalar_lea.vmem [#allocation6], 11
        %v1701 = vld [vmem:[%s1700] sm:$0x1]
        %1703 = vset.pattern.permute.xlu0 0
        %1704 = vperm.xlu0 %1703, %v1692
        %v1705 = vpop.permute.xlu0 %1704
        %1708 = vset.pattern.permute.xlu0 0
        %1709 = vperm.xlu0 %1708, %v1693
        %v1710 = vpop.permute.xlu0 %1709
        %1713 = vset.pattern.permute.xlu0 0
        %1714 = vperm.xlu0 %1713, %v1694
        %v1715 = vpop.permute.xlu0 %1714
        %1718 = vset.pattern.permute.xlu0 0
        %1719 = vperm.xlu0 %1718, %v1695
        %v1720 = vpop.permute.xlu0 %1719
        %1723 = vset.pattern.permute.xlu0 0
        %1724 = vperm.xlu0 %1723, %v1696
        %v1725 = vpop.permute.xlu0 %1724
        %1728 = vset.pattern.permute.xlu0 0
        %1729 = vperm.xlu0 %1728, %v1697
        %v1730 = vpop.permute.xlu0 %1729
        %1733 = vset.pattern.permute.xlu0 0
        %1734 = vperm.xlu0 %1733, %v1698
        %v1735 = vpop.permute.xlu0 %1734
        %1738 = vset.pattern.permute.xlu0 0
        %1739 = vperm.xlu0 %1738, %v1699
        %v1740 = vpop.permute.xlu0 %1739
        %v1743 = vlaneseq
        %v1744 = vshrl.u32 %v1743, 7
        %v1745 = vsub.s32 0, %v1744
        %v1746 = vrot.slane %v1701, %v1745
        %v1748 = vmul.f32 %v1705, %v1746
        %v1749 = vmul.f32 %v1710, %v1746
        %v1750 = vmul.f32 %v1715, %v1746
        %v1751 = vmul.f32 %v1720, %v1746
        %v1752 = vmul.f32 %v1725, %v1746
        %v1753 = vmul.f32 %v1730, %v1746
        %v1754 = vmul.f32 %v1735, %v1746
        %v1755 = vmul.f32 %v1740, %v1746
        %v1756 = vadd.f32 %v1684, %v1748
        %v1757 = vadd.f32 %v1685, %v1749
        %v1758 = vadd.f32 %v1686, %v1750
        %v1759 = vadd.f32 %v1687, %v1751
        %v1760 = vadd.f32 %v1688, %v1752
        %v1761 = vadd.f32 %v1689, %v1753
        %v1762 = vadd.f32 %v1690, %v1754
        %v1763 = vadd.f32 %v1691, %v1755
        %v1764 = vld [vmem:[%s899 + $0xc] sm:$0xff]
        %v1765 = vld [vmem:[%s899 + $0x14] sm:$0xff]
        %v1766 = vld [vmem:[%s899 + $0x1c] sm:$0xff]
        %v1767 = vld [vmem:[%s899 + $0x24] sm:$0xff]
        %v1768 = vld [vmem:[%s899 + $0x2c] sm:$0xff]
        %v1769 = vld [vmem:[%s899 + $0x34] sm:$0xff]
        %v1770 = vld [vmem:[%s899 + $0x3c] sm:$0xff]
        %v1771 = vld [vmem:[%s899 + $0x44] sm:$0x7f]
        %s1772 = scalar_lea.vmem [#allocation6], 12
        %v1773 = vld [vmem:[%s1772] sm:$0x1]
        %1775 = vset.pattern.permute.xlu0 0
        %1776 = vperm.xlu0 %1775, %v1764
        %v1777 = vpop.permute.xlu0 %1776
        %1780 = vset.pattern.permute.xlu0 0
        %1781 = vperm.xlu0 %1780, %v1765
        %v1782 = vpop.permute.xlu0 %1781
        %1785 = vset.pattern.permute.xlu0 0
        %1786 = vperm.xlu0 %1785, %v1766
        %v1787 = vpop.permute.xlu0 %1786
        %1790 = vset.pattern.permute.xlu0 0
        %1791 = vperm.xlu0 %1790, %v1767
        %v1792 = vpop.permute.xlu0 %1791
        %1795 = vset.pattern.permute.xlu0 0
        %1796 = vperm.xlu0 %1795, %v1768
        %v1797 = vpop.permute.xlu0 %1796
        %1800 = vset.pattern.permute.xlu0 0
        %1801 = vperm.xlu0 %1800, %v1769
        %v1802 = vpop.permute.xlu0 %1801
        %1805 = vset.pattern.permute.xlu0 0
        %1806 = vperm.xlu0 %1805, %v1770
        %v1807 = vpop.permute.xlu0 %1806
        %1810 = vset.pattern.permute.xlu0 0
        %1811 = vperm.xlu0 %1810, %v1771
        %v1812 = vpop.permute.xlu0 %1811
        %v1815 = vlaneseq
        %v1816 = vshrl.u32 %v1815, 7
        %v1817 = vsub.s32 0, %v1816
        %v1818 = vrot.slane %v1773, %v1817
        %v1820 = vmul.f32 %v1777, %v1818
        %v1821 = vmul.f32 %v1782, %v1818
        %v1822 = vmul.f32 %v1787, %v1818
        %v1823 = vmul.f32 %v1792, %v1818
        %v1824 = vmul.f32 %v1797, %v1818
        %v1825 = vmul.f32 %v1802, %v1818
        %v1826 = vmul.f32 %v1807, %v1818
        %v1827 = vmul.f32 %v1812, %v1818
        %v1828 = vadd.f32 %v1756, %v1820
        %v1829 = vadd.f32 %v1757, %v1821
        %v1830 = vadd.f32 %v1758, %v1822
        %v1831 = vadd.f32 %v1759, %v1823
        %v1832 = vadd.f32 %v1760, %v1824
        %v1833 = vadd.f32 %v1761, %v1825
        %v1834 = vadd.f32 %v1762, %v1826
        %v1835 = vadd.f32 %v1763, %v1827
        %v1836 = vld [vmem:[%s899 + $0xd] sm:$0xff]
        %v1837 = vld [vmem:[%s899 + $0x15] sm:$0xff]
        %v1838 = vld [vmem:[%s899 + $0x1d] sm:$0xff]
        %v1839 = vld [vmem:[%s899 + $0x25] sm:$0xff]
        %v1840 = vld [vmem:[%s899 + $0x2d] sm:$0xff]
        %v1841 = vld [vmem:[%s899 + $0x35] sm:$0xff]
        %v1842 = vld [vmem:[%s899 + $0x3d] sm:$0xff]
        %v1843 = vld [vmem:[%s899 + $0x45] sm:$0x7f]
        %s1844 = scalar_lea.vmem [#allocation6], 13
        %v1845 = vld [vmem:[%s1844] sm:$0x1]
        %1847 = vset.pattern.permute.xlu0 0
        %1848 = vperm.xlu0 %1847, %v1836
        %v1849 = vpop.permute.xlu0 %1848
        %1852 = vset.pattern.permute.xlu0 0
        %1853 = vperm.xlu0 %1852, %v1837
        %v1854 = vpop.permute.xlu0 %1853
        %1857 = vset.pattern.permute.xlu0 0
        %1858 = vperm.xlu0 %1857, %v1838
        %v1859 = vpop.permute.xlu0 %1858
        %1862 = vset.pattern.permute.xlu0 0
        %1863 = vperm.xlu0 %1862, %v1839
        %v1864 = vpop.permute.xlu0 %1863
        %1867 = vset.pattern.permute.xlu0 0
        %1868 = vperm.xlu0 %1867, %v1840
        %v1869 = vpop.permute.xlu0 %1868
        %1872 = vset.pattern.permute.xlu0 0
        %1873 = vperm.xlu0 %1872, %v1841
        %v1874 = vpop.permute.xlu0 %1873
        %1877 = vset.pattern.permute.xlu0 0
        %1878 = vperm.xlu0 %1877, %v1842
        %v1879 = vpop.permute.xlu0 %1878
        %1882 = vset.pattern.permute.xlu0 0
        %1883 = vperm.xlu0 %1882, %v1843
        %v1884 = vpop.permute.xlu0 %1883
        %v1887 = vlaneseq
        %v1888 = vshrl.u32 %v1887, 7
        %v1889 = vsub.s32 0, %v1888
        %v1890 = vrot.slane %v1845, %v1889
        %v1892 = vmul.f32 %v1849, %v1890
        %v1893 = vmul.f32 %v1854, %v1890
        %v1894 = vmul.f32 %v1859, %v1890
        %v1895 = vmul.f32 %v1864, %v1890
        %v1896 = vmul.f32 %v1869, %v1890
        %v1897 = vmul.f32 %v1874, %v1890
        %v1898 = vmul.f32 %v1879, %v1890
        %v1899 = vmul.f32 %v1884, %v1890
        %v1900 = vadd.f32 %v1828, %v1892
        %v1901 = vadd.f32 %v1829, %v1893
        %v1902 = vadd.f32 %v1830, %v1894
        %v1903 = vadd.f32 %v1831, %v1895
        %v1904 = vadd.f32 %v1832, %v1896
        %v1905 = vadd.f32 %v1833, %v1897
        %v1906 = vadd.f32 %v1834, %v1898
        %v1907 = vadd.f32 %v1835, %v1899
        %v1908 = vld [vmem:[%s899 + $0xe] sm:$0xff]
        %v1909 = vld [vmem:[%s899 + $0x16] sm:$0xff]
        %v1910 = vld [vmem:[%s899 + $0x1e] sm:$0xff]
        %v1911 = vld [vmem:[%s899 + $0x26] sm:$0xff]
        %v1912 = vld [vmem:[%s899 + $0x2e] sm:$0xff]
        %v1913 = vld [vmem:[%s899 + $0x36] sm:$0xff]
        %v1914 = vld [vmem:[%s899 + $0x3e] sm:$0xff]
        %v1915 = vld [vmem:[%s899 + $0x46] sm:$0x7f]
        %s1916 = scalar_lea.vmem [#allocation6], 14
        %v1917 = vld [vmem:[%s1916] sm:$0x1]
        %1919 = vset.pattern.permute.xlu0 0
        %1920 = vperm.xlu0 %1919, %v1908
        %v1921 = vpop.permute.xlu0 %1920
        %1924 = vset.pattern.permute.xlu0 0
        %1925 = vperm.xlu0 %1924, %v1909
        %v1926 = vpop.permute.xlu0 %1925
        %1929 = vset.pattern.permute.xlu0 0
        %1930 = vperm.xlu0 %1929, %v1910
        %v1931 = vpop.permute.xlu0 %1930
        %1934 = vset.pattern.permute.xlu0 0
        %1935 = vperm.xlu0 %1934, %v1911
        %v1936 = vpop.permute.xlu0 %1935
        %1939 = vset.pattern.permute.xlu0 0
        %1940 = vperm.xlu0 %1939, %v1912
        %v1941 = vpop.permute.xlu0 %1940
        %1944 = vset.pattern.permute.xlu0 0
        %1945 = vperm.xlu0 %1944, %v1913
        %v1946 = vpop.permute.xlu0 %1945
        %1949 = vset.pattern.permute.xlu0 0
        %1950 = vperm.xlu0 %1949, %v1914
        %v1951 = vpop.permute.xlu0 %1950
        %1954 = vset.pattern.permute.xlu0 0
        %1955 = vperm.xlu0 %1954, %v1915
        %v1956 = vpop.permute.xlu0 %1955
        %v1959 = vlaneseq
        %v1960 = vshrl.u32 %v1959, 7
        %v1961 = vsub.s32 0, %v1960
        %v1962 = vrot.slane %v1917, %v1961
        %v1964 = vmul.f32 %v1921, %v1962
        %v1965 = vmul.f32 %v1926, %v1962
        %v1966 = vmul.f32 %v1931, %v1962
        %v1967 = vmul.f32 %v1936, %v1962
        %v1968 = vmul.f32 %v1941, %v1962
        %v1969 = vmul.f32 %v1946, %v1962
        %v1970 = vmul.f32 %v1951, %v1962
        %v1971 = vmul.f32 %v1956, %v1962
        %v1972 = vadd.f32 %v1900, %v1964
        %v1973 = vadd.f32 %v1901, %v1965
        %v1974 = vadd.f32 %v1902, %v1966
        %v1975 = vadd.f32 %v1903, %v1967
        %v1976 = vadd.f32 %v1904, %v1968
        %v1977 = vadd.f32 %v1905, %v1969
        %v1978 = vadd.f32 %v1906, %v1970
        %v1979 = vadd.f32 %v1907, %v1971
        %v1980 = vld [vmem:[#allocation8] sm:$0x1]
        %v1982 = vlaneseq
        %v1983 = vshrl.u32 %v1982, 7
        %v1984 = vsub.s32 0, %v1983
        %v1985 = vrot.slane %v1980, %v1984
        %v1987 = vadd.f32 %v1972, %v1985
        %v1988 = vadd.f32 %v1973, %v1985
        %v1989 = vadd.f32 %v1974, %v1985
        %v1990 = vadd.f32 %v1975, %v1985
        %v1991 = vadd.f32 %v1976, %v1985
        %v1992 = vadd.f32 %v1977, %v1985
        %v1993 = vadd.f32 %v1978, %v1985
        %v1994 = vadd.f32 %v1979, %v1985
        %v1995 = vmax.f32 %v1987, 0.0
        %v1996 = vmax.f32 %v1988, 0.0
        %v1997 = vmax.f32 %v1989, 0.0
        %v1998 = vmax.f32 %v1990, 0.0
        %v1999 = vmax.f32 %v1991, 0.0
        %v2000 = vmax.f32 %v1992, 0.0
        %v2001 = vmax.f32 %v1993, 0.0
        %v2002 = vmax.f32 %v1994, 0.0
        %v2003 = vlaneseq
        %v2004 = vshrl.u32 %v2003, 7
        %v2005 = vadd.s32 %v2004, 8
        %v2006 = vadd.s32 %v2004, 16
        %v2007 = vadd.s32 %v2004, 24
        %v2008 = vlaneseq
        %v2009 = vand.u32 %v2008, 127
        %v2010 = vmul.u32 %v2004, 2
        %v2011 = vmul.u32 %v2005, 2
        %v2012 = vmul.u32 %v2006, 2
        %v2013 = vmul.u32 %v2007, 2
        %vm2014 = vcmp.eq.s32.totalorder %v2009, %v2010
        %vm2015 = vcmp.eq.s32.totalorder %v2009, %v2011
        %vm2016 = vcmp.eq.s32.totalorder %v2009, %v2012
        %vm2017 = vcmp.eq.s32.totalorder %v2009, %v2013
        %v2018 = vsel %vm2014, 1, 0
        %v2019 = vsel %vm2015, 1, 0
        %v2020 = vsel %vm2016, 1, 0
        %v2021 = vsel %vm2017, 1, 0
        %v2022 = vcvt.s32.f32 %v2018
        %v2023 = vcvt.s32.f32 %v2019
        %v2024 = vcvt.s32.f32 %v2020
        %v2025 = vcvt.s32.f32 %v2021
        %vm2026 = vcmask 515072
        %v2028 = vsel %vm2026, %v2022, 0
        %v2031 = vsel %vm2026, %v2023, 0
        %v2034 = vsel %vm2026, %v2024, 0
        %v2037 = vsel %vm2026, %v2025, 0
        %vm2039 = vcmask 1046528
        %v2041 = vsel %vm2039, %v2002, 0
        %2043 = vmatprep.subr.mxu0 0.0
        %2044 = vmatpush1.msra.mxu0 %v1995
        %2045 = vmatprep.subr.mxu0 0.0
        %2046 = vmatpush1.msra.mxu0 %v1996
        %2047 = vmatprep.subr.mxu0 0.0
        %2048 = vmatpush1.msra.mxu0 %v1997
        %2049 = vmatprep.subr.mxu0 0.0
        %2050 = vmatpush1.msra.mxu0 %v1998
        %2051 = vmatprep.subr.mxu0 0.0
        %2052 = vmatpush1.msra.mxu0 %v1999
        %2053 = vmatprep.subr.mxu0 0.0
        %2054 = vmatpush1.msra.mxu0 %v2000
        %2055 = vmatprep.subr.mxu0 0.0
        %2056 = vmatpush1.msra.mxu0 %v2001
        %2057 = vmatprep.subr.mxu0 0.0
        %2058 = vmatpush1.msra.mxu0 %v2041
        %2059 = vmatprep.subr.mxu0 0.0
        %2060 = vmatpush1.msra.mxu0 0.0
        %2061 = vmatprep.subr.mxu0 0.0
        %2062 = vmatpush1.msra.mxu0 0.0
        %2063 = vmatprep.subr.mxu0 0.0
        %2064 = vmatpush1.msra.mxu0 0.0
        %2065 = vmatprep.subr.mxu0 0.0
        %2066 = vmatpush1.msra.mxu0 0.0
        %2067 = vmatprep.subr.mxu0 0.0
        %2068 = vmatpush1.msra.mxu0 0.0
        %2069 = vmatprep.subr.mxu0 0.0
        %2070 = vmatpush1.msra.mxu0 0.0
        %2071 = vmatprep.subr.mxu0 0.0
        %2072 = vmatpush1.msra.mxu0 0.0
        %2073 = vmatprep.subr.mxu0 0.0
        %2074 = vmatpush1.msra.mxu0 0.0
        %2075 = vmatprep.subr.mxu0 0.0
        %2076 = vmatpush1.msra.mxu0 0.0
        %2077 = vmatprep.subr.mxu0 0.0
        %2078 = vmatpush1.msra.mxu0 0.0
        %2079 = vmatprep.subr.mxu0 0.0
        %2080 = vmatpush1.msra.mxu0 0.0
        %2081 = vmatprep.subr.mxu0 0.0
        %2082 = vmatpush1.msra.mxu0 0.0
        %2083 = vmatprep.subr.mxu0 0.0
        %2084 = vmatpush1.msra.mxu0 0.0
        %2085 = vmatprep.subr.mxu0 0.0
        %2086 = vmatpush1.msra.mxu0 0.0
        %2087 = vmatprep.subr.mxu0 0.0
        %2088 = vmatpush1.msra.mxu0 0.0
        %2089 = vmatprep.subr.mxu0 0.0
        %2090 = vmatpush1.msra.mxu0 0.0
        %2091 = vmatprep.subr.mxu0 0.0
        %2092 = vmatpush1.msra.mxu0 0.0
        %2093 = vmatprep.subr.mxu0 0.0
        %2094 = vmatpush1.msra.mxu0 0.0
        %2095 = vmatprep.subr.mxu0 0.0
        %2096 = vmatpush1.msra.mxu0 0.0
        %2097 = vmatprep.subr.mxu0 0.0
        %2098 = vmatpush1.msra.mxu0 0.0
        %2099 = vmatprep.subr.mxu0 0.0
        %2100 = vmatpush1.msra.mxu0 0.0
        %2101 = vmatprep.subr.mxu0 0.0
        %2102 = vmatpush1.msra.mxu0 0.0
        %2103 = vmatprep.subr.mxu0 0.0
        %2104 = vmatpush1.msra.mxu0 0.0
        %2105 = vmatprep.subr.mxu0 0.0
        %2106 = vmatpush1.msra.mxu0 0.0
        %2107 = vmatprep.mubr.f32.mxu0 0.0
        %2108 = vmatmul.mubr.f32.gmra.mrb[0].mxu0 %v2028
        %v2109 = vpop.f32.mrb[0].mxu0
        %v2110 = vadd.f32 0.0, %v2109
        %v2111 = vpop.f32.mrb[0].mxu0
        %2112 = vmatprep.mubr.f32.mxu0 0.0
        %2113 = vmatmul.mubr.f32.gmra.mrb[0].mxu0 %v2031
        %v2114 = vpop.f32.mrb[0].mxu0
        %v2115 = vadd.f32 0.0, %v2114
        %v2116 = vpop.f32.mrb[0].mxu0
        %2117 = vmatprep.mubr.f32.mxu0 0.0
        %2118 = vmatmul.mubr.f32.gmra.mrb[0].mxu0 %v2034
        %v2119 = vpop.f32.mrb[0].mxu0
        %v2120 = vadd.f32 0.0, %v2119
        %v2121 = vpop.f32.mrb[0].mxu0
        %2122 = vmatprep.mubr.f32.mxu0 0.0
        %2123 = vmatmul.mubr.f32.gmra.mrb[0].mxu0 %v2037
        %v2124 = vpop.f32.mrb[0].mxu0
        %v2125 = vadd.f32 0.0, %v2124
        %v2126 = vpop.f32.mrb[0].mxu0
        %2127 = vdwg.mxu0
        %vm2128 = vcmask 516096
        %2129 = vst.msk [vmem:[#allocation2 + $0x7] sm:$0x1] %vm2128, 0.0
        %2130 = vst.msk [vmem:[#allocation2 + $0xa0] sm:$0x1] %vm2128, 0.0
        %vm2131 = vcmask 523264
        %2132 = vst.msk [vmem:[#allocation2 + $0x20] sm:$0xff] %vm2131, %v2110
        %2133 = vst.msk [vmem:[#allocation2 + $0x40] sm:$0xff] %vm2131, %v2115
        %2134 = vst.msk [vmem:[#allocation2 + $0x60] sm:$0xff] %vm2131, %v2120
        %2135 = vst.msk [vmem:[#allocation2 + $0x80] sm:$0xff] %vm2131, %v2125
        %v2136 = vld [vmem:[#allocation2] sm:$0x80]
        %v2137 = vld [vmem:[#allocation2 + $0x20] sm:$0xff]
        %v2138 = vld [vmem:[#allocation2 + $0x40] sm:$0xff]
        %v2139 = vld [vmem:[#allocation2 + $0x60] sm:$0xff]
        %v2140 = vld [vmem:[#allocation2 + $0x80] sm:$0x3f]
        %v2141 = vld [vmem:[#allocation2 + $0x80] sm:$0x7f]
        %v2146 = vrot.slane %v2137, 1
        %v2147 = vrot.slane %v2138, 1
        %v2148 = vsel %vm2039, %v2146, %v2147
        %v2149 = vrot.slane %v2139, 1
        %v2150 = vsel %vm2039, %v2147, %v2149
        %v2151 = vrot.slane %v2141, 1
        %v2152 = vsel %vm2039, %v2149, %v2151
        %v2158 = vmax.f32 %v2136, %v2146
        %v2159 = vmax.f32 %v2137, %v2148
        %v2160 = vmax.f32 %v2138, %v2150
        %v2161 = vmax.f32 %v2139, %v2152
        %v2162 = vmax.f32 %v2140, %v2151
        %v2163 = vld [vmem:[#allocation2 + $0x20] sm:$0xfe]
        %v2164 = vld [vmem:[#allocation2 + $0x80] sm:$0xff]
        %vm2167 = vcmask 1045504
        %v2168 = vrot.slane %v2163, 2
        %v2169 = vrot.slane %v2138, 2
        %v2170 = vsel %vm2167, %v2168, %v2169
        %v2171 = vrot.slane %v2139, 2
        %v2172 = vsel %vm2167, %v2169, %v2171
        %v2173 = vrot.slane %v2164, 2
        %v2174 = vsel %vm2167, %v2171, %v2173
        %v2180 = vmax.f32 %v2158, %v2168
        %v2181 = vmax.f32 %v2159, %v2170
        %v2182 = vmax.f32 %v2160, %v2172
        %v2183 = vmax.f32 %v2161, %v2174
        %v2184 = vmax.f32 %v2162, %v2173
        %vm2190 = vcmask 1040384
        %v2191 = vrot.slane %v2180, 7
        %v2192 = vrot.slane %v2181, 7
        %v2193 = vsel %vm2190, %v2191, %v2192
        %v2194 = vrot.slane %v2182, 7
        %v2195 = vsel %vm2190, %v2192, %v2194
        %v2196 = vrot.slane %v2183, 7
        %v2197 = vsel %vm2190, %v2194, %v2196
        %v2198 = vrot.slane %v2184, 7
        %v2199 = vsel %vm2190, %v2196, %v2198
        %vm2203 = vcmask 252928
        %v2204 = vsel %vm2203, %v2022, 0
        %v2206 = vsel %vm2203, %v2023, 0
        %v2208 = vsel %vm2039, %v2199, 0
        %2210 = vmatprep.subr.mxu0 0.0
        %2211 = vmatpush1.msra.mxu0 %v2193
        %2212 = vmatprep.subr.mxu0 0.0
        %2213 = vmatpush1.msra.mxu0 %v2195
        %2214 = vmatprep.subr.mxu0 0.0
        %2215 = vmatpush1.msra.mxu0 %v2197
        %2216 = vmatprep.subr.mxu0 0.0
        %2217 = vmatpush1.msra.mxu0 %v2208
        %2218 = vmatprep.subr.mxu0 0.0
        %2219 = vmatpush1.msra.mxu0 0.0
        %2220 = vmatprep.subr.mxu0 0.0
        %2221 = vmatpush1.msra.mxu0 0.0
        %2222 = vmatprep.subr.mxu0 0.0
        %2223 = vmatpush1.msra.mxu0 0.0
        %2224 = vmatprep.subr.mxu0 0.0
        %2225 = vmatpush1.msra.mxu0 0.0
        %2226 = vmatprep.subr.mxu0 0.0
        %2227 = vmatpush1.msra.mxu0 0.0
        %2228 = vmatprep.subr.mxu0 0.0
        %2229 = vmatpush1.msra.mxu0 0.0
        %2230 = vmatprep.subr.mxu0 0.0
        %2231 = vmatpush1.msra.mxu0 0.0
        %2232 = vmatprep.subr.mxu0 0.0
        %2233 = vmatpush1.msra.mxu0 0.0
        %2234 = vmatprep.subr.mxu0 0.0
        %2235 = vmatpush1.msra.mxu0 0.0
        %2236 = vmatprep.subr.mxu0 0.0
        %2237 = vmatpush1.msra.mxu0 0.0
        %2238 = vmatprep.subr.mxu0 0.0
        %2239 = vmatpush1.msra.mxu0 0.0
        %2240 = vmatprep.subr.mxu0 0.0
        %2241 = vmatpush1.msra.mxu0 0.0
        %2242 = vmatprep.subr.mxu0 0.0
        %2243 = vmatpush1.msra.mxu0 0.0
        %2244 = vmatprep.subr.mxu0 0.0
        %2245 = vmatpush1.msra.mxu0 0.0
        %2246 = vmatprep.subr.mxu0 0.0
        %2247 = vmatpush1.msra.mxu0 0.0
        %2248 = vmatprep.subr.mxu0 0.0
        %2249 = vmatpush1.msra.mxu0 0.0
        %2250 = vmatprep.subr.mxu0 0.0
        %2251 = vmatpush1.msra.mxu0 0.0
        %2252 = vmatprep.subr.mxu0 0.0
        %2253 = vmatpush1.msra.mxu0 0.0
        %2254 = vmatprep.subr.mxu0 0.0
        %2255 = vmatpush1.msra.mxu0 0.0
        %2256 = vmatprep.subr.mxu0 0.0
        %2257 = vmatpush1.msra.mxu0 0.0
        %2258 = vmatprep.subr.mxu0 0.0
        %2259 = vmatpush1.msra.mxu0 0.0
        %2260 = vmatprep.subr.mxu0 0.0
        %2261 = vmatpush1.msra.mxu0 0.0
        %2262 = vmatprep.subr.mxu0 0.0
        %2263 = vmatpush1.msra.mxu0 0.0
        %2264 = vmatprep.subr.mxu0 0.0
        %2265 = vmatpush1.msra.mxu0 0.0
        %2266 = vmatprep.subr.mxu0 0.0
        %2267 = vmatpush1.msra.mxu0 0.0
        %2268 = vmatprep.subr.mxu0 0.0
        %2269 = vmatpush1.msra.mxu0 0.0
        %2270 = vmatprep.subr.mxu0 0.0
        %2271 = vmatpush1.msra.mxu0 0.0
        %2272 = vmatprep.subr.mxu0 0.0
        %2273 = vmatpush1.msra.mxu0 0.0
        %2274 = vmatprep.mubr.f32.mxu0 0.0
        %2275 = vmatmul.mubr.f32.gmra.mrb[0].mxu0 %v2204
        %v2276 = vpop.f32.mrb[0].mxu0
        %v2277 = vadd.f32 0.0, %v2276
        %v2278 = vpop.f32.mrb[0].mxu0
        %2279 = vmatprep.mubr.f32.mxu0 0.0
        %2280 = vmatmul.mubr.f32.gmra.mrb[0].mxu0 %v2206
        %v2281 = vpop.f32.mrb[0].mxu0
        %v2282 = vadd.f32 0.0, %v2281
        %v2283 = vpop.f32.mrb[0].mxu0
        %2284 = vdwg.mxu0
        %2285 = vst.msk [vmem:[#allocation2 + $0x7] sm:$0x1] %vm2128, 0.0
        %2286 = vst.msk [vmem:[#allocation2 + $0x60] sm:$0x1] %vm2128, 0.0
        %2287 = vst.msk [vmem:[#allocation2 + $0x20] sm:$0xff] %vm2131, %v2277
        %2288 = vst.msk [vmem:[#allocation2 + $0x40] sm:$0xff] %vm2131, %v2282
        %v2289 = vld [vmem:[#allocation2] sm:$0x80]
        %v2290 = vld [vmem:[#allocation2 + $0x20] sm:$0xff]
        %v2291 = vld [vmem:[#allocation2 + $0x40] sm:$0x7f]
        %v2292 = vpack.c.bf16 %v2290, %v2289
        %v2293 = vpack.c.bf16 %v2291, %v2291
        %v2294 = vld [vmem:[#allocation9] sm:$0xf]
        %v2295 = vld [vmem:[#allocation9 + $0x4] sm:$0xf]
        %v2296 = vld [vmem:[#allocation9 + $0x8] sm:$0xf]
        %v2297 = vld [vmem:[#allocation9 + $0xc] sm:$0xf]
        %v2298 = vld [vmem:[#allocation9 + $0x10] sm:$0xf]
        %v2299 = vld [vmem:[#allocation9 + $0x14] sm:$0xf]
        %v2300 = vld [vmem:[#allocation9 + $0x18] sm:$0xf]
        %v2301 = vld [vmem:[#allocation9 + $0x1c] sm:$0xf]
        %v2302 = vld [vmem:[#allocation2 + $0x40] sm:$0xff]
        %v2303 = vpack.c.bf16 %v2302, %v2290
        %s2304 = scalar_lea.vmem [#allocation9], 32
        %v2305 = vld [vmem:[%s2304] sm:$0xf]
        %v2306 = vld [vmem:[%s2304 + $0x4] sm:$0xf]
        %v2307 = vld [vmem:[%s2304 + $0x8] sm:$0xf]
        %v2308 = vld [vmem:[%s2304 + $0xc] sm:$0xf]
        %v2309 = vld [vmem:[%s2304 + $0x10] sm:$0xf]
        %v2310 = vld [vmem:[%s2304 + $0x14] sm:$0xf]
        %v2311 = vld [vmem:[%s2304 + $0x18] sm:$0xf]
        %v2312 = vld [vmem:[%s2304 + $0x1c] sm:$0xf]
        %v2321 = vunpack.c.l.b16 %v2305
        %v2322 = vunpack.c.l.b16 %v2306
        %v2323 = vunpack.c.l.b16 %v2307
        %v2324 = vunpack.c.l.b16 %v2308
        %v2325 = vunpack.c.l.b16 %v2309
        %v2326 = vunpack.c.l.b16 %v2310
        %v2327 = vunpack.c.l.b16 %v2311
        %v2328 = vunpack.c.l.b16 %v2312
        %v2329 = vpack.c.b16 %v2322, %v2321
        %v2330 = vpack.c.b16 %v2324, %v2323
        %v2331 = vpack.c.b16 %v2326, %v2325
        %v2332 = vpack.c.b16 %v2328, %v2327
        %v2338 = vsel %vm2131, %v2303, 0
        %2340 = vmatprep.subr.bf16.mxu0 0
        %2341 = vmatpush1.bf16.msra.mxu0 %v2329
        %2342 = vmatprep.subr.bf16.mxu0 0
        %2343 = vmatpush1.bf16.msra.mxu0 %v2330
        %2344 = vmatprep.subr.bf16.mxu0 0
        %2345 = vmatpush1.bf16.msra.mxu0 %v2331
        %2346 = vmatprep.subr.bf16.mxu0 0
        %2347 = vmatpush1.bf16.msra.mxu0 %v2332
        %2348 = vmatprep.subr.bf16.mxu0 0
        %2349 = vmatpush1.bf16.msra.mxu0 0
        %2350 = vmatprep.subr.bf16.mxu0 0
        %2351 = vmatpush1.bf16.msra.mxu0 0
        %2352 = vmatprep.subr.bf16.mxu0 0
        %2353 = vmatpush1.bf16.msra.mxu0 0
        %2354 = vmatprep.subr.bf16.mxu0 0
        %2355 = vmatpush1.bf16.msra.mxu0 0
        %2356 = vmatprep.subr.bf16.mxu0 0
        %2357 = vmatpush1.bf16.msra.mxu0 0
        %2358 = vmatprep.subr.bf16.mxu0 0
        %2359 = vmatpush1.bf16.msra.mxu0 0
        %2360 = vmatprep.subr.bf16.mxu0 0
        %2361 = vmatpush1.bf16.msra.mxu0 0
        %2362 = vmatprep.subr.bf16.mxu0 0
        %2363 = vmatpush1.bf16.msra.mxu0 0
        %2364 = vmatprep.subr.bf16.mxu0 0
        %2365 = vmatpush1.bf16.msra.mxu0 0
        %2366 = vmatprep.subr.bf16.mxu0 0
        %2367 = vmatpush1.bf16.msra.mxu0 0
        %2368 = vmatprep.subr.bf16.mxu0 0
        %2369 = vmatpush1.bf16.msra.mxu0 0
        %2370 = vmatprep.subr.bf16.mxu0 0
        %2371 = vmatpush1.bf16.msra.mxu0 0
        %2372 = vmatprep.mubr.bf16.mxu0 0
        %2373 = vmatmul.mubr.bf16.gmra.mrb[0].mxu0 %v2338
        %v2374 = vpop.f32.mrb[0].mxu0
        %v2375 = vadd.f32 0.0, %v2374
        %v2376 = vpop.f32.mrb[0].mxu0
        %v2377 = vpop.f32.mrb[0].mxu0
        %v2378 = vadd.f32 0.0, %v2377
        %v2379 = vpop.f32.mrb[0].mxu0
        %2380 = vdwg.mxu0
        %vm2381 = vsmask.f32 4352
        %v2383 = vshrl.u32 %v2292, 16
        %v2385 = vrot.slane %v2383, 3
        %v2386 = vshll.u32 %v2292, 16
        %v2388 = vrot.slane %v2386, 4
        %v2389 = vor.u32 %v2385, %v2388
        %v2391 = vshrl.u32 %v2293, 16
        %v2393 = vrot.slane %v2391, 3
        %v2394 = vshll.u32 %v2293, 16
        %v2396 = vrot.slane %v2394, 4
        %v2397 = vor.u32 %v2393, %v2396
        %v2398 = vsel %vm2381, %v2389, %v2397
        %v2407 = vunpack.c.l.b16 %v2294
        %v2408 = vunpack.c.l.b16 %v2295
        %v2409 = vunpack.c.l.b16 %v2296
        %v2410 = vunpack.c.l.b16 %v2297
        %v2411 = vunpack.c.l.b16 %v2298
        %v2412 = vunpack.c.l.b16 %v2299
        %v2413 = vunpack.c.l.b16 %v2300
        %v2414 = vunpack.c.l.b16 %v2301
        %v2415 = vpack.c.b16 %v2408, %v2407
        %v2416 = vpack.c.b16 %v2410, %v2409
        %v2417 = vpack.c.b16 %v2412, %v2411
        %v2418 = vpack.c.b16 %v2414, %v2413
        %v2424 = vsel %vm2131, %v2398, 0
        %2426 = vmatprep.subr.bf16.mxu0 0
        %2427 = vmatpush1.bf16.msra.mxu0 %v2415
        %2428 = vmatprep.subr.bf16.mxu0 0
        %2429 = vmatpush1.bf16.msra.mxu0 %v2416
        %2430 = vmatprep.subr.bf16.mxu0 0
        %2431 = vmatpush1.bf16.msra.mxu0 %v2417
        %2432 = vmatprep.subr.bf16.mxu0 0
        %2433 = vmatpush1.bf16.msra.mxu0 %v2418
        %2434 = vmatprep.subr.bf16.mxu0 0
        %2435 = vmatpush1.bf16.msra.mxu0 0
        %2436 = vmatprep.subr.bf16.mxu0 0
        %2437 = vmatpush1.bf16.msra.mxu0 0
        %2438 = vmatprep.subr.bf16.mxu0 0
        %2439 = vmatpush1.bf16.msra.mxu0 0
        %2440 = vmatprep.subr.bf16.mxu0 0
        %2441 = vmatpush1.bf16.msra.mxu0 0
        %2442 = vmatprep.subr.bf16.mxu0 0
        %2443 = vmatpush1.bf16.msra.mxu0 0
        %2444 = vmatprep.subr.bf16.mxu0 0
        %2445 = vmatpush1.bf16.msra.mxu0 0
        %2446 = vmatprep.subr.bf16.mxu0 0
        %2447 = vmatpush1.bf16.msra.mxu0 0
        %2448 = vmatprep.subr.bf16.mxu0 0
        %2449 = vmatpush1.bf16.msra.mxu0 0
        %2450 = vmatprep.subr.bf16.mxu0 0
        %2451 = vmatpush1.bf16.msra.mxu0 0
        %2452 = vmatprep.subr.bf16.mxu0 0
        %2453 = vmatpush1.bf16.msra.mxu0 0
        %2454 = vmatprep.subr.bf16.mxu0 0
        %2455 = vmatpush1.bf16.msra.mxu0 0
        %2456 = vmatprep.subr.bf16.mxu0 0
        %2457 = vmatpush1.bf16.msra.mxu0 0
        %2458 = vmatprep.mubr.bf16.mxu0 0
        %2459 = vmatmul.mubr.bf16.gmra.mrb[0].mxu0 %v2424
        %v2460 = vpop.f32.mrb[0].mxu0
        %v2461 = vadd.f32 %v2375, %v2460
        %v2462 = vpop.f32.mrb[0].mxu0
        %v2463 = vpop.f32.mrb[0].mxu0
        %v2464 = vadd.f32 %v2378, %v2463
        %v2465 = vpop.f32.mrb[0].mxu0
        %2466 = vdwg.mxu0
        %v2467 = vld [vmem:[#allocation2 + $0x20] sm:$0xfe]
        %v2468 = vld [vmem:[#allocation2 + $0x40] sm:$0xff]
        %v2469 = vld [vmem:[#allocation2 + $0x60] sm:$0x1]
        %v2470 = vpack.c.bf16 %v2468, %v2467
        %v2471 = vpack.c.bf16 %v2469, %v2469
        %s2472 = scalar_lea.vmem [#allocation9], 64
        %v2473 = vld [vmem:[%s2472] sm:$0xf]
        %v2474 = vld [vmem:[%s2472 + $0x4] sm:$0xf]
        %v2475 = vld [vmem:[%s2472 + $0x8] sm:$0xf]
        %v2476 = vld [vmem:[%s2472 + $0xc] sm:$0xf]
        %v2477 = vld [vmem:[%s2472 + $0x10] sm:$0xf]
        %v2478 = vld [vmem:[%s2472 + $0x14] sm:$0xf]
        %v2479 = vld [vmem:[%s2472 + $0x18] sm:$0xf]
        %v2480 = vld [vmem:[%s2472 + $0x1c] sm:$0xf]
        %vm2481 = vsmask.f32 7424
        %v2483 = vshrl.u32 %v2470, 16
        %v2485 = vshll.u32 %v2470, 16
        %v2487 = vrot.slane %v2485, 1
        %v2488 = vor.u32 %v2483, %v2487
        %v2490 = vshll.u32 %v2471, 16
        %v2492 = vrot.slane %v2490, 1
        %v2493 = vsel %vm2481, %v2488, %v2492
        %v2502 = vunpack.c.l.b16 %v2473
        %v2503 = vunpack.c.l.b16 %v2474
        %v2504 = vunpack.c.l.b16 %v2475
        %v2505 = vunpack.c.l.b16 %v2476
        %v2506 = vunpack.c.l.b16 %v2477
        %v2507 = vunpack.c.l.b16 %v2478
        %v2508 = vunpack.c.l.b16 %v2479
        %v2509 = vunpack.c.l.b16 %v2480
        %v2510 = vpack.c.b16 %v2503, %v2502
        %v2511 = vpack.c.b16 %v2505, %v2504
        %v2512 = vpack.c.b16 %v2507, %v2506
        %v2513 = vpack.c.b16 %v2509, %v2508
        %v2519 = vsel %vm2131, %v2493, 0
        %2521 = vmatprep.subr.bf16.mxu0 0
        %2522 = vmatpush1.bf16.msra.mxu0 %v2510
        %2523 = vmatprep.subr.bf16.mxu0 0
        %2524 = vmatpush1.bf16.msra.mxu0 %v2511
        %2525 = vmatprep.subr.bf16.mxu0 0
        %2526 = vmatpush1.bf16.msra.mxu0 %v2512
        %2527 = vmatprep.subr.bf16.mxu0 0
        %2528 = vmatpush1.bf16.msra.mxu0 %v2513
        %2529 = vmatprep.subr.bf16.mxu0 0
        %2530 = vmatpush1.bf16.msra.mxu0 0
        %2531 = vmatprep.subr.bf16.mxu0 0
        %2532 = vmatpush1.bf16.msra.mxu0 0
        %2533 = vmatprep.subr.bf16.mxu0 0
        %2534 = vmatpush1.bf16.msra.mxu0 0
        %2535 = vmatprep.subr.bf16.mxu0 0
        %2536 = vmatpush1.bf16.msra.mxu0 0
        %2537 = vmatprep.subr.bf16.mxu0 0
        %2538 = vmatpush1.bf16.msra.mxu0 0
        %2539 = vmatprep.subr.bf16.mxu0 0
        %2540 = vmatpush1.bf16.msra.mxu0 0
        %2541 = vmatprep.subr.bf16.mxu0 0
        %2542 = vmatpush1.bf16.msra.mxu0 0
        %2543 = vmatprep.subr.bf16.mxu0 0
        %2544 = vmatpush1.bf16.msra.mxu0 0
        %2545 = vmatprep.subr.bf16.mxu0 0
        %2546 = vmatpush1.bf16.msra.mxu0 0
        %2547 = vmatprep.subr.bf16.mxu0 0
        %2548 = vmatpush1.bf16.msra.mxu0 0
        %2549 = vmatprep.subr.bf16.mxu0 0
        %2550 = vmatpush1.bf16.msra.mxu0 0
        %2551 = vmatprep.subr.bf16.mxu0 0
        %2552 = vmatpush1.bf16.msra.mxu0 0
        %2553 = vmatprep.mubr.bf16.mxu0 0
        %2554 = vmatmul.mubr.bf16.gmra.mrb[0].mxu0 %v2519
        %v2555 = vpop.f32.mrb[0].mxu0
        %v2556 = vadd.f32 0.0, %v2555
        %v2557 = vpop.f32.mrb[0].mxu0
        %v2558 = vpop.f32.mrb[0].mxu0
        %v2559 = vadd.f32 0.0, %v2558
        %v2560 = vpop.f32.mrb[0].mxu0
        %2561 = vdwg.mxu0
        %v2562 = vadd.f32 %v2461, %v2556
        %v2563 = vadd.f32 %v2464, %v2559
        %v2564 = vmax.f32 %v2562, 0.0
        %v2565 = vmax.f32 %v2563, 0.0
        %2566 = vst.msk [vmem:[#allocation2 + $0x7] sm:$0x1] %vm2128, 0.0
        %2567 = vst.msk [vmem:[#allocation2 + $0x60] sm:$0x1] %vm2128, 0.0
        %2568 = vst.msk [vmem:[#allocation2 + $0x20] sm:$0xff] %vm2131, %v2564
        %2569 = vst.msk [vmem:[#allocation2 + $0x40] sm:$0xff] %vm2131, %v2565
        %v2570 = vld [vmem:[#allocation2] sm:$0x80]
        %v2571 = vld [vmem:[#allocation2 + $0x20] sm:$0xff]
        %v2572 = vld [vmem:[#allocation2 + $0x40] sm:$0x7f]
        %v2573 = vpack.c.bf16 %v2571, %v2570
        %v2574 = vpack.c.bf16 %v2572, %v2572
        %v2575 = vld [vmem:[#allocation11] sm:$0xf]
        %v2576 = vld [vmem:[#allocation11 + $0x4] sm:$0xf]
        %v2577 = vld [vmem:[#allocation11 + $0x8] sm:$0xf]
        %v2578 = vld [vmem:[#allocation11 + $0xc] sm:$0xf]
        %v2579 = vld [vmem:[#allocation11 + $0x10] sm:$0xf]
        %v2580 = vld [vmem:[#allocation11 + $0x14] sm:$0xf]
        %v2581 = vld [vmem:[#allocation11 + $0x18] sm:$0xf]
        %v2582 = vld [vmem:[#allocation11 + $0x1c] sm:$0xf]
        %v2583 = vld [vmem:[#allocation2 + $0x40] sm:$0xff]
        %v2584 = vpack.c.bf16 %v2583, %v2571
        %s2585 = scalar_lea.vmem [#allocation11], 32
        %v2586 = vld [vmem:[%s2585] sm:$0xf]
        %v2587 = vld [vmem:[%s2585 + $0x4] sm:$0xf]
        %v2588 = vld [vmem:[%s2585 + $0x8] sm:$0xf]
        %v2589 = vld [vmem:[%s2585 + $0xc] sm:$0xf]
        %v2590 = vld [vmem:[%s2585 + $0x10] sm:$0xf]
        %v2591 = vld [vmem:[%s2585 + $0x14] sm:$0xf]
        %v2592 = vld [vmem:[%s2585 + $0x18] sm:$0xf]
        %v2593 = vld [vmem:[%s2585 + $0x1c] sm:$0xf]
        %v2602 = vunpack.c.l.b16 %v2586
        %v2603 = vunpack.c.l.b16 %v2587
        %v2604 = vunpack.c.l.b16 %v2588
        %v2605 = vunpack.c.l.b16 %v2589
        %v2606 = vunpack.c.l.b16 %v2590
        %v2607 = vunpack.c.l.b16 %v2591
        %v2608 = vunpack.c.l.b16 %v2592
        %v2609 = vunpack.c.l.b16 %v2593
        %v2610 = vpack.c.b16 %v2603, %v2602
        %v2611 = vpack.c.b16 %v2605, %v2604
        %v2612 = vpack.c.b16 %v2607, %v2606
        %v2613 = vpack.c.b16 %v2609, %v2608
        %v2619 = vsel %vm2131, %v2584, 0
        %2621 = vmatprep.subr.bf16.mxu0 0
        %2622 = vmatpush1.bf16.msra.mxu0 %v2610
        %2623 = vmatprep.subr.bf16.mxu0 0
        %2624 = vmatpush1.bf16.msra.mxu0 %v2611
        %2625 = vmatprep.subr.bf16.mxu0 0
        %2626 = vmatpush1.bf16.msra.mxu0 %v2612
        %2627 = vmatprep.subr.bf16.mxu0 0
        %2628 = vmatpush1.bf16.msra.mxu0 %v2613
        %2629 = vmatprep.subr.bf16.mxu0 0
        %2630 = vmatpush1.bf16.msra.mxu0 0
        %2631 = vmatprep.subr.bf16.mxu0 0
        %2632 = vmatpush1.bf16.msra.mxu0 0
        %2633 = vmatprep.subr.bf16.mxu0 0
        %2634 = vmatpush1.bf16.msra.mxu0 0
        %2635 = vmatprep.subr.bf16.mxu0 0
        %2636 = vmatpush1.bf16.msra.mxu0 0
        %2637 = vmatprep.subr.bf16.mxu0 0
        %2638 = vmatpush1.bf16.msra.mxu0 0
        %2639 = vmatprep.subr.bf16.mxu0 0
        %2640 = vmatpush1.bf16.msra.mxu0 0
        %2641 = vmatprep.subr.bf16.mxu0 0
        %2642 = vmatpush1.bf16.msra.mxu0 0
        %2643 = vmatprep.subr.bf16.mxu0 0
        %2644 = vmatpush1.bf16.msra.mxu0 0
        %2645 = vmatprep.subr.bf16.mxu0 0
        %2646 = vmatpush1.bf16.msra.mxu0 0
        %2647 = vmatprep.subr.bf16.mxu0 0
        %2648 = vmatpush1.bf16.msra.mxu0 0
        %2649 = vmatprep.subr.bf16.mxu0 0
        %2650 = vmatpush1.bf16.msra.mxu0 0
        %2651 = vmatprep.subr.bf16.mxu0 0
        %2652 = vmatpush1.bf16.msra.mxu0 0
        %2653 = vmatprep.mubr.bf16.mxu0 0
        %2654 = vmatmul.mubr.bf16.gmra.mrb[0].mxu0 %v2619
        %v2655 = vpop.f32.mrb[0].mxu0
        %v2656 = vadd.f32 0.0, %v2655
        %v2657 = vpop.f32.mrb[0].mxu0
        %v2658 = vpop.f32.mrb[0].mxu0
        %v2659 = vadd.f32 0.0, %v2658
        %v2660 = vpop.f32.mrb[0].mxu0
        %2661 = vdwg.mxu0
        %v2663 = vshrl.u32 %v2573, 16
        %v2665 = vrot.slane %v2663, 3
        %v2666 = vshll.u32 %v2573, 16
        %v2668 = vrot.slane %v2666, 4
        %v2669 = vor.u32 %v2665, %v2668
        %v2671 = vshrl.u32 %v2574, 16
        %v2673 = vrot.slane %v2671, 3
        %v2674 = vshll.u32 %v2574, 16
        %v2676 = vrot.slane %v2674, 4
        %v2677 = vor.u32 %v2673, %v2676
        %v2678 = vsel %vm2381, %v2669, %v2677
        %v2687 = vunpack.c.l.b16 %v2575
        %v2688 = vunpack.c.l.b16 %v2576
        %v2689 = vunpack.c.l.b16 %v2577
        %v2690 = vunpack.c.l.b16 %v2578
        %v2691 = vunpack.c.l.b16 %v2579
        %v2692 = vunpack.c.l.b16 %v2580
        %v2693 = vunpack.c.l.b16 %v2581
        %v2694 = vunpack.c.l.b16 %v2582
        %v2695 = vpack.c.b16 %v2688, %v2687
        %v2696 = vpack.c.b16 %v2690, %v2689
        %v2697 = vpack.c.b16 %v2692, %v2691
        %v2698 = vpack.c.b16 %v2694, %v2693
        %v2704 = vsel %vm2131, %v2678, 0
        %2706 = vmatprep.subr.bf16.mxu0 0
        %2707 = vmatpush1.bf16.msra.mxu0 %v2695
        %2708 = vmatprep.subr.bf16.mxu0 0
        %2709 = vmatpush1.bf16.msra.mxu0 %v2696
        %2710 = vmatprep.subr.bf16.mxu0 0
        %2711 = vmatpush1.bf16.msra.mxu0 %v2697
        %2712 = vmatprep.subr.bf16.mxu0 0
        %2713 = vmatpush1.bf16.msra.mxu0 %v2698
        %2714 = vmatprep.subr.bf16.mxu0 0
        %2715 = vmatpush1.bf16.msra.mxu0 0
        %2716 = vmatprep.subr.bf16.mxu0 0
        %2717 = vmatpush1.bf16.msra.mxu0 0
        %2718 = vmatprep.subr.bf16.mxu0 0
        %2719 = vmatpush1.bf16.msra.mxu0 0
        %2720 = vmatprep.subr.bf16.mxu0 0
        %2721 = vmatpush1.bf16.msra.mxu0 0
        %2722 = vmatprep.subr.bf16.mxu0 0
        %2723 = vmatpush1.bf16.msra.mxu0 0
        %2724 = vmatprep.subr.bf16.mxu0 0
        %2725 = vmatpush1.bf16.msra.mxu0 0
        %2726 = vmatprep.subr.bf16.mxu0 0
        %2727 = vmatpush1.bf16.msra.mxu0 0
        %2728 = vmatprep.subr.bf16.mxu0 0
        %2729 = vmatpush1.bf16.msra.mxu0 0
        %2730 = vmatprep.subr.bf16.mxu0 0
        %2731 = vmatpush1.bf16.msra.mxu0 0
        %2732 = vmatprep.subr.bf16.mxu0 0
        %2733 = vmatpush1.bf16.msra.mxu0 0
        %2734 = vmatprep.subr.bf16.mxu0 0
        %2735 = vmatpush1.bf16.msra.mxu0 0
        %2736 = vmatprep.subr.bf16.mxu0 0
        %2737 = vmatpush1.bf16.msra.mxu0 0
        %2738 = vmatprep.mubr.bf16.mxu0 0
        %2739 = vmatmul.mubr.bf16.gmra.mrb[0].mxu0 %v2704
        %v2740 = vpop.f32.mrb[0].mxu0
        %v2741 = vadd.f32 %v2656, %v2740
        %v2742 = vpop.f32.mrb[0].mxu0
        %v2743 = vpop.f32.mrb[0].mxu0
        %v2744 = vadd.f32 %v2659, %v2743
        %v2745 = vpop.f32.mrb[0].mxu0
        %2746 = vdwg.mxu0
        %v2747 = vld [vmem:[#allocation2 + $0x20] sm:$0xfe]
        %v2748 = vld [vmem:[#allocation2 + $0x40] sm:$0xff]
        %v2749 = vld [vmem:[#allocation2 + $0x60] sm:$0x1]
        %v2750 = vpack.c.bf16 %v2748, %v2747
        %v2751 = vpack.c.bf16 %v2749, %v2749
        %s2752 = scalar_lea.vmem [#allocation11], 64
        %v2753 = vld [vmem:[%s2752] sm:$0xf]
        %v2754 = vld [vmem:[%s2752 + $0x4] sm:$0xf]
        %v2755 = vld [vmem:[%s2752 + $0x8] sm:$0xf]
        %v2756 = vld [vmem:[%s2752 + $0xc] sm:$0xf]
        %v2757 = vld [vmem:[%s2752 + $0x10] sm:$0xf]
        %v2758 = vld [vmem:[%s2752 + $0x14] sm:$0xf]
        %v2759 = vld [vmem:[%s2752 + $0x18] sm:$0xf]
        %v2760 = vld [vmem:[%s2752 + $0x1c] sm:$0xf]
        %v2762 = vshrl.u32 %v2750, 16
        %v2764 = vshll.u32 %v2750, 16
        %v2766 = vrot.slane %v2764, 1
        %v2767 = vor.u32 %v2762, %v2766
        %v2769 = vshll.u32 %v2751, 16
        %v2771 = vrot.slane %v2769, 1
        %v2772 = vsel %vm2481, %v2767, %v2771
        %v2781 = vunpack.c.l.b16 %v2753
        %v2782 = vunpack.c.l.b16 %v2754
        %v2783 = vunpack.c.l.b16 %v2755
        %v2784 = vunpack.c.l.b16 %v2756
        %v2785 = vunpack.c.l.b16 %v2757
        %v2786 = vunpack.c.l.b16 %v2758
        %v2787 = vunpack.c.l.b16 %v2759
        %v2788 = vunpack.c.l.b16 %v2760
        %v2789 = vpack.c.b16 %v2782, %v2781
        %v2790 = vpack.c.b16 %v2784, %v2783
        %v2791 = vpack.c.b16 %v2786, %v2785
        %v2792 = vpack.c.b16 %v2788, %v2787
        %v2798 = vsel %vm2131, %v2772, 0
        %2800 = vmatprep.subr.bf16.mxu0 0
        %2801 = vmatpush1.bf16.msra.mxu0 %v2789
        %2802 = vmatprep.subr.bf16.mxu0 0
        %2803 = vmatpush1.bf16.msra.mxu0 %v2790
        %2804 = vmatprep.subr.bf16.mxu0 0
        %2805 = vmatpush1.bf16.msra.mxu0 %v2791
        %2806 = vmatprep.subr.bf16.mxu0 0
        %2807 = vmatpush1.bf16.msra.mxu0 %v2792
        %2808 = vmatprep.subr.bf16.mxu0 0
        %2809 = vmatpush1.bf16.msra.mxu0 0
        %2810 = vmatprep.subr.bf16.mxu0 0
        %2811 = vmatpush1.bf16.msra.mxu0 0
        %2812 = vmatprep.subr.bf16.mxu0 0
        %2813 = vmatpush1.bf16.msra.mxu0 0
        %2814 = vmatprep.subr.bf16.mxu0 0
        %2815 = vmatpush1.bf16.msra.mxu0 0
        %2816 = vmatprep.subr.bf16.mxu0 0
        %2817 = vmatpush1.bf16.msra.mxu0 0
        %2818 = vmatprep.subr.bf16.mxu0 0
        %2819 = vmatpush1.bf16.msra.mxu0 0
        %2820 = vmatprep.subr.bf16.mxu0 0
        %2821 = vmatpush1.bf16.msra.mxu0 0
        %2822 = vmatprep.subr.bf16.mxu0 0
        %2823 = vmatpush1.bf16.msra.mxu0 0
        %2824 = vmatprep.subr.bf16.mxu0 0
        %2825 = vmatpush1.bf16.msra.mxu0 0
        %2826 = vmatprep.subr.bf16.mxu0 0
        %2827 = vmatpush1.bf16.msra.mxu0 0
        %2828 = vmatprep.subr.bf16.mxu0 0
        %2829 = vmatpush1.bf16.msra.mxu0 0
        %2830 = vmatprep.subr.bf16.mxu0 0
        %2831 = vmatpush1.bf16.msra.mxu0 0
        %2832 = vmatprep.mubr.bf16.mxu0 0
        %2833 = vmatmul.mubr.bf16.gmra.mrb[0].mxu0 %v2798
        %v2834 = vpop.f32.mrb[0].mxu0
        %v2835 = vadd.f32 0.0, %v2834
        %v2836 = vpop.f32.mrb[0].mxu0
        %v2837 = vpop.f32.mrb[0].mxu0
        %v2838 = vadd.f32 0.0, %v2837
        %v2839 = vpop.f32.mrb[0].mxu0
        %2840 = vdwg.mxu0
        %v2841 = vadd.f32 %v2741, %v2835
        %v2842 = vadd.f32 %v2744, %v2838
        %v2843 = vadd.f32 %v2841, %v2277
        %v2844 = vadd.f32 %v2842, %v2282
        %v2845 = vmax.f32 %v2843, 0.0
        %v2846 = vmax.f32 %v2844, 0.0
        %2847 = vst.msk [vmem:[#allocation2 + $0x7] sm:$0x1] %vm2128, 0.0
        %2848 = vst.msk [vmem:[#allocation2 + $0x60] sm:$0x1] %vm2128, 0.0
        %2849 = vst.msk [vmem:[#allocation2 + $0x20] sm:$0xff] %vm2131, %v2845
        %2850 = vst.msk [vmem:[#allocation2 + $0x40] sm:$0xff] %vm2131, %v2846
        %v2851 = vld [vmem:[#allocation2] sm:$0x80]
        %v2852 = vld [vmem:[#allocation2 + $0x20] sm:$0xff]
        %v2853 = vld [vmem:[#allocation2 + $0x40] sm:$0x3f]
        %v2854 = vpack.c.bf16 %v2852, %v2851
        %v2855 = vpack.c.bf16 %v2853, %v2853
        %v2856 = vld [vmem:[#allocation12] sm:$0xf]
        %v2857 = vld [vmem:[#allocation12 + $0x4] sm:$0xf]
        %v2858 = vld [vmem:[#allocation12 + $0x8] sm:$0xf]
        %v2859 = vld [vmem:[#allocation12 + $0xc] sm:$0xf]
        %v2860 = vld [vmem:[#allocation12 + $0x10] sm:$0xf]
        %v2861 = vld [vmem:[#allocation12 + $0x14] sm:$0xf]
        %v2862 = vld [vmem:[#allocation12 + $0x18] sm:$0xf]
        %v2863 = vld [vmem:[#allocation12 + $0x1c] sm:$0xf]
        %v2864 = vld [vmem:[#allocation2 + $0x40] sm:$0x7f]
        %v2865 = vpack.c.bf16 %v2864, %v2852
        %s2866 = scalar_lea.vmem [#allocation12], 32
        %v2867 = vld [vmem:[%s2866] sm:$0xf]
        %v2868 = vld [vmem:[%s2866 + $0x4] sm:$0xf]
        %v2869 = vld [vmem:[%s2866 + $0x8] sm:$0xf]
        %v2870 = vld [vmem:[%s2866 + $0xc] sm:$0xf]
        %v2871 = vld [vmem:[%s2866 + $0x10] sm:$0xf]
        %v2872 = vld [vmem:[%s2866 + $0x14] sm:$0xf]
        %v2873 = vld [vmem:[%s2866 + $0x18] sm:$0xf]
        %v2874 = vld [vmem:[%s2866 + $0x1c] sm:$0xf]
        %v2883 = vunpack.c.l.b16 %v2867
        %v2884 = vunpack.c.l.b16 %v2868
        %v2885 = vunpack.c.l.b16 %v2869
        %v2886 = vunpack.c.l.b16 %v2870
        %v2887 = vunpack.c.l.b16 %v2871
        %v2888 = vunpack.c.l.b16 %v2872
        %v2889 = vunpack.c.l.b16 %v2873
        %v2890 = vunpack.c.l.b16 %v2874
        %v2891 = vpack.c.b16 %v2884, %v2883
        %v2892 = vpack.c.b16 %v2886, %v2885
        %v2893 = vpack.c.b16 %v2888, %v2887
        %v2894 = vpack.c.b16 %v2890, %v2889
        %v2900 = vsel %vm2131, %v2865, 0
        %2902 = vmatprep.subr.bf16.mxu0 0
        %2903 = vmatpush1.bf16.msra.mxu0 %v2891
        %2904 = vmatprep.subr.bf16.mxu0 0
        %2905 = vmatpush1.bf16.msra.mxu0 %v2892
        %2906 = vmatprep.subr.bf16.mxu0 0
        %2907 = vmatpush1.bf16.msra.mxu0 %v2893
        %2908 = vmatprep.subr.bf16.mxu0 0
        %2909 = vmatpush1.bf16.msra.mxu0 %v2894
        %2910 = vmatprep.subr.bf16.mxu0 0
        %2911 = vmatpush1.bf16.msra.mxu0 0
        %2912 = vmatprep.subr.bf16.mxu0 0
        %2913 = vmatpush1.bf16.msra.mxu0 0
        %2914 = vmatprep.subr.bf16.mxu0 0
        %2915 = vmatpush1.bf16.msra.mxu0 0
        %2916 = vmatprep.subr.bf16.mxu0 0
        %2917 = vmatpush1.bf16.msra.mxu0 0
        %2918 = vmatprep.subr.bf16.mxu0 0
        %2919 = vmatpush1.bf16.msra.mxu0 0
        %2920 = vmatprep.subr.bf16.mxu0 0
        %2921 = vmatpush1.bf16.msra.mxu0 0
        %2922 = vmatprep.subr.bf16.mxu0 0
        %2923 = vmatpush1.bf16.msra.mxu0 0
        %2924 = vmatprep.subr.bf16.mxu0 0
        %2925 = vmatpush1.bf16.msra.mxu0 0
        %2926 = vmatprep.subr.bf16.mxu0 0
        %2927 = vmatpush1.bf16.msra.mxu0 0
        %2928 = vmatprep.subr.bf16.mxu0 0
        %2929 = vmatpush1.bf16.msra.mxu0 0
        %2930 = vmatprep.subr.bf16.mxu0 0
        %2931 = vmatpush1.bf16.msra.mxu0 0
        %2932 = vmatprep.subr.bf16.mxu0 0
        %2933 = vmatpush1.bf16.msra.mxu0 0
        %2934 = vmatprep.mubr.bf16.mxu0 0
        %2935 = vmatmul.mubr.bf16.gmra.mrb[0].mxu0 %v2900
        %v2936 = vpop.f32.mrb[0].mxu0
        %v2937 = vadd.f32 0.0, %v2936
        %v2938 = vpop.f32.mrb[0].mxu0
        %v2939 = vpop.f32.mrb[0].mxu0
        %v2940 = vadd.f32 0.0, %v2939
        %v2941 = vpop.f32.mrb[0].mxu0
        %2942 = vdwg.mxu0
        %v2944 = vshrl.u32 %v2854, 16
        %v2946 = vrot.slane %v2944, 3
        %v2947 = vshll.u32 %v2854, 16
        %v2949 = vrot.slane %v2947, 4
        %v2950 = vor.u32 %v2946, %v2949
        %v2952 = vshrl.u32 %v2855, 16
        %v2954 = vrot.slane %v2952, 3
        %v2955 = vshll.u32 %v2855, 16
        %v2957 = vrot.slane %v2955, 4
        %v2958 = vor.u32 %v2954, %v2957
        %v2959 = vsel %vm2381, %v2950, %v2958
        %v2968 = vunpack.c.l.b16 %v2856
        %v2969 = vunpack.c.l.b16 %v2857
        %v2970 = vunpack.c.l.b16 %v2858
        %v2971 = vunpack.c.l.b16 %v2859
        %v2972 = vunpack.c.l.b16 %v2860
        %v2973 = vunpack.c.l.b16 %v2861
        %v2974 = vunpack.c.l.b16 %v2862
        %v2975 = vunpack.c.l.b16 %v2863
        %v2976 = vpack.c.b16 %v2969, %v2968
        %v2977 = vpack.c.b16 %v2971, %v2970
        %v2978 = vpack.c.b16 %v2973, %v2972
        %v2979 = vpack.c.b16 %v2975, %v2974
        %v2985 = vsel %vm2131, %v2959, 0
        %2987 = vmatprep.subr.bf16.mxu0 0
        %2988 = vmatpush1.bf16.msra.mxu0 %v2976
        %2989 = vmatprep.subr.bf16.mxu0 0
        %2990 = vmatpush1.bf16.msra.mxu0 %v2977
        %2991 = vmatprep.subr.bf16.mxu0 0
        %2992 = vmatpush1.bf16.msra.mxu0 %v2978
        %2993 = vmatprep.subr.bf16.mxu0 0
        %2994 = vmatpush1.bf16.msra.mxu0 %v2979
        %2995 = vmatprep.subr.bf16.mxu0 0
        %2996 = vmatpush1.bf16.msra.mxu0 0
        %2997 = vmatprep.subr.bf16.mxu0 0
        %2998 = vmatpush1.bf16.msra.mxu0 0
        %2999 = vmatprep.subr.bf16.mxu0 0
        %3000 = vmatpush1.bf16.msra.mxu0 0
        %3001 = vmatprep.subr.bf16.mxu0 0
        %3002 = vmatpush1.bf16.msra.mxu0 0
        %3003 = vmatprep.subr.bf16.mxu0 0
        %3004 = vmatpush1.bf16.msra.mxu0 0
        %3005 = vmatprep.subr.bf16.mxu0 0
        %3006 = vmatpush1.bf16.msra.mxu0 0
        %3007 = vmatprep.subr.bf16.mxu0 0
        %3008 = vmatpush1.bf16.msra.mxu0 0
        %3009 = vmatprep.subr.bf16.mxu0 0
        %3010 = vmatpush1.bf16.msra.mxu0 0
        %3011 = vmatprep.subr.bf16.mxu0 0
        %3012 = vmatpush1.bf16.msra.mxu0 0
        %3013 = vmatprep.subr.bf16.mxu0 0
        %3014 = vmatpush1.bf16.msra.mxu0 0
        %3015 = vmatprep.subr.bf16.mxu0 0
        %3016 = vmatpush1.bf16.msra.mxu0 0
        %3017 = vmatprep.subr.bf16.mxu0 0
        %3018 = vmatpush1.bf16.msra.mxu0 0
        %3019 = vmatprep.mubr.bf16.mxu0 0
        %3020 = vmatmul.mubr.bf16.gmra.mrb[0].mxu0 %v2985
        %v3021 = vpop.f32.mrb[0].mxu0
        %v3022 = vadd.f32 %v2937, %v3021
        %v3023 = vpop.f32.mrb[0].mxu0
        %v3024 = vpop.f32.mrb[0].mxu0
        %v3025 = vadd.f32 %v2940, %v3024
        %v3026 = vpop.f32.mrb[0].mxu0
        %3027 = vdwg.mxu0
        %v3028 = vld [vmem:[#allocation2 + $0x20] sm:$0xfe]
        %v3029 = vld [vmem:[#allocation2 + $0x40] sm:$0xff]
        %v3030 = vpack.c.bf16 %v3029, %v3028
        %s3031 = scalar_lea.vmem [#allocation12], 64
        %v3032 = vld [vmem:[%s3031] sm:$0xf]
        %v3033 = vld [vmem:[%s3031 + $0x4] sm:$0xf]
        %v3034 = vld [vmem:[%s3031 + $0x8] sm:$0xf]
        %v3035 = vld [vmem:[%s3031 + $0xc] sm:$0xf]
        %v3036 = vld [vmem:[%s3031 + $0x10] sm:$0xf]
        %v3037 = vld [vmem:[%s3031 + $0x14] sm:$0xf]
        %v3038 = vld [vmem:[%s3031 + $0x18] sm:$0xf]
        %v3039 = vld [vmem:[%s3031 + $0x1c] sm:$0xf]
        %v3041 = vshrl.u32 %v3030, 16
        %v3043 = vshll.u32 %v3030, 16
        %v3045 = vrot.slane %v3043, 1
        %v3046 = vor.u32 %v3041, %v3045
        %v3055 = vunpack.c.l.b16 %v3032
        %v3056 = vunpack.c.l.b16 %v3033
        %v3057 = vunpack.c.l.b16 %v3034
        %v3058 = vunpack.c.l.b16 %v3035
        %v3059 = vunpack.c.l.b16 %v3036
        %v3060 = vunpack.c.l.b16 %v3037
        %v3061 = vunpack.c.l.b16 %v3038
        %v3062 = vunpack.c.l.b16 %v3039
        %v3063 = vpack.c.b16 %v3056, %v3055
        %v3064 = vpack.c.b16 %v3058, %v3057
        %v3065 = vpack.c.b16 %v3060, %v3059
        %v3066 = vpack.c.b16 %v3062, %v3061
        %v3072 = vsel %vm2131, %v3046, 0
        %3074 = vmatprep.subr.bf16.mxu0 0
        %3075 = vmatpush1.bf16.msra.mxu0 %v3063
        %3076 = vmatprep.subr.bf16.mxu0 0
        %3077 = vmatpush1.bf16.msra.mxu0 %v3064
        %3078 = vmatprep.subr.bf16.mxu0 0
        %3079 = vmatpush1.bf16.msra.mxu0 %v3065
        %3080 = vmatprep.subr.bf16.mxu0 0
        %3081 = vmatpush1.bf16.msra.mxu0 %v3066
        %3082 = vmatprep.subr.bf16.mxu0 0
        %3083 = vmatpush1.bf16.msra.mxu0 0
        %3084 = vmatprep.subr.bf16.mxu0 0
        %3085 = vmatpush1.bf16.msra.mxu0 0
        %3086 = vmatprep.subr.bf16.mxu0 0
        %3087 = vmatpush1.bf16.msra.mxu0 0
        %3088 = vmatprep.subr.bf16.mxu0 0
        %3089 = vmatpush1.bf16.msra.mxu0 0
        %3090 = vmatprep.subr.bf16.mxu0 0
        %3091 = vmatpush1.bf16.msra.mxu0 0
        %3092 = vmatprep.subr.bf16.mxu0 0
        %3093 = vmatpush1.bf16.msra.mxu0 0
        %3094 = vmatprep.subr.bf16.mxu0 0
        %3095 = vmatpush1.bf16.msra.mxu0 0
        %3096 = vmatprep.subr.bf16.mxu0 0
        %3097 = vmatpush1.bf16.msra.mxu0 0
        %3098 = vmatprep.subr.bf16.mxu0 0
        %3099 = vmatpush1.bf16.msra.mxu0 0
        %3100 = vmatprep.subr.bf16.mxu0 0
        %3101 = vmatpush1.bf16.msra.mxu0 0
        %3102 = vmatprep.subr.bf16.mxu0 0
        %3103 = vmatpush1.bf16.msra.mxu0 0
        %3104 = vmatprep.subr.bf16.mxu0 0
        %3105 = vmatpush1.bf16.msra.mxu0 0
        %3106 = vmatprep.mubr.bf16.mxu0 0
        %3107 = vmatmul.mubr.bf16.gmra.mrb[0].mxu0 %v3072
        %v3108 = vpop.f32.mrb[0].mxu0
        %v3109 = vadd.f32 0.0, %v3108
        %v3110 = vpop.f32.mrb[0].mxu0
        %v3111 = vpop.f32.mrb[0].mxu0
        %v3112 = vadd.f32 0.0, %v3111
        %v3113 = vpop.f32.mrb[0].mxu0
        %3114 = vdwg.mxu0
        %v3115 = vadd.f32 %v3022, %v3109
        %v3116 = vadd.f32 %v3025, %v3112
        %vm3117 = vcmask 121856
        %v3118 = vsel %vm3117, %v2022, 0
        %v3121 = vsel %vm2039, %v3116, 0
        %3123 = vmatprep.subr.mxu0 0.0
        %3124 = vmatpush1.msra.mxu0 %v3115
        %3125 = vmatprep.subr.mxu0 0.0
        %3126 = vmatpush1.msra.mxu0 %v3121
        %3127 = vmatprep.subr.mxu0 0.0
        %3128 = vmatpush1.msra.mxu0 0.0
        %3129 = vmatprep.subr.mxu0 0.0
        %3130 = vmatpush1.msra.mxu0 0.0
        %3131 = vmatprep.subr.mxu0 0.0
        %3132 = vmatpush1.msra.mxu0 0.0
        %3133 = vmatprep.subr.mxu0 0.0
        %3134 = vmatpush1.msra.mxu0 0.0
        %3135 = vmatprep.subr.mxu0 0.0
        %3136 = vmatpush1.msra.mxu0 0.0
        %3137 = vmatprep.subr.mxu0 0.0
        %3138 = vmatpush1.msra.mxu0 0.0
        %3139 = vmatprep.subr.mxu0 0.0
        %3140 = vmatpush1.msra.mxu0 0.0
        %3141 = vmatprep.subr.mxu0 0.0
        %3142 = vmatpush1.msra.mxu0 0.0
        %3143 = vmatprep.subr.mxu0 0.0
        %3144 = vmatpush1.msra.mxu0 0.0
        %3145 = vmatprep.subr.mxu0 0.0
        %3146 = vmatpush1.msra.mxu0 0.0
        %3147 = vmatprep.subr.mxu0 0.0
        %3148 = vmatpush1.msra.mxu0 0.0
        %3149 = vmatprep.subr.mxu0 0.0
        %3150 = vmatpush1.msra.mxu0 0.0
        %3151 = vmatprep.subr.mxu0 0.0
        %3152 = vmatpush1.msra.mxu0 0.0
        %3153 = vmatprep.subr.mxu0 0.0
        %3154 = vmatpush1.msra.mxu0 0.0
        %3155 = vmatprep.subr.mxu0 0.0
        %3156 = vmatpush1.msra.mxu0 0.0
        %3157 = vmatprep.subr.mxu0 0.0
        %3158 = vmatpush1.msra.mxu0 0.0
        %3159 = vmatprep.subr.mxu0 0.0
        %3160 = vmatpush1.msra.mxu0 0.0
        %3161 = vmatprep.subr.mxu0 0.0
        %3162 = vmatpush1.msra.mxu0 0.0
        %3163 = vmatprep.subr.mxu0 0.0
        %3164 = vmatpush1.msra.mxu0 0.0
        %3165 = vmatprep.subr.mxu0 0.0
        %3166 = vmatpush1.msra.mxu0 0.0
        %3167 = vmatprep.subr.mxu0 0.0
        %3168 = vmatpush1.msra.mxu0 0.0
        %3169 = vmatprep.subr.mxu0 0.0
        %3170 = vmatpush1.msra.mxu0 0.0
        %3171 = vmatprep.subr.mxu0 0.0
        %3172 = vmatpush1.msra.mxu0 0.0
        %3173 = vmatprep.subr.mxu0 0.0
        %3174 = vmatpush1.msra.mxu0 0.0
        %3175 = vmatprep.subr.mxu0 0.0
        %3176 = vmatpush1.msra.mxu0 0.0
        %3177 = vmatprep.subr.mxu0 0.0
        %3178 = vmatpush1.msra.mxu0 0.0
        %3179 = vmatprep.subr.mxu0 0.0
        %3180 = vmatpush1.msra.mxu0 0.0
        %3181 = vmatprep.subr.mxu0 0.0
        %3182 = vmatpush1.msra.mxu0 0.0
        %3183 = vmatprep.subr.mxu0 0.0
        %3184 = vmatpush1.msra.mxu0 0.0
        %3185 = vmatprep.subr.mxu0 0.0
        %3186 = vmatpush1.msra.mxu0 0.0
        %3187 = vmatprep.mubr.f32.mxu0 0.0
        %3188 = vmatmul.mubr.f32.gmra.mrb[0].mxu0 %v3118
        %v3189 = vpop.f32.mrb[0].mxu0
        %v3190 = vadd.f32 0.0, %v3189
        %v3191 = vpop.f32.mrb[0].mxu0
        %3192 = vdwg.mxu0
        %v3193 = vmax.f32 %v3190, 0.0
        %3194 = vst [vmem:[#allocation2 + $0x7] sm:$0x1] 0.0
        %3195 = vst [vmem:[#allocation2 + $0x40] sm:$0x1] 0.0
        %3196 = vst [vmem:[#allocation2 + $0x20] sm:$0xff] %v3193
        %v3197 = vld [vmem:[#allocation2] sm:$0x80]
        %v3198 = vld [vmem:[#allocation2 + $0x20] sm:$0x7f]
        %v3199 = vpack.c.bf16 %v3198, %v3197
        %v3200 = vld [vmem:[#allocation14] sm:$0xf]
        %v3201 = vld [vmem:[#allocation14 + $0x4] sm:$0xf]
        %v3202 = vld [vmem:[#allocation14 + $0x8] sm:$0xf]
        %v3203 = vld [vmem:[#allocation14 + $0xc] sm:$0xf]
        %v3204 = vld [vmem:[#allocation14 + $0x10] sm:$0xf]
        %v3205 = vld [vmem:[#allocation14 + $0x14] sm:$0xf]
        %v3206 = vld [vmem:[#allocation14 + $0x18] sm:$0xf]
        %v3207 = vld [vmem:[#allocation14 + $0x1c] sm:$0xf]
        %v3208 = vld [vmem:[#allocation14 + $0x20] sm:$0xf]
        %v3209 = vld [vmem:[#allocation14 + $0x24] sm:$0xf]
        %v3210 = vld [vmem:[#allocation14 + $0x28] sm:$0xf]
        %v3211 = vld [vmem:[#allocation14 + $0x2c] sm:$0xf]
        %v3212 = vld [vmem:[#allocation14 + $0x30] sm:$0xf]
        %v3213 = vld [vmem:[#allocation14 + $0x34] sm:$0xf]
        %v3214 = vld [vmem:[#allocation14 + $0x38] sm:$0xf]
        %v3215 = vld [vmem:[#allocation14 + $0x3c] sm:$0xf]
        %v3216 = vld [vmem:[#allocation2 + $0x20] sm:$0xff]
        %v3217 = vpack.c.bf16 %v3216, %v3216
        %s3218 = scalar_lea.vmem [#allocation14], 64
        %v3219 = vld [vmem:[%s3218] sm:$0xf]
        %v3220 = vld [vmem:[%s3218 + $0x4] sm:$0xf]
        %v3221 = vld [vmem:[%s3218 + $0x8] sm:$0xf]
        %v3222 = vld [vmem:[%s3218 + $0xc] sm:$0xf]
        %v3223 = vld [vmem:[%s3218 + $0x10] sm:$0xf]
        %v3224 = vld [vmem:[%s3218 + $0x14] sm:$0xf]
        %v3225 = vld [vmem:[%s3218 + $0x18] sm:$0xf]
        %v3226 = vld [vmem:[%s3218 + $0x1c] sm:$0xf]
        %v3227 = vld [vmem:[%s3218 + $0x20] sm:$0xf]
        %v3228 = vld [vmem:[%s3218 + $0x24] sm:$0xf]
        %v3229 = vld [vmem:[%s3218 + $0x28] sm:$0xf]
        %v3230 = vld [vmem:[%s3218 + $0x2c] sm:$0xf]
        %v3231 = vld [vmem:[%s3218 + $0x30] sm:$0xf]
        %v3232 = vld [vmem:[%s3218 + $0x34] sm:$0xf]
        %v3233 = vld [vmem:[%s3218 + $0x38] sm:$0xf]
        %v3234 = vld [vmem:[%s3218 + $0x3c] sm:$0xf]
        %v3251 = vunpack.c.l.b16 %v3219
        %v3252 = vunpack.c.l.b16 %v3220
        %v3253 = vunpack.c.l.b16 %v3221
        %v3254 = vunpack.c.l.b16 %v3222
        %v3255 = vunpack.c.l.b16 %v3223
        %v3256 = vunpack.c.l.b16 %v3224
        %v3257 = vunpack.c.l.b16 %v3225
        %v3258 = vunpack.c.l.b16 %v3226
        %v3259 = vunpack.c.l.b16 %v3227
        %v3260 = vunpack.c.l.b16 %v3228
        %v3261 = vunpack.c.l.b16 %v3229
        %v3262 = vunpack.c.l.b16 %v3230
        %v3263 = vunpack.c.l.b16 %v3231
        %v3264 = vunpack.c.l.b16 %v3232
        %v3265 = vunpack.c.l.b16 %v3233
        %v3266 = vunpack.c.l.b16 %v3234
        %v3267 = vpack.c.b16 %v3252, %v3251
        %v3268 = vpack.c.b16 %v3254, %v3253
        %v3269 = vpack.c.b16 %v3256, %v3255
        %v3270 = vpack.c.b16 %v3258, %v3257
        %v3271 = vpack.c.b16 %v3260, %v3259
        %v3272 = vpack.c.b16 %v3262, %v3261
        %v3273 = vpack.c.b16 %v3264, %v3263
        %v3274 = vpack.c.b16 %v3266, %v3265
        %3283 = vmatprep.subr.bf16.mxu0 0
        %3284 = vmatpush1.bf16.msra.mxu0 %v3267
        %3285 = vmatprep.subr.bf16.mxu0 0
        %3286 = vmatpush1.bf16.msra.mxu0 %v3268
        %3287 = vmatprep.subr.bf16.mxu0 0
        %3288 = vmatpush1.bf16.msra.mxu0 %v3269
        %3289 = vmatprep.subr.bf16.mxu0 0
        %3290 = vmatpush1.bf16.msra.mxu0 %v3270
        %3291 = vmatprep.subr.bf16.mxu0 0
        %3292 = vmatpush1.bf16.msra.mxu0 %v3271
        %3293 = vmatprep.subr.bf16.mxu0 0
        %3294 = vmatpush1.bf16.msra.mxu0 %v3272
        %3295 = vmatprep.subr.bf16.mxu0 0
        %3296 = vmatpush1.bf16.msra.mxu0 %v3273
        %3297 = vmatprep.subr.bf16.mxu0 0
        %3298 = vmatpush1.bf16.msra.mxu0 %v3274
        %3299 = vmatprep.subr.bf16.mxu0 0
        %3300 = vmatpush1.bf16.msra.mxu0 0
        %3301 = vmatprep.subr.bf16.mxu0 0
        %3302 = vmatpush1.bf16.msra.mxu0 0
        %3303 = vmatprep.subr.bf16.mxu0 0
        %3304 = vmatpush1.bf16.msra.mxu0 0
        %3305 = vmatprep.subr.bf16.mxu0 0
        %3306 = vmatpush1.bf16.msra.mxu0 0
        %3307 = vmatprep.subr.bf16.mxu0 0
        %3308 = vmatpush1.bf16.msra.mxu0 0
        %3309 = vmatprep.subr.bf16.mxu0 0
        %3310 = vmatpush1.bf16.msra.mxu0 0
        %3311 = vmatprep.subr.bf16.mxu0 0
        %3312 = vmatpush1.bf16.msra.mxu0 0
        %3313 = vmatprep.subr.bf16.mxu0 0
        %3314 = vmatpush1.bf16.msra.mxu0 0
        %3315 = vmatprep.mubr.bf16.mxu0 0
        %3316 = vmatmul.mubr.bf16.gmra.mrb[0].mxu0 %v3217
        %v3317 = vpop.f32.mrb[0].mxu0
        %v3318 = vadd.f32 0.0, %v3317
        %v3319 = vpop.f32.mrb[0].mxu0
        %v3320 = vpop.f32.mrb[0].mxu0
        %v3321 = vpop.f32.mrb[0].mxu0
        %3322 = vdwg.mxu0
        %v3324 = vshrl.u32 %v3199, 16
        %v3326 = vrot.slane %v3324, 3
        %v3327 = vshll.u32 %v3199, 16
        %v3329 = vrot.slane %v3327, 4
        %v3330 = vor.u32 %v3326, %v3329
        %v3348 = vunpack.c.l.b16 %v3200
        %v3349 = vunpack.c.l.b16 %v3201
        %v3350 = vunpack.c.l.b16 %v3202
        %v3351 = vunpack.c.l.b16 %v3203
        %v3352 = vunpack.c.l.b16 %v3204
        %v3353 = vunpack.c.l.b16 %v3205
        %v3354 = vunpack.c.l.b16 %v3206
        %v3355 = vunpack.c.l.b16 %v3207
        %v3356 = vunpack.c.l.b16 %v3208
        %v3357 = vunpack.c.l.b16 %v3209
        %v3358 = vunpack.c.l.b16 %v3210
        %v3359 = vunpack.c.l.b16 %v3211
        %v3360 = vunpack.c.l.b16 %v3212
        %v3361 = vunpack.c.l.b16 %v3213
        %v3362 = vunpack.c.l.b16 %v3214
        %v3363 = vunpack.c.l.b16 %v3215
        %v3364 = vpack.c.b16 %v3349, %v3348
        %v3365 = vpack.c.b16 %v3351, %v3350
        %v3366 = vpack.c.b16 %v3353, %v3352
        %v3367 = vpack.c.b16 %v3355, %v3354
        %v3368 = vpack.c.b16 %v3357, %v3356
        %v3369 = vpack.c.b16 %v3359, %v3358
        %v3370 = vpack.c.b16 %v3361, %v3360
        %v3371 = vpack.c.b16 %v3363, %v3362
        %3380 = vmatprep.subr.bf16.mxu0 0
        %3381 = vmatpush1.bf16.msra.mxu0 %v3364
        %3382 = vmatprep.subr.bf16.mxu0 0
        %3383 = vmatpush1.bf16.msra.mxu0 %v3365
        %3384 = vmatprep.subr.bf16.mxu0 0
        %3385 = vmatpush1.bf16.msra.mxu0 %v3366
        %3386 = vmatprep.subr.bf16.mxu0 0
        %3387 = vmatpush1.bf16.msra.mxu0 %v3367
        %3388 = vmatprep.subr.bf16.mxu0 0
        %3389 = vmatpush1.bf16.msra.mxu0 %v3368
        %3390 = vmatprep.subr.bf16.mxu0 0
        %3391 = vmatpush1.bf16.msra.mxu0 %v3369
        %3392 = vmatprep.subr.bf16.mxu0 0
        %3393 = vmatpush1.bf16.msra.mxu0 %v3370
        %3394 = vmatprep.subr.bf16.mxu0 0
        %3395 = vmatpush1.bf16.msra.mxu0 %v3371
        %3396 = vmatprep.subr.bf16.mxu0 0
        %3397 = vmatpush1.bf16.msra.mxu0 0
        %3398 = vmatprep.subr.bf16.mxu0 0
        %3399 = vmatpush1.bf16.msra.mxu0 0
        %3400 = vmatprep.subr.bf16.mxu0 0
        %3401 = vmatpush1.bf16.msra.mxu0 0
        %3402 = vmatprep.subr.bf16.mxu0 0
        %3403 = vmatpush1.bf16.msra.mxu0 0
        %3404 = vmatprep.subr.bf16.mxu0 0
        %3405 = vmatpush1.bf16.msra.mxu0 0
        %3406 = vmatprep.subr.bf16.mxu0 0
        %3407 = vmatpush1.bf16.msra.mxu0 0
        %3408 = vmatprep.subr.bf16.mxu0 0
        %3409 = vmatpush1.bf16.msra.mxu0 0
        %3410 = vmatprep.subr.bf16.mxu0 0
        %3411 = vmatpush1.bf16.msra.mxu0 0
        %3412 = vmatprep.mubr.bf16.mxu0 0
        %3413 = vmatmul.mubr.bf16.gmra.mrb[0].mxu0 %v3330
        %v3414 = vpop.f32.mrb[0].mxu0
        %v3415 = vadd.f32 %v3318, %v3414
        %v3416 = vpop.f32.mrb[0].mxu0
        %v3417 = vpop.f32.mrb[0].mxu0
        %v3418 = vpop.f32.mrb[0].mxu0
        %3419 = vdwg.mxu0
        %v3420 = vld [vmem:[#allocation2 + $0x20] sm:$0xfe]
        %v3421 = vld [vmem:[#allocation2 + $0x40] sm:$0x1]
        %v3422 = vpack.c.bf16 %v3421, %v3420
        %s3423 = scalar_lea.vmem [#allocation14], 128
        %v3424 = vld [vmem:[%s3423] sm:$0xf]
        %v3425 = vld [vmem:[%s3423 + $0x4] sm:$0xf]
        %v3426 = vld [vmem:[%s3423 + $0x8] sm:$0xf]
        %v3427 = vld [vmem:[%s3423 + $0xc] sm:$0xf]
        %v3428 = vld [vmem:[%s3423 + $0x10] sm:$0xf]
        %v3429 = vld [vmem:[%s3423 + $0x14] sm:$0xf]
        %v3430 = vld [vmem:[%s3423 + $0x18] sm:$0xf]
        %v3431 = vld [vmem:[%s3423 + $0x1c] sm:$0xf]
        %v3432 = vld [vmem:[%s3423 + $0x20] sm:$0xf]
        %v3433 = vld [vmem:[%s3423 + $0x24] sm:$0xf]
        %v3434 = vld [vmem:[%s3423 + $0x28] sm:$0xf]
        %v3435 = vld [vmem:[%s3423 + $0x2c] sm:$0xf]
        %v3436 = vld [vmem:[%s3423 + $0x30] sm:$0xf]
        %v3437 = vld [vmem:[%s3423 + $0x34] sm:$0xf]
        %v3438 = vld [vmem:[%s3423 + $0x38] sm:$0xf]
        %v3439 = vld [vmem:[%s3423 + $0x3c] sm:$0xf]
        %v3441 = vshrl.u32 %v3422, 16
        %v3443 = vshll.u32 %v3422, 16
        %v3445 = vrot.slane %v3443, 1
        %v3446 = vor.u32 %v3441, %v3445
        %v3464 = vunpack.c.l.b16 %v3424
        %v3465 = vunpack.c.l.b16 %v3425
        %v3466 = vunpack.c.l.b16 %v3426
        %v3467 = vunpack.c.l.b16 %v3427
        %v3468 = vunpack.c.l.b16 %v3428
        %v3469 = vunpack.c.l.b16 %v3429
        %v3470 = vunpack.c.l.b16 %v3430
        %v3471 = vunpack.c.l.b16 %v3431
        %v3472 = vunpack.c.l.b16 %v3432
        %v3473 = vunpack.c.l.b16 %v3433
        %v3474 = vunpack.c.l.b16 %v3434
        %v3475 = vunpack.c.l.b16 %v3435
        %v3476 = vunpack.c.l.b16 %v3436
        %v3477 = vunpack.c.l.b16 %v3437
        %v3478 = vunpack.c.l.b16 %v3438
        %v3479 = vunpack.c.l.b16 %v3439
        %v3480 = vpack.c.b16 %v3465, %v3464
        %v3481 = vpack.c.b16 %v3467, %v3466
        %v3482 = vpack.c.b16 %v3469, %v3468
        %v3483 = vpack.c.b16 %v3471, %v3470
        %v3484 = vpack.c.b16 %v3473, %v3472
        %v3485 = vpack.c.b16 %v3475, %v3474
        %v3486 = vpack.c.b16 %v3477, %v3476
        %v3487 = vpack.c.b16 %v3479, %v3478
        %3496 = vmatprep.subr.bf16.mxu0 0
        %3497 = vmatpush1.bf16.msra.mxu0 %v3480
        %3498 = vmatprep.subr.bf16.mxu0 0
        %3499 = vmatpush1.bf16.msra.mxu0 %v3481
        %3500 = vmatprep.subr.bf16.mxu0 0
        %3501 = vmatpush1.bf16.msra.mxu0 %v3482
        %3502 = vmatprep.subr.bf16.mxu0 0
        %3503 = vmatpush1.bf16.msra.mxu0 %v3483
        %3504 = vmatprep.subr.bf16.mxu0 0
        %3505 = vmatpush1.bf16.msra.mxu0 %v3484
        %3506 = vmatprep.subr.bf16.mxu0 0
        %3507 = vmatpush1.bf16.msra.mxu0 %v3485
        %3508 = vmatprep.subr.bf16.mxu0 0
        %3509 = vmatpush1.bf16.msra.mxu0 %v3486
        %3510 = vmatprep.subr.bf16.mxu0 0
        %3511 = vmatpush1.bf16.msra.mxu0 %v3487
        %3512 = vmatprep.subr.bf16.mxu0 0
        %3513 = vmatpush1.bf16.msra.mxu0 0
        %3514 = vmatprep.subr.bf16.mxu0 0
        %3515 = vmatpush1.bf16.msra.mxu0 0
        %3516 = vmatprep.subr.bf16.mxu0 0
        %3517 = vmatpush1.bf16.msra.mxu0 0
        %3518 = vmatprep.subr.bf16.mxu0 0
        %3519 = vmatpush1.bf16.msra.mxu0 0
        %3520 = vmatprep.subr.bf16.mxu0 0
        %3521 = vmatpush1.bf16.msra.mxu0 0
        %3522 = vmatprep.subr.bf16.mxu0 0
        %3523 = vmatpush1.bf16.msra.mxu0 0
        %3524 = vmatprep.subr.bf16.mxu0 0
        %3525 = vmatpush1.bf16.msra.mxu0 0
        %3526 = vmatprep.subr.bf16.mxu0 0
        %3527 = vmatpush1.bf16.msra.mxu0 0
        %3528 = vmatprep.mubr.bf16.mxu0 0
        %3529 = vmatmul.mubr.bf16.gmra.mrb[0].mxu0 %v3446
        %v3530 = vpop.f32.mrb[0].mxu0
        %v3531 = vadd.f32 0.0, %v3530
        %v3532 = vpop.f32.mrb[0].mxu0
        %v3533 = vpop.f32.mrb[0].mxu0
        %v3534 = vpop.f32.mrb[0].mxu0
        %3535 = vdwg.mxu0
        %v3536 = vadd.f32 %v3415, %v3531
        %v3537 = vpack.c.bf16 %v2846, %v2845
        %v3538 = vld [vmem:[#allocation15] sm:$0xf]
        %v3539 = vld [vmem:[#allocation15 + $0x4] sm:$0xf]
        %v3540 = vld [vmem:[#allocation15 + $0x8] sm:$0xf]
        %v3541 = vld [vmem:[#allocation15 + $0xc] sm:$0xf]
        %v3542 = vld [vmem:[#allocation15 + $0x10] sm:$0xf]
        %v3543 = vld [vmem:[#allocation15 + $0x14] sm:$0xf]
        %v3544 = vld [vmem:[#allocation15 + $0x18] sm:$0xf]
        %v3545 = vld [vmem:[#allocation15 + $0x1c] sm:$0xf]
        %v3554 = vunpack.c.l.b16 %v3538
        %v3555 = vunpack.c.l.b16 %v3539
        %v3556 = vunpack.c.l.b16 %v3540
        %v3557 = vunpack.c.l.b16 %v3541
        %v3558 = vunpack.c.l.b16 %v3542
        %v3559 = vunpack.c.l.b16 %v3543
        %v3560 = vunpack.c.l.b16 %v3544
        %v3561 = vunpack.c.l.b16 %v3545
        %v3562 = vpack.c.b16 %v3555, %v3554
        %v3563 = vpack.c.b16 %v3557, %v3556
        %v3564 = vpack.c.b16 %v3559, %v3558
        %v3565 = vpack.c.b16 %v3561, %v3560
        %v3571 = vsel %vm2131, %v3537, 0
        %3573 = vmatprep.subr.bf16.mxu0 0
        %3574 = vmatpush1.bf16.msra.mxu0 %v3562
        %3575 = vmatprep.subr.bf16.mxu0 0
        %3576 = vmatpush1.bf16.msra.mxu0 %v3563
        %3577 = vmatprep.subr.bf16.mxu0 0
        %3578 = vmatpush1.bf16.msra.mxu0 %v3564
        %3579 = vmatprep.subr.bf16.mxu0 0
        %3580 = vmatpush1.bf16.msra.mxu0 %v3565
        %3581 = vmatprep.subr.bf16.mxu0 0
        %3582 = vmatpush1.bf16.msra.mxu0 0
        %3583 = vmatprep.subr.bf16.mxu0 0
        %3584 = vmatpush1.bf16.msra.mxu0 0
        %3585 = vmatprep.subr.bf16.mxu0 0
        %3586 = vmatpush1.bf16.msra.mxu0 0
        %3587 = vmatprep.subr.bf16.mxu0 0
        %3588 = vmatpush1.bf16.msra.mxu0 0
        %3589 = vmatprep.subr.bf16.mxu0 0
        %3590 = vmatpush1.bf16.msra.mxu0 0
        %3591 = vmatprep.subr.bf16.mxu0 0
        %3592 = vmatpush1.bf16.msra.mxu0 0
        %3593 = vmatprep.subr.bf16.mxu0 0
        %3594 = vmatpush1.bf16.msra.mxu0 0
        %3595 = vmatprep.subr.bf16.mxu0 0
        %3596 = vmatpush1.bf16.msra.mxu0 0
        %3597 = vmatprep.subr.bf16.mxu0 0
        %3598 = vmatpush1.bf16.msra.mxu0 0
        %3599 = vmatprep.subr.bf16.mxu0 0
        %3600 = vmatpush1.bf16.msra.mxu0 0
        %3601 = vmatprep.subr.bf16.mxu0 0
        %3602 = vmatpush1.bf16.msra.mxu0 0
        %3603 = vmatprep.subr.bf16.mxu0 0
        %3604 = vmatpush1.bf16.msra.mxu0 0
        %3605 = vmatprep.mubr.bf16.mxu0 0
        %3606 = vmatmul.mubr.bf16.gmra.mrb[0].mxu0 %v3571
        %v3607 = vpop.f32.mrb[0].mxu0
        %v3608 = vadd.f32 0.0, %v3607
        %v3609 = vpop.f32.mrb[0].mxu0
        %v3610 = vpop.f32.mrb[0].mxu0
        %v3611 = vadd.f32 0.0, %v3610
        %v3612 = vpop.f32.mrb[0].mxu0
        %3613 = vdwg.mxu0
        %vm3614 = vcmask 130048
        %v3615 = vsel %vm3614, %v2022, 0
        %3617 = vmatprep.subr.mxu0 0.0
        %3618 = vmatpush1.msra.mxu0 %v3608
        %3619 = vmatprep.subr.mxu0 0.0
        %3620 = vmatpush1.msra.mxu0 %v3611
        %3621 = vmatprep.subr.mxu0 0.0
        %3622 = vmatpush1.msra.mxu0 0.0
        %3623 = vmatprep.subr.mxu0 0.0
        %3624 = vmatpush1.msra.mxu0 0.0
        %3625 = vmatprep.subr.mxu0 0.0
        %3626 = vmatpush1.msra.mxu0 0.0
        %3627 = vmatprep.subr.mxu0 0.0
        %3628 = vmatpush1.msra.mxu0 0.0
        %3629 = vmatprep.subr.mxu0 0.0
        %3630 = vmatpush1.msra.mxu0 0.0
        %3631 = vmatprep.subr.mxu0 0.0
        %3632 = vmatpush1.msra.mxu0 0.0
        %3633 = vmatprep.subr.mxu0 0.0
        %3634 = vmatpush1.msra.mxu0 0.0
        %3635 = vmatprep.subr.mxu0 0.0
        %3636 = vmatpush1.msra.mxu0 0.0
        %3637 = vmatprep.subr.mxu0 0.0
        %3638 = vmatpush1.msra.mxu0 0.0
        %3639 = vmatprep.subr.mxu0 0.0
        %3640 = vmatpush1.msra.mxu0 0.0
        %3641 = vmatprep.subr.mxu0 0.0
        %3642 = vmatpush1.msra.mxu0 0.0
        %3643 = vmatprep.subr.mxu0 0.0
        %3644 = vmatpush1.msra.mxu0 0.0
        %3645 = vmatprep.subr.mxu0 0.0
        %3646 = vmatpush1.msra.mxu0 0.0
        %3647 = vmatprep.subr.mxu0 0.0
        %3648 = vmatpush1.msra.mxu0 0.0
        %3649 = vmatprep.subr.mxu0 0.0
        %3650 = vmatpush1.msra.mxu0 0.0
        %3651 = vmatprep.subr.mxu0 0.0
        %3652 = vmatpush1.msra.mxu0 0.0
        %3653 = vmatprep.subr.mxu0 0.0
        %3654 = vmatpush1.msra.mxu0 0.0
        %3655 = vmatprep.subr.mxu0 0.0
        %3656 = vmatpush1.msra.mxu0 0.0
        %3657 = vmatprep.subr.mxu0 0.0
        %3658 = vmatpush1.msra.mxu0 0.0
        %3659 = vmatprep.subr.mxu0 0.0
        %3660 = vmatpush1.msra.mxu0 0.0
        %3661 = vmatprep.subr.mxu0 0.0
        %3662 = vmatpush1.msra.mxu0 0.0
        %3663 = vmatprep.subr.mxu0 0.0
        %3664 = vmatpush1.msra.mxu0 0.0
        %3665 = vmatprep.subr.mxu0 0.0
        %3666 = vmatpush1.msra.mxu0 0.0
        %3667 = vmatprep.subr.mxu0 0.0
        %3668 = vmatpush1.msra.mxu0 0.0
        %3669 = vmatprep.subr.mxu0 0.0
        %3670 = vmatpush1.msra.mxu0 0.0
        %3671 = vmatprep.subr.mxu0 0.0
        %3672 = vmatpush1.msra.mxu0 0.0
        %3673 = vmatprep.subr.mxu0 0.0
        %3674 = vmatpush1.msra.mxu0 0.0
        %3675 = vmatprep.subr.mxu0 0.0
        %3676 = vmatpush1.msra.mxu0 0.0
        %3677 = vmatprep.subr.mxu0 0.0
        %3678 = vmatpush1.msra.mxu0 0.0
        %3679 = vmatprep.subr.mxu0 0.0
        %3680 = vmatpush1.msra.mxu0 0.0
        %3681 = vmatprep.mubr.f32.mxu0 0.0
        %3682 = vmatmul.mubr.f32.gmra.mrb[0].mxu0 %v3615
        %v3683 = vpop.f32.mrb[0].mxu0
        %v3684 = vadd.f32 0.0, %v3683
        %v3685 = vpop.f32.mrb[0].mxu0
        %3686 = vdwg.mxu0
        %v3687 = vadd.f32 %v3536, %v3684
        %v3688 = vmax.f32 %v3687, 0.0
        %3689 = vst [vmem:[#allocation2 + $0x7] sm:$0x1] 0.0
        %3690 = vst [vmem:[#allocation2 + $0x40] sm:$0x1] 0.0
        %3691 = vst [vmem:[#allocation2 + $0x20] sm:$0xff] %v3688
        %v3692 = vld [vmem:[#allocation2] sm:$0x80]
        %v3693 = vld [vmem:[#allocation2 + $0x20] sm:$0x3f]
        %v3694 = vpack.c.bf16 %v3693, %v3692
        %v3695 = vld [vmem:[#allocation17] sm:$0xff]
        %v3696 = vld [vmem:[#allocation17 + $0x8] sm:$0xff]
        %v3697 = vld [vmem:[#allocation17 + $0x10] sm:$0xff]
        %v3698 = vld [vmem:[#allocation17 + $0x18] sm:$0xff]
        %v3699 = vld [vmem:[#allocation17 + $0x20] sm:$0xff]
        %v3700 = vld [vmem:[#allocation17 + $0x28] sm:$0xff]
        %v3701 = vld [vmem:[#allocation17 + $0x30] sm:$0xff]
        %v3702 = vld [vmem:[#allocation17 + $0x38] sm:$0xff]
        %v3703 = vld [vmem:[#allocation17 + $0x40] sm:$0xff]
        %v3704 = vld [vmem:[#allocation17 + $0x48] sm:$0xff]
        %v3705 = vld [vmem:[#allocation17 + $0x50] sm:$0xff]
        %v3706 = vld [vmem:[#allocation17 + $0x58] sm:$0xff]
        %v3707 = vld [vmem:[#allocation17 + $0x60] sm:$0xff]
        %v3708 = vld [vmem:[#allocation17 + $0x68] sm:$0xff]
        %v3709 = vld [vmem:[#allocation17 + $0x70] sm:$0xff]
        %v3710 = vld [vmem:[#allocation17 + $0x78] sm:$0xff]
        %v3711 = vld [vmem:[#allocation2 + $0x20] sm:$0x7f]
        %v3712 = vpack.c.bf16 %v3711, %v3711
        %s3713 = scalar_lea.vmem [#allocation17], 128
        %v3714 = vld [vmem:[%s3713] sm:$0xff]
        %v3715 = vld [vmem:[%s3713 + $0x8] sm:$0xff]
        %v3716 = vld [vmem:[%s3713 + $0x10] sm:$0xff]
        %v3717 = vld [vmem:[%s3713 + $0x18] sm:$0xff]
        %v3718 = vld [vmem:[%s3713 + $0x20] sm:$0xff]
        %v3719 = vld [vmem:[%s3713 + $0x28] sm:$0xff]
        %v3720 = vld [vmem:[%s3713 + $0x30] sm:$0xff]
        %v3721 = vld [vmem:[%s3713 + $0x38] sm:$0xff]
        %v3722 = vld [vmem:[%s3713 + $0x40] sm:$0xff]
        %v3723 = vld [vmem:[%s3713 + $0x48] sm:$0xff]
        %v3724 = vld [vmem:[%s3713 + $0x50] sm:$0xff]
        %v3725 = vld [vmem:[%s3713 + $0x58] sm:$0xff]
        %v3726 = vld [vmem:[%s3713 + $0x60] sm:$0xff]
        %v3727 = vld [vmem:[%s3713 + $0x68] sm:$0xff]
        %v3728 = vld [vmem:[%s3713 + $0x70] sm:$0xff]
        %v3729 = vld [vmem:[%s3713 + $0x78] sm:$0xff]
        %v3746 = vunpack.c.l.b16 %v3714
        %v3747 = vunpack.c.h.b16 %v3714
        %v3748 = vunpack.c.l.b16 %v3715
        %v3749 = vunpack.c.h.b16 %v3715
        %v3750 = vunpack.c.l.b16 %v3716
        %v3751 = vunpack.c.h.b16 %v3716
        %v3752 = vunpack.c.l.b16 %v3717
        %v3753 = vunpack.c.h.b16 %v3717
        %v3754 = vunpack.c.l.b16 %v3718
        %v3755 = vunpack.c.h.b16 %v3718
        %v3756 = vunpack.c.l.b16 %v3719
        %v3757 = vunpack.c.h.b16 %v3719
        %v3758 = vunpack.c.l.b16 %v3720
        %v3759 = vunpack.c.h.b16 %v3720
        %v3760 = vunpack.c.l.b16 %v3721
        %v3761 = vunpack.c.h.b16 %v3721
        %v3762 = vunpack.c.l.b16 %v3722
        %v3763 = vunpack.c.h.b16 %v3722
        %v3764 = vunpack.c.l.b16 %v3723
        %v3765 = vunpack.c.h.b16 %v3723
        %v3766 = vunpack.c.l.b16 %v3724
        %v3767 = vunpack.c.h.b16 %v3724
        %v3768 = vunpack.c.l.b16 %v3725
        %v3769 = vunpack.c.h.b16 %v3725
        %v3770 = vunpack.c.l.b16 %v3726
        %v3771 = vunpack.c.h.b16 %v3726
        %v3772 = vunpack.c.l.b16 %v3727
        %v3773 = vunpack.c.h.b16 %v3727
        %v3774 = vunpack.c.l.b16 %v3728
        %v3775 = vunpack.c.h.b16 %v3728
        %v3776 = vunpack.c.l.b16 %v3729
        %v3777 = vunpack.c.h.b16 %v3729
        %v3778 = vpack.c.b16 %v3748, %v3746
        %v3779 = vpack.c.b16 %v3749, %v3747
        %v3780 = vpack.c.b16 %v3752, %v3750
        %v3781 = vpack.c.b16 %v3753, %v3751
        %v3782 = vpack.c.b16 %v3756, %v3754
        %v3783 = vpack.c.b16 %v3757, %v3755
        %v3784 = vpack.c.b16 %v3760, %v3758
        %v3785 = vpack.c.b16 %v3761, %v3759
        %v3786 = vpack.c.b16 %v3764, %v3762
        %v3787 = vpack.c.b16 %v3765, %v3763
        %v3788 = vpack.c.b16 %v3768, %v3766
        %v3789 = vpack.c.b16 %v3769, %v3767
        %v3790 = vpack.c.b16 %v3772, %v3770
        %v3791 = vpack.c.b16 %v3773, %v3771
        %v3792 = vpack.c.b16 %v3776, %v3774
        %v3793 = vpack.c.b16 %v3777, %v3775
        %3810 = vmatprep.subr.bf16.mxu0 %v3779
        %3811 = vmatpush1.bf16.msra.mxu0 %v3778
        %3812 = vmatprep.subr.bf16.mxu0 %v3781
        %3813 = vmatpush1.bf16.msra.mxu0 %v3780
        %3814 = vmatprep.subr.bf16.mxu0 %v3783
        %3815 = vmatpush1.bf16.msra.mxu0 %v3782
        %3816 = vmatprep.subr.bf16.mxu0 %v3785
        %3817 = vmatpush1.bf16.msra.mxu0 %v3784
        %3818 = vmatprep.subr.bf16.mxu0 %v3787
        %3819 = vmatpush1.bf16.msra.mxu0 %v3786
        %3820 = vmatprep.subr.bf16.mxu0 %v3789
        %3821 = vmatpush1.bf16.msra.mxu0 %v3788
        %3822 = vmatprep.subr.bf16.mxu0 %v3791
        %3823 = vmatpush1.bf16.msra.mxu0 %v3790
        %3824 = vmatprep.subr.bf16.mxu0 %v3793
        %3825 = vmatpush1.bf16.msra.mxu0 %v3792
        %3826 = vmatprep.subr.bf16.mxu0 0
        %3827 = vmatpush1.bf16.msra.mxu0 0
        %3828 = vmatprep.subr.bf16.mxu0 0
        %3829 = vmatpush1.bf16.msra.mxu0 0
        %3830 = vmatprep.subr.bf16.mxu0 0
        %3831 = vmatpush1.bf16.msra.mxu0 0
        %3832 = vmatprep.subr.bf16.mxu0 0
        %3833 = vmatpush1.bf16.msra.mxu0 0
        %3834 = vmatprep.subr.bf16.mxu0 0
        %3835 = vmatpush1.bf16.msra.mxu0 0
        %3836 = vmatprep.subr.bf16.mxu0 0
        %3837 = vmatpush1.bf16.msra.mxu0 0
        %3838 = vmatprep.subr.bf16.mxu0 0
        %3839 = vmatpush1.bf16.msra.mxu0 0
        %3840 = vmatprep.subr.bf16.mxu0 0
        %3841 = vmatpush1.bf16.msra.mxu0 0
        %3842 = vmatprep.mubr.bf16.mxu0 0
        %3843 = vmatmul.mubr.bf16.gmra.mrb[0].mxu0 %v3712
        %v3844 = vpop.f32.mrb[0].mxu0
        %v3845 = vadd.f32 0.0, %v3844
        %v3846 = vpop.f32.mrb[0].mxu0
        %v3847 = vadd.f32 0.0, %v3846
        %v3848 = vpop.f32.mrb[0].mxu0
        %v3849 = vpop.f32.mrb[0].mxu0
        %3850 = vdwg.mxu0
        %v3852 = vshrl.u32 %v3694, 16
        %v3854 = vrot.slane %v3852, 3
        %v3855 = vshll.u32 %v3694, 16
        %v3857 = vrot.slane %v3855, 4
        %v3858 = vor.u32 %v3854, %v3857
        %v3876 = vunpack.c.l.b16 %v3695
        %v3877 = vunpack.c.h.b16 %v3695
        %v3878 = vunpack.c.l.b16 %v3696
        %v3879 = vunpack.c.h.b16 %v3696
        %v3880 = vunpack.c.l.b16 %v3697
        %v3881 = vunpack.c.h.b16 %v3697
        %v3882 = vunpack.c.l.b16 %v3698
        %v3883 = vunpack.c.h.b16 %v3698
        %v3884 = vunpack.c.l.b16 %v3699
        %v3885 = vunpack.c.h.b16 %v3699
        %v3886 = vunpack.c.l.b16 %v3700
        %v3887 = vunpack.c.h.b16 %v3700
        %v3888 = vunpack.c.l.b16 %v3701
        %v3889 = vunpack.c.h.b16 %v3701
        %v3890 = vunpack.c.l.b16 %v3702
        %v3891 = vunpack.c.h.b16 %v3702
        %v3892 = vunpack.c.l.b16 %v3703
        %v3893 = vunpack.c.h.b16 %v3703
        %v3894 = vunpack.c.l.b16 %v3704
        %v3895 = vunpack.c.h.b16 %v3704
        %v3896 = vunpack.c.l.b16 %v3705
        %v3897 = vunpack.c.h.b16 %v3705
        %v3898 = vunpack.c.l.b16 %v3706
        %v3899 = vunpack.c.h.b16 %v3706
        %v3900 = vunpack.c.l.b16 %v3707
        %v3901 = vunpack.c.h.b16 %v3707
        %v3902 = vunpack.c.l.b16 %v3708
        %v3903 = vunpack.c.h.b16 %v3708
        %v3904 = vunpack.c.l.b16 %v3709
        %v3905 = vunpack.c.h.b16 %v3709
        %v3906 = vunpack.c.l.b16 %v3710
        %v3907 = vunpack.c.h.b16 %v3710
        %v3908 = vpack.c.b16 %v3878, %v3876
        %v3909 = vpack.c.b16 %v3879, %v3877
        %v3910 = vpack.c.b16 %v3882, %v3880
        %v3911 = vpack.c.b16 %v3883, %v3881
        %v3912 = vpack.c.b16 %v3886, %v3884
        %v3913 = vpack.c.b16 %v3887, %v3885
        %v3914 = vpack.c.b16 %v3890, %v3888
        %v3915 = vpack.c.b16 %v3891, %v3889
        %v3916 = vpack.c.b16 %v3894, %v3892
        %v3917 = vpack.c.b16 %v3895, %v3893
        %v3918 = vpack.c.b16 %v3898, %v3896
        %v3919 = vpack.c.b16 %v3899, %v3897
        %v3920 = vpack.c.b16 %v3902, %v3900
        %v3921 = vpack.c.b16 %v3903, %v3901
        %v3922 = vpack.c.b16 %v3906, %v3904
        %v3923 = vpack.c.b16 %v3907, %v3905
        %3940 = vmatprep.subr.bf16.mxu0 %v3909
        %3941 = vmatpush1.bf16.msra.mxu0 %v3908
        %3942 = vmatprep.subr.bf16.mxu0 %v3911
        %3943 = vmatpush1.bf16.msra.mxu0 %v3910
        %3944 = vmatprep.subr.bf16.mxu0 %v3913
        %3945 = vmatpush1.bf16.msra.mxu0 %v3912
        %3946 = vmatprep.subr.bf16.mxu0 %v3915
        %3947 = vmatpush1.bf16.msra.mxu0 %v3914
        %3948 = vmatprep.subr.bf16.mxu0 %v3917
        %3949 = vmatpush1.bf16.msra.mxu0 %v3916
        %3950 = vmatprep.subr.bf16.mxu0 %v3919
        %3951 = vmatpush1.bf16.msra.mxu0 %v3918
        %3952 = vmatprep.subr.bf16.mxu0 %v3921
        %3953 = vmatpush1.bf16.msra.mxu0 %v3920
        %3954 = vmatprep.subr.bf16.mxu0 %v3923
        %3955 = vmatpush1.bf16.msra.mxu0 %v3922
        %3956 = vmatprep.subr.bf16.mxu0 0
        %3957 = vmatpush1.bf16.msra.mxu0 0
        %3958 = vmatprep.subr.bf16.mxu0 0
        %3959 = vmatpush1.bf16.msra.mxu0 0
        %3960 = vmatprep.subr.bf16.mxu0 0
        %3961 = vmatpush1.bf16.msra.mxu0 0
        %3962 = vmatprep.subr.bf16.mxu0 0
        %3963 = vmatpush1.bf16.msra.mxu0 0
        %3964 = vmatprep.subr.bf16.mxu0 0
        %3965 = vmatpush1.bf16.msra.mxu0 0
        %3966 = vmatprep.subr.bf16.mxu0 0
        %3967 = vmatpush1.bf16.msra.mxu0 0
        %3968 = vmatprep.subr.bf16.mxu0 0
        %3969 = vmatpush1.bf16.msra.mxu0 0
        %3970 = vmatprep.subr.bf16.mxu0 0
        %3971 = vmatpush1.bf16.msra.mxu0 0
        %3972 = vmatprep.mubr.bf16.mxu0 0
        %3973 = vmatmul.mubr.bf16.gmra.mrb[0].mxu0 %v3858
        %v3974 = vpop.f32.mrb[0].mxu0
        %v3975 = vadd.f32 %v3845, %v3974
        %v3976 = vpop.f32.mrb[0].mxu0
        %v3977 = vadd.f32 %v3847, %v3976
        %v3978 = vpop.f32.mrb[0].mxu0
        %v3979 = vpop.f32.mrb[0].mxu0
        %3980 = vdwg.mxu0
        %v3981 = vld [vmem:[#allocation2 + $0x20] sm:$0xfe]
        %v3982 = vpack.c.bf16 %v3981, %v3981
        %s3983 = scalar_lea.vmem [#allocation17], 256
        %v3984 = vld [vmem:[%s3983] sm:$0xff]
        %v3985 = vld [vmem:[%s3983 + $0x8] sm:$0xff]
        %v3986 = vld [vmem:[%s3983 + $0x10] sm:$0xff]
        %v3987 = vld [vmem:[%s3983 + $0x18] sm:$0xff]
        %v3988 = vld [vmem:[%s3983 + $0x20] sm:$0xff]
        %v3989 = vld [vmem:[%s3983 + $0x28] sm:$0xff]
        %v3990 = vld [vmem:[%s3983 + $0x30] sm:$0xff]
        %v3991 = vld [vmem:[%s3983 + $0x38] sm:$0xff]
        %v3992 = vld [vmem:[%s3983 + $0x40] sm:$0xff]
        %v3993 = vld [vmem:[%s3983 + $0x48] sm:$0xff]
        %v3994 = vld [vmem:[%s3983 + $0x50] sm:$0xff]
        %v3995 = vld [vmem:[%s3983 + $0x58] sm:$0xff]
        %v3996 = vld [vmem:[%s3983 + $0x60] sm:$0xff]
        %v3997 = vld [vmem:[%s3983 + $0x68] sm:$0xff]
        %v3998 = vld [vmem:[%s3983 + $0x70] sm:$0xff]
        %v3999 = vld [vmem:[%s3983 + $0x78] sm:$0xff]
        %v4001 = vshrl.u32 %v3982, 16
        %v4003 = vshll.u32 %v3982, 16
        %v4005 = vrot.slane %v4003, 1
        %v4006 = vor.u32 %v4001, %v4005
        %v4024 = vunpack.c.l.b16 %v3984
        %v4025 = vunpack.c.h.b16 %v3984
        %v4026 = vunpack.c.l.b16 %v3985
        %v4027 = vunpack.c.h.b16 %v3985
        %v4028 = vunpack.c.l.b16 %v3986
        %v4029 = vunpack.c.h.b16 %v3986
        %v4030 = vunpack.c.l.b16 %v3987
        %v4031 = vunpack.c.h.b16 %v3987
        %v4032 = vunpack.c.l.b16 %v3988
        %v4033 = vunpack.c.h.b16 %v3988
        %v4034 = vunpack.c.l.b16 %v3989
        %v4035 = vunpack.c.h.b16 %v3989
        %v4036 = vunpack.c.l.b16 %v3990
        %v4037 = vunpack.c.h.b16 %v3990
        %v4038 = vunpack.c.l.b16 %v3991
        %v4039 = vunpack.c.h.b16 %v3991
        %v4040 = vunpack.c.l.b16 %v3992
        %v4041 = vunpack.c.h.b16 %v3992
        %v4042 = vunpack.c.l.b16 %v3993
        %v4043 = vunpack.c.h.b16 %v3993
        %v4044 = vunpack.c.l.b16 %v3994
        %v4045 = vunpack.c.h.b16 %v3994
        %v4046 = vunpack.c.l.b16 %v3995
        %v4047 = vunpack.c.h.b16 %v3995
        %v4048 = vunpack.c.l.b16 %v3996
        %v4049 = vunpack.c.h.b16 %v3996
        %v4050 = vunpack.c.l.b16 %v3997
        %v4051 = vunpack.c.h.b16 %v3997
        %v4052 = vunpack.c.l.b16 %v3998
        %v4053 = vunpack.c.h.b16 %v3998
        %v4054 = vunpack.c.l.b16 %v3999
        %v4055 = vunpack.c.h.b16 %v3999
        %v4056 = vpack.c.b16 %v4026, %v4024
        %v4057 = vpack.c.b16 %v4027, %v4025
        %v4058 = vpack.c.b16 %v4030, %v4028
        %v4059 = vpack.c.b16 %v4031, %v4029
        %v4060 = vpack.c.b16 %v4034, %v4032
        %v4061 = vpack.c.b16 %v4035, %v4033
        %v4062 = vpack.c.b16 %v4038, %v4036
        %v4063 = vpack.c.b16 %v4039, %v4037
        %v4064 = vpack.c.b16 %v4042, %v4040
        %v4065 = vpack.c.b16 %v4043, %v4041
        %v4066 = vpack.c.b16 %v4046, %v4044
        %v4067 = vpack.c.b16 %v4047, %v4045
        %v4068 = vpack.c.b16 %v4050, %v4048
        %v4069 = vpack.c.b16 %v4051, %v4049
        %v4070 = vpack.c.b16 %v4054, %v4052
        %v4071 = vpack.c.b16 %v4055, %v4053
        %4088 = vmatprep.subr.bf16.mxu0 %v4057
        %4089 = vmatpush1.bf16.msra.mxu0 %v4056
        %4090 = vmatprep.subr.bf16.mxu0 %v4059
        %4091 = vmatpush1.bf16.msra.mxu0 %v4058
        %4092 = vmatprep.subr.bf16.mxu0 %v4061
        %4093 = vmatpush1.bf16.msra.mxu0 %v4060
        %4094 = vmatprep.subr.bf16.mxu0 %v4063
        %4095 = vmatpush1.bf16.msra.mxu0 %v4062
        %4096 = vmatprep.subr.bf16.mxu0 %v4065
        %4097 = vmatpush1.bf16.msra.mxu0 %v4064
        %4098 = vmatprep.subr.bf16.mxu0 %v4067
        %4099 = vmatpush1.bf16.msra.mxu0 %v4066
        %4100 = vmatprep.subr.bf16.mxu0 %v4069
        %4101 = vmatpush1.bf16.msra.mxu0 %v4068
        %4102 = vmatprep.subr.bf16.mxu0 %v4071
        %4103 = vmatpush1.bf16.msra.mxu0 %v4070
        %4104 = vmatprep.subr.bf16.mxu0 0
        %4105 = vmatpush1.bf16.msra.mxu0 0
        %4106 = vmatprep.subr.bf16.mxu0 0
        %4107 = vmatpush1.bf16.msra.mxu0 0
        %4108 = vmatprep.subr.bf16.mxu0 0
        %4109 = vmatpush1.bf16.msra.mxu0 0
        %4110 = vmatprep.subr.bf16.mxu0 0
        %4111 = vmatpush1.bf16.msra.mxu0 0
        %4112 = vmatprep.subr.bf16.mxu0 0
        %4113 = vmatpush1.bf16.msra.mxu0 0
        %4114 = vmatprep.subr.bf16.mxu0 0
        %4115 = vmatpush1.bf16.msra.mxu0 0
        %4116 = vmatprep.subr.bf16.mxu0 0
        %4117 = vmatpush1.bf16.msra.mxu0 0
        %4118 = vmatprep.subr.bf16.mxu0 0
        %4119 = vmatpush1.bf16.msra.mxu0 0
        %4120 = vmatprep.mubr.bf16.mxu0 0
        %4121 = vmatmul.mubr.bf16.gmra.mrb[0].mxu0 %v4006
        %v4122 = vpop.f32.mrb[0].mxu0
        %v4123 = vadd.f32 0.0, %v4122
        %v4124 = vpop.f32.mrb[0].mxu0
        %v4125 = vadd.f32 0.0, %v4124
        %v4126 = vpop.f32.mrb[0].mxu0
        %v4127 = vpop.f32.mrb[0].mxu0
        %4128 = vdwg.mxu0
        %v4129 = vadd.f32 %v3975, %v4123
        %v4130 = vadd.f32 %v3977, %v4125
        %vm4131 = vcmask 56320
        %v4132 = vsel %vm4131, %v2022, 0
        %v4135 = vsel %vm2039, %v4129, 0
        %v4138 = vsel %vm2039, %v4130, 0
        %4140 = vmatprep.subr.mxu0 %v4138
        %4141 = vmatpush1.msra.mxu0 %v4135
        %4142 = vmatprep.subr.mxu0 0.0
        %4143 = vmatpush1.msra.mxu0 0.0
        %4144 = vmatprep.subr.mxu0 0.0
        %4145 = vmatpush1.msra.mxu0 0.0
        %4146 = vmatprep.subr.mxu0 0.0
        %4147 = vmatpush1.msra.mxu0 0.0
        %4148 = vmatprep.subr.mxu0 0.0
        %4149 = vmatpush1.msra.mxu0 0.0
        %4150 = vmatprep.subr.mxu0 0.0
        %4151 = vmatpush1.msra.mxu0 0.0
        %4152 = vmatprep.subr.mxu0 0.0
        %4153 = vmatpush1.msra.mxu0 0.0
        %4154 = vmatprep.subr.mxu0 0.0
        %4155 = vmatpush1.msra.mxu0 0.0
        %4156 = vmatprep.subr.mxu0 0.0
        %4157 = vmatpush1.msra.mxu0 0.0
        %4158 = vmatprep.subr.mxu0 0.0
        %4159 = vmatpush1.msra.mxu0 0.0
        %4160 = vmatprep.subr.mxu0 0.0
        %4161 = vmatpush1.msra.mxu0 0.0
        %4162 = vmatprep.subr.mxu0 0.0
        %4163 = vmatpush1.msra.mxu0 0.0
        %4164 = vmatprep.subr.mxu0 0.0
        %4165 = vmatpush1.msra.mxu0 0.0
        %4166 = vmatprep.subr.mxu0 0.0
        %4167 = vmatpush1.msra.mxu0 0.0
        %4168 = vmatprep.subr.mxu0 0.0
        %4169 = vmatpush1.msra.mxu0 0.0
        %4170 = vmatprep.subr.mxu0 0.0
        %4171 = vmatpush1.msra.mxu0 0.0
        %4172 = vmatprep.subr.mxu0 0.0
        %4173 = vmatpush1.msra.mxu0 0.0
        %4174 = vmatprep.subr.mxu0 0.0
        %4175 = vmatpush1.msra.mxu0 0.0
        %4176 = vmatprep.subr.mxu0 0.0
        %4177 = vmatpush1.msra.mxu0 0.0
        %4178 = vmatprep.subr.mxu0 0.0
        %4179 = vmatpush1.msra.mxu0 0.0
        %4180 = vmatprep.subr.mxu0 0.0
        %4181 = vmatpush1.msra.mxu0 0.0
        %4182 = vmatprep.subr.mxu0 0.0
        %4183 = vmatpush1.msra.mxu0 0.0
        %4184 = vmatprep.subr.mxu0 0.0
        %4185 = vmatpush1.msra.mxu0 0.0
        %4186 = vmatprep.subr.mxu0 0.0
        %4187 = vmatpush1.msra.mxu0 0.0
        %4188 = vmatprep.subr.mxu0 0.0
        %4189 = vmatpush1.msra.mxu0 0.0
        %4190 = vmatprep.subr.mxu0 0.0
        %4191 = vmatpush1.msra.mxu0 0.0
        %4192 = vmatprep.subr.mxu0 0.0
        %4193 = vmatpush1.msra.mxu0 0.0
        %4194 = vmatprep.subr.mxu0 0.0
        %4195 = vmatpush1.msra.mxu0 0.0
        %4196 = vmatprep.subr.mxu0 0.0
        %4197 = vmatpush1.msra.mxu0 0.0
        %4198 = vmatprep.subr.mxu0 0.0
        %4199 = vmatpush1.msra.mxu0 0.0
        %4200 = vmatprep.subr.mxu0 0.0
        %4201 = vmatpush1.msra.mxu0 0.0
        %4202 = vmatprep.subr.mxu0 0.0
        %4203 = vmatpush1.msra.mxu0 0.0
        %4204 = vmatprep.mubr.f32.mxu0 0.0
        %4205 = vmatmul.mubr.f32.gmra.mrb[0].mxu0 %v4132
        %v4206 = vpop.f32.mrb[0].mxu0
        %v4207 = vadd.f32 0.0, %v4206
        %v4208 = vpop.f32.mrb[0].mxu0
        %v4209 = vadd.f32 0.0, %v4208
        %4210 = vdwg.mxu0
        %v4211 = vmax.f32 %v4207, 0.0
        %v4212 = vmax.f32 %v4209, 0.0
        %v4213 = vlaneseq
        %vm4214 = vcmp.ge.s32.totalorder %v4213, 0
        %vm4215 = vcmp.lt.s32.totalorder %v4213, 256
        %vm4216 = vmand %vm4214, %vm4215
        %s4217 = scalar_lea.vmem [#allocation2], 7
        %4218 = vst.msk [vmem:[%s4217] ss:$8 sm:$0x3] %vm4216, 0.0
        %4219 = vst.msk [vmem:[%s4217] ss:$8 sm:$0x0] %vm4216, 0.0
        %s4220 = scalar_lea.vmem [#allocation2], 36
        %4221 = vst.msk [vmem:[%s4220] ss:$8 sm:$0x3] %vm4216, 0.0
        %4222 = vst.msk [vmem:[%s4220] ss:$8 sm:$0x0] %vm4216, 0.0
        %4223 = vst [vmem:[#allocation2 + $0x20] sm:$0xf] %v4211
        %4224 = vst [vmem:[#allocation2 + $0x28] sm:$0xf] %v4212
        %v4225 = vld [vmem:[#allocation2] sm:$0x80]
        %v4226 = vld [vmem:[#allocation2 + $0x8] sm:$0x80]
        %v4227 = vld [vmem:[#allocation2 + $0x20] sm:$0x7]
        %v4228 = vld [vmem:[#allocation2 + $0x28] sm:$0x7]
        %v4229 = vpack.c.bf16 %v4227, %v4225
        %v4230 = vpack.c.bf16 %v4228, %v4226
        %v4231 = vld [vmem:[#allocation18] sm:$0xff]
        %v4232 = vld [vmem:[#allocation18 + $0x8] sm:$0xff]
        %v4233 = vld [vmem:[#allocation18 + $0x10] sm:$0xff]
        %v4234 = vld [vmem:[#allocation18 + $0x18] sm:$0xff]
        %v4235 = vld [vmem:[#allocation18 + $0x20] sm:$0xff]
        %v4236 = vld [vmem:[#allocation18 + $0x28] sm:$0xff]
        %v4237 = vld [vmem:[#allocation18 + $0x30] sm:$0xff]
        %v4238 = vld [vmem:[#allocation18 + $0x38] sm:$0xff]
        %v4239 = vld [vmem:[#allocation18 + $0x40] sm:$0xff]
        %v4240 = vld [vmem:[#allocation18 + $0x48] sm:$0xff]
        %v4241 = vld [vmem:[#allocation18 + $0x50] sm:$0xff]
        %v4242 = vld [vmem:[#allocation18 + $0x58] sm:$0xff]
        %v4243 = vld [vmem:[#allocation18 + $0x60] sm:$0xff]
        %v4244 = vld [vmem:[#allocation18 + $0x68] sm:$0xff]
        %v4245 = vld [vmem:[#allocation18 + $0x70] sm:$0xff]
        %v4246 = vld [vmem:[#allocation18 + $0x78] sm:$0xff]
        %v4247 = vld [vmem:[#allocation18 + $0x80] sm:$0xff]
        %v4248 = vld [vmem:[#allocation18 + $0x88] sm:$0xff]
        %v4249 = vld [vmem:[#allocation18 + $0x90] sm:$0xff]
        %v4250 = vld [vmem:[#allocation18 + $0x98] sm:$0xff]
        %v4251 = vld [vmem:[#allocation18 + $0xa0] sm:$0xff]
        %v4252 = vld [vmem:[#allocation18 + $0xa8] sm:$0xff]
        %v4253 = vld [vmem:[#allocation18 + $0xb0] sm:$0xff]
        %v4254 = vld [vmem:[#allocation18 + $0xb8] sm:$0xff]
        %v4255 = vld [vmem:[#allocation18 + $0xc0] sm:$0xff]
        %v4256 = vld [vmem:[#allocation18 + $0xc8] sm:$0xff]
        %v4257 = vld [vmem:[#allocation18 + $0xd0] sm:$0xff]
        %v4258 = vld [vmem:[#allocation18 + $0xd8] sm:$0xff]
        %v4259 = vld [vmem:[#allocation18 + $0xe0] sm:$0xff]
        %v4260 = vld [vmem:[#allocation18 + $0xe8] sm:$0xff]
        %v4261 = vld [vmem:[#allocation18 + $0xf0] sm:$0xff]
        %v4262 = vld [vmem:[#allocation18 + $0xf8] sm:$0xff]
        %v4263 = vld [vmem:[#allocation2 + $0x20] sm:$0xf]
        %v4264 = vld [vmem:[#allocation2 + $0x28] sm:$0xf]
        %v4265 = vpack.c.bf16 %v4263, %v4263
        %v4266 = vpack.c.bf16 %v4264, %v4264
        %s4267 = scalar_lea.vmem [#allocation18], 256
        %v4268 = vld [vmem:[%s4267] sm:$0xff]
        %v4269 = vld [vmem:[%s4267 + $0x8] sm:$0xff]
        %v4270 = vld [vmem:[%s4267 + $0x10] sm:$0xff]
        %v4271 = vld [vmem:[%s4267 + $0x18] sm:$0xff]
        %v4272 = vld [vmem:[%s4267 + $0x20] sm:$0xff]
        %v4273 = vld [vmem:[%s4267 + $0x28] sm:$0xff]
        %v4274 = vld [vmem:[%s4267 + $0x30] sm:$0xff]
        %v4275 = vld [vmem:[%s4267 + $0x38] sm:$0xff]
        %v4276 = vld [vmem:[%s4267 + $0x40] sm:$0xff]
        %v4277 = vld [vmem:[%s4267 + $0x48] sm:$0xff]
        %v4278 = vld [vmem:[%s4267 + $0x50] sm:$0xff]
        %v4279 = vld [vmem:[%s4267 + $0x58] sm:$0xff]
        %v4280 = vld [vmem:[%s4267 + $0x60] sm:$0xff]
        %v4281 = vld [vmem:[%s4267 + $0x68] sm:$0xff]
        %v4282 = vld [vmem:[%s4267 + $0x70] sm:$0xff]
        %v4283 = vld [vmem:[%s4267 + $0x78] sm:$0xff]
        %v4284 = vld [vmem:[%s4267 + $0x80] sm:$0xff]
        %v4285 = vld [vmem:[%s4267 + $0x88] sm:$0xff]
        %v4286 = vld [vmem:[%s4267 + $0x90] sm:$0xff]
        %v4287 = vld [vmem:[%s4267 + $0x98] sm:$0xff]
        %v4288 = vld [vmem:[%s4267 + $0xa0] sm:$0xff]
        %v4289 = vld [vmem:[%s4267 + $0xa8] sm:$0xff]
        %v4290 = vld [vmem:[%s4267 + $0xb0] sm:$0xff]
        %v4291 = vld [vmem:[%s4267 + $0xb8] sm:$0xff]
        %v4292 = vld [vmem:[%s4267 + $0xc0] sm:$0xff]
        %v4293 = vld [vmem:[%s4267 + $0xc8] sm:$0xff]
        %v4294 = vld [vmem:[%s4267 + $0xd0] sm:$0xff]
        %v4295 = vld [vmem:[%s4267 + $0xd8] sm:$0xff]
        %v4296 = vld [vmem:[%s4267 + $0xe0] sm:$0xff]
        %v4297 = vld [vmem:[%s4267 + $0xe8] sm:$0xff]
        %v4298 = vld [vmem:[%s4267 + $0xf0] sm:$0xff]
        %v4299 = vld [vmem:[%s4267 + $0xf8] sm:$0xff]
        %v4332 = vunpack.c.l.b16 %v4268
        %v4333 = vunpack.c.h.b16 %v4268
        %v4334 = vunpack.c.l.b16 %v4269
        %v4335 = vunpack.c.h.b16 %v4269
        %v4336 = vunpack.c.l.b16 %v4270
        %v4337 = vunpack.c.h.b16 %v4270
        %v4338 = vunpack.c.l.b16 %v4271
        %v4339 = vunpack.c.h.b16 %v4271
        %v4340 = vunpack.c.l.b16 %v4272
        %v4341 = vunpack.c.h.b16 %v4272
        %v4342 = vunpack.c.l.b16 %v4273
        %v4343 = vunpack.c.h.b16 %v4273
        %v4344 = vunpack.c.l.b16 %v4274
        %v4345 = vunpack.c.h.b16 %v4274
        %v4346 = vunpack.c.l.b16 %v4275
        %v4347 = vunpack.c.h.b16 %v4275
        %v4348 = vunpack.c.l.b16 %v4276
        %v4349 = vunpack.c.h.b16 %v4276
        %v4350 = vunpack.c.l.b16 %v4277
        %v4351 = vunpack.c.h.b16 %v4277
        %v4352 = vunpack.c.l.b16 %v4278
        %v4353 = vunpack.c.h.b16 %v4278
        %v4354 = vunpack.c.l.b16 %v4279
        %v4355 = vunpack.c.h.b16 %v4279
        %v4356 = vunpack.c.l.b16 %v4280
        %v4357 = vunpack.c.h.b16 %v4280
        %v4358 = vunpack.c.l.b16 %v4281
        %v4359 = vunpack.c.h.b16 %v4281
        %v4360 = vunpack.c.l.b16 %v4282
        %v4361 = vunpack.c.h.b16 %v4282
        %v4362 = vunpack.c.l.b16 %v4283
        %v4363 = vunpack.c.h.b16 %v4283
        %v4364 = vunpack.c.l.b16 %v4284
        %v4365 = vunpack.c.h.b16 %v4284
        %v4366 = vunpack.c.l.b16 %v4285
        %v4367 = vunpack.c.h.b16 %v4285
        %v4368 = vunpack.c.l.b16 %v4286
        %v4369 = vunpack.c.h.b16 %v4286
        %v4370 = vunpack.c.l.b16 %v4287
        %v4371 = vunpack.c.h.b16 %v4287
        %v4372 = vunpack.c.l.b16 %v4288
        %v4373 = vunpack.c.h.b16 %v4288
        %v4374 = vunpack.c.l.b16 %v4289
        %v4375 = vunpack.c.h.b16 %v4289
        %v4376 = vunpack.c.l.b16 %v4290
        %v4377 = vunpack.c.h.b16 %v4290
        %v4378 = vunpack.c.l.b16 %v4291
        %v4379 = vunpack.c.h.b16 %v4291
        %v4380 = vunpack.c.l.b16 %v4292
        %v4381 = vunpack.c.h.b16 %v4292
        %v4382 = vunpack.c.l.b16 %v4293
        %v4383 = vunpack.c.h.b16 %v4293
        %v4384 = vunpack.c.l.b16 %v4294
        %v4385 = vunpack.c.h.b16 %v4294
        %v4386 = vunpack.c.l.b16 %v4295
        %v4387 = vunpack.c.h.b16 %v4295
        %v4388 = vunpack.c.l.b16 %v4296
        %v4389 = vunpack.c.h.b16 %v4296
        %v4390 = vunpack.c.l.b16 %v4297
        %v4391 = vunpack.c.h.b16 %v4297
        %v4392 = vunpack.c.l.b16 %v4298
        %v4393 = vunpack.c.h.b16 %v4298
        %v4394 = vunpack.c.l.b16 %v4299
        %v4395 = vunpack.c.h.b16 %v4299
        %v4396 = vpack.c.b16 %v4334, %v4332
        %v4397 = vpack.c.b16 %v4335, %v4333
        %v4398 = vpack.c.b16 %v4338, %v4336
        %v4399 = vpack.c.b16 %v4339, %v4337
        %v4400 = vpack.c.b16 %v4342, %v4340
        %v4401 = vpack.c.b16 %v4343, %v4341
        %v4402 = vpack.c.b16 %v4346, %v4344
        %v4403 = vpack.c.b16 %v4347, %v4345
        %v4404 = vpack.c.b16 %v4350, %v4348
        %v4405 = vpack.c.b16 %v4351, %v4349
        %v4406 = vpack.c.b16 %v4354, %v4352
        %v4407 = vpack.c.b16 %v4355, %v4353
        %v4408 = vpack.c.b16 %v4358, %v4356
        %v4409 = vpack.c.b16 %v4359, %v4357
        %v4410 = vpack.c.b16 %v4362, %v4360
        %v4411 = vpack.c.b16 %v4363, %v4361
        %v4412 = vpack.c.b16 %v4366, %v4364
        %v4413 = vpack.c.b16 %v4367, %v4365
        %v4414 = vpack.c.b16 %v4370, %v4368
        %v4415 = vpack.c.b16 %v4371, %v4369
        %v4416 = vpack.c.b16 %v4374, %v4372
        %v4417 = vpack.c.b16 %v4375, %v4373
        %v4418 = vpack.c.b16 %v4378, %v4376
        %v4419 = vpack.c.b16 %v4379, %v4377
        %v4420 = vpack.c.b16 %v4382, %v4380
        %v4421 = vpack.c.b16 %v4383, %v4381
        %v4422 = vpack.c.b16 %v4386, %v4384
        %v4423 = vpack.c.b16 %v4387, %v4385
        %v4424 = vpack.c.b16 %v4390, %v4388
        %v4425 = vpack.c.b16 %v4391, %v4389
        %v4426 = vpack.c.b16 %v4394, %v4392
        %v4427 = vpack.c.b16 %v4395, %v4393
        %4460 = vmatprep.subr.bf16.mxu0 %v4397
        %4461 = vmatpush1.bf16.msra.mxu0 %v4396
        %4462 = vmatprep.subr.bf16.mxu0 %v4399
        %4463 = vmatpush1.bf16.msra.mxu0 %v4398
        %4464 = vmatprep.subr.bf16.mxu0 %v4401
        %4465 = vmatpush1.bf16.msra.mxu0 %v4400
        %4466 = vmatprep.subr.bf16.mxu0 %v4403
        %4467 = vmatpush1.bf16.msra.mxu0 %v4402
        %4468 = vmatprep.subr.bf16.mxu0 %v4405
        %4469 = vmatpush1.bf16.msra.mxu0 %v4404
        %4470 = vmatprep.subr.bf16.mxu0 %v4407
        %4471 = vmatpush1.bf16.msra.mxu0 %v4406
        %4472 = vmatprep.subr.bf16.mxu0 %v4409
        %4473 = vmatpush1.bf16.msra.mxu0 %v4408
        %4474 = vmatprep.subr.bf16.mxu0 %v4411
        %4475 = vmatpush1.bf16.msra.mxu0 %v4410
        %4476 = vmatprep.subr.bf16.mxu0 %v4413
        %4477 = vmatpush1.bf16.msra.mxu0 %v4412
        %4478 = vmatprep.subr.bf16.mxu0 %v4415
        %4479 = vmatpush1.bf16.msra.mxu0 %v4414
        %4480 = vmatprep.subr.bf16.mxu0 %v4417
        %4481 = vmatpush1.bf16.msra.mxu0 %v4416
        %4482 = vmatprep.subr.bf16.mxu0 %v4419
        %4483 = vmatpush1.bf16.msra.mxu0 %v4418
        %4484 = vmatprep.subr.bf16.mxu0 %v4421
        %4485 = vmatpush1.bf16.msra.mxu0 %v4420
        %4486 = vmatprep.subr.bf16.mxu0 %v4423
        %4487 = vmatpush1.bf16.msra.mxu0 %v4422
        %4488 = vmatprep.subr.bf16.mxu0 %v4425
        %4489 = vmatpush1.bf16.msra.mxu0 %v4424
        %4490 = vmatprep.subr.bf16.mxu0 %v4427
        %4491 = vmatpush1.bf16.msra.mxu0 %v4426
        %4492 = vmatprep.mubr.bf16.mxu0 %v4266
        %4493 = vmatmul.mubr.bf16.gmra.mrb[0].mxu0 %v4265
        %v4494 = vpop.f32.mrb[0].mxu0
        %v4495 = vadd.f32 0.0, %v4494
        %v4496 = vpop.f32.mrb[0].mxu0
        %v4497 = vadd.f32 0.0, %v4496
        %v4498 = vpop.f32.mrb[0].mxu0
        %v4499 = vpop.f32.mrb[0].mxu0
        %4500 = vdwg.mxu0
        %v4502 = vshrl.u32 %v4229, 16
        %v4504 = vrot.slane %v4502, 3
        %v4505 = vshll.u32 %v4229, 16
        %v4507 = vrot.slane %v4505, 4
        %v4508 = vor.u32 %v4504, %v4507
        %v4510 = vshrl.u32 %v4230, 16
        %v4512 = vrot.slane %v4510, 3
        %v4513 = vshll.u32 %v4230, 16
        %v4515 = vrot.slane %v4513, 4
        %v4516 = vor.u32 %v4512, %v4515
        %v4551 = vunpack.c.l.b16 %v4231
        %v4552 = vunpack.c.h.b16 %v4231
        %v4553 = vunpack.c.l.b16 %v4232
        %v4554 = vunpack.c.h.b16 %v4232
        %v4555 = vunpack.c.l.b16 %v4233
        %v4556 = vunpack.c.h.b16 %v4233
        %v4557 = vunpack.c.l.b16 %v4234
        %v4558 = vunpack.c.h.b16 %v4234
        %v4559 = vunpack.c.l.b16 %v4235
        %v4560 = vunpack.c.h.b16 %v4235
        %v4561 = vunpack.c.l.b16 %v4236
        %v4562 = vunpack.c.h.b16 %v4236
        %v4563 = vunpack.c.l.b16 %v4237
        %v4564 = vunpack.c.h.b16 %v4237
        %v4565 = vunpack.c.l.b16 %v4238
        %v4566 = vunpack.c.h.b16 %v4238
        %v4567 = vunpack.c.l.b16 %v4239
        %v4568 = vunpack.c.h.b16 %v4239
        %v4569 = vunpack.c.l.b16 %v4240
        %v4570 = vunpack.c.h.b16 %v4240
        %v4571 = vunpack.c.l.b16 %v4241
        %v4572 = vunpack.c.h.b16 %v4241
        %v4573 = vunpack.c.l.b16 %v4242
        %v4574 = vunpack.c.h.b16 %v4242
        %v4575 = vunpack.c.l.b16 %v4243
        %v4576 = vunpack.c.h.b16 %v4243
        %v4577 = vunpack.c.l.b16 %v4244
        %v4578 = vunpack.c.h.b16 %v4244
        %v4579 = vunpack.c.l.b16 %v4245
        %v4580 = vunpack.c.h.b16 %v4245
        %v4581 = vunpack.c.l.b16 %v4246
        %v4582 = vunpack.c.h.b16 %v4246
        %v4583 = vunpack.c.l.b16 %v4247
        %v4584 = vunpack.c.h.b16 %v4247
        %v4585 = vunpack.c.l.b16 %v4248
        %v4586 = vunpack.c.h.b16 %v4248
        %v4587 = vunpack.c.l.b16 %v4249
        %v4588 = vunpack.c.h.b16 %v4249
        %v4589 = vunpack.c.l.b16 %v4250
        %v4590 = vunpack.c.h.b16 %v4250
        %v4591 = vunpack.c.l.b16 %v4251
        %v4592 = vunpack.c.h.b16 %v4251
        %v4593 = vunpack.c.l.b16 %v4252
        %v4594 = vunpack.c.h.b16 %v4252
        %v4595 = vunpack.c.l.b16 %v4253
        %v4596 = vunpack.c.h.b16 %v4253
        %v4597 = vunpack.c.l.b16 %v4254
        %v4598 = vunpack.c.h.b16 %v4254
        %v4599 = vunpack.c.l.b16 %v4255
        %v4600 = vunpack.c.h.b16 %v4255
        %v4601 = vunpack.c.l.b16 %v4256
        %v4602 = vunpack.c.h.b16 %v4256
        %v4603 = vunpack.c.l.b16 %v4257
        %v4604 = vunpack.c.h.b16 %v4257
        %v4605 = vunpack.c.l.b16 %v4258
        %v4606 = vunpack.c.h.b16 %v4258
        %v4607 = vunpack.c.l.b16 %v4259
        %v4608 = vunpack.c.h.b16 %v4259
        %v4609 = vunpack.c.l.b16 %v4260
        %v4610 = vunpack.c.h.b16 %v4260
        %v4611 = vunpack.c.l.b16 %v4261
        %v4612 = vunpack.c.h.b16 %v4261
        %v4613 = vunpack.c.l.b16 %v4262
        %v4614 = vunpack.c.h.b16 %v4262
        %v4615 = vpack.c.b16 %v4553, %v4551
        %v4616 = vpack.c.b16 %v4554, %v4552
        %v4617 = vpack.c.b16 %v4557, %v4555
        %v4618 = vpack.c.b16 %v4558, %v4556
        %v4619 = vpack.c.b16 %v4561, %v4559
        %v4620 = vpack.c.b16 %v4562, %v4560
        %v4621 = vpack.c.b16 %v4565, %v4563
        %v4622 = vpack.c.b16 %v4566, %v4564
        %v4623 = vpack.c.b16 %v4569, %v4567
        %v4624 = vpack.c.b16 %v4570, %v4568
        %v4625 = vpack.c.b16 %v4573, %v4571
        %v4626 = vpack.c.b16 %v4574, %v4572
        %v4627 = vpack.c.b16 %v4577, %v4575
        %v4628 = vpack.c.b16 %v4578, %v4576
        %v4629 = vpack.c.b16 %v4581, %v4579
        %v4630 = vpack.c.b16 %v4582, %v4580
        %v4631 = vpack.c.b16 %v4585, %v4583
        %v4632 = vpack.c.b16 %v4586, %v4584
        %v4633 = vpack.c.b16 %v4589, %v4587
        %v4634 = vpack.c.b16 %v4590, %v4588
        %v4635 = vpack.c.b16 %v4593, %v4591
        %v4636 = vpack.c.b16 %v4594, %v4592
        %v4637 = vpack.c.b16 %v4597, %v4595
        %v4638 = vpack.c.b16 %v4598, %v4596
        %v4639 = vpack.c.b16 %v4601, %v4599
        %v4640 = vpack.c.b16 %v4602, %v4600
        %v4641 = vpack.c.b16 %v4605, %v4603
        %v4642 = vpack.c.b16 %v4606, %v4604
        %v4643 = vpack.c.b16 %v4609, %v4607
        %v4644 = vpack.c.b16 %v4610, %v4608
        %v4645 = vpack.c.b16 %v4613, %v4611
        %v4646 = vpack.c.b16 %v4614, %v4612
        %4679 = vmatprep.subr.bf16.mxu0 %v4616
        %4680 = vmatpush1.bf16.msra.mxu0 %v4615
        %4681 = vmatprep.subr.bf16.mxu0 %v4618
        %4682 = vmatpush1.bf16.msra.mxu0 %v4617
        %4683 = vmatprep.subr.bf16.mxu0 %v4620
        %4684 = vmatpush1.bf16.msra.mxu0 %v4619
        %4685 = vmatprep.subr.bf16.mxu0 %v4622
        %4686 = vmatpush1.bf16.msra.mxu0 %v4621
        %4687 = vmatprep.subr.bf16.mxu0 %v4624
        %4688 = vmatpush1.bf16.msra.mxu0 %v4623
        %4689 = vmatprep.subr.bf16.mxu0 %v4626
        %4690 = vmatpush1.bf16.msra.mxu0 %v4625
        %4691 = vmatprep.subr.bf16.mxu0 %v4628
        %4692 = vmatpush1.bf16.msra.mxu0 %v4627
        %4693 = vmatprep.subr.bf16.mxu0 %v4630
        %4694 = vmatpush1.bf16.msra.mxu0 %v4629
        %4695 = vmatprep.subr.bf16.mxu0 %v4632
        %4696 = vmatpush1.bf16.msra.mxu0 %v4631
        %4697 = vmatprep.subr.bf16.mxu0 %v4634
        %4698 = vmatpush1.bf16.msra.mxu0 %v4633
        %4699 = vmatprep.subr.bf16.mxu0 %v4636
        %4700 = vmatpush1.bf16.msra.mxu0 %v4635
        %4701 = vmatprep.subr.bf16.mxu0 %v4638
        %4702 = vmatpush1.bf16.msra.mxu0 %v4637
        %4703 = vmatprep.subr.bf16.mxu0 %v4640
        %4704 = vmatpush1.bf16.msra.mxu0 %v4639
        %4705 = vmatprep.subr.bf16.mxu0 %v4642
        %4706 = vmatpush1.bf16.msra.mxu0 %v4641
        %4707 = vmatprep.subr.bf16.mxu0 %v4644
        %4708 = vmatpush1.bf16.msra.mxu0 %v4643
        %4709 = vmatprep.subr.bf16.mxu0 %v4646
        %4710 = vmatpush1.bf16.msra.mxu0 %v4645
        %4711 = vmatprep.mubr.bf16.mxu0 %v4516
        %4712 = vmatmul.mubr.bf16.gmra.mrb[0].mxu0 %v4508
        %v4713 = vpop.f32.mrb[0].mxu0
        %v4714 = vadd.f32 %v4495, %v4713
        %v4715 = vpop.f32.mrb[0].mxu0
        %v4716 = vadd.f32 %v4497, %v4715
        %v4717 = vpop.f32.mrb[0].mxu0
        %v4718 = vpop.f32.mrb[0].mxu0
        %4719 = vdwg.mxu0
        %v4720 = vld [vmem:[#allocation2 + $0x20] sm:$0x1e]
        %v4721 = vld [vmem:[#allocation2 + $0x28] sm:$0x1e]
        %v4722 = vpack.c.bf16 %v4720, %v4720
        %v4723 = vpack.c.bf16 %v4721, %v4721
        %s4724 = scalar_lea.vmem [#allocation18], 512
        %v4725 = vld [vmem:[%s4724] sm:$0xff]
        %v4726 = vld [vmem:[%s4724 + $0x8] sm:$0xff]
        %v4727 = vld [vmem:[%s4724 + $0x10] sm:$0xff]
        %v4728 = vld [vmem:[%s4724 + $0x18] sm:$0xff]
        %v4729 = vld [vmem:[%s4724 + $0x20] sm:$0xff]
        %v4730 = vld [vmem:[%s4724 + $0x28] sm:$0xff]
        %v4731 = vld [vmem:[%s4724 + $0x30] sm:$0xff]
        %v4732 = vld [vmem:[%s4724 + $0x38] sm:$0xff]
        %v4733 = vld [vmem:[%s4724 + $0x40] sm:$0xff]
        %v4734 = vld [vmem:[%s4724 + $0x48] sm:$0xff]
        %v4735 = vld [vmem:[%s4724 + $0x50] sm:$0xff]
        %v4736 = vld [vmem:[%s4724 + $0x58] sm:$0xff]
        %v4737 = vld [vmem:[%s4724 + $0x60] sm:$0xff]
        %v4738 = vld [vmem:[%s4724 + $0x68] sm:$0xff]
        %v4739 = vld [vmem:[%s4724 + $0x70] sm:$0xff]
        %v4740 = vld [vmem:[%s4724 + $0x78] sm:$0xff]
        %v4741 = vld [vmem:[%s4724 + $0x80] sm:$0xff]
        %v4742 = vld [vmem:[%s4724 + $0x88] sm:$0xff]
        %v4743 = vld [vmem:[%s4724 + $0x90] sm:$0xff]
        %v4744 = vld [vmem:[%s4724 + $0x98] sm:$0xff]
        %v4745 = vld [vmem:[%s4724 + $0xa0] sm:$0xff]
        %v4746 = vld [vmem:[%s4724 + $0xa8] sm:$0xff]
        %v4747 = vld [vmem:[%s4724 + $0xb0] sm:$0xff]
        %v4748 = vld [vmem:[%s4724 + $0xb8] sm:$0xff]
        %v4749 = vld [vmem:[%s4724 + $0xc0] sm:$0xff]
        %v4750 = vld [vmem:[%s4724 + $0xc8] sm:$0xff]
        %v4751 = vld [vmem:[%s4724 + $0xd0] sm:$0xff]
        %v4752 = vld [vmem:[%s4724 + $0xd8] sm:$0xff]
        %v4753 = vld [vmem:[%s4724 + $0xe0] sm:$0xff]
        %v4754 = vld [vmem:[%s4724 + $0xe8] sm:$0xff]
        %v4755 = vld [vmem:[%s4724 + $0xf0] sm:$0xff]
        %v4756 = vld [vmem:[%s4724 + $0xf8] sm:$0xff]
        %v4758 = vshrl.u32 %v4722, 16
        %v4760 = vshll.u32 %v4722, 16
        %v4762 = vrot.slane %v4760, 1
        %v4763 = vor.u32 %v4758, %v4762
        %v4765 = vshrl.u32 %v4723, 16
        %v4767 = vshll.u32 %v4723, 16
        %v4769 = vrot.slane %v4767, 1
        %v4770 = vor.u32 %v4765, %v4769
        %v4805 = vunpack.c.l.b16 %v4725
        %v4806 = vunpack.c.h.b16 %v4725
        %v4807 = vunpack.c.l.b16 %v4726
        %v4808 = vunpack.c.h.b16 %v4726
        %v4809 = vunpack.c.l.b16 %v4727
        %v4810 = vunpack.c.h.b16 %v4727
        %v4811 = vunpack.c.l.b16 %v4728
        %v4812 = vunpack.c.h.b16 %v4728
        %v4813 = vunpack.c.l.b16 %v4729
        %v4814 = vunpack.c.h.b16 %v4729
        %v4815 = vunpack.c.l.b16 %v4730
        %v4816 = vunpack.c.h.b16 %v4730
        %v4817 = vunpack.c.l.b16 %v4731
        %v4818 = vunpack.c.h.b16 %v4731
        %v4819 = vunpack.c.l.b16 %v4732
        %v4820 = vunpack.c.h.b16 %v4732
        %v4821 = vunpack.c.l.b16 %v4733
        %v4822 = vunpack.c.h.b16 %v4733
        %v4823 = vunpack.c.l.b16 %v4734
        %v4824 = vunpack.c.h.b16 %v4734
        %v4825 = vunpack.c.l.b16 %v4735
        %v4826 = vunpack.c.h.b16 %v4735
        %v4827 = vunpack.c.l.b16 %v4736
        %v4828 = vunpack.c.h.b16 %v4736
        %v4829 = vunpack.c.l.b16 %v4737
        %v4830 = vunpack.c.h.b16 %v4737
        %v4831 = vunpack.c.l.b16 %v4738
        %v4832 = vunpack.c.h.b16 %v4738
        %v4833 = vunpack.c.l.b16 %v4739
        %v4834 = vunpack.c.h.b16 %v4739
        %v4835 = vunpack.c.l.b16 %v4740
        %v4836 = vunpack.c.h.b16 %v4740
        %v4837 = vunpack.c.l.b16 %v4741
        %v4838 = vunpack.c.h.b16 %v4741
        %v4839 = vunpack.c.l.b16 %v4742
        %v4840 = vunpack.c.h.b16 %v4742
        %v4841 = vunpack.c.l.b16 %v4743
        %v4842 = vunpack.c.h.b16 %v4743
        %v4843 = vunpack.c.l.b16 %v4744
        %v4844 = vunpack.c.h.b16 %v4744
        %v4845 = vunpack.c.l.b16 %v4745
        %v4846 = vunpack.c.h.b16 %v4745
        %v4847 = vunpack.c.l.b16 %v4746
        %v4848 = vunpack.c.h.b16 %v4746
        %v4849 = vunpack.c.l.b16 %v4747
        %v4850 = vunpack.c.h.b16 %v4747
        %v4851 = vunpack.c.l.b16 %v4748
        %v4852 = vunpack.c.h.b16 %v4748
        %v4853 = vunpack.c.l.b16 %v4749
        %v4854 = vunpack.c.h.b16 %v4749
        %v4855 = vunpack.c.l.b16 %v4750
        %v4856 = vunpack.c.h.b16 %v4750
        %v4857 = vunpack.c.l.b16 %v4751
        %v4858 = vunpack.c.h.b16 %v4751
        %v4859 = vunpack.c.l.b16 %v4752
        %v4860 = vunpack.c.h.b16 %v4752
        %v4861 = vunpack.c.l.b16 %v4753
        %v4862 = vunpack.c.h.b16 %v4753
        %v4863 = vunpack.c.l.b16 %v4754
        %v4864 = vunpack.c.h.b16 %v4754
        %v4865 = vunpack.c.l.b16 %v4755
        %v4866 = vunpack.c.h.b16 %v4755
        %v4867 = vunpack.c.l.b16 %v4756
        %v4868 = vunpack.c.h.b16 %v4756
        %v4869 = vpack.c.b16 %v4807, %v4805
        %v4870 = vpack.c.b16 %v4808, %v4806
        %v4871 = vpack.c.b16 %v4811, %v4809
        %v4872 = vpack.c.b16 %v4812, %v4810
        %v4873 = vpack.c.b16 %v4815, %v4813
        %v4874 = vpack.c.b16 %v4816, %v4814
        %v4875 = vpack.c.b16 %v4819, %v4817
        %v4876 = vpack.c.b16 %v4820, %v4818
        %v4877 = vpack.c.b16 %v4823, %v4821
        %v4878 = vpack.c.b16 %v4824, %v4822
        %v4879 = vpack.c.b16 %v4827, %v4825
        %v4880 = vpack.c.b16 %v4828, %v4826
        %v4881 = vpack.c.b16 %v4831, %v4829
        %v4882 = vpack.c.b16 %v4832, %v4830
        %v4883 = vpack.c.b16 %v4835, %v4833
        %v4884 = vpack.c.b16 %v4836, %v4834
        %v4885 = vpack.c.b16 %v4839, %v4837
        %v4886 = vpack.c.b16 %v4840, %v4838
        %v4887 = vpack.c.b16 %v4843, %v4841
        %v4888 = vpack.c.b16 %v4844, %v4842
        %v4889 = vpack.c.b16 %v4847, %v4845
        %v4890 = vpack.c.b16 %v4848, %v4846
        %v4891 = vpack.c.b16 %v4851, %v4849
        %v4892 = vpack.c.b16 %v4852, %v4850
        %v4893 = vpack.c.b16 %v4855, %v4853
        %v4894 = vpack.c.b16 %v4856, %v4854
        %v4895 = vpack.c.b16 %v4859, %v4857
        %v4896 = vpack.c.b16 %v4860, %v4858
        %v4897 = vpack.c.b16 %v4863, %v4861
        %v4898 = vpack.c.b16 %v4864, %v4862
        %v4899 = vpack.c.b16 %v4867, %v4865
        %v4900 = vpack.c.b16 %v4868, %v4866
        %4933 = vmatprep.subr.bf16.mxu0 %v4870
        %4934 = vmatpush1.bf16.msra.mxu0 %v4869
        %4935 = vmatprep.subr.bf16.mxu0 %v4872
        %4936 = vmatpush1.bf16.msra.mxu0 %v4871
        %4937 = vmatprep.subr.bf16.mxu0 %v4874
        %4938 = vmatpush1.bf16.msra.mxu0 %v4873
        %4939 = vmatprep.subr.bf16.mxu0 %v4876
        %4940 = vmatpush1.bf16.msra.mxu0 %v4875
        %4941 = vmatprep.subr.bf16.mxu0 %v4878
        %4942 = vmatpush1.bf16.msra.mxu0 %v4877
        %4943 = vmatprep.subr.bf16.mxu0 %v4880
        %4944 = vmatpush1.bf16.msra.mxu0 %v4879
        %4945 = vmatprep.subr.bf16.mxu0 %v4882
        %4946 = vmatpush1.bf16.msra.mxu0 %v4881
        %4947 = vmatprep.subr.bf16.mxu0 %v4884
        %4948 = vmatpush1.bf16.msra.mxu0 %v4883
        %4949 = vmatprep.subr.bf16.mxu0 %v4886
        %4950 = vmatpush1.bf16.msra.mxu0 %v4885
        %4951 = vmatprep.subr.bf16.mxu0 %v4888
        %4952 = vmatpush1.bf16.msra.mxu0 %v4887
        %4953 = vmatprep.subr.bf16.mxu0 %v4890
        %4954 = vmatpush1.bf16.msra.mxu0 %v4889
        %4955 = vmatprep.subr.bf16.mxu0 %v4892
        %4956 = vmatpush1.bf16.msra.mxu0 %v4891
        %4957 = vmatprep.subr.bf16.mxu0 %v4894
        %4958 = vmatpush1.bf16.msra.mxu0 %v4893
        %4959 = vmatprep.subr.bf16.mxu0 %v4896
        %4960 = vmatpush1.bf16.msra.mxu0 %v4895
        %4961 = vmatprep.subr.bf16.mxu0 %v4898
        %4962 = vmatpush1.bf16.msra.mxu0 %v4897
        %4963 = vmatprep.subr.bf16.mxu0 %v4900
        %4964 = vmatpush1.bf16.msra.mxu0 %v4899
        %4965 = vmatprep.mubr.bf16.mxu0 %v4770
        %4966 = vmatmul.mubr.bf16.gmra.mrb[0].mxu0 %v4763
        %v4967 = vpop.f32.mrb[0].mxu0
        %v4968 = vadd.f32 0.0, %v4967
        %v4969 = vpop.f32.mrb[0].mxu0
        %v4970 = vadd.f32 0.0, %v4969
        %v4971 = vpop.f32.mrb[0].mxu0
        %v4972 = vpop.f32.mrb[0].mxu0
        %4973 = vdwg.mxu0
        %v4974 = vadd.f32 %v4714, %v4968
        %v4975 = vadd.f32 %v4716, %v4970
        %v4976 = vpack.c.bf16 %v3688, %v3688
        %v4977 = vld [vmem:[#allocation20] sm:$0xff]
        %v4978 = vld [vmem:[#allocation20 + $0x8] sm:$0xff]
        %v4979 = vld [vmem:[#allocation20 + $0x10] sm:$0xff]
        %v4980 = vld [vmem:[#allocation20 + $0x18] sm:$0xff]
        %v4981 = vld [vmem:[#allocation20 + $0x20] sm:$0xff]
        %v4982 = vld [vmem:[#allocation20 + $0x28] sm:$0xff]
        %v4983 = vld [vmem:[#allocation20 + $0x30] sm:$0xff]
        %v4984 = vld [vmem:[#allocation20 + $0x38] sm:$0xff]
        %v4985 = vld [vmem:[#allocation20 + $0x40] sm:$0xff]
        %v4986 = vld [vmem:[#allocation20 + $0x48] sm:$0xff]
        %v4987 = vld [vmem:[#allocation20 + $0x50] sm:$0xff]
        %v4988 = vld [vmem:[#allocation20 + $0x58] sm:$0xff]
        %v4989 = vld [vmem:[#allocation20 + $0x60] sm:$0xff]
        %v4990 = vld [vmem:[#allocation20 + $0x68] sm:$0xff]
        %v4991 = vld [vmem:[#allocation20 + $0x70] sm:$0xff]
        %v4992 = vld [vmem:[#allocation20 + $0x78] sm:$0xff]
        %v5009 = vunpack.c.l.b16 %v4977
        %v5010 = vunpack.c.h.b16 %v4977
        %v5011 = vunpack.c.l.b16 %v4978
        %v5012 = vunpack.c.h.b16 %v4978
        %v5013 = vunpack.c.l.b16 %v4979
        %v5014 = vunpack.c.h.b16 %v4979
        %v5015 = vunpack.c.l.b16 %v4980
        %v5016 = vunpack.c.h.b16 %v4980
        %v5017 = vunpack.c.l.b16 %v4981
        %v5018 = vunpack.c.h.b16 %v4981
        %v5019 = vunpack.c.l.b16 %v4982
        %v5020 = vunpack.c.h.b16 %v4982
        %v5021 = vunpack.c.l.b16 %v4983
        %v5022 = vunpack.c.h.b16 %v4983
        %v5023 = vunpack.c.l.b16 %v4984
        %v5024 = vunpack.c.h.b16 %v4984
        %v5025 = vunpack.c.l.b16 %v4985
        %v5026 = vunpack.c.h.b16 %v4985
        %v5027 = vunpack.c.l.b16 %v4986
        %v5028 = vunpack.c.h.b16 %v4986
        %v5029 = vunpack.c.l.b16 %v4987
        %v5030 = vunpack.c.h.b16 %v4987
        %v5031 = vunpack.c.l.b16 %v4988
        %v5032 = vunpack.c.h.b16 %v4988
        %v5033 = vunpack.c.l.b16 %v4989
        %v5034 = vunpack.c.h.b16 %v4989
        %v5035 = vunpack.c.l.b16 %v4990
        %v5036 = vunpack.c.h.b16 %v4990
        %v5037 = vunpack.c.l.b16 %v4991
        %v5038 = vunpack.c.h.b16 %v4991
        %v5039 = vunpack.c.l.b16 %v4992
        %v5040 = vunpack.c.h.b16 %v4992
        %v5041 = vpack.c.b16 %v5011, %v5009
        %v5042 = vpack.c.b16 %v5012, %v5010
        %v5043 = vpack.c.b16 %v5015, %v5013
        %v5044 = vpack.c.b16 %v5016, %v5014
        %v5045 = vpack.c.b16 %v5019, %v5017
        %v5046 = vpack.c.b16 %v5020, %v5018
        %v5047 = vpack.c.b16 %v5023, %v5021
        %v5048 = vpack.c.b16 %v5024, %v5022
        %v5049 = vpack.c.b16 %v5027, %v5025
        %v5050 = vpack.c.b16 %v5028, %v5026
        %v5051 = vpack.c.b16 %v5031, %v5029
        %v5052 = vpack.c.b16 %v5032, %v5030
        %v5053 = vpack.c.b16 %v5035, %v5033
        %v5054 = vpack.c.b16 %v5036, %v5034
        %v5055 = vpack.c.b16 %v5039, %v5037
        %v5056 = vpack.c.b16 %v5040, %v5038
        %5073 = vmatprep.subr.bf16.mxu0 %v5042
        %5074 = vmatpush1.bf16.msra.mxu0 %v5041
        %5075 = vmatprep.subr.bf16.mxu0 %v5044
        %5076 = vmatpush1.bf16.msra.mxu0 %v5043
        %5077 = vmatprep.subr.bf16.mxu0 %v5046
        %5078 = vmatpush1.bf16.msra.mxu0 %v5045
        %5079 = vmatprep.subr.bf16.mxu0 %v5048
        %5080 = vmatpush1.bf16.msra.mxu0 %v5047
        %5081 = vmatprep.subr.bf16.mxu0 %v5050
        %5082 = vmatpush1.bf16.msra.mxu0 %v5049
        %5083 = vmatprep.subr.bf16.mxu0 %v5052
        %5084 = vmatpush1.bf16.msra.mxu0 %v5051
        %5085 = vmatprep.subr.bf16.mxu0 %v5054
        %5086 = vmatpush1.bf16.msra.mxu0 %v5053
        %5087 = vmatprep.subr.bf16.mxu0 %v5056
        %5088 = vmatpush1.bf16.msra.mxu0 %v5055
        %5089 = vmatprep.subr.bf16.mxu0 0
        %5090 = vmatpush1.bf16.msra.mxu0 0
        %5091 = vmatprep.subr.bf16.mxu0 0
        %5092 = vmatpush1.bf16.msra.mxu0 0
        %5093 = vmatprep.subr.bf16.mxu0 0
        %5094 = vmatpush1.bf16.msra.mxu0 0
        %5095 = vmatprep.subr.bf16.mxu0 0
        %5096 = vmatpush1.bf16.msra.mxu0 0
        %5097 = vmatprep.subr.bf16.mxu0 0
        %5098 = vmatpush1.bf16.msra.mxu0 0
        %5099 = vmatprep.subr.bf16.mxu0 0
        %5100 = vmatpush1.bf16.msra.mxu0 0
        %5101 = vmatprep.subr.bf16.mxu0 0
        %5102 = vmatpush1.bf16.msra.mxu0 0
        %5103 = vmatprep.subr.bf16.mxu0 0
        %5104 = vmatpush1.bf16.msra.mxu0 0
        %5105 = vmatprep.mubr.bf16.mxu0 0
        %5106 = vmatmul.mubr.bf16.gmra.mrb[0].mxu0 %v4976
        %v5107 = vpop.f32.mrb[0].mxu0
        %v5108 = vadd.f32 0.0, %v5107
        %v5109 = vpop.f32.mrb[0].mxu0
        %v5110 = vadd.f32 0.0, %v5109
        %v5111 = vpop.f32.mrb[0].mxu0
        %v5112 = vpop.f32.mrb[0].mxu0
        %5113 = vdwg.mxu0
        %vm5114 = vcmask 64512
        %v5115 = vsel %vm5114, %v2022, 0
        %5117 = vmatprep.subr.mxu0 %v5110
        %5118 = vmatpush1.msra.mxu0 %v5108
        %5119 = vmatprep.subr.mxu0 0.0
        %5120 = vmatpush1.msra.mxu0 0.0
        %5121 = vmatprep.subr.mxu0 0.0
        %5122 = vmatpush1.msra.mxu0 0.0
        %5123 = vmatprep.subr.mxu0 0.0
        %5124 = vmatpush1.msra.mxu0 0.0
        %5125 = vmatprep.subr.mxu0 0.0
        %5126 = vmatpush1.msra.mxu0 0.0
        %5127 = vmatprep.subr.mxu0 0.0
        %5128 = vmatpush1.msra.mxu0 0.0
        %5129 = vmatprep.subr.mxu0 0.0
        %5130 = vmatpush1.msra.mxu0 0.0
        %5131 = vmatprep.subr.mxu0 0.0
        %5132 = vmatpush1.msra.mxu0 0.0
        %5133 = vmatprep.subr.mxu0 0.0
        %5134 = vmatpush1.msra.mxu0 0.0
        %5135 = vmatprep.subr.mxu0 0.0
        %5136 = vmatpush1.msra.mxu0 0.0
        %5137 = vmatprep.subr.mxu0 0.0
        %5138 = vmatpush1.msra.mxu0 0.0
        %5139 = vmatprep.subr.mxu0 0.0
        %5140 = vmatpush1.msra.mxu0 0.0
        %5141 = vmatprep.subr.mxu0 0.0
        %5142 = vmatpush1.msra.mxu0 0.0
        %5143 = vmatprep.subr.mxu0 0.0
        %5144 = vmatpush1.msra.mxu0 0.0
        %5145 = vmatprep.subr.mxu0 0.0
        %5146 = vmatpush1.msra.mxu0 0.0
        %5147 = vmatprep.subr.mxu0 0.0
        %5148 = vmatpush1.msra.mxu0 0.0
        %5149 = vmatprep.subr.mxu0 0.0
        %5150 = vmatpush1.msra.mxu0 0.0
        %5151 = vmatprep.subr.mxu0 0.0
        %5152 = vmatpush1.msra.mxu0 0.0
        %5153 = vmatprep.subr.mxu0 0.0
        %5154 = vmatpush1.msra.mxu0 0.0
        %5155 = vmatprep.subr.mxu0 0.0
        %5156 = vmatpush1.msra.mxu0 0.0
        %5157 = vmatprep.subr.mxu0 0.0
        %5158 = vmatpush1.msra.mxu0 0.0
        %5159 = vmatprep.subr.mxu0 0.0
        %5160 = vmatpush1.msra.mxu0 0.0
        %5161 = vmatprep.subr.mxu0 0.0
        %5162 = vmatpush1.msra.mxu0 0.0
        %5163 = vmatprep.subr.mxu0 0.0
        %5164 = vmatpush1.msra.mxu0 0.0
        %5165 = vmatprep.subr.mxu0 0.0
        %5166 = vmatpush1.msra.mxu0 0.0
        %5167 = vmatprep.subr.mxu0 0.0
        %5168 = vmatpush1.msra.mxu0 0.0
        %5169 = vmatprep.subr.mxu0 0.0
        %5170 = vmatpush1.msra.mxu0 0.0
        %5171 = vmatprep.subr.mxu0 0.0
        %5172 = vmatpush1.msra.mxu0 0.0
        %5173 = vmatprep.subr.mxu0 0.0
        %5174 = vmatpush1.msra.mxu0 0.0
        %5175 = vmatprep.subr.mxu0 0.0
        %5176 = vmatpush1.msra.mxu0 0.0
        %5177 = vmatprep.subr.mxu0 0.0
        %5178 = vmatpush1.msra.mxu0 0.0
        %5179 = vmatprep.subr.mxu0 0.0
        %5180 = vmatpush1.msra.mxu0 0.0
        %5181 = vmatprep.mubr.f32.mxu0 0.0
        %5182 = vmatmul.mubr.f32.gmra.mrb[0].mxu0 %v5115
        %v5183 = vpop.f32.mrb[0].mxu0
        %v5184 = vadd.f32 0.0, %v5183
        %v5185 = vpop.f32.mrb[0].mxu0
        %v5186 = vadd.f32 0.0, %v5185
        %5187 = vdwg.mxu0
        %v5188 = vadd.f32 %v4974, %v5184
        %v5189 = vadd.f32 %v4975, %v5186
        %v5190 = vmax.f32 %v5188, 0.0
        %v5191 = vmax.f32 %v5189, 0.0
        %5192 = vst.msk [vmem:[%s4217] ss:$8 sm:$0x3] %vm4216, 0.0
        %5193 = vst.msk [vmem:[%s4217] ss:$8 sm:$0x0] %vm4216, 0.0
        %5194 = vst.msk [vmem:[%s4220] ss:$8 sm:$0x3] %vm4216, 0.0
        %5195 = vst.msk [vmem:[%s4220] ss:$8 sm:$0x0] %vm4216, 0.0
        %5196 = vst [vmem:[#allocation2 + $0x20] sm:$0xf] %v5190
        %5197 = vst [vmem:[#allocation2 + $0x28] sm:$0xf] %v5191
        %v5198 = vld [vmem:[#allocation2] sm:$0x80]
        %v5199 = vld [vmem:[#allocation2 + $0x8] sm:$0x80]
        %v5200 = vld [vmem:[#allocation2 + $0x20] sm:$0x3]
        %v5201 = vld [vmem:[#allocation2 + $0x28] sm:$0x3]
        %v5202 = vpack.c.bf16 %v5200, %v5198
        %v5203 = vpack.c.bf16 %v5201, %v5199
        %v5204 = vld [vmem:[#allocation21] sm:$0xff]
        %v5205 = vld [vmem:[#allocation21 + $0x8] sm:$0xff]
        %v5206 = vld [vmem:[#allocation21 + $0x10] sm:$0xff]
        %v5207 = vld [vmem:[#allocation21 + $0x18] sm:$0xff]
        %v5208 = vld [vmem:[#allocation21 + $0x20] sm:$0xff]
        %v5209 = vld [vmem:[#allocation21 + $0x28] sm:$0xff]
        %v5210 = vld [vmem:[#allocation21 + $0x30] sm:$0xff]
        %v5211 = vld [vmem:[#allocation21 + $0x38] sm:$0xff]
        %v5212 = vld [vmem:[#allocation21 + $0x40] sm:$0xff]
        %v5213 = vld [vmem:[#allocation21 + $0x48] sm:$0xff]
        %v5214 = vld [vmem:[#allocation21 + $0x50] sm:$0xff]
        %v5215 = vld [vmem:[#allocation21 + $0x58] sm:$0xff]
        %v5216 = vld [vmem:[#allocation21 + $0x60] sm:$0xff]
        %v5217 = vld [vmem:[#allocation21 + $0x68] sm:$0xff]
        %v5218 = vld [vmem:[#allocation21 + $0x70] sm:$0xff]
        %v5219 = vld [vmem:[#allocation21 + $0x78] sm:$0xff]
        %v5220 = vld [vmem:[#allocation21 + $0x80] sm:$0xff]
        %v5221 = vld [vmem:[#allocation21 + $0x88] sm:$0xff]
        %v5222 = vld [vmem:[#allocation21 + $0x90] sm:$0xff]
        %v5223 = vld [vmem:[#allocation21 + $0x98] sm:$0xff]
        %v5224 = vld [vmem:[#allocation21 + $0xa0] sm:$0xff]
        %v5225 = vld [vmem:[#allocation21 + $0xa8] sm:$0xff]
        %v5226 = vld [vmem:[#allocation21 + $0xb0] sm:$0xff]
        %v5227 = vld [vmem:[#allocation21 + $0xb8] sm:$0xff]
        %v5228 = vld [vmem:[#allocation21 + $0xc0] sm:$0xff]
        %v5229 = vld [vmem:[#allocation21 + $0xc8] sm:$0xff]
        %v5230 = vld [vmem:[#allocation21 + $0xd0] sm:$0xff]
        %v5231 = vld [vmem:[#allocation21 + $0xd8] sm:$0xff]
        %v5232 = vld [vmem:[#allocation21 + $0xe0] sm:$0xff]
        %v5233 = vld [vmem:[#allocation21 + $0xe8] sm:$0xff]
        %v5234 = vld [vmem:[#allocation21 + $0xf0] sm:$0xff]
        %v5235 = vld [vmem:[#allocation21 + $0xf8] sm:$0xff]
        %v5236 = vld [vmem:[#allocation21 + $0x100] sm:$0xff]
        %v5237 = vld [vmem:[#allocation21 + $0x108] sm:$0xff]
        %v5238 = vld [vmem:[#allocation21 + $0x110] sm:$0xff]
        %v5239 = vld [vmem:[#allocation21 + $0x118] sm:$0xff]
        %v5240 = vld [vmem:[#allocation21 + $0x120] sm:$0xff]
        %v5241 = vld [vmem:[#allocation21 + $0x128] sm:$0xff]
        %v5242 = vld [vmem:[#allocation21 + $0x130] sm:$0xff]
        %v5243 = vld [vmem:[#allocation21 + $0x138] sm:$0xff]
        %v5244 = vld [vmem:[#allocation21 + $0x140] sm:$0xff]
        %v5245 = vld [vmem:[#allocation21 + $0x148] sm:$0xff]
        %v5246 = vld [vmem:[#allocation21 + $0x150] sm:$0xff]
        %v5247 = vld [vmem:[#allocation21 + $0x158] sm:$0xff]
        %v5248 = vld [vmem:[#allocation21 + $0x160] sm:$0xff]
        %v5249 = vld [vmem:[#allocation21 + $0x168] sm:$0xff]
        %v5250 = vld [vmem:[#allocation21 + $0x170] sm:$0xff]
        %v5251 = vld [vmem:[#allocation21 + $0x178] sm:$0xff]
        %v5252 = vld [vmem:[#allocation21 + $0x180] sm:$0xff]
        %v5253 = vld [vmem:[#allocation21 + $0x188] sm:$0xff]
        %v5254 = vld [vmem:[#allocation21 + $0x190] sm:$0xff]
        %v5255 = vld [vmem:[#allocation21 + $0x198] sm:$0xff]
        %v5256 = vld [vmem:[#allocation21 + $0x1a0] sm:$0xff]
        %v5257 = vld [vmem:[#allocation21 + $0x1a8] sm:$0xff]
        %v5258 = vld [vmem:[#allocation21 + $0x1b0] sm:$0xff]
        %v5259 = vld [vmem:[#allocation21 + $0x1b8] sm:$0xff]
        %v5260 = vld [vmem:[#allocation21 + $0x1c0] sm:$0xff]
        %v5261 = vld [vmem:[#allocation21 + $0x1c8] sm:$0xff]
        %v5262 = vld [vmem:[#allocation21 + $0x1d0] sm:$0xff]
        %v5263 = vld [vmem:[#allocation21 + $0x1d8] sm:$0xff]
        %v5264 = vld [vmem:[#allocation21 + $0x1e0] sm:$0xff]
        %v5265 = vld [vmem:[#allocation21 + $0x1e8] sm:$0xff]
        %v5266 = vld [vmem:[#allocation21 + $0x1f0] sm:$0xff]
        %v5267 = vld [vmem:[#allocation21 + $0x1f8] sm:$0xff]
        %v5268 = vld [vmem:[#allocation2 + $0x20] sm:$0x7]
        %v5269 = vld [vmem:[#allocation2 + $0x28] sm:$0x7]
        %v5270 = vpack.c.bf16 %v5268, %v5268
        %v5271 = vpack.c.bf16 %v5269, %v5269
        %s5272 = scalar_lea.vmem [#allocation21], 512
        %v5273 = vld [vmem:[%s5272] sm:$0xff]
        %v5274 = vld [vmem:[%s5272 + $0x8] sm:$0xff]
        %v5275 = vld [vmem:[%s5272 + $0x10] sm:$0xff]
        %v5276 = vld [vmem:[%s5272 + $0x18] sm:$0xff]
        %v5277 = vld [vmem:[%s5272 + $0x20] sm:$0xff]
        %v5278 = vld [vmem:[%s5272 + $0x28] sm:$0xff]
        %v5279 = vld [vmem:[%s5272 + $0x30] sm:$0xff]
        %v5280 = vld [vmem:[%s5272 + $0x38] sm:$0xff]
        %v5281 = vld [vmem:[%s5272 + $0x40] sm:$0xff]
        %v5282 = vld [vmem:[%s5272 + $0x48] sm:$0xff]
        %v5283 = vld [vmem:[%s5272 + $0x50] sm:$0xff]
        %v5284 = vld [vmem:[%s5272 + $0x58] sm:$0xff]
        %v5285 = vld [vmem:[%s5272 + $0x60] sm:$0xff]
        %v5286 = vld [vmem:[%s5272 + $0x68] sm:$0xff]
        %v5287 = vld [vmem:[%s5272 + $0x70] sm:$0xff]
        %v5288 = vld [vmem:[%s5272 + $0x78] sm:$0xff]
        %v5289 = vld [vmem:[%s5272 + $0x80] sm:$0xff]
        %v5290 = vld [vmem:[%s5272 + $0x88] sm:$0xff]
        %v5291 = vld [vmem:[%s5272 + $0x90] sm:$0xff]
        %v5292 = vld [vmem:[%s5272 + $0x98] sm:$0xff]
        %v5293 = vld [vmem:[%s5272 + $0xa0] sm:$0xff]
        %v5294 = vld [vmem:[%s5272 + $0xa8] sm:$0xff]
        %v5295 = vld [vmem:[%s5272 + $0xb0] sm:$0xff]
        %v5296 = vld [vmem:[%s5272 + $0xb8] sm:$0xff]
        %v5297 = vld [vmem:[%s5272 + $0xc0] sm:$0xff]
        %v5298 = vld [vmem:[%s5272 + $0xc8] sm:$0xff]
        %v5299 = vld [vmem:[%s5272 + $0xd0] sm:$0xff]
        %v5300 = vld [vmem:[%s5272 + $0xd8] sm:$0xff]
        %v5301 = vld [vmem:[%s5272 + $0xe0] sm:$0xff]
        %v5302 = vld [vmem:[%s5272 + $0xe8] sm:$0xff]
        %v5303 = vld [vmem:[%s5272 + $0xf0] sm:$0xff]
        %v5304 = vld [vmem:[%s5272 + $0xf8] sm:$0xff]
        %v5305 = vld [vmem:[%s5272 + $0x100] sm:$0xff]
        %v5306 = vld [vmem:[%s5272 + $0x108] sm:$0xff]
        %v5307 = vld [vmem:[%s5272 + $0x110] sm:$0xff]
        %v5308 = vld [vmem:[%s5272 + $0x118] sm:$0xff]
        %v5309 = vld [vmem:[%s5272 + $0x120] sm:$0xff]
        %v5310 = vld [vmem:[%s5272 + $0x128] sm:$0xff]
        %v5311 = vld [vmem:[%s5272 + $0x130] sm:$0xff]
        %v5312 = vld [vmem:[%s5272 + $0x138] sm:$0xff]
        %v5313 = vld [vmem:[%s5272 + $0x140] sm:$0xff]
        %v5314 = vld [vmem:[%s5272 + $0x148] sm:$0xff]
        %v5315 = vld [vmem:[%s5272 + $0x150] sm:$0xff]
        %v5316 = vld [vmem:[%s5272 + $0x158] sm:$0xff]
        %v5317 = vld [vmem:[%s5272 + $0x160] sm:$0xff]
        %v5318 = vld [vmem:[%s5272 + $0x168] sm:$0xff]
        %v5319 = vld [vmem:[%s5272 + $0x170] sm:$0xff]
        %v5320 = vld [vmem:[%s5272 + $0x178] sm:$0xff]
        %v5321 = vld [vmem:[%s5272 + $0x180] sm:$0xff]
        %v5322 = vld [vmem:[%s5272 + $0x188] sm:$0xff]
        %v5323 = vld [vmem:[%s5272 + $0x190] sm:$0xff]
        %v5324 = vld [vmem:[%s5272 + $0x198] sm:$0xff]
        %v5325 = vld [vmem:[%s5272 + $0x1a0] sm:$0xff]
        %v5326 = vld [vmem:[%s5272 + $0x1a8] sm:$0xff]
        %v5327 = vld [vmem:[%s5272 + $0x1b0] sm:$0xff]
        %v5328 = vld [vmem:[%s5272 + $0x1b8] sm:$0xff]
        %v5329 = vld [vmem:[%s5272 + $0x1c0] sm:$0xff]
        %v5330 = vld [vmem:[%s5272 + $0x1c8] sm:$0xff]
        %v5331 = vld [vmem:[%s5272 + $0x1d0] sm:$0xff]
        %v5332 = vld [vmem:[%s5272 + $0x1d8] sm:$0xff]
        %v5333 = vld [vmem:[%s5272 + $0x1e0] sm:$0xff]
        %v5334 = vld [vmem:[%s5272 + $0x1e8] sm:$0xff]
        %v5335 = vld [vmem:[%s5272 + $0x1f0] sm:$0xff]
        %v5336 = vld [vmem:[%s5272 + $0x1f8] sm:$0xff]
        %v5401 = vunpack.c.l.b16 %v5273
        %v5402 = vunpack.c.h.b16 %v5273
        %v5403 = vunpack.c.l.b16 %v5274
        %v5404 = vunpack.c.h.b16 %v5274
        %v5405 = vunpack.c.l.b16 %v5275
        %v5406 = vunpack.c.h.b16 %v5275
        %v5407 = vunpack.c.l.b16 %v5276
        %v5408 = vunpack.c.h.b16 %v5276
        %v5409 = vunpack.c.l.b16 %v5277
        %v5410 = vunpack.c.h.b16 %v5277
        %v5411 = vunpack.c.l.b16 %v5278
        %v5412 = vunpack.c.h.b16 %v5278
        %v5413 = vunpack.c.l.b16 %v5279
        %v5414 = vunpack.c.h.b16 %v5279
        %v5415 = vunpack.c.l.b16 %v5280
        %v5416 = vunpack.c.h.b16 %v5280
        %v5417 = vunpack.c.l.b16 %v5281
        %v5418 = vunpack.c.h.b16 %v5281
        %v5419 = vunpack.c.l.b16 %v5282
        %v5420 = vunpack.c.h.b16 %v5282
        %v5421 = vunpack.c.l.b16 %v5283
        %v5422 = vunpack.c.h.b16 %v5283
        %v5423 = vunpack.c.l.b16 %v5284
        %v5424 = vunpack.c.h.b16 %v5284
        %v5425 = vunpack.c.l.b16 %v5285
        %v5426 = vunpack.c.h.b16 %v5285
        %v5427 = vunpack.c.l.b16 %v5286
        %v5428 = vunpack.c.h.b16 %v5286
        %v5429 = vunpack.c.l.b16 %v5287
        %v5430 = vunpack.c.h.b16 %v5287
        %v5431 = vunpack.c.l.b16 %v5288
        %v5432 = vunpack.c.h.b16 %v5288
        %v5433 = vunpack.c.l.b16 %v5289
        %v5434 = vunpack.c.h.b16 %v5289
        %v5435 = vunpack.c.l.b16 %v5290
        %v5436 = vunpack.c.h.b16 %v5290
        %v5437 = vunpack.c.l.b16 %v5291
        %v5438 = vunpack.c.h.b16 %v5291
        %v5439 = vunpack.c.l.b16 %v5292
        %v5440 = vunpack.c.h.b16 %v5292
        %v5441 = vunpack.c.l.b16 %v5293
        %v5442 = vunpack.c.h.b16 %v5293
        %v5443 = vunpack.c.l.b16 %v5294
        %v5444 = vunpack.c.h.b16 %v5294
        %v5445 = vunpack.c.l.b16 %v5295
        %v5446 = vunpack.c.h.b16 %v5295
        %v5447 = vunpack.c.l.b16 %v5296
        %v5448 = vunpack.c.h.b16 %v5296
        %v5449 = vunpack.c.l.b16 %v5297
        %v5450 = vunpack.c.h.b16 %v5297
        %v5451 = vunpack.c.l.b16 %v5298
        %v5452 = vunpack.c.h.b16 %v5298
        %v5453 = vunpack.c.l.b16 %v5299
        %v5454 = vunpack.c.h.b16 %v5299
        %v5455 = vunpack.c.l.b16 %v5300
        %v5456 = vunpack.c.h.b16 %v5300
        %v5457 = vunpack.c.l.b16 %v5301
        %v5458 = vunpack.c.h.b16 %v5301
        %v5459 = vunpack.c.l.b16 %v5302
        %v5460 = vunpack.c.h.b16 %v5302
        %v5461 = vunpack.c.l.b16 %v5303
        %v5462 = vunpack.c.h.b16 %v5303
        %v5463 = vunpack.c.l.b16 %v5304
        %v5464 = vunpack.c.h.b16 %v5304
        %v5465 = vunpack.c.l.b16 %v5305
        %v5466 = vunpack.c.h.b16 %v5305
        %v5467 = vunpack.c.l.b16 %v5306
        %v5468 = vunpack.c.h.b16 %v5306
        %v5469 = vunpack.c.l.b16 %v5307
        %v5470 = vunpack.c.h.b16 %v5307
        %v5471 = vunpack.c.l.b16 %v5308
        %v5472 = vunpack.c.h.b16 %v5308
        %v5473 = vunpack.c.l.b16 %v5309
        %v5474 = vunpack.c.h.b16 %v5309
        %v5475 = vunpack.c.l.b16 %v5310
        %v5476 = vunpack.c.h.b16 %v5310
        %v5477 = vunpack.c.l.b16 %v5311
        %v5478 = vunpack.c.h.b16 %v5311
        %v5479 = vunpack.c.l.b16 %v5312
        %v5480 = vunpack.c.h.b16 %v5312
        %v5481 = vunpack.c.l.b16 %v5313
        %v5482 = vunpack.c.h.b16 %v5313
        %v5483 = vunpack.c.l.b16 %v5314
        %v5484 = vunpack.c.h.b16 %v5314
        %v5485 = vunpack.c.l.b16 %v5315
        %v5486 = vunpack.c.h.b16 %v5315
        %v5487 = vunpack.c.l.b16 %v5316
        %v5488 = vunpack.c.h.b16 %v5316
        %v5489 = vunpack.c.l.b16 %v5317
        %v5490 = vunpack.c.h.b16 %v5317
        %v5491 = vunpack.c.l.b16 %v5318
        %v5492 = vunpack.c.h.b16 %v5318
        %v5493 = vunpack.c.l.b16 %v5319
        %v5494 = vunpack.c.h.b16 %v5319
        %v5495 = vunpack.c.l.b16 %v5320
        %v5496 = vunpack.c.h.b16 %v5320
        %v5497 = vunpack.c.l.b16 %v5321
        %v5498 = vunpack.c.h.b16 %v5321
        %v5499 = vunpack.c.l.b16 %v5322
        %v5500 = vunpack.c.h.b16 %v5322
        %v5501 = vunpack.c.l.b16 %v5323
        %v5502 = vunpack.c.h.b16 %v5323
        %v5503 = vunpack.c.l.b16 %v5324
        %v5504 = vunpack.c.h.b16 %v5324
        %v5505 = vunpack.c.l.b16 %v5325
        %v5506 = vunpack.c.h.b16 %v5325
        %v5507 = vunpack.c.l.b16 %v5326
        %v5508 = vunpack.c.h.b16 %v5326
        %v5509 = vunpack.c.l.b16 %v5327
        %v5510 = vunpack.c.h.b16 %v5327
        %v5511 = vunpack.c.l.b16 %v5328
        %v5512 = vunpack.c.h.b16 %v5328
        %v5513 = vunpack.c.l.b16 %v5329
        %v5514 = vunpack.c.h.b16 %v5329
        %v5515 = vunpack.c.l.b16 %v5330
        %v5516 = vunpack.c.h.b16 %v5330
        %v5517 = vunpack.c.l.b16 %v5331
        %v5518 = vunpack.c.h.b16 %v5331
        %v5519 = vunpack.c.l.b16 %v5332
        %v5520 = vunpack.c.h.b16 %v5332
        %v5521 = vunpack.c.l.b16 %v5333
        %v5522 = vunpack.c.h.b16 %v5333
        %v5523 = vunpack.c.l.b16 %v5334
        %v5524 = vunpack.c.h.b16 %v5334
        %v5525 = vunpack.c.l.b16 %v5335
        %v5526 = vunpack.c.h.b16 %v5335
        %v5527 = vunpack.c.l.b16 %v5336
        %v5528 = vunpack.c.h.b16 %v5336
        %v5529 = vpack.c.b16 %v5405, %v5401
        %v5530 = vpack.c.b16 %v5406, %v5402
        %v5531 = vpack.c.b16 %v5407, %v5403
        %v5532 = vpack.c.b16 %v5408, %v5404
        %v5533 = vpack.c.b16 %v5413, %v5409
        %v5534 = vpack.c.b16 %v5414, %v5410
        %v5535 = vpack.c.b16 %v5415, %v5411
        %v5536 = vpack.c.b16 %v5416, %v5412
        %v5537 = vpack.c.b16 %v5421, %v5417
        %v5538 = vpack.c.b16 %v5422, %v5418
        %v5539 = vpack.c.b16 %v5423, %v5419
        %v5540 = vpack.c.b16 %v5424, %v5420
        %v5541 = vpack.c.b16 %v5429, %v5425
        %v5542 = vpack.c.b16 %v5430, %v5426
        %v5543 = vpack.c.b16 %v5431, %v5427
        %v5544 = vpack.c.b16 %v5432, %v5428
        %v5545 = vpack.c.b16 %v5437, %v5433
        %v5546 = vpack.c.b16 %v5438, %v5434
        %v5547 = vpack.c.b16 %v5439, %v5435
        %v5548 = vpack.c.b16 %v5440, %v5436
        %v5549 = vpack.c.b16 %v5445, %v5441
        %v5550 = vpack.c.b16 %v5446, %v5442
        %v5551 = vpack.c.b16 %v5447, %v5443
        %v5552 = vpack.c.b16 %v5448, %v5444
        %v5553 = vpack.c.b16 %v5453, %v5449
        %v5554 = vpack.c.b16 %v5454, %v5450
        %v5555 = vpack.c.b16 %v5455, %v5451
        %v5556 = vpack.c.b16 %v5456, %v5452
        %v5557 = vpack.c.b16 %v5461, %v5457
        %v5558 = vpack.c.b16 %v5462, %v5458
        %v5559 = vpack.c.b16 %v5463, %v5459
        %v5560 = vpack.c.b16 %v5464, %v5460
        %v5561 = vpack.c.b16 %v5469, %v5465
        %v5562 = vpack.c.b16 %v5470, %v5466
        %v5563 = vpack.c.b16 %v5471, %v5467
        %v5564 = vpack.c.b16 %v5472, %v5468
        %v5565 = vpack.c.b16 %v5477, %v5473
        %v5566 = vpack.c.b16 %v5478, %v5474
        %v5567 = vpack.c.b16 %v5479, %v5475
        %v5568 = vpack.c.b16 %v5480, %v5476
        %v5569 = vpack.c.b16 %v5485, %v5481
        %v5570 = vpack.c.b16 %v5486, %v5482
        %v5571 = vpack.c.b16 %v5487, %v5483
        %v5572 = vpack.c.b16 %v5488, %v5484
        %v5573 = vpack.c.b16 %v5493, %v5489
        %v5574 = vpack.c.b16 %v5494, %v5490
        %v5575 = vpack.c.b16 %v5495, %v5491
        %v5576 = vpack.c.b16 %v5496, %v5492
        %v5577 = vpack.c.b16 %v5501, %v5497
        %v5578 = vpack.c.b16 %v5502, %v5498
        %v5579 = vpack.c.b16 %v5503, %v5499
        %v5580 = vpack.c.b16 %v5504, %v5500
        %v5581 = vpack.c.b16 %v5509, %v5505
        %v5582 = vpack.c.b16 %v5510, %v5506
        %v5583 = vpack.c.b16 %v5511, %v5507
        %v5584 = vpack.c.b16 %v5512, %v5508
        %v5585 = vpack.c.b16 %v5517, %v5513
        %v5586 = vpack.c.b16 %v5518, %v5514
        %v5587 = vpack.c.b16 %v5519, %v5515
        %v5588 = vpack.c.b16 %v5520, %v5516
        %v5589 = vpack.c.b16 %v5525, %v5521
        %v5590 = vpack.c.b16 %v5526, %v5522
        %v5591 = vpack.c.b16 %v5527, %v5523
        %v5592 = vpack.c.b16 %v5528, %v5524
        %5657 = vmatprep.subr.bf16.mxu0 %v5530
        %5658 = vmatpush1.bf16.msra.mxu0 %v5529
        %5659 = vmatprep.subr.bf16.mxu0 %v5534
        %5660 = vmatpush1.bf16.msra.mxu0 %v5533
        %5661 = vmatprep.subr.bf16.mxu0 %v5538
        %5662 = vmatpush1.bf16.msra.mxu0 %v5537
        %5663 = vmatprep.subr.bf16.mxu0 %v5542
        %5664 = vmatpush1.bf16.msra.mxu0 %v5541
        %5665 = vmatprep.subr.bf16.mxu0 %v5546
        %5666 = vmatpush1.bf16.msra.mxu0 %v5545
        %5667 = vmatprep.subr.bf16.mxu0 %v5550
        %5668 = vmatpush1.bf16.msra.mxu0 %v5549
        %5669 = vmatprep.subr.bf16.mxu0 %v5554
        %5670 = vmatpush1.bf16.msra.mxu0 %v5553
        %5671 = vmatprep.subr.bf16.mxu0 %v5558
        %5672 = vmatpush1.bf16.msra.mxu0 %v5557
        %5673 = vmatprep.subr.bf16.mxu0 %v5562
        %5674 = vmatpush1.bf16.msra.mxu0 %v5561
        %5675 = vmatprep.subr.bf16.mxu0 %v5566
        %5676 = vmatpush1.bf16.msra.mxu0 %v5565
        %5677 = vmatprep.subr.bf16.mxu0 %v5570
        %5678 = vmatpush1.bf16.msra.mxu0 %v5569
        %5679 = vmatprep.subr.bf16.mxu0 %v5574
        %5680 = vmatpush1.bf16.msra.mxu0 %v5573
        %5681 = vmatprep.subr.bf16.mxu0 %v5578
        %5682 = vmatpush1.bf16.msra.mxu0 %v5577
        %5683 = vmatprep.subr.bf16.mxu0 %v5582
        %5684 = vmatpush1.bf16.msra.mxu0 %v5581
        %5685 = vmatprep.subr.bf16.mxu0 %v5586
        %5686 = vmatpush1.bf16.msra.mxu0 %v5585
        %5687 = vmatprep.subr.bf16.mxu0 %v5590
        %5688 = vmatpush1.bf16.msra.mxu0 %v5589
        %5689 = vmatprep.mubr.bf16.mxu0 %v5271
        %5690 = vmatmul.mubr.bf16.gmra.mrb[0].mxu0 %v5270
        %v5691 = vpop.f32.mrb[0].mxu0
        %v5692 = vadd.f32 0.0, %v5691
        %v5693 = vpop.f32.mrb[0].mxu0
        %v5694 = vadd.f32 0.0, %v5693
        %v5695 = vpop.f32.mrb[0].mxu0
        %v5696 = vpop.f32.mrb[0].mxu0
        %5697 = vdwg.mxu0
        %5698 = vmatprep.subr.bf16.mxu0 %v5532
        %5699 = vmatpush1.bf16.msra.mxu0 %v5531
        %5700 = vmatprep.subr.bf16.mxu0 %v5536
        %5701 = vmatpush1.bf16.msra.mxu0 %v5535
        %5702 = vmatprep.subr.bf16.mxu0 %v5540
        %5703 = vmatpush1.bf16.msra.mxu0 %v5539
        %5704 = vmatprep.subr.bf16.mxu0 %v5544
        %5705 = vmatpush1.bf16.msra.mxu0 %v5543
        %5706 = vmatprep.subr.bf16.mxu0 %v5548
        %5707 = vmatpush1.bf16.msra.mxu0 %v5547
        %5708 = vmatprep.subr.bf16.mxu0 %v5552
        %5709 = vmatpush1.bf16.msra.mxu0 %v5551
        %5710 = vmatprep.subr.bf16.mxu0 %v5556
        %5711 = vmatpush1.bf16.msra.mxu0 %v5555
        %5712 = vmatprep.subr.bf16.mxu0 %v5560
        %5713 = vmatpush1.bf16.msra.mxu0 %v5559
        %5714 = vmatprep.subr.bf16.mxu0 %v5564
        %5715 = vmatpush1.bf16.msra.mxu0 %v5563
        %5716 = vmatprep.subr.bf16.mxu0 %v5568
        %5717 = vmatpush1.bf16.msra.mxu0 %v5567
        %5718 = vmatprep.subr.bf16.mxu0 %v5572
        %5719 = vmatpush1.bf16.msra.mxu0 %v5571
        %5720 = vmatprep.subr.bf16.mxu0 %v5576
        %5721 = vmatpush1.bf16.msra.mxu0 %v5575
        %5722 = vmatprep.subr.bf16.mxu0 %v5580
        %5723 = vmatpush1.bf16.msra.mxu0 %v5579
        %5724 = vmatprep.subr.bf16.mxu0 %v5584
        %5725 = vmatpush1.bf16.msra.mxu0 %v5583
        %5726 = vmatprep.subr.bf16.mxu0 %v5588
        %5727 = vmatpush1.bf16.msra.mxu0 %v5587
        %5728 = vmatprep.subr.bf16.mxu0 %v5592
        %5729 = vmatpush1.bf16.msra.mxu0 %v5591
        %5730 = vmatprep.mubr.bf16.mxu0 %v5271
        %5731 = vmatmul.mubr.bf16.gmra.mrb[0].mxu0 %v5270
        %v5732 = vpop.f32.mrb[0].mxu0
        %v5733 = vadd.f32 0.0, %v5732
        %v5734 = vpop.f32.mrb[0].mxu0
        %v5735 = vadd.f32 0.0, %v5734
        %v5736 = vpop.f32.mrb[0].mxu0
        %v5737 = vpop.f32.mrb[0].mxu0
        %5738 = vdwg.mxu0
        %v5740 = vshrl.u32 %v5202, 16
        %v5742 = vrot.slane %v5740, 3
        %v5743 = vshll.u32 %v5202, 16
        %v5745 = vrot.slane %v5743, 4
        %v5746 = vor.u32 %v5742, %v5745
        %v5748 = vshrl.u32 %v5203, 16
        %v5750 = vrot.slane %v5748, 3
        %v5751 = vshll.u32 %v5203, 16
        %v5753 = vrot.slane %v5751, 4
        %v5754 = vor.u32 %v5750, %v5753
        %v5821 = vunpack.c.l.b16 %v5204
        %v5822 = vunpack.c.h.b16 %v5204
        %v5823 = vunpack.c.l.b16 %v5205
        %v5824 = vunpack.c.h.b16 %v5205
        %v5825 = vunpack.c.l.b16 %v5206
        %v5826 = vunpack.c.h.b16 %v5206
        %v5827 = vunpack.c.l.b16 %v5207
        %v5828 = vunpack.c.h.b16 %v5207
        %v5829 = vunpack.c.l.b16 %v5208
        %v5830 = vunpack.c.h.b16 %v5208
        %v5831 = vunpack.c.l.b16 %v5209
        %v5832 = vunpack.c.h.b16 %v5209
        %v5833 = vunpack.c.l.b16 %v5210
        %v5834 = vunpack.c.h.b16 %v5210
        %v5835 = vunpack.c.l.b16 %v5211
        %v5836 = vunpack.c.h.b16 %v5211
        %v5837 = vunpack.c.l.b16 %v5212
        %v5838 = vunpack.c.h.b16 %v5212
        %v5839 = vunpack.c.l.b16 %v5213
        %v5840 = vunpack.c.h.b16 %v5213
        %v5841 = vunpack.c.l.b16 %v5214
        %v5842 = vunpack.c.h.b16 %v5214
        %v5843 = vunpack.c.l.b16 %v5215
        %v5844 = vunpack.c.h.b16 %v5215
        %v5845 = vunpack.c.l.b16 %v5216
        %v5846 = vunpack.c.h.b16 %v5216
        %v5847 = vunpack.c.l.b16 %v5217
        %v5848 = vunpack.c.h.b16 %v5217
        %v5849 = vunpack.c.l.b16 %v5218
        %v5850 = vunpack.c.h.b16 %v5218
        %v5851 = vunpack.c.l.b16 %v5219
        %v5852 = vunpack.c.h.b16 %v5219
        %v5853 = vunpack.c.l.b16 %v5220
        %v5854 = vunpack.c.h.b16 %v5220
        %v5855 = vunpack.c.l.b16 %v5221
        %v5856 = vunpack.c.h.b16 %v5221
        %v5857 = vunpack.c.l.b16 %v5222
        %v5858 = vunpack.c.h.b16 %v5222
        %v5859 = vunpack.c.l.b16 %v5223
        %v5860 = vunpack.c.h.b16 %v5223
        %v5861 = vunpack.c.l.b16 %v5224
        %v5862 = vunpack.c.h.b16 %v5224
        %v5863 = vunpack.c.l.b16 %v5225
        %v5864 = vunpack.c.h.b16 %v5225
        %v5865 = vunpack.c.l.b16 %v5226
        %v5866 = vunpack.c.h.b16 %v5226
        %v5867 = vunpack.c.l.b16 %v5227
        %v5868 = vunpack.c.h.b16 %v5227
        %v5869 = vunpack.c.l.b16 %v5228
        %v5870 = vunpack.c.h.b16 %v5228
        %v5871 = vunpack.c.l.b16 %v5229
        %v5872 = vunpack.c.h.b16 %v5229
        %v5873 = vunpack.c.l.b16 %v5230
        %v5874 = vunpack.c.h.b16 %v5230
        %v5875 = vunpack.c.l.b16 %v5231
        %v5876 = vunpack.c.h.b16 %v5231
        %v5877 = vunpack.c.l.b16 %v5232
        %v5878 = vunpack.c.h.b16 %v5232
        %v5879 = vunpack.c.l.b16 %v5233
        %v5880 = vunpack.c.h.b16 %v5233
        %v5881 = vunpack.c.l.b16 %v5234
        %v5882 = vunpack.c.h.b16 %v5234
        %v5883 = vunpack.c.l.b16 %v5235
        %v5884 = vunpack.c.h.b16 %v5235
        %v5885 = vunpack.c.l.b16 %v5236
        %v5886 = vunpack.c.h.b16 %v5236
        %v5887 = vunpack.c.l.b16 %v5237
        %v5888 = vunpack.c.h.b16 %v5237
        %v5889 = vunpack.c.l.b16 %v5238
        %v5890 = vunpack.c.h.b16 %v5238
        %v5891 = vunpack.c.l.b16 %v5239
        %v5892 = vunpack.c.h.b16 %v5239
        %v5893 = vunpack.c.l.b16 %v5240
        %v5894 = vunpack.c.h.b16 %v5240
        %v5895 = vunpack.c.l.b16 %v5241
        %v5896 = vunpack.c.h.b16 %v5241
        %v5897 = vunpack.c.l.b16 %v5242
        %v5898 = vunpack.c.h.b16 %v5242
        %v5899 = vunpack.c.l.b16 %v5243
        %v5900 = vunpack.c.h.b16 %v5243
        %v5901 = vunpack.c.l.b16 %v5244
        %v5902 = vunpack.c.h.b16 %v5244
        %v5903 = vunpack.c.l.b16 %v5245
        %v5904 = vunpack.c.h.b16 %v5245
        %v5905 = vunpack.c.l.b16 %v5246
        %v5906 = vunpack.c.h.b16 %v5246
        %v5907 = vunpack.c.l.b16 %v5247
        %v5908 = vunpack.c.h.b16 %v5247
        %v5909 = vunpack.c.l.b16 %v5248
        %v5910 = vunpack.c.h.b16 %v5248
        %v5911 = vunpack.c.l.b16 %v5249
        %v5912 = vunpack.c.h.b16 %v5249
        %v5913 = vunpack.c.l.b16 %v5250
        %v5914 = vunpack.c.h.b16 %v5250
        %v5915 = vunpack.c.l.b16 %v5251
        %v5916 = vunpack.c.h.b16 %v5251
        %v5917 = vunpack.c.l.b16 %v5252
        %v5918 = vunpack.c.h.b16 %v5252
        %v5919 = vunpack.c.l.b16 %v5253
        %v5920 = vunpack.c.h.b16 %v5253
        %v5921 = vunpack.c.l.b16 %v5254
        %v5922 = vunpack.c.h.b16 %v5254
        %v5923 = vunpack.c.l.b16 %v5255
        %v5924 = vunpack.c.h.b16 %v5255
        %v5925 = vunpack.c.l.b16 %v5256
        %v5926 = vunpack.c.h.b16 %v5256
        %v5927 = vunpack.c.l.b16 %v5257
        %v5928 = vunpack.c.h.b16 %v5257
        %v5929 = vunpack.c.l.b16 %v5258
        %v5930 = vunpack.c.h.b16 %v5258
        %v5931 = vunpack.c.l.b16 %v5259
        %v5932 = vunpack.c.h.b16 %v5259
        %v5933 = vunpack.c.l.b16 %v5260
        %v5934 = vunpack.c.h.b16 %v5260
        %v5935 = vunpack.c.l.b16 %v5261
        %v5936 = vunpack.c.h.b16 %v5261
        %v5937 = vunpack.c.l.b16 %v5262
        %v5938 = vunpack.c.h.b16 %v5262
        %v5939 = vunpack.c.l.b16 %v5263
        %v5940 = vunpack.c.h.b16 %v5263
        %v5941 = vunpack.c.l.b16 %v5264
        %v5942 = vunpack.c.h.b16 %v5264
        %v5943 = vunpack.c.l.b16 %v5265
        %v5944 = vunpack.c.h.b16 %v5265
        %v5945 = vunpack.c.l.b16 %v5266
        %v5946 = vunpack.c.h.b16 %v5266
        %v5947 = vunpack.c.l.b16 %v5267
        %v5948 = vunpack.c.h.b16 %v5267
        %v5949 = vpack.c.b16 %v5825, %v5821
        %v5950 = vpack.c.b16 %v5826, %v5822
        %v5951 = vpack.c.b16 %v5827, %v5823
        %v5952 = vpack.c.b16 %v5828, %v5824
        %v5953 = vpack.c.b16 %v5833, %v5829
        %v5954 = vpack.c.b16 %v5834, %v5830
        %v5955 = vpack.c.b16 %v5835, %v5831
        %v5956 = vpack.c.b16 %v5836, %v5832
        %v5957 = vpack.c.b16 %v5841, %v5837
        %v5958 = vpack.c.b16 %v5842, %v5838
        %v5959 = vpack.c.b16 %v5843, %v5839
        %v5960 = vpack.c.b16 %v5844, %v5840
        %v5961 = vpack.c.b16 %v5849, %v5845
        %v5962 = vpack.c.b16 %v5850, %v5846
        %v5963 = vpack.c.b16 %v5851, %v5847
        %v5964 = vpack.c.b16 %v5852, %v5848
        %v5965 = vpack.c.b16 %v5857, %v5853
        %v5966 = vpack.c.b16 %v5858, %v5854
        %v5967 = vpack.c.b16 %v5859, %v5855
        %v5968 = vpack.c.b16 %v5860, %v5856
        %v5969 = vpack.c.b16 %v5865, %v5861
        %v5970 = vpack.c.b16 %v5866, %v5862
        %v5971 = vpack.c.b16 %v5867, %v5863
        %v5972 = vpack.c.b16 %v5868, %v5864
        %v5973 = vpack.c.b16 %v5873, %v5869
        %v5974 = vpack.c.b16 %v5874, %v5870
        %v5975 = vpack.c.b16 %v5875, %v5871
        %v5976 = vpack.c.b16 %v5876, %v5872
        %v5977 = vpack.c.b16 %v5881, %v5877
        %v5978 = vpack.c.b16 %v5882, %v5878
        %v5979 = vpack.c.b16 %v5883, %v5879
        %v5980 = vpack.c.b16 %v5884, %v5880
        %v5981 = vpack.c.b16 %v5889, %v5885
        %v5982 = vpack.c.b16 %v5890, %v5886
        %v5983 = vpack.c.b16 %v5891, %v5887
        %v5984 = vpack.c.b16 %v5892, %v5888
        %v5985 = vpack.c.b16 %v5897, %v5893
        %v5986 = vpack.c.b16 %v5898, %v5894
        %v5987 = vpack.c.b16 %v5899, %v5895
        %v5988 = vpack.c.b16 %v5900, %v5896
        %v5989 = vpack.c.b16 %v5905, %v5901
        %v5990 = vpack.c.b16 %v5906, %v5902
        %v5991 = vpack.c.b16 %v5907, %v5903
        %v5992 = vpack.c.b16 %v5908, %v5904
        %v5993 = vpack.c.b16 %v5913, %v5909
        %v5994 = vpack.c.b16 %v5914, %v5910
        %v5995 = vpack.c.b16 %v5915, %v5911
        %v5996 = vpack.c.b16 %v5916, %v5912
        %v5997 = vpack.c.b16 %v5921, %v5917
        %v5998 = vpack.c.b16 %v5922, %v5918
        %v5999 = vpack.c.b16 %v5923, %v5919
        %v6000 = vpack.c.b16 %v5924, %v5920
        %v6001 = vpack.c.b16 %v5929, %v5925
        %v6002 = vpack.c.b16 %v5930, %v5926
        %v6003 = vpack.c.b16 %v5931, %v5927
        %v6004 = vpack.c.b16 %v5932, %v5928
        %v6005 = vpack.c.b16 %v5937, %v5933
        %v6006 = vpack.c.b16 %v5938, %v5934
        %v6007 = vpack.c.b16 %v5939, %v5935
        %v6008 = vpack.c.b16 %v5940, %v5936
        %v6009 = vpack.c.b16 %v5945, %v5941
        %v6010 = vpack.c.b16 %v5946, %v5942
        %v6011 = vpack.c.b16 %v5947, %v5943
        %v6012 = vpack.c.b16 %v5948, %v5944
        %6077 = vmatprep.subr.bf16.mxu0 %v5950
        %6078 = vmatpush1.bf16.msra.mxu0 %v5949
        %6079 = vmatprep.subr.bf16.mxu0 %v5954
        %6080 = vmatpush1.bf16.msra.mxu0 %v5953
        %6081 = vmatprep.subr.bf16.mxu0 %v5958
        %6082 = vmatpush1.bf16.msra.mxu0 %v5957
        %6083 = vmatprep.subr.bf16.mxu0 %v5962
        %6084 = vmatpush1.bf16.msra.mxu0 %v5961
        %6085 = vmatprep.subr.bf16.mxu0 %v5966
        %6086 = vmatpush1.bf16.msra.mxu0 %v5965
        %6087 = vmatprep.subr.bf16.mxu0 %v5970
        %6088 = vmatpush1.bf16.msra.mxu0 %v5969
        %6089 = vmatprep.subr.bf16.mxu0 %v5974
        %6090 = vmatpush1.bf16.msra.mxu0 %v5973
        %6091 = vmatprep.subr.bf16.mxu0 %v5978
        %6092 = vmatpush1.bf16.msra.mxu0 %v5977
        %6093 = vmatprep.subr.bf16.mxu0 %v5982
        %6094 = vmatpush1.bf16.msra.mxu0 %v5981
        %6095 = vmatprep.subr.bf16.mxu0 %v5986
        %6096 = vmatpush1.bf16.msra.mxu0 %v5985
        %6097 = vmatprep.subr.bf16.mxu0 %v5990
        %6098 = vmatpush1.bf16.msra.mxu0 %v5989
        %6099 = vmatprep.subr.bf16.mxu0 %v5994
        %6100 = vmatpush1.bf16.msra.mxu0 %v5993
        %6101 = vmatprep.subr.bf16.mxu0 %v5998
        %6102 = vmatpush1.bf16.msra.mxu0 %v5997
        %6103 = vmatprep.subr.bf16.mxu0 %v6002
        %6104 = vmatpush1.bf16.msra.mxu0 %v6001
        %6105 = vmatprep.subr.bf16.mxu0 %v6006
        %6106 = vmatpush1.bf16.msra.mxu0 %v6005
        %6107 = vmatprep.subr.bf16.mxu0 %v6010
        %6108 = vmatpush1.bf16.msra.mxu0 %v6009
        %6109 = vmatprep.mubr.bf16.mxu0 %v5754
        %6110 = vmatmul.mubr.bf16.gmra.mrb[0].mxu0 %v5746
        %v6111 = vpop.f32.mrb[0].mxu0
        %v6112 = vadd.f32 %v5692, %v6111
        %v6113 = vpop.f32.mrb[0].mxu0
        %v6114 = vadd.f32 %v5694, %v6113
        %v6115 = vpop.f32.mrb[0].mxu0
        %v6116 = vpop.f32.mrb[0].mxu0
        %6117 = vdwg.mxu0
        %6118 = vmatprep.subr.bf16.mxu0 %v5952
        %6119 = vmatpush1.bf16.msra.mxu0 %v5951
        %6120 = vmatprep.subr.bf16.mxu0 %v5956
        %6121 = vmatpush1.bf16.msra.mxu0 %v5955
        %6122 = vmatprep.subr.bf16.mxu0 %v5960
        %6123 = vmatpush1.bf16.msra.mxu0 %v5959
        %6124 = vmatprep.subr.bf16.mxu0 %v5964
        %6125 = vmatpush1.bf16.msra.mxu0 %v5963
        %6126 = vmatprep.subr.bf16.mxu0 %v5968
        %6127 = vmatpush1.bf16.msra.mxu0 %v5967
        %6128 = vmatprep.subr.bf16.mxu0 %v5972
        %6129 = vmatpush1.bf16.msra.mxu0 %v5971
        %6130 = vmatprep.subr.bf16.mxu0 %v5976
        %6131 = vmatpush1.bf16.msra.mxu0 %v5975
        %6132 = vmatprep.subr.bf16.mxu0 %v5980
        %6133 = vmatpush1.bf16.msra.mxu0 %v5979
        %6134 = vmatprep.subr.bf16.mxu0 %v5984
        %6135 = vmatpush1.bf16.msra.mxu0 %v5983
        %6136 = vmatprep.subr.bf16.mxu0 %v5988
        %6137 = vmatpush1.bf16.msra.mxu0 %v5987
        %6138 = vmatprep.subr.bf16.mxu0 %v5992
        %6139 = vmatpush1.bf16.msra.mxu0 %v5991
        %6140 = vmatprep.subr.bf16.mxu0 %v5996
        %6141 = vmatpush1.bf16.msra.mxu0 %v5995
        %6142 = vmatprep.subr.bf16.mxu0 %v6000
        %6143 = vmatpush1.bf16.msra.mxu0 %v5999
        %6144 = vmatprep.subr.bf16.mxu0 %v6004
        %6145 = vmatpush1.bf16.msra.mxu0 %v6003
        %6146 = vmatprep.subr.bf16.mxu0 %v6008
        %6147 = vmatpush1.bf16.msra.mxu0 %v6007
        %6148 = vmatprep.subr.bf16.mxu0 %v6012
        %6149 = vmatpush1.bf16.msra.mxu0 %v6011
        %6150 = vmatprep.mubr.bf16.mxu0 %v5754
        %6151 = vmatmul.mubr.bf16.gmra.mrb[0].mxu0 %v5746
        %v6152 = vpop.f32.mrb[0].mxu0
        %v6153 = vadd.f32 %v5733, %v6152
        %v6154 = vpop.f32.mrb[0].mxu0
        %v6155 = vadd.f32 %v5735, %v6154
        %v6156 = vpop.f32.mrb[0].mxu0
        %v6157 = vpop.f32.mrb[0].mxu0
        %6158 = vdwg.mxu0
        %v6159 = vld [vmem:[#allocation2 + $0x20] sm:$0xe]
        %v6160 = vld [vmem:[#allocation2 + $0x28] sm:$0xe]
        %v6161 = vpack.c.bf16 %v6159, %v6159
        %v6162 = vpack.c.bf16 %v6160, %v6160
        %s6163 = scalar_lea.vmem [#allocation21], 1024
        %v6164 = vld [vmem:[%s6163] sm:$0xff]
        %v6165 = vld [vmem:[%s6163 + $0x8] sm:$0xff]
        %v6166 = vld [vmem:[%s6163 + $0x10] sm:$0xff]
        %v6167 = vld [vmem:[%s6163 + $0x18] sm:$0xff]
        %v6168 = vld [vmem:[%s6163 + $0x20] sm:$0xff]
        %v6169 = vld [vmem:[%s6163 + $0x28] sm:$0xff]
        %v6170 = vld [vmem:[%s6163 + $0x30] sm:$0xff]
        %v6171 = vld [vmem:[%s6163 + $0x38] sm:$0xff]
        %v6172 = vld [vmem:[%s6163 + $0x40] sm:$0xff]
        %v6173 = vld [vmem:[%s6163 + $0x48] sm:$0xff]
        %v6174 = vld [vmem:[%s6163 + $0x50] sm:$0xff]
        %v6175 = vld [vmem:[%s6163 + $0x58] sm:$0xff]
        %v6176 = vld [vmem:[%s6163 + $0x60] sm:$0xff]
        %v6177 = vld [vmem:[%s6163 + $0x68] sm:$0xff]
        %v6178 = vld [vmem:[%s6163 + $0x70] sm:$0xff]
        %v6179 = vld [vmem:[%s6163 + $0x78] sm:$0xff]
        %v6180 = vld [vmem:[%s6163 + $0x80] sm:$0xff]
        %v6181 = vld [vmem:[%s6163 + $0x88] sm:$0xff]
        %v6182 = vld [vmem:[%s6163 + $0x90] sm:$0xff]
        %v6183 = vld [vmem:[%s6163 + $0x98] sm:$0xff]
        %v6184 = vld [vmem:[%s6163 + $0xa0] sm:$0xff]
        %v6185 = vld [vmem:[%s6163 + $0xa8] sm:$0xff]
        %v6186 = vld [vmem:[%s6163 + $0xb0] sm:$0xff]
        %v6187 = vld [vmem:[%s6163 + $0xb8] sm:$0xff]
        %v6188 = vld [vmem:[%s6163 + $0xc0] sm:$0xff]
        %v6189 = vld [vmem:[%s6163 + $0xc8] sm:$0xff]
        %v6190 = vld [vmem:[%s6163 + $0xd0] sm:$0xff]
        %v6191 = vld [vmem:[%s6163 + $0xd8] sm:$0xff]
        %v6192 = vld [vmem:[%s6163 + $0xe0] sm:$0xff]
        %v6193 = vld [vmem:[%s6163 + $0xe8] sm:$0xff]
        %v6194 = vld [vmem:[%s6163 + $0xf0] sm:$0xff]
        %v6195 = vld [vmem:[%s6163 + $0xf8] sm:$0xff]
        %v6196 = vld [vmem:[%s6163 + $0x100] sm:$0xff]
        %v6197 = vld [vmem:[%s6163 + $0x108] sm:$0xff]
        %v6198 = vld [vmem:[%s6163 + $0x110] sm:$0xff]
        %v6199 = vld [vmem:[%s6163 + $0x118] sm:$0xff]
        %v6200 = vld [vmem:[%s6163 + $0x120] sm:$0xff]
        %v6201 = vld [vmem:[%s6163 + $0x128] sm:$0xff]
        %v6202 = vld [vmem:[%s6163 + $0x130] sm:$0xff]
        %v6203 = vld [vmem:[%s6163 + $0x138] sm:$0xff]
        %v6204 = vld [vmem:[%s6163 + $0x140] sm:$0xff]
        %v6205 = vld [vmem:[%s6163 + $0x148] sm:$0xff]
        %v6206 = vld [vmem:[%s6163 + $0x150] sm:$0xff]
        %v6207 = vld [vmem:[%s6163 + $0x158] sm:$0xff]
        %v6208 = vld [vmem:[%s6163 + $0x160] sm:$0xff]
        %v6209 = vld [vmem:[%s6163 + $0x168] sm:$0xff]
        %v6210 = vld [vmem:[%s6163 + $0x170] sm:$0xff]
        %v6211 = vld [vmem:[%s6163 + $0x178] sm:$0xff]
        %v6212 = vld [vmem:[%s6163 + $0x180] sm:$0xff]
        %v6213 = vld [vmem:[%s6163 + $0x188] sm:$0xff]
        %v6214 = vld [vmem:[%s6163 + $0x190] sm:$0xff]
        %v6215 = vld [vmem:[%s6163 + $0x198] sm:$0xff]
        %v6216 = vld [vmem:[%s6163 + $0x1a0] sm:$0xff]
        %v6217 = vld [vmem:[%s6163 + $0x1a8] sm:$0xff]
        %v6218 = vld [vmem:[%s6163 + $0x1b0] sm:$0xff]
        %v6219 = vld [vmem:[%s6163 + $0x1b8] sm:$0xff]
        %v6220 = vld [vmem:[%s6163 + $0x1c0] sm:$0xff]
        %v6221 = vld [vmem:[%s6163 + $0x1c8] sm:$0xff]
        %v6222 = vld [vmem:[%s6163 + $0x1d0] sm:$0xff]
        %v6223 = vld [vmem:[%s6163 + $0x1d8] sm:$0xff]
        %v6224 = vld [vmem:[%s6163 + $0x1e0] sm:$0xff]
        %v6225 = vld [vmem:[%s6163 + $0x1e8] sm:$0xff]
        %v6226 = vld [vmem:[%s6163 + $0x1f0] sm:$0xff]
        %v6227 = vld [vmem:[%s6163 + $0x1f8] sm:$0xff]
        %v6229 = vshrl.u32 %v6161, 16
        %v6231 = vshll.u32 %v6161, 16
        %v6233 = vrot.slane %v6231, 1
        %v6234 = vor.u32 %v6229, %v6233
        %v6236 = vshrl.u32 %v6162, 16
        %v6238 = vshll.u32 %v6162, 16
        %v6240 = vrot.slane %v6238, 1
        %v6241 = vor.u32 %v6236, %v6240
        %v6308 = vunpack.c.l.b16 %v6164
        %v6309 = vunpack.c.h.b16 %v6164
        %v6310 = vunpack.c.l.b16 %v6165
        %v6311 = vunpack.c.h.b16 %v6165
        %v6312 = vunpack.c.l.b16 %v6166
        %v6313 = vunpack.c.h.b16 %v6166
        %v6314 = vunpack.c.l.b16 %v6167
        %v6315 = vunpack.c.h.b16 %v6167
        %v6316 = vunpack.c.l.b16 %v6168
        %v6317 = vunpack.c.h.b16 %v6168
        %v6318 = vunpack.c.l.b16 %v6169
        %v6319 = vunpack.c.h.b16 %v6169
        %v6320 = vunpack.c.l.b16 %v6170
        %v6321 = vunpack.c.h.b16 %v6170
        %v6322 = vunpack.c.l.b16 %v6171
        %v6323 = vunpack.c.h.b16 %v6171
        %v6324 = vunpack.c.l.b16 %v6172
        %v6325 = vunpack.c.h.b16 %v6172
        %v6326 = vunpack.c.l.b16 %v6173
        %v6327 = vunpack.c.h.b16 %v6173
        %v6328 = vunpack.c.l.b16 %v6174
        %v6329 = vunpack.c.h.b16 %v6174
        %v6330 = vunpack.c.l.b16 %v6175
        %v6331 = vunpack.c.h.b16 %v6175
        %v6332 = vunpack.c.l.b16 %v6176
        %v6333 = vunpack.c.h.b16 %v6176
        %v6334 = vunpack.c.l.b16 %v6177
        %v6335 = vunpack.c.h.b16 %v6177
        %v6336 = vunpack.c.l.b16 %v6178
        %v6337 = vunpack.c.h.b16 %v6178
        %v6338 = vunpack.c.l.b16 %v6179
        %v6339 = vunpack.c.h.b16 %v6179
        %v6340 = vunpack.c.l.b16 %v6180
        %v6341 = vunpack.c.h.b16 %v6180
        %v6342 = vunpack.c.l.b16 %v6181
        %v6343 = vunpack.c.h.b16 %v6181
        %v6344 = vunpack.c.l.b16 %v6182
        %v6345 = vunpack.c.h.b16 %v6182
        %v6346 = vunpack.c.l.b16 %v6183
        %v6347 = vunpack.c.h.b16 %v6183
        %v6348 = vunpack.c.l.b16 %v6184
        %v6349 = vunpack.c.h.b16 %v6184
        %v6350 = vunpack.c.l.b16 %v6185
        %v6351 = vunpack.c.h.b16 %v6185
        %v6352 = vunpack.c.l.b16 %v6186
        %v6353 = vunpack.c.h.b16 %v6186
        %v6354 = vunpack.c.l.b16 %v6187
        %v6355 = vunpack.c.h.b16 %v6187
        %v6356 = vunpack.c.l.b16 %v6188
        %v6357 = vunpack.c.h.b16 %v6188
        %v6358 = vunpack.c.l.b16 %v6189
        %v6359 = vunpack.c.h.b16 %v6189
        %v6360 = vunpack.c.l.b16 %v6190
        %v6361 = vunpack.c.h.b16 %v6190
        %v6362 = vunpack.c.l.b16 %v6191
        %v6363 = vunpack.c.h.b16 %v6191
        %v6364 = vunpack.c.l.b16 %v6192
        %v6365 = vunpack.c.h.b16 %v6192
        %v6366 = vunpack.c.l.b16 %v6193
        %v6367 = vunpack.c.h.b16 %v6193
        %v6368 = vunpack.c.l.b16 %v6194
        %v6369 = vunpack.c.h.b16 %v6194
        %v6370 = vunpack.c.l.b16 %v6195
        %v6371 = vunpack.c.h.b16 %v6195
        %v6372 = vunpack.c.l.b16 %v6196
        %v6373 = vunpack.c.h.b16 %v6196
        %v6374 = vunpack.c.l.b16 %v6197
        %v6375 = vunpack.c.h.b16 %v6197
        %v6376 = vunpack.c.l.b16 %v6198
        %v6377 = vunpack.c.h.b16 %v6198
        %v6378 = vunpack.c.l.b16 %v6199
        %v6379 = vunpack.c.h.b16 %v6199
        %v6380 = vunpack.c.l.b16 %v6200
        %v6381 = vunpack.c.h.b16 %v6200
        %v6382 = vunpack.c.l.b16 %v6201
        %v6383 = vunpack.c.h.b16 %v6201
        %v6384 = vunpack.c.l.b16 %v6202
        %v6385 = vunpack.c.h.b16 %v6202
        %v6386 = vunpack.c.l.b16 %v6203
        %v6387 = vunpack.c.h.b16 %v6203
        %v6388 = vunpack.c.l.b16 %v6204
        %v6389 = vunpack.c.h.b16 %v6204
        %v6390 = vunpack.c.l.b16 %v6205
        %v6391 = vunpack.c.h.b16 %v6205
        %v6392 = vunpack.c.l.b16 %v6206
        %v6393 = vunpack.c.h.b16 %v6206
        %v6394 = vunpack.c.l.b16 %v6207
        %v6395 = vunpack.c.h.b16 %v6207
        %v6396 = vunpack.c.l.b16 %v6208
        %v6397 = vunpack.c.h.b16 %v6208
        %v6398 = vunpack.c.l.b16 %v6209
        %v6399 = vunpack.c.h.b16 %v6209
        %v6400 = vunpack.c.l.b16 %v6210
        %v6401 = vunpack.c.h.b16 %v6210
        %v6402 = vunpack.c.l.b16 %v6211
        %v6403 = vunpack.c.h.b16 %v6211
        %v6404 = vunpack.c.l.b16 %v6212
        %v6405 = vunpack.c.h.b16 %v6212
        %v6406 = vunpack.c.l.b16 %v6213
        %v6407 = vunpack.c.h.b16 %v6213
        %v6408 = vunpack.c.l.b16 %v6214
        %v6409 = vunpack.c.h.b16 %v6214
        %v6410 = vunpack.c.l.b16 %v6215
        %v6411 = vunpack.c.h.b16 %v6215
        %v6412 = vunpack.c.l.b16 %v6216
        %v6413 = vunpack.c.h.b16 %v6216
        %v6414 = vunpack.c.l.b16 %v6217
        %v6415 = vunpack.c.h.b16 %v6217
        %v6416 = vunpack.c.l.b16 %v6218
        %v6417 = vunpack.c.h.b16 %v6218
        %v6418 = vunpack.c.l.b16 %v6219
        %v6419 = vunpack.c.h.b16 %v6219
        %v6420 = vunpack.c.l.b16 %v6220
        %v6421 = vunpack.c.h.b16 %v6220
        %v6422 = vunpack.c.l.b16 %v6221
        %v6423 = vunpack.c.h.b16 %v6221
        %v6424 = vunpack.c.l.b16 %v6222
        %v6425 = vunpack.c.h.b16 %v6222
        %v6426 = vunpack.c.l.b16 %v6223
        %v6427 = vunpack.c.h.b16 %v6223
        %v6428 = vunpack.c.l.b16 %v6224
        %v6429 = vunpack.c.h.b16 %v6224
        %v6430 = vunpack.c.l.b16 %v6225
        %v6431 = vunpack.c.h.b16 %v6225
        %v6432 = vunpack.c.l.b16 %v6226
        %v6433 = vunpack.c.h.b16 %v6226
        %v6434 = vunpack.c.l.b16 %v6227
        %v6435 = vunpack.c.h.b16 %v6227
        %v6436 = vpack.c.b16 %v6312, %v6308
        %v6437 = vpack.c.b16 %v6313, %v6309
        %v6438 = vpack.c.b16 %v6314, %v6310
        %v6439 = vpack.c.b16 %v6315, %v6311
        %v6440 = vpack.c.b16 %v6320, %v6316
        %v6441 = vpack.c.b16 %v6321, %v6317
        %v6442 = vpack.c.b16 %v6322, %v6318
        %v6443 = vpack.c.b16 %v6323, %v6319
        %v6444 = vpack.c.b16 %v6328, %v6324
        %v6445 = vpack.c.b16 %v6329, %v6325
        %v6446 = vpack.c.b16 %v6330, %v6326
        %v6447 = vpack.c.b16 %v6331, %v6327
        %v6448 = vpack.c.b16 %v6336, %v6332
        %v6449 = vpack.c.b16 %v6337, %v6333
        %v6450 = vpack.c.b16 %v6338, %v6334
        %v6451 = vpack.c.b16 %v6339, %v6335
        %v6452 = vpack.c.b16 %v6344, %v6340
        %v6453 = vpack.c.b16 %v6345, %v6341
        %v6454 = vpack.c.b16 %v6346, %v6342
        %v6455 = vpack.c.b16 %v6347, %v6343
        %v6456 = vpack.c.b16 %v6352, %v6348
        %v6457 = vpack.c.b16 %v6353, %v6349
        %v6458 = vpack.c.b16 %v6354, %v6350
        %v6459 = vpack.c.b16 %v6355, %v6351
        %v6460 = vpack.c.b16 %v6360, %v6356
        %v6461 = vpack.c.b16 %v6361, %v6357
        %v6462 = vpack.c.b16 %v6362, %v6358
        %v6463 = vpack.c.b16 %v6363, %v6359
        %v6464 = vpack.c.b16 %v6368, %v6364
        %v6465 = vpack.c.b16 %v6369, %v6365
        %v6466 = vpack.c.b16 %v6370, %v6366
        %v6467 = vpack.c.b16 %v6371, %v6367
        %v6468 = vpack.c.b16 %v6376, %v6372
        %v6469 = vpack.c.b16 %v6377, %v6373
        %v6470 = vpack.c.b16 %v6378, %v6374
        %v6471 = vpack.c.b16 %v6379, %v6375
        %v6472 = vpack.c.b16 %v6384, %v6380
        %v6473 = vpack.c.b16 %v6385, %v6381
        %v6474 = vpack.c.b16 %v6386, %v6382
        %v6475 = vpack.c.b16 %v6387, %v6383
        %v6476 = vpack.c.b16 %v6392, %v6388
        %v6477 = vpack.c.b16 %v6393, %v6389
        %v6478 = vpack.c.b16 %v6394, %v6390
        %v6479 = vpack.c.b16 %v6395, %v6391
        %v6480 = vpack.c.b16 %v6400, %v6396
        %v6481 = vpack.c.b16 %v6401, %v6397
        %v6482 = vpack.c.b16 %v6402, %v6398
        %v6483 = vpack.c.b16 %v6403, %v6399
        %v6484 = vpack.c.b16 %v6408, %v6404
        %v6485 = vpack.c.b16 %v6409, %v6405
        %v6486 = vpack.c.b16 %v6410, %v6406
        %v6487 = vpack.c.b16 %v6411, %v6407
        %v6488 = vpack.c.b16 %v6416, %v6412
        %v6489 = vpack.c.b16 %v6417, %v6413
        %v6490 = vpack.c.b16 %v6418, %v6414
        %v6491 = vpack.c.b16 %v6419, %v6415
        %v6492 = vpack.c.b16 %v6424, %v6420
        %v6493 = vpack.c.b16 %v6425, %v6421
        %v6494 = vpack.c.b16 %v6426, %v6422
        %v6495 = vpack.c.b16 %v6427, %v6423
        %v6496 = vpack.c.b16 %v6432, %v6428
        %v6497 = vpack.c.b16 %v6433, %v6429
        %v6498 = vpack.c.b16 %v6434, %v6430
        %v6499 = vpack.c.b16 %v6435, %v6431
        %6564 = vmatprep.subr.bf16.mxu0 %v6437
        %6565 = vmatpush1.bf16.msra.mxu0 %v6436
        %6566 = vmatprep.subr.bf16.mxu0 %v6441
        %6567 = vmatpush1.bf16.msra.mxu0 %v6440
        %6568 = vmatprep.subr.bf16.mxu0 %v6445
        %6569 = vmatpush1.bf16.msra.mxu0 %v6444
        %6570 = vmatprep.subr.bf16.mxu0 %v6449
        %6571 = vmatpush1.bf16.msra.mxu0 %v6448
        %6572 = vmatprep.subr.bf16.mxu0 %v6453
        %6573 = vmatpush1.bf16.msra.mxu0 %v6452
        %6574 = vmatprep.subr.bf16.mxu0 %v6457
        %6575 = vmatpush1.bf16.msra.mxu0 %v6456
        %6576 = vmatprep.subr.bf16.mxu0 %v6461
        %6577 = vmatpush1.bf16.msra.mxu0 %v6460
        %6578 = vmatprep.subr.bf16.mxu0 %v6465
        %6579 = vmatpush1.bf16.msra.mxu0 %v6464
        %6580 = vmatprep.subr.bf16.mxu0 %v6469
        %6581 = vmatpush1.bf16.msra.mxu0 %v6468
        %6582 = vmatprep.subr.bf16.mxu0 %v6473
        %6583 = vmatpush1.bf16.msra.mxu0 %v6472
        %6584 = vmatprep.subr.bf16.mxu0 %v6477
        %6585 = vmatpush1.bf16.msra.mxu0 %v6476
        %6586 = vmatprep.subr.bf16.mxu0 %v6481
        %6587 = vmatpush1.bf16.msra.mxu0 %v6480
        %6588 = vmatprep.subr.bf16.mxu0 %v6485
        %6589 = vmatpush1.bf16.msra.mxu0 %v6484
        %6590 = vmatprep.subr.bf16.mxu0 %v6489
        %6591 = vmatpush1.bf16.msra.mxu0 %v6488
        %6592 = vmatprep.subr.bf16.mxu0 %v6493
        %6593 = vmatpush1.bf16.msra.mxu0 %v6492
        %6594 = vmatprep.subr.bf16.mxu0 %v6497
        %6595 = vmatpush1.bf16.msra.mxu0 %v6496
        %6596 = vmatprep.mubr.bf16.mxu0 %v6241
        %6597 = vmatmul.mubr.bf16.gmra.mrb[0].mxu0 %v6234
        %v6598 = vpop.f32.mrb[0].mxu0
        %v6599 = vadd.f32 0.0, %v6598
        %v6600 = vpop.f32.mrb[0].mxu0
        %v6601 = vadd.f32 0.0, %v6600
        %v6602 = vpop.f32.mrb[0].mxu0
        %v6603 = vpop.f32.mrb[0].mxu0
        %6604 = vdwg.mxu0
        %6605 = vmatprep.subr.bf16.mxu0 %v6439
        %6606 = vmatpush1.bf16.msra.mxu0 %v6438
        %6607 = vmatprep.subr.bf16.mxu0 %v6443
        %6608 = vmatpush1.bf16.msra.mxu0 %v6442
        %6609 = vmatprep.subr.bf16.mxu0 %v6447
        %6610 = vmatpush1.bf16.msra.mxu0 %v6446
        %6611 = vmatprep.subr.bf16.mxu0 %v6451
        %6612 = vmatpush1.bf16.msra.mxu0 %v6450
        %6613 = vmatprep.subr.bf16.mxu0 %v6455
        %6614 = vmatpush1.bf16.msra.mxu0 %v6454
        %6615 = vmatprep.subr.bf16.mxu0 %v6459
        %6616 = vmatpush1.bf16.msra.mxu0 %v6458
        %6617 = vmatprep.subr.bf16.mxu0 %v6463
        %6618 = vmatpush1.bf16.msra.mxu0 %v6462
        %6619 = vmatprep.subr.bf16.mxu0 %v6467
        %6620 = vmatpush1.bf16.msra.mxu0 %v6466
        %6621 = vmatprep.subr.bf16.mxu0 %v6471
        %6622 = vmatpush1.bf16.msra.mxu0 %v6470
        %6623 = vmatprep.subr.bf16.mxu0 %v6475
        %6624 = vmatpush1.bf16.msra.mxu0 %v6474
        %6625 = vmatprep.subr.bf16.mxu0 %v6479
        %6626 = vmatpush1.bf16.msra.mxu0 %v6478
        %6627 = vmatprep.subr.bf16.mxu0 %v6483
        %6628 = vmatpush1.bf16.msra.mxu0 %v6482
        %6629 = vmatprep.subr.bf16.mxu0 %v6487
        %6630 = vmatpush1.bf16.msra.mxu0 %v6486
        %6631 = vmatprep.subr.bf16.mxu0 %v6491
        %6632 = vmatpush1.bf16.msra.mxu0 %v6490
        %6633 = vmatprep.subr.bf16.mxu0 %v6495
        %6634 = vmatpush1.bf16.msra.mxu0 %v6494
        %6635 = vmatprep.subr.bf16.mxu0 %v6499
        %6636 = vmatpush1.bf16.msra.mxu0 %v6498
        %6637 = vmatprep.mubr.bf16.mxu0 %v6241
        %6638 = vmatmul.mubr.bf16.gmra.mrb[0].mxu0 %v6234
        %v6639 = vpop.f32.mrb[0].mxu0
        %v6640 = vadd.f32 0.0, %v6639
        %v6641 = vpop.f32.mrb[0].mxu0
        %v6642 = vadd.f32 0.0, %v6641
        %v6643 = vpop.f32.mrb[0].mxu0
        %v6644 = vpop.f32.mrb[0].mxu0
        %6645 = vdwg.mxu0
        %v6646 = vadd.f32 %v6112, %v6599
        %v6647 = vadd.f32 %v6114, %v6601
        %v6648 = vadd.f32 %v6153, %v6640
        %v6649 = vadd.f32 %v6155, %v6642
        %vm6650 = vcmask 23552
        %v6651 = vsel %vm6650, %v2022, 0
        %vm6653 = vcmask 1042432
        %v6655 = vsel %vm6653, %v6646, 0
        %v6658 = vsel %vm6653, %v6647, 0
        %v6661 = vsel %vm6653, %v6648, 0
        %v6664 = vsel %vm6653, %v6649, 0
        %6666 = vmatprep.subr.mxu0 %v6658
        %6667 = vmatpush1.msra.mxu0 %v6655
        %6668 = vmatprep.subr.mxu0 0.0
        %6669 = vmatpush1.msra.mxu0 0.0
        %6670 = vmatprep.subr.mxu0 0.0
        %6671 = vmatpush1.msra.mxu0 0.0
        %6672 = vmatprep.subr.mxu0 0.0
        %6673 = vmatpush1.msra.mxu0 0.0
        %6674 = vmatprep.subr.mxu0 0.0
        %6675 = vmatpush1.msra.mxu0 0.0
        %6676 = vmatprep.subr.mxu0 0.0
        %6677 = vmatpush1.msra.mxu0 0.0
        %6678 = vmatprep.subr.mxu0 0.0
        %6679 = vmatpush1.msra.mxu0 0.0
        %6680 = vmatprep.subr.mxu0 0.0
        %6681 = vmatpush1.msra.mxu0 0.0
        %6682 = vmatprep.subr.mxu0 0.0
        %6683 = vmatpush1.msra.mxu0 0.0
        %6684 = vmatprep.subr.mxu0 0.0
        %6685 = vmatpush1.msra.mxu0 0.0
        %6686 = vmatprep.subr.mxu0 0.0
        %6687 = vmatpush1.msra.mxu0 0.0
        %6688 = vmatprep.subr.mxu0 0.0
        %6689 = vmatpush1.msra.mxu0 0.0
        %6690 = vmatprep.subr.mxu0 0.0
        %6691 = vmatpush1.msra.mxu0 0.0
        %6692 = vmatprep.subr.mxu0 0.0
        %6693 = vmatpush1.msra.mxu0 0.0
        %6694 = vmatprep.subr.mxu0 0.0
        %6695 = vmatpush1.msra.mxu0 0.0
        %6696 = vmatprep.subr.mxu0 0.0
        %6697 = vmatpush1.msra.mxu0 0.0
        %6698 = vmatprep.subr.mxu0 0.0
        %6699 = vmatpush1.msra.mxu0 0.0
        %6700 = vmatprep.subr.mxu0 0.0
        %6701 = vmatpush1.msra.mxu0 0.0
        %6702 = vmatprep.subr.mxu0 0.0
        %6703 = vmatpush1.msra.mxu0 0.0
        %6704 = vmatprep.subr.mxu0 0.0
        %6705 = vmatpush1.msra.mxu0 0.0
        %6706 = vmatprep.subr.mxu0 0.0
        %6707 = vmatpush1.msra.mxu0 0.0
        %6708 = vmatprep.subr.mxu0 0.0
        %6709 = vmatpush1.msra.mxu0 0.0
        %6710 = vmatprep.subr.mxu0 0.0
        %6711 = vmatpush1.msra.mxu0 0.0
        %6712 = vmatprep.subr.mxu0 0.0
        %6713 = vmatpush1.msra.mxu0 0.0
        %6714 = vmatprep.subr.mxu0 0.0
        %6715 = vmatpush1.msra.mxu0 0.0
        %6716 = vmatprep.subr.mxu0 0.0
        %6717 = vmatpush1.msra.mxu0 0.0
        %6718 = vmatprep.subr.mxu0 0.0
        %6719 = vmatpush1.msra.mxu0 0.0
        %6720 = vmatprep.subr.mxu0 0.0
        %6721 = vmatpush1.msra.mxu0 0.0
        %6722 = vmatprep.subr.mxu0 0.0
        %6723 = vmatpush1.msra.mxu0 0.0
        %6724 = vmatprep.subr.mxu0 0.0
        %6725 = vmatpush1.msra.mxu0 0.0
        %6726 = vmatprep.subr.mxu0 0.0
        %6727 = vmatpush1.msra.mxu0 0.0
        %6728 = vmatprep.subr.mxu0 0.0
        %6729 = vmatpush1.msra.mxu0 0.0
        %6730 = vmatprep.mubr.f32.mxu0 0.0
        %6731 = vmatmul.mubr.f32.gmra.mrb[0].mxu0 %v6651
        %v6732 = vpop.f32.mrb[0].mxu0
        %v6733 = vadd.f32 0.0, %v6732
        %v6734 = vpop.f32.mrb[0].mxu0
        %v6735 = vadd.f32 0.0, %v6734
        %6736 = vdwg.mxu0
        %6737 = vmatprep.subr.mxu0 %v6664
        %6738 = vmatpush1.msra.mxu0 %v6661
        %6739 = vmatprep.subr.mxu0 0.0
        %6740 = vmatpush1.msra.mxu0 0.0
        %6741 = vmatprep.subr.mxu0 0.0
        %6742 = vmatpush1.msra.mxu0 0.0
        %6743 = vmatprep.subr.mxu0 0.0
        %6744 = vmatpush1.msra.mxu0 0.0
        %6745 = vmatprep.subr.mxu0 0.0
        %6746 = vmatpush1.msra.mxu0 0.0
        %6747 = vmatprep.subr.mxu0 0.0
        %6748 = vmatpush1.msra.mxu0 0.0
        %6749 = vmatprep.subr.mxu0 0.0
        %6750 = vmatpush1.msra.mxu0 0.0
        %6751 = vmatprep.subr.mxu0 0.0
        %6752 = vmatpush1.msra.mxu0 0.0
        %6753 = vmatprep.subr.mxu0 0.0
        %6754 = vmatpush1.msra.mxu0 0.0
        %6755 = vmatprep.subr.mxu0 0.0
        %6756 = vmatpush1.msra.mxu0 0.0
        %6757 = vmatprep.subr.mxu0 0.0
        %6758 = vmatpush1.msra.mxu0 0.0
        %6759 = vmatprep.subr.mxu0 0.0
        %6760 = vmatpush1.msra.mxu0 0.0
        %6761 = vmatprep.subr.mxu0 0.0
        %6762 = vmatpush1.msra.mxu0 0.0
        %6763 = vmatprep.subr.mxu0 0.0
        %6764 = vmatpush1.msra.mxu0 0.0
        %6765 = vmatprep.subr.mxu0 0.0
        %6766 = vmatpush1.msra.mxu0 0.0
        %6767 = vmatprep.subr.mxu0 0.0
        %6768 = vmatpush1.msra.mxu0 0.0
        %6769 = vmatprep.subr.mxu0 0.0
        %6770 = vmatpush1.msra.mxu0 0.0
        %6771 = vmatprep.subr.mxu0 0.0
        %6772 = vmatpush1.msra.mxu0 0.0
        %6773 = vmatprep.subr.mxu0 0.0
        %6774 = vmatpush1.msra.mxu0 0.0
        %6775 = vmatprep.subr.mxu0 0.0
        %6776 = vmatpush1.msra.mxu0 0.0
        %6777 = vmatprep.subr.mxu0 0.0
        %6778 = vmatpush1.msra.mxu0 0.0
        %6779 = vmatprep.subr.mxu0 0.0
        %6780 = vmatpush1.msra.mxu0 0.0
        %6781 = vmatprep.subr.mxu0 0.0
        %6782 = vmatpush1.msra.mxu0 0.0
        %6783 = vmatprep.subr.mxu0 0.0
        %6784 = vmatpush1.msra.mxu0 0.0
        %6785 = vmatprep.subr.mxu0 0.0
        %6786 = vmatpush1.msra.mxu0 0.0
        %6787 = vmatprep.subr.mxu0 0.0
        %6788 = vmatpush1.msra.mxu0 0.0
        %6789 = vmatprep.subr.mxu0 0.0
        %6790 = vmatpush1.msra.mxu0 0.0
        %6791 = vmatprep.subr.mxu0 0.0
        %6792 = vmatpush1.msra.mxu0 0.0
        %6793 = vmatprep.subr.mxu0 0.0
        %6794 = vmatpush1.msra.mxu0 0.0
        %6795 = vmatprep.subr.mxu0 0.0
        %6796 = vmatpush1.msra.mxu0 0.0
        %6797 = vmatprep.subr.mxu0 0.0
        %6798 = vmatpush1.msra.mxu0 0.0
        %6799 = vmatprep.subr.mxu0 0.0
        %6800 = vmatpush1.msra.mxu0 0.0
        %6801 = vmatprep.mubr.f32.mxu0 0.0
        %6802 = vmatmul.mubr.f32.gmra.mrb[0].mxu0 %v6651
        %v6803 = vpop.f32.mrb[0].mxu0
        %v6804 = vadd.f32 0.0, %v6803
        %v6805 = vpop.f32.mrb[0].mxu0
        %v6806 = vadd.f32 0.0, %v6805
        %6807 = vdwg.mxu0
        %v6808 = vmax.f32 %v6733, 0.0
        %v6809 = vmax.f32 %v6735, 0.0
        %v6810 = vmax.f32 %v6804, 0.0
        %v6811 = vmax.f32 %v6806, 0.0
        %vm6812 = vcmp.lt.s32.totalorder %v4213, 512
        %vm6813 = vmand %vm4214, %vm6812
        %6814 = vst.msk [vmem:[%s4217] ss:$8 sm:$0xf] %vm6813, 0.0
        %6815 = vst.msk [vmem:[%s4217] ss:$8 sm:$0x0] %vm6813, 0.0
        %s6816 = scalar_lea.vmem [#allocation2], 34
        %6817 = vst.msk [vmem:[%s6816] ss:$8 sm:$0xf] %vm6813, 0.0
        %6818 = vst.msk [vmem:[%s6816] ss:$8 sm:$0x0] %vm6813, 0.0
        %6819 = vst [vmem:[#allocation2 + $0x20] sm:$0x3] %v6808
        %6820 = vst [vmem:[#allocation2 + $0x28] sm:$0x3] %v6809
        %6821 = vst [vmem:[#allocation2 + $0x30] sm:$0x3] %v6810
        %6822 = vst [vmem:[#allocation2 + $0x38] sm:$0x3] %v6811
        %v6823 = vld [vmem:[#allocation2] sm:$0x80]
        %v6824 = vld [vmem:[#allocation2 + $0x8] sm:$0x80]
        %v6825 = vld [vmem:[#allocation2 + $0x10] sm:$0x80]
        %v6826 = vld [vmem:[#allocation2 + $0x18] sm:$0x80]
        %v6827 = vld [vmem:[#allocation2 + $0x20] sm:$0x1]
        %v6828 = vld [vmem:[#allocation2 + $0x28] sm:$0x1]
        %v6829 = vld [vmem:[#allocation2 + $0x30] sm:$0x1]
        %v6830 = vld [vmem:[#allocation2 + $0x38] sm:$0x1]
        %v6831 = vpack.c.bf16 %v6827, %v6823
        %v6832 = vpack.c.bf16 %v6828, %v6824
        %v6833 = vpack.c.bf16 %v6829, %v6825
        %v6834 = vpack.c.bf16 %v6830, %v6826
        %v6835 = vld [vmem:[#allocation23] sm:$0xff]
        %v6836 = vld [vmem:[#allocation23 + $0x8] sm:$0xff]
        %v6837 = vld [vmem:[#allocation23 + $0x10] sm:$0xff]
        %v6838 = vld [vmem:[#allocation23 + $0x18] sm:$0xff]
        %v6839 = vld [vmem:[#allocation23 + $0x20] sm:$0xff]
        %v6840 = vld [vmem:[#allocation23 + $0x28] sm:$0xff]
        %v6841 = vld [vmem:[#allocation23 + $0x30] sm:$0xff]
        %v6842 = vld [vmem:[#allocation23 + $0x38] sm:$0xff]
        %v6843 = vld [vmem:[#allocation23 + $0x40] sm:$0xff]
        %v6844 = vld [vmem:[#allocation23 + $0x48] sm:$0xff]
        %v6845 = vld [vmem:[#allocation23 + $0x50] sm:$0xff]
        %v6846 = vld [vmem:[#allocation23 + $0x58] sm:$0xff]
        %v6847 = vld [vmem:[#allocation23 + $0x60] sm:$0xff]
        %v6848 = vld [vmem:[#allocation23 + $0x68] sm:$0xff]
        %v6849 = vld [vmem:[#allocation23 + $0x70] sm:$0xff]
        %v6850 = vld [vmem:[#allocation23 + $0x78] sm:$0xff]
        %v6851 = vld [vmem:[#allocation23 + $0x80] sm:$0xff]
        %v6852 = vld [vmem:[#allocation23 + $0x88] sm:$0xff]
        %v6853 = vld [vmem:[#allocation23 + $0x90] sm:$0xff]
        %v6854 = vld [vmem:[#allocation23 + $0x98] sm:$0xff]
        %v6855 = vld [vmem:[#allocation23 + $0xa0] sm:$0xff]
        %v6856 = vld [vmem:[#allocation23 + $0xa8] sm:$0xff]
        %v6857 = vld [vmem:[#allocation23 + $0xb0] sm:$0xff]
        %v6858 = vld [vmem:[#allocation23 + $0xb8] sm:$0xff]
        %v6859 = vld [vmem:[#allocation23 + $0xc0] sm:$0xff]
        %v6860 = vld [vmem:[#allocation23 + $0xc8] sm:$0xff]
        %v6861 = vld [vmem:[#allocation23 + $0xd0] sm:$0xff]
        %v6862 = vld [vmem:[#allocation23 + $0xd8] sm:$0xff]
        %v6863 = vld [vmem:[#allocation23 + $0xe0] sm:$0xff]
        %v6864 = vld [vmem:[#allocation23 + $0xe8] sm:$0xff]
        %v6865 = vld [vmem:[#allocation23 + $0xf0] sm:$0xff]
        %v6866 = vld [vmem:[#allocation23 + $0xf8] sm:$0xff]
        %v6867 = vld [vmem:[#allocation23 + $0x100] sm:$0xff]
        %v6868 = vld [vmem:[#allocation23 + $0x108] sm:$0xff]
        %v6869 = vld [vmem:[#allocation23 + $0x110] sm:$0xff]
        %v6870 = vld [vmem:[#allocation23 + $0x118] sm:$0xff]
        %v6871 = vld [vmem:[#allocation23 + $0x120] sm:$0xff]
        %v6872 = vld [vmem:[#allocation23 + $0x128] sm:$0xff]
        %v6873 = vld [vmem:[#allocation23 + $0x130] sm:$0xff]
        %v6874 = vld [vmem:[#allocation23 + $0x138] sm:$0xff]
        %v6875 = vld [vmem:[#allocation23 + $0x140] sm:$0xff]
        %v6876 = vld [vmem:[#allocation23 + $0x148] sm:$0xff]
        %v6877 = vld [vmem:[#allocation23 + $0x150] sm:$0xff]
        %v6878 = vld [vmem:[#allocation23 + $0x158] sm:$0xff]
        %v6879 = vld [vmem:[#allocation23 + $0x160] sm:$0xff]
        %v6880 = vld [vmem:[#allocation23 + $0x168] sm:$0xff]
        %v6881 = vld [vmem:[#allocation23 + $0x170] sm:$0xff]
        %v6882 = vld [vmem:[#allocation23 + $0x178] sm:$0xff]
        %v6883 = vld [vmem:[#allocation23 + $0x180] sm:$0xff]
        %v6884 = vld [vmem:[#allocation23 + $0x188] sm:$0xff]
        %v6885 = vld [vmem:[#allocation23 + $0x190] sm:$0xff]
        %v6886 = vld [vmem:[#allocation23 + $0x198] sm:$0xff]
        %v6887 = vld [vmem:[#allocation23 + $0x1a0] sm:$0xff]
        %v6888 = vld [vmem:[#allocation23 + $0x1a8] sm:$0xff]
        %v6889 = vld [vmem:[#allocation23 + $0x1b0] sm:$0xff]
        %v6890 = vld [vmem:[#allocation23 + $0x1b8] sm:$0xff]
        %v6891 = vld [vmem:[#allocation23 + $0x1c0] sm:$0xff]
        %v6892 = vld [vmem:[#allocation23 + $0x1c8] sm:$0xff]
        %v6893 = vld [vmem:[#allocation23 + $0x1d0] sm:$0xff]
        %v6894 = vld [vmem:[#allocation23 + $0x1d8] sm:$0xff]
        %v6895 = vld [vmem:[#allocation23 + $0x1e0] sm:$0xff]
        %v6896 = vld [vmem:[#allocation23 + $0x1e8] sm:$0xff]
        %v6897 = vld [vmem:[#allocation23 + $0x1f0] sm:$0xff]
        %v6898 = vld [vmem:[#allocation23 + $0x1f8] sm:$0xff]
        %v6899 = vld [vmem:[#allocation23 + $0x200] sm:$0xff]
        %v6900 = vld [vmem:[#allocation23 + $0x208] sm:$0xff]
        %v6901 = vld [vmem:[#allocation23 + $0x210] sm:$0xff]
        %v6902 = vld [vmem:[#allocation23 + $0x218] sm:$0xff]
        %v6903 = vld [vmem:[#allocation23 + $0x220] sm:$0xff]
        %v6904 = vld [vmem:[#allocation23 + $0x228] sm:$0xff]
        %v6905 = vld [vmem:[#allocation23 + $0x230] sm:$0xff]
        %v6906 = vld [vmem:[#allocation23 + $0x238] sm:$0xff]
        %v6907 = vld [vmem:[#allocation23 + $0x240] sm:$0xff]
        %v6908 = vld [vmem:[#allocation23 + $0x248] sm:$0xff]
        %v6909 = vld [vmem:[#allocation23 + $0x250] sm:$0xff]
        %v6910 = vld [vmem:[#allocation23 + $0x258] sm:$0xff]
        %v6911 = vld [vmem:[#allocation23 + $0x260] sm:$0xff]
        %v6912 = vld [vmem:[#allocation23 + $0x268] sm:$0xff]
        %v6913 = vld [vmem:[#allocation23 + $0x270] sm:$0xff]
        %v6914 = vld [vmem:[#allocation23 + $0x278] sm:$0xff]
        %v6915 = vld [vmem:[#allocation23 + $0x280] sm:$0xff]
        %v6916 = vld [vmem:[#allocation23 + $0x288] sm:$0xff]
        %v6917 = vld [vmem:[#allocation23 + $0x290] sm:$0xff]
        %v6918 = vld [vmem:[#allocation23 + $0x298] sm:$0xff]
        %v6919 = vld [vmem:[#allocation23 + $0x2a0] sm:$0xff]
        %v6920 = vld [vmem:[#allocation23 + $0x2a8] sm:$0xff]
        %v6921 = vld [vmem:[#allocation23 + $0x2b0] sm:$0xff]
        %v6922 = vld [vmem:[#allocation23 + $0x2b8] sm:$0xff]
        %v6923 = vld [vmem:[#allocation23 + $0x2c0] sm:$0xff]
        %v6924 = vld [vmem:[#allocation23 + $0x2c8] sm:$0xff]
        %v6925 = vld [vmem:[#allocation23 + $0x2d0] sm:$0xff]
        %v6926 = vld [vmem:[#allocation23 + $0x2d8] sm:$0xff]
        %v6927 = vld [vmem:[#allocation23 + $0x2e0] sm:$0xff]
        %v6928 = vld [vmem:[#allocation23 + $0x2e8] sm:$0xff]
        %v6929 = vld [vmem:[#allocation23 + $0x2f0] sm:$0xff]
        %v6930 = vld [vmem:[#allocation23 + $0x2f8] sm:$0xff]
        %v6931 = vld [vmem:[#allocation23 + $0x300] sm:$0xff]
        %v6932 = vld [vmem:[#allocation23 + $0x308] sm:$0xff]
        %v6933 = vld [vmem:[#allocation23 + $0x310] sm:$0xff]
        %v6934 = vld [vmem:[#allocation23 + $0x318] sm:$0xff]
        %v6935 = vld [vmem:[#allocation23 + $0x320] sm:$0xff]
        %v6936 = vld [vmem:[#allocation23 + $0x328] sm:$0xff]
        %v6937 = vld [vmem:[#allocation23 + $0x330] sm:$0xff]
        %v6938 = vld [vmem:[#allocation23 + $0x338] sm:$0xff]
        %v6939 = vld [vmem:[#allocation23 + $0x340] sm:$0xff]
        %v6940 = vld [vmem:[#allocation23 + $0x348] sm:$0xff]
        %v6941 = vld [vmem:[#allocation23 + $0x350] sm:$0xff]
        %v6942 = vld [vmem:[#allocation23 + $0x358] sm:$0xff]
        %v6943 = vld [vmem:[#allocation23 + $0x360] sm:$0xff]
        %v6944 = vld [vmem:[#allocation23 + $0x368] sm:$0xff]
        %v6945 = vld [vmem:[#allocation23 + $0x370] sm:$0xff]
        %v6946 = vld [vmem:[#allocation23 + $0x378] sm:$0xff]
        %v6947 = vld [vmem:[#allocation23 + $0x380] sm:$0xff]
        %v6948 = vld [vmem:[#allocation23 + $0x388] sm:$0xff]
        %v6949 = vld [vmem:[#allocation23 + $0x390] sm:$0xff]
        %v6950 = vld [vmem:[#allocation23 + $0x398] sm:$0xff]
        %v6951 = vld [vmem:[#allocation23 + $0x3a0] sm:$0xff]
        %v6952 = vld [vmem:[#allocation23 + $0x3a8] sm:$0xff]
        %v6953 = vld [vmem:[#allocation23 + $0x3b0] sm:$0xff]
        %v6954 = vld [vmem:[#allocation23 + $0x3b8] sm:$0xff]
        %v6955 = vld [vmem:[#allocation23 + $0x3c0] sm:$0xff]
        %v6956 = vld [vmem:[#allocation23 + $0x3c8] sm:$0xff]
        %v6957 = vld [vmem:[#allocation23 + $0x3d0] sm:$0xff]
        %v6958 = vld [vmem:[#allocation23 + $0x3d8] sm:$0xff]
        %v6959 = vld [vmem:[#allocation23 + $0x3e0] sm:$0xff]
        %v6960 = vld [vmem:[#allocation23 + $0x3e8] sm:$0xff]
        %v6961 = vld [vmem:[#allocation23 + $0x3f0] sm:$0xff]
        %v6962 = vld [vmem:[#allocation23 + $0x3f8] sm:$0xff]
        %v6963 = vld [vmem:[#allocation2 + $0x20] sm:$0x3]
        %v6964 = vld [vmem:[#allocation2 + $0x28] sm:$0x3]
        %v6965 = vld [vmem:[#allocation2 + $0x30] sm:$0x3]
        %v6966 = vld [vmem:[#allocation2 + $0x38] sm:$0x3]
        %v6967 = vpack.c.bf16 %v6963, %v6963
        %v6968 = vpack.c.bf16 %v6964, %v6964
        %v6969 = vpack.c.bf16 %v6965, %v6965
        %v6970 = vpack.c.bf16 %v6966, %v6966
        %s6971 = scalar_lea.vmem [#allocation23], 1024
        %v6972 = vld [vmem:[%s6971] sm:$0xff]
        %v6973 = vld [vmem:[%s6971 + $0x8] sm:$0xff]
        %v6974 = vld [vmem:[%s6971 + $0x10] sm:$0xff]
        %v6975 = vld [vmem:[%s6971 + $0x18] sm:$0xff]
        %v6976 = vld [vmem:[%s6971 + $0x20] sm:$0xff]
        %v6977 = vld [vmem:[%s6971 + $0x28] sm:$0xff]
        %v6978 = vld [vmem:[%s6971 + $0x30] sm:$0xff]
        %v6979 = vld [vmem:[%s6971 + $0x38] sm:$0xff]
        %v6980 = vld [vmem:[%s6971 + $0x40] sm:$0xff]
        %v6981 = vld [vmem:[%s6971 + $0x48] sm:$0xff]
        %v6982 = vld [vmem:[%s6971 + $0x50] sm:$0xff]
        %v6983 = vld [vmem:[%s6971 + $0x58] sm:$0xff]
        %v6984 = vld [vmem:[%s6971 + $0x60] sm:$0xff]
        %v6985 = vld [vmem:[%s6971 + $0x68] sm:$0xff]
        %v6986 = vld [vmem:[%s6971 + $0x70] sm:$0xff]
        %v6987 = vld [vmem:[%s6971 + $0x78] sm:$0xff]
        %v6988 = vld [vmem:[%s6971 + $0x80] sm:$0xff]
        %v6989 = vld [vmem:[%s6971 + $0x88] sm:$0xff]
        %v6990 = vld [vmem:[%s6971 + $0x90] sm:$0xff]
        %v6991 = vld [vmem:[%s6971 + $0x98] sm:$0xff]
        %v6992 = vld [vmem:[%s6971 + $0xa0] sm:$0xff]
        %v6993 = vld [vmem:[%s6971 + $0xa8] sm:$0xff]
        %v6994 = vld [vmem:[%s6971 + $0xb0] sm:$0xff]
        %v6995 = vld [vmem:[%s6971 + $0xb8] sm:$0xff]
        %v6996 = vld [vmem:[%s6971 + $0xc0] sm:$0xff]
        %v6997 = vld [vmem:[%s6971 + $0xc8] sm:$0xff]
        %v6998 = vld [vmem:[%s6971 + $0xd0] sm:$0xff]
        %v6999 = vld [vmem:[%s6971 + $0xd8] sm:$0xff]
        %v7000 = vld [vmem:[%s6971 + $0xe0] sm:$0xff]
        %v7001 = vld [vmem:[%s6971 + $0xe8] sm:$0xff]
        %v7002 = vld [vmem:[%s6971 + $0xf0] sm:$0xff]
        %v7003 = vld [vmem:[%s6971 + $0xf8] sm:$0xff]
        %v7004 = vld [vmem:[%s6971 + $0x100] sm:$0xff]
        %v7005 = vld [vmem:[%s6971 + $0x108] sm:$0xff]
        %v7006 = vld [vmem:[%s6971 + $0x110] sm:$0xff]
        %v7007 = vld [vmem:[%s6971 + $0x118] sm:$0xff]
        %v7008 = vld [vmem:[%s6971 + $0x120] sm:$0xff]
        %v7009 = vld [vmem:[%s6971 + $0x128] sm:$0xff]
        %v7010 = vld [vmem:[%s6971 + $0x130] sm:$0xff]
        %v7011 = vld [vmem:[%s6971 + $0x138] sm:$0xff]
        %v7012 = vld [vmem:[%s6971 + $0x140] sm:$0xff]
        %v7013 = vld [vmem:[%s6971 + $0x148] sm:$0xff]
        %v7014 = vld [vmem:[%s6971 + $0x150] sm:$0xff]
        %v7015 = vld [vmem:[%s6971 + $0x158] sm:$0xff]
        %v7016 = vld [vmem:[%s6971 + $0x160] sm:$0xff]
        %v7017 = vld [vmem:[%s6971 + $0x168] sm:$0xff]
        %v7018 = vld [vmem:[%s6971 + $0x170] sm:$0xff]
        %v7019 = vld [vmem:[%s6971 + $0x178] sm:$0xff]
        %v7020 = vld [vmem:[%s6971 + $0x180] sm:$0xff]
        %v7021 = vld [vmem:[%s6971 + $0x188] sm:$0xff]
        %v7022 = vld [vmem:[%s6971 + $0x190] sm:$0xff]
        %v7023 = vld [vmem:[%s6971 + $0x198] sm:$0xff]
        %v7024 = vld [vmem:[%s6971 + $0x1a0] sm:$0xff]
        %v7025 = vld [vmem:[%s6971 + $0x1a8] sm:$0xff]
        %v7026 = vld [vmem:[%s6971 + $0x1b0] sm:$0xff]
        %v7027 = vld [vmem:[%s6971 + $0x1b8] sm:$0xff]
        %v7028 = vld [vmem:[%s6971 + $0x1c0] sm:$0xff]
        %v7029 = vld [vmem:[%s6971 + $0x1c8] sm:$0xff]
        %v7030 = vld [vmem:[%s6971 + $0x1d0] sm:$0xff]
        %v7031 = vld [vmem:[%s6971 + $0x1d8] sm:$0xff]
        %v7032 = vld [vmem:[%s6971 + $0x1e0] sm:$0xff]
        %v7033 = vld [vmem:[%s6971 + $0x1e8] sm:$0xff]
        %v7034 = vld [vmem:[%s6971 + $0x1f0] sm:$0xff]
        %v7035 = vld [vmem:[%s6971 + $0x1f8] sm:$0xff]
        %v7036 = vld [vmem:[%s6971 + $0x200] sm:$0xff]
        %v7037 = vld [vmem:[%s6971 + $0x208] sm:$0xff]
        %v7038 = vld [vmem:[%s6971 + $0x210] sm:$0xff]
        %v7039 = vld [vmem:[%s6971 + $0x218] sm:$0xff]
        %v7040 = vld [vmem:[%s6971 + $0x220] sm:$0xff]
        %v7041 = vld [vmem:[%s6971 + $0x228] sm:$0xff]
        %v7042 = vld [vmem:[%s6971 + $0x230] sm:$0xff]
        %v7043 = vld [vmem:[%s6971 + $0x238] sm:$0xff]
        %v7044 = vld [vmem:[%s6971 + $0x240] sm:$0xff]
        %v7045 = vld [vmem:[%s6971 + $0x248] sm:$0xff]
        %v7046 = vld [vmem:[%s6971 + $0x250] sm:$0xff]
        %v7047 = vld [vmem:[%s6971 + $0x258] sm:$0xff]
        %v7048 = vld [vmem:[%s6971 + $0x260] sm:$0xff]
        %v7049 = vld [vmem:[%s6971 + $0x268] sm:$0xff]
        %v7050 = vld [vmem:[%s6971 + $0x270] sm:$0xff]
        %v7051 = vld [vmem:[%s6971 + $0x278] sm:$0xff]
        %v7052 = vld [vmem:[%s6971 + $0x280] sm:$0xff]
        %v7053 = vld [vmem:[%s6971 + $0x288] sm:$0xff]
        %v7054 = vld [vmem:[%s6971 + $0x290] sm:$0xff]
        %v7055 = vld [vmem:[%s6971 + $0x298] sm:$0xff]
        %v7056 = vld [vmem:[%s6971 + $0x2a0] sm:$0xff]
        %v7057 = vld [vmem:[%s6971 + $0x2a8] sm:$0xff]
        %v7058 = vld [vmem:[%s6971 + $0x2b0] sm:$0xff]
        %v7059 = vld [vmem:[%s6971 + $0x2b8] sm:$0xff]
        %v7060 = vld [vmem:[%s6971 + $0x2c0] sm:$0xff]
        %v7061 = vld [vmem:[%s6971 + $0x2c8] sm:$0xff]
        %v7062 = vld [vmem:[%s6971 + $0x2d0] sm:$0xff]
        %v7063 = vld [vmem:[%s6971 + $0x2d8] sm:$0xff]
        %v7064 = vld [vmem:[%s6971 + $0x2e0] sm:$0xff]
        %v7065 = vld [vmem:[%s6971 + $0x2e8] sm:$0xff]
        %v7066 = vld [vmem:[%s6971 + $0x2f0] sm:$0xff]
        %v7067 = vld [vmem:[%s6971 + $0x2f8] sm:$0xff]
        %v7068 = vld [vmem:[%s6971 + $0x300] sm:$0xff]
        %v7069 = vld [vmem:[%s6971 + $0x308] sm:$0xff]
        %v7070 = vld [vmem:[%s6971 + $0x310] sm:$0xff]
        %v7071 = vld [vmem:[%s6971 + $0x318] sm:$0xff]
        %v7072 = vld [vmem:[%s6971 + $0x320] sm:$0xff]
        %v7073 = vld [vmem:[%s6971 + $0x328] sm:$0xff]
        %v7074 = vld [vmem:[%s6971 + $0x330] sm:$0xff]
        %v7075 = vld [vmem:[%s6971 + $0x338] sm:$0xff]
        %v7076 = vld [vmem:[%s6971 + $0x340] sm:$0xff]
        %v7077 = vld [vmem:[%s6971 + $0x348] sm:$0xff]
        %v7078 = vld [vmem:[%s6971 + $0x350] sm:$0xff]
        %v7079 = vld [vmem:[%s6971 + $0x358] sm:$0xff]
        %v7080 = vld [vmem:[%s6971 + $0x360] sm:$0xff]
        %v7081 = vld [vmem:[%s6971 + $0x368] sm:$0xff]
        %v7082 = vld [vmem:[%s6971 + $0x370] sm:$0xff]
        %v7083 = vld [vmem:[%s6971 + $0x378] sm:$0xff]
        %v7084 = vld [vmem:[%s6971 + $0x380] sm:$0xff]
        %v7085 = vld [vmem:[%s6971 + $0x388] sm:$0xff]
        %v7086 = vld [vmem:[%s6971 + $0x390] sm:$0xff]
        %v7087 = vld [vmem:[%s6971 + $0x398] sm:$0xff]
        %v7088 = vld [vmem:[%s6971 + $0x3a0] sm:$0xff]
        %v7089 = vld [vmem:[%s6971 + $0x3a8] sm:$0xff]
        %v7090 = vld [vmem:[%s6971 + $0x3b0] sm:$0xff]
        %v7091 = vld [vmem:[%s6971 + $0x3b8] sm:$0xff]
        %v7092 = vld [vmem:[%s6971 + $0x3c0] sm:$0xff]
        %v7093 = vld [vmem:[%s6971 + $0x3c8] sm:$0xff]
        %v7094 = vld [vmem:[%s6971 + $0x3d0] sm:$0xff]
        %v7095 = vld [vmem:[%s6971 + $0x3d8] sm:$0xff]
        %v7096 = vld [vmem:[%s6971 + $0x3e0] sm:$0xff]
        %v7097 = vld [vmem:[%s6971 + $0x3e8] sm:$0xff]
        %v7098 = vld [vmem:[%s6971 + $0x3f0] sm:$0xff]
        %v7099 = vld [vmem:[%s6971 + $0x3f8] sm:$0xff]
        %v7228 = vunpack.c.l.b16 %v6972
        %v7229 = vunpack.c.h.b16 %v6972
        %v7230 = vunpack.c.l.b16 %v6973
        %v7231 = vunpack.c.h.b16 %v6973
        %v7232 = vunpack.c.l.b16 %v6974
        %v7233 = vunpack.c.h.b16 %v6974
        %v7234 = vunpack.c.l.b16 %v6975
        %v7235 = vunpack.c.h.b16 %v6975
        %v7236 = vunpack.c.l.b16 %v6976
        %v7237 = vunpack.c.h.b16 %v6976
        %v7238 = vunpack.c.l.b16 %v6977
        %v7239 = vunpack.c.h.b16 %v6977
        %v7240 = vunpack.c.l.b16 %v6978
        %v7241 = vunpack.c.h.b16 %v6978
        %v7242 = vunpack.c.l.b16 %v6979
        %v7243 = vunpack.c.h.b16 %v6979
        %v7244 = vunpack.c.l.b16 %v6980
        %v7245 = vunpack.c.h.b16 %v6980
        %v7246 = vunpack.c.l.b16 %v6981
        %v7247 = vunpack.c.h.b16 %v6981
        %v7248 = vunpack.c.l.b16 %v6982
        %v7249 = vunpack.c.h.b16 %v6982
        %v7250 = vunpack.c.l.b16 %v6983
        %v7251 = vunpack.c.h.b16 %v6983
        %v7252 = vunpack.c.l.b16 %v6984
        %v7253 = vunpack.c.h.b16 %v6984
        %v7254 = vunpack.c.l.b16 %v6985
        %v7255 = vunpack.c.h.b16 %v6985
        %v7256 = vunpack.c.l.b16 %v6986
        %v7257 = vunpack.c.h.b16 %v6986
        %v7258 = vunpack.c.l.b16 %v6987
        %v7259 = vunpack.c.h.b16 %v6987
        %v7260 = vunpack.c.l.b16 %v6988
        %v7261 = vunpack.c.h.b16 %v6988
        %v7262 = vunpack.c.l.b16 %v6989
        %v7263 = vunpack.c.h.b16 %v6989
        %v7264 = vunpack.c.l.b16 %v6990
        %v7265 = vunpack.c.h.b16 %v6990
        %v7266 = vunpack.c.l.b16 %v6991
        %v7267 = vunpack.c.h.b16 %v6991
        %v7268 = vunpack.c.l.b16 %v6992
        %v7269 = vunpack.c.h.b16 %v6992
        %v7270 = vunpack.c.l.b16 %v6993
        %v7271 = vunpack.c.h.b16 %v6993
        %v7272 = vunpack.c.l.b16 %v6994
        %v7273 = vunpack.c.h.b16 %v6994
        %v7274 = vunpack.c.l.b16 %v6995
        %v7275 = vunpack.c.h.b16 %v6995
        %v7276 = vunpack.c.l.b16 %v6996
        %v7277 = vunpack.c.h.b16 %v6996
        %v7278 = vunpack.c.l.b16 %v6997
        %v7279 = vunpack.c.h.b16 %v6997
        %v7280 = vunpack.c.l.b16 %v6998
        %v7281 = vunpack.c.h.b16 %v6998
        %v7282 = vunpack.c.l.b16 %v6999
        %v7283 = vunpack.c.h.b16 %v6999
        %v7284 = vunpack.c.l.b16 %v7000
        %v7285 = vunpack.c.h.b16 %v7000
        %v7286 = vunpack.c.l.b16 %v7001
        %v7287 = vunpack.c.h.b16 %v7001
        %v7288 = vunpack.c.l.b16 %v7002
        %v7289 = vunpack.c.h.b16 %v7002
        %v7290 = vunpack.c.l.b16 %v7003
        %v7291 = vunpack.c.h.b16 %v7003
        %v7292 = vunpack.c.l.b16 %v7004
        %v7293 = vunpack.c.h.b16 %v7004
        %v7294 = vunpack.c.l.b16 %v7005
        %v7295 = vunpack.c.h.b16 %v7005
        %v7296 = vunpack.c.l.b16 %v7006
        %v7297 = vunpack.c.h.b16 %v7006
        %v7298 = vunpack.c.l.b16 %v7007
        %v7299 = vunpack.c.h.b16 %v7007
        %v7300 = vunpack.c.l.b16 %v7008
        %v7301 = vunpack.c.h.b16 %v7008
        %v7302 = vunpack.c.l.b16 %v7009
        %v7303 = vunpack.c.h.b16 %v7009
        %v7304 = vunpack.c.l.b16 %v7010
        %v7305 = vunpack.c.h.b16 %v7010
        %v7306 = vunpack.c.l.b16 %v7011
        %v7307 = vunpack.c.h.b16 %v7011
        %v7308 = vunpack.c.l.b16 %v7012
        %v7309 = vunpack.c.h.b16 %v7012
        %v7310 = vunpack.c.l.b16 %v7013
        %v7311 = vunpack.c.h.b16 %v7013
        %v7312 = vunpack.c.l.b16 %v7014
        %v7313 = vunpack.c.h.b16 %v7014
        %v7314 = vunpack.c.l.b16 %v7015
        %v7315 = vunpack.c.h.b16 %v7015
        %v7316 = vunpack.c.l.b16 %v7016
        %v7317 = vunpack.c.h.b16 %v7016
        %v7318 = vunpack.c.l.b16 %v7017
        %v7319 = vunpack.c.h.b16 %v7017
        %v7320 = vunpack.c.l.b16 %v7018
        %v7321 = vunpack.c.h.b16 %v7018
        %v7322 = vunpack.c.l.b16 %v7019
        %v7323 = vunpack.c.h.b16 %v7019
        %v7324 = vunpack.c.l.b16 %v7020
        %v7325 = vunpack.c.h.b16 %v7020
        %v7326 = vunpack.c.l.b16 %v7021
        %v7327 = vunpack.c.h.b16 %v7021
        %v7328 = vunpack.c.l.b16 %v7022
        %v7329 = vunpack.c.h.b16 %v7022
        %v7330 = vunpack.c.l.b16 %v7023
        %v7331 = vunpack.c.h.b16 %v7023
        %v7332 = vunpack.c.l.b16 %v7024
        %v7333 = vunpack.c.h.b16 %v7024
        %v7334 = vunpack.c.l.b16 %v7025
        %v7335 = vunpack.c.h.b16 %v7025
        %v7336 = vunpack.c.l.b16 %v7026
        %v7337 = vunpack.c.h.b16 %v7026
        %v7338 = vunpack.c.l.b16 %v7027
        %v7339 = vunpack.c.h.b16 %v7027
        %v7340 = vunpack.c.l.b16 %v7028
        %v7341 = vunpack.c.h.b16 %v7028
        %v7342 = vunpack.c.l.b16 %v7029
        %v7343 = vunpack.c.h.b16 %v7029
        %v7344 = vunpack.c.l.b16 %v7030
        %v7345 = vunpack.c.h.b16 %v7030
        %v7346 = vunpack.c.l.b16 %v7031
        %v7347 = vunpack.c.h.b16 %v7031
        %v7348 = vunpack.c.l.b16 %v7032
        %v7349 = vunpack.c.h.b16 %v7032
        %v7350 = vunpack.c.l.b16 %v7033
        %v7351 = vunpack.c.h.b16 %v7033
        %v7352 = vunpack.c.l.b16 %v7034
        %v7353 = vunpack.c.h.b16 %v7034
        %v7354 = vunpack.c.l.b16 %v7035
        %v7355 = vunpack.c.h.b16 %v7035
        %v7356 = vunpack.c.l.b16 %v7036
        %v7357 = vunpack.c.h.b16 %v7036
        %v7358 = vunpack.c.l.b16 %v7037
        %v7359 = vunpack.c.h.b16 %v7037
        %v7360 = vunpack.c.l.b16 %v7038
        %v7361 = vunpack.c.h.b16 %v7038
        %v7362 = vunpack.c.l.b16 %v7039
        %v7363 = vunpack.c.h.b16 %v7039
        %v7364 = vunpack.c.l.b16 %v7040
        %v7365 = vunpack.c.h.b16 %v7040
        %v7366 = vunpack.c.l.b16 %v7041
        %v7367 = vunpack.c.h.b16 %v7041
        %v7368 = vunpack.c.l.b16 %v7042
        %v7369 = vunpack.c.h.b16 %v7042
        %v7370 = vunpack.c.l.b16 %v7043
        %v7371 = vunpack.c.h.b16 %v7043
        %v7372 = vunpack.c.l.b16 %v7044
        %v7373 = vunpack.c.h.b16 %v7044
        %v7374 = vunpack.c.l.b16 %v7045
        %v7375 = vunpack.c.h.b16 %v7045
        %v7376 = vunpack.c.l.b16 %v7046
        %v7377 = vunpack.c.h.b16 %v7046
        %v7378 = vunpack.c.l.b16 %v7047
        %v7379 = vunpack.c.h.b16 %v7047
        %v7380 = vunpack.c.l.b16 %v7048
        %v7381 = vunpack.c.h.b16 %v7048
        %v7382 = vunpack.c.l.b16 %v7049
        %v7383 = vunpack.c.h.b16 %v7049
        %v7384 = vunpack.c.l.b16 %v7050
        %v7385 = vunpack.c.h.b16 %v7050
        %v7386 = vunpack.c.l.b16 %v7051
        %v7387 = vunpack.c.h.b16 %v7051
        %v7388 = vunpack.c.l.b16 %v7052
        %v7389 = vunpack.c.h.b16 %v7052
        %v7390 = vunpack.c.l.b16 %v7053
        %v7391 = vunpack.c.h.b16 %v7053
        %v7392 = vunpack.c.l.b16 %v7054
        %v7393 = vunpack.c.h.b16 %v7054
        %v7394 = vunpack.c.l.b16 %v7055
        %v7395 = vunpack.c.h.b16 %v7055
        %v7396 = vunpack.c.l.b16 %v7056
        %v7397 = vunpack.c.h.b16 %v7056
        %v7398 = vunpack.c.l.b16 %v7057
        %v7399 = vunpack.c.h.b16 %v7057
        %v7400 = vunpack.c.l.b16 %v7058
        %v7401 = vunpack.c.h.b16 %v7058
        %v7402 = vunpack.c.l.b16 %v7059
        %v7403 = vunpack.c.h.b16 %v7059
        %v7404 = vunpack.c.l.b16 %v7060
        %v7405 = vunpack.c.h.b16 %v7060
        %v7406 = vunpack.c.l.b16 %v7061
        %v7407 = vunpack.c.h.b16 %v7061
        %v7408 = vunpack.c.l.b16 %v7062
        %v7409 = vunpack.c.h.b16 %v7062
        %v7410 = vunpack.c.l.b16 %v7063
        %v7411 = vunpack.c.h.b16 %v7063
        %v7412 = vunpack.c.l.b16 %v7064
        %v7413 = vunpack.c.h.b16 %v7064
        %v7414 = vunpack.c.l.b16 %v7065
        %v7415 = vunpack.c.h.b16 %v7065
        %v7416 = vunpack.c.l.b16 %v7066
        %v7417 = vunpack.c.h.b16 %v7066
        %v7418 = vunpack.c.l.b16 %v7067
        %v7419 = vunpack.c.h.b16 %v7067
        %v7420 = vunpack.c.l.b16 %v7068
        %v7421 = vunpack.c.h.b16 %v7068
        %v7422 = vunpack.c.l.b16 %v7069
        %v7423 = vunpack.c.h.b16 %v7069
        %v7424 = vunpack.c.l.b16 %v7070
        %v7425 = vunpack.c.h.b16 %v7070
        %v7426 = vunpack.c.l.b16 %v7071
        %v7427 = vunpack.c.h.b16 %v7071
        %v7428 = vunpack.c.l.b16 %v7072
        %v7429 = vunpack.c.h.b16 %v7072
        %v7430 = vunpack.c.l.b16 %v7073
        %v7431 = vunpack.c.h.b16 %v7073
        %v7432 = vunpack.c.l.b16 %v7074
        %v7433 = vunpack.c.h.b16 %v7074
        %v7434 = vunpack.c.l.b16 %v7075
        %v7435 = vunpack.c.h.b16 %v7075
        %v7436 = vunpack.c.l.b16 %v7076
        %v7437 = vunpack.c.h.b16 %v7076
        %v7438 = vunpack.c.l.b16 %v7077
        %v7439 = vunpack.c.h.b16 %v7077
        %v7440 = vunpack.c.l.b16 %v7078
        %v7441 = vunpack.c.h.b16 %v7078
        %v7442 = vunpack.c.l.b16 %v7079
        %v7443 = vunpack.c.h.b16 %v7079
        %v7444 = vunpack.c.l.b16 %v7080
        %v7445 = vunpack.c.h.b16 %v7080
        %v7446 = vunpack.c.l.b16 %v7081
        %v7447 = vunpack.c.h.b16 %v7081
        %v7448 = vunpack.c.l.b16 %v7082
        %v7449 = vunpack.c.h.b16 %v7082
        %v7450 = vunpack.c.l.b16 %v7083
        %v7451 = vunpack.c.h.b16 %v7083
        %v7452 = vunpack.c.l.b16 %v7084
        %v7453 = vunpack.c.h.b16 %v7084
        %v7454 = vunpack.c.l.b16 %v7085
        %v7455 = vunpack.c.h.b16 %v7085
        %v7456 = vunpack.c.l.b16 %v7086
        %v7457 = vunpack.c.h.b16 %v7086
        %v7458 = vunpack.c.l.b16 %v7087
        %v7459 = vunpack.c.h.b16 %v7087
        %v7460 = vunpack.c.l.b16 %v7088
        %v7461 = vunpack.c.h.b16 %v7088
        %v7462 = vunpack.c.l.b16 %v7089
        %v7463 = vunpack.c.h.b16 %v7089
        %v7464 = vunpack.c.l.b16 %v7090
        %v7465 = vunpack.c.h.b16 %v7090
        %v7466 = vunpack.c.l.b16 %v7091
        %v7467 = vunpack.c.h.b16 %v7091
        %v7468 = vunpack.c.l.b16 %v7092
        %v7469 = vunpack.c.h.b16 %v7092
        %v7470 = vunpack.c.l.b16 %v7093
        %v7471 = vunpack.c.h.b16 %v7093
        %v7472 = vunpack.c.l.b16 %v7094
        %v7473 = vunpack.c.h.b16 %v7094
        %v7474 = vunpack.c.l.b16 %v7095
        %v7475 = vunpack.c.h.b16 %v7095
        %v7476 = vunpack.c.l.b16 %v7096
        %v7477 = vunpack.c.h.b16 %v7096
        %v7478 = vunpack.c.l.b16 %v7097
        %v7479 = vunpack.c.h.b16 %v7097
        %v7480 = vunpack.c.l.b16 %v7098
        %v7481 = vunpack.c.h.b16 %v7098
        %v7482 = vunpack.c.l.b16 %v7099
        %v7483 = vunpack.c.h.b16 %v7099
        %v7484 = vpack.c.b16 %v7232, %v7228
        %v7485 = vpack.c.b16 %v7233, %v7229
        %v7486 = vpack.c.b16 %v7234, %v7230
        %v7487 = vpack.c.b16 %v7235, %v7231
        %v7488 = vpack.c.b16 %v7240, %v7236
        %v7489 = vpack.c.b16 %v7241, %v7237
        %v7490 = vpack.c.b16 %v7242, %v7238
        %v7491 = vpack.c.b16 %v7243, %v7239
        %v7492 = vpack.c.b16 %v7248, %v7244
        %v7493 = vpack.c.b16 %v7249, %v7245
        %v7494 = vpack.c.b16 %v7250, %v7246
        %v7495 = vpack.c.b16 %v7251, %v7247
        %v7496 = vpack.c.b16 %v7256, %v7252
        %v7497 = vpack.c.b16 %v7257, %v7253
        %v7498 = vpack.c.b16 %v7258, %v7254
        %v7499 = vpack.c.b16 %v7259, %v7255
        %v7500 = vpack.c.b16 %v7264, %v7260
        %v7501 = vpack.c.b16 %v7265, %v7261
        %v7502 = vpack.c.b16 %v7266, %v7262
        %v7503 = vpack.c.b16 %v7267, %v7263
        %v7504 = vpack.c.b16 %v7272, %v7268
        %v7505 = vpack.c.b16 %v7273, %v7269
        %v7506 = vpack.c.b16 %v7274, %v7270
        %v7507 = vpack.c.b16 %v7275, %v7271
        %v7508 = vpack.c.b16 %v7280, %v7276
        %v7509 = vpack.c.b16 %v7281, %v7277
        %v7510 = vpack.c.b16 %v7282, %v7278
        %v7511 = vpack.c.b16 %v7283, %v7279
        %v7512 = vpack.c.b16 %v7288, %v7284
        %v7513 = vpack.c.b16 %v7289, %v7285
        %v7514 = vpack.c.b16 %v7290, %v7286
        %v7515 = vpack.c.b16 %v7291, %v7287
        %v7516 = vpack.c.b16 %v7296, %v7292
        %v7517 = vpack.c.b16 %v7297, %v7293
        %v7518 = vpack.c.b16 %v7298, %v7294
        %v7519 = vpack.c.b16 %v7299, %v7295
        %v7520 = vpack.c.b16 %v7304, %v7300
        %v7521 = vpack.c.b16 %v7305, %v7301
        %v7522 = vpack.c.b16 %v7306, %v7302
        %v7523 = vpack.c.b16 %v7307, %v7303
        %v7524 = vpack.c.b16 %v7312, %v7308
        %v7525 = vpack.c.b16 %v7313, %v7309
        %v7526 = vpack.c.b16 %v7314, %v7310
        %v7527 = vpack.c.b16 %v7315, %v7311
        %v7528 = vpack.c.b16 %v7320, %v7316
        %v7529 = vpack.c.b16 %v7321, %v7317
        %v7530 = vpack.c.b16 %v7322, %v7318
        %v7531 = vpack.c.b16 %v7323, %v7319
        %v7532 = vpack.c.b16 %v7328, %v7324
        %v7533 = vpack.c.b16 %v7329, %v7325
        %v7534 = vpack.c.b16 %v7330, %v7326
        %v7535 = vpack.c.b16 %v7331, %v7327
        %v7536 = vpack.c.b16 %v7336, %v7332
        %v7537 = vpack.c.b16 %v7337, %v7333
        %v7538 = vpack.c.b16 %v7338, %v7334
        %v7539 = vpack.c.b16 %v7339, %v7335
        %v7540 = vpack.c.b16 %v7344, %v7340
        %v7541 = vpack.c.b16 %v7345, %v7341
        %v7542 = vpack.c.b16 %v7346, %v7342
        %v7543 = vpack.c.b16 %v7347, %v7343
        %v7544 = vpack.c.b16 %v7352, %v7348
        %v7545 = vpack.c.b16 %v7353, %v7349
        %v7546 = vpack.c.b16 %v7354, %v7350
        %v7547 = vpack.c.b16 %v7355, %v7351
        %v7548 = vpack.c.b16 %v7360, %v7356
        %v7549 = vpack.c.b16 %v7361, %v7357
        %v7550 = vpack.c.b16 %v7362, %v7358
        %v7551 = vpack.c.b16 %v7363, %v7359
        %v7552 = vpack.c.b16 %v7368, %v7364
        %v7553 = vpack.c.b16 %v7369, %v7365
        %v7554 = vpack.c.b16 %v7370, %v7366
        %v7555 = vpack.c.b16 %v7371, %v7367
        %v7556 = vpack.c.b16 %v7376, %v7372
        %v7557 = vpack.c.b16 %v7377, %v7373
        %v7558 = vpack.c.b16 %v7378, %v7374
        %v7559 = vpack.c.b16 %v7379, %v7375
        %v7560 = vpack.c.b16 %v7384, %v7380
        %v7561 = vpack.c.b16 %v7385, %v7381
        %v7562 = vpack.c.b16 %v7386, %v7382
        %v7563 = vpack.c.b16 %v7387, %v7383
        %v7564 = vpack.c.b16 %v7392, %v7388
        %v7565 = vpack.c.b16 %v7393, %v7389
        %v7566 = vpack.c.b16 %v7394, %v7390
        %v7567 = vpack.c.b16 %v7395, %v7391
        %v7568 = vpack.c.b16 %v7400, %v7396
        %v7569 = vpack.c.b16 %v7401, %v7397
        %v7570 = vpack.c.b16 %v7402, %v7398
        %v7571 = vpack.c.b16 %v7403, %v7399
        %v7572 = vpack.c.b16 %v7408, %v7404
        %v7573 = vpack.c.b16 %v7409, %v7405
        %v7574 = vpack.c.b16 %v7410, %v7406
        %v7575 = vpack.c.b16 %v7411, %v7407
        %v7576 = vpack.c.b16 %v7416, %v7412
        %v7577 = vpack.c.b16 %v7417, %v7413
        %v7578 = vpack.c.b16 %v7418, %v7414
        %v7579 = vpack.c.b16 %v7419, %v7415
        %v7580 = vpack.c.b16 %v7424, %v7420
        %v7581 = vpack.c.b16 %v7425, %v7421
        %v7582 = vpack.c.b16 %v7426, %v7422
        %v7583 = vpack.c.b16 %v7427, %v7423
        %v7584 = vpack.c.b16 %v7432, %v7428
        %v7585 = vpack.c.b16 %v7433, %v7429
        %v7586 = vpack.c.b16 %v7434, %v7430
        %v7587 = vpack.c.b16 %v7435, %v7431
        %v7588 = vpack.c.b16 %v7440, %v7436
        %v7589 = vpack.c.b16 %v7441, %v7437
        %v7590 = vpack.c.b16 %v7442, %v7438
        %v7591 = vpack.c.b16 %v7443, %v7439
        %v7592 = vpack.c.b16 %v7448, %v7444
        %v7593 = vpack.c.b16 %v7449, %v7445
        %v7594 = vpack.c.b16 %v7450, %v7446
        %v7595 = vpack.c.b16 %v7451, %v7447
        %v7596 = vpack.c.b16 %v7456, %v7452
        %v7597 = vpack.c.b16 %v7457, %v7453
        %v7598 = vpack.c.b16 %v7458, %v7454
        %v7599 = vpack.c.b16 %v7459, %v7455
        %v7600 = vpack.c.b16 %v7464, %v7460
        %v7601 = vpack.c.b16 %v7465, %v7461
        %v7602 = vpack.c.b16 %v7466, %v7462
        %v7603 = vpack.c.b16 %v7467, %v7463
        %v7604 = vpack.c.b16 %v7472, %v7468
        %v7605 = vpack.c.b16 %v7473, %v7469
        %v7606 = vpack.c.b16 %v7474, %v7470
        %v7607 = vpack.c.b16 %v7475, %v7471
        %v7608 = vpack.c.b16 %v7480, %v7476
        %v7609 = vpack.c.b16 %v7481, %v7477
        %v7610 = vpack.c.b16 %v7482, %v7478
        %v7611 = vpack.c.b16 %v7483, %v7479
        %7740 = vmatprep.subr.bf16.mxu0 %v7485
        %7741 = vmatpush1.bf16.msra.mxu0 %v7484
        %7742 = vmatprep.subr.bf16.mxu0 %v7489
        %7743 = vmatpush1.bf16.msra.mxu0 %v7488
        %7744 = vmatprep.subr.bf16.mxu0 %v7493
        %7745 = vmatpush1.bf16.msra.mxu0 %v7492
        %7746 = vmatprep.subr.bf16.mxu0 %v7497
        %7747 = vmatpush1.bf16.msra.mxu0 %v7496
        %7748 = vmatprep.subr.bf16.mxu0 %v7501
        %7749 = vmatpush1.bf16.msra.mxu0 %v7500
        %7750 = vmatprep.subr.bf16.mxu0 %v7505
        %7751 = vmatpush1.bf16.msra.mxu0 %v7504
        %7752 = vmatprep.subr.bf16.mxu0 %v7509
        %7753 = vmatpush1.bf16.msra.mxu0 %v7508
        %7754 = vmatprep.subr.bf16.mxu0 %v7513
        %7755 = vmatpush1.bf16.msra.mxu0 %v7512
        %7756 = vmatprep.subr.bf16.mxu0 %v7517
        %7757 = vmatpush1.bf16.msra.mxu0 %v7516
        %7758 = vmatprep.subr.bf16.mxu0 %v7521
        %7759 = vmatpush1.bf16.msra.mxu0 %v7520
        %7760 = vmatprep.subr.bf16.mxu0 %v7525
        %7761 = vmatpush1.bf16.msra.mxu0 %v7524
        %7762 = vmatprep.subr.bf16.mxu0 %v7529
        %7763 = vmatpush1.bf16.msra.mxu0 %v7528
        %7764 = vmatprep.subr.bf16.mxu0 %v7533
        %7765 = vmatpush1.bf16.msra.mxu0 %v7532
        %7766 = vmatprep.subr.bf16.mxu0 %v7537
        %7767 = vmatpush1.bf16.msra.mxu0 %v7536
        %7768 = vmatprep.subr.bf16.mxu0 %v7541
        %7769 = vmatpush1.bf16.msra.mxu0 %v7540
        %7770 = vmatprep.subr.bf16.mxu0 %v7545
        %7771 = vmatpush1.bf16.msra.mxu0 %v7544
        %7772 = vmatprep.mubr.bf16.mxu0 %v6968
        %7773 = vmatmul.mubr.bf16.gmra.mrb[0].mxu0 %v6967
        %v7774 = vpop.f32.mrb[0].mxu0
        %v7775 = vadd.f32 0.0, %v7774
        %v7776 = vpop.f32.mrb[0].mxu0
        %v7777 = vadd.f32 0.0, %v7776
        %v7778 = vpop.f32.mrb[0].mxu0
        %v7779 = vpop.f32.mrb[0].mxu0
        %7780 = vdwg.mxu0
        %7781 = vmatprep.subr.bf16.mxu0 %v7549
        %7782 = vmatpush1.bf16.msra.mxu0 %v7548
        %7783 = vmatprep.subr.bf16.mxu0 %v7553
        %7784 = vmatpush1.bf16.msra.mxu0 %v7552
        %7785 = vmatprep.subr.bf16.mxu0 %v7557
        %7786 = vmatpush1.bf16.msra.mxu0 %v7556
        %7787 = vmatprep.subr.bf16.mxu0 %v7561
        %7788 = vmatpush1.bf16.msra.mxu0 %v7560
        %7789 = vmatprep.subr.bf16.mxu0 %v7565
        %7790 = vmatpush1.bf16.msra.mxu0 %v7564
        %7791 = vmatprep.subr.bf16.mxu0 %v7569
        %7792 = vmatpush1.bf16.msra.mxu0 %v7568
        %7793 = vmatprep.subr.bf16.mxu0 %v7573
        %7794 = vmatpush1.bf16.msra.mxu0 %v7572
        %7795 = vmatprep.subr.bf16.mxu0 %v7577
        %7796 = vmatpush1.bf16.msra.mxu0 %v7576
        %7797 = vmatprep.subr.bf16.mxu0 %v7581
        %7798 = vmatpush1.bf16.msra.mxu0 %v7580
        %7799 = vmatprep.subr.bf16.mxu0 %v7585
        %7800 = vmatpush1.bf16.msra.mxu0 %v7584
        %7801 = vmatprep.subr.bf16.mxu0 %v7589
        %7802 = vmatpush1.bf16.msra.mxu0 %v7588
        %7803 = vmatprep.subr.bf16.mxu0 %v7593
        %7804 = vmatpush1.bf16.msra.mxu0 %v7592
        %7805 = vmatprep.subr.bf16.mxu0 %v7597
        %7806 = vmatpush1.bf16.msra.mxu0 %v7596
        %7807 = vmatprep.subr.bf16.mxu0 %v7601
        %7808 = vmatpush1.bf16.msra.mxu0 %v7600
        %7809 = vmatprep.subr.bf16.mxu0 %v7605
        %7810 = vmatpush1.bf16.msra.mxu0 %v7604
        %7811 = vmatprep.subr.bf16.mxu0 %v7609
        %7812 = vmatpush1.bf16.msra.mxu0 %v7608
        %7813 = vmatprep.mubr.bf16.mxu0 %v6970
        %7814 = vmatmul.mubr.bf16.gmra.mrb[0].mxu0 %v6969
        %v7815 = vpop.f32.mrb[0].mxu0
        %v7816 = vadd.f32 %v7775, %v7815
        %v7817 = vpop.f32.mrb[0].mxu0
        %v7818 = vadd.f32 %v7777, %v7817
        %v7819 = vpop.f32.mrb[0].mxu0
        %v7820 = vpop.f32.mrb[0].mxu0
        %7821 = vdwg.mxu0
        %7822 = vmatprep.subr.bf16.mxu0 %v7487
        %7823 = vmatpush1.bf16.msra.mxu0 %v7486
        %7824 = vmatprep.subr.bf16.mxu0 %v7491
        %7825 = vmatpush1.bf16.msra.mxu0 %v7490
        %7826 = vmatprep.subr.bf16.mxu0 %v7495
        %7827 = vmatpush1.bf16.msra.mxu0 %v7494
        %7828 = vmatprep.subr.bf16.mxu0 %v7499
        %7829 = vmatpush1.bf16.msra.mxu0 %v7498
        %7830 = vmatprep.subr.bf16.mxu0 %v7503
        %7831 = vmatpush1.bf16.msra.mxu0 %v7502
        %7832 = vmatprep.subr.bf16.mxu0 %v7507
        %7833 = vmatpush1.bf16.msra.mxu0 %v7506
        %7834 = vmatprep.subr.bf16.mxu0 %v7511
        %7835 = vmatpush1.bf16.msra.mxu0 %v7510
        %7836 = vmatprep.subr.bf16.mxu0 %v7515
        %7837 = vmatpush1.bf16.msra.mxu0 %v7514
        %7838 = vmatprep.subr.bf16.mxu0 %v7519
        %7839 = vmatpush1.bf16.msra.mxu0 %v7518
        %7840 = vmatprep.subr.bf16.mxu0 %v7523
        %7841 = vmatpush1.bf16.msra.mxu0 %v7522
        %7842 = vmatprep.subr.bf16.mxu0 %v7527
        %7843 = vmatpush1.bf16.msra.mxu0 %v7526
        %7844 = vmatprep.subr.bf16.mxu0 %v7531
        %7845 = vmatpush1.bf16.msra.mxu0 %v7530
        %7846 = vmatprep.subr.bf16.mxu0 %v7535
        %7847 = vmatpush1.bf16.msra.mxu0 %v7534
        %7848 = vmatprep.subr.bf16.mxu0 %v7539
        %7849 = vmatpush1.bf16.msra.mxu0 %v7538
        %7850 = vmatprep.subr.bf16.mxu0 %v7543
        %7851 = vmatpush1.bf16.msra.mxu0 %v7542
        %7852 = vmatprep.subr.bf16.mxu0 %v7547
        %7853 = vmatpush1.bf16.msra.mxu0 %v7546
        %7854 = vmatprep.mubr.bf16.mxu0 %v6968
        %7855 = vmatmul.mubr.bf16.gmra.mrb[0].mxu0 %v6967
        %v7856 = vpop.f32.mrb[0].mxu0
        %v7857 = vadd.f32 0.0, %v7856
        %v7858 = vpop.f32.mrb[0].mxu0
        %v7859 = vadd.f32 0.0, %v7858
        %v7860 = vpop.f32.mrb[0].mxu0
        %v7861 = vpop.f32.mrb[0].mxu0
        %7862 = vdwg.mxu0
        %7863 = vmatprep.subr.bf16.mxu0 %v7551
        %7864 = vmatpush1.bf16.msra.mxu0 %v7550
        %7865 = vmatprep.subr.bf16.mxu0 %v7555
        %7866 = vmatpush1.bf16.msra.mxu0 %v7554
        %7867 = vmatprep.subr.bf16.mxu0 %v7559
        %7868 = vmatpush1.bf16.msra.mxu0 %v7558
        %7869 = vmatprep.subr.bf16.mxu0 %v7563
        %7870 = vmatpush1.bf16.msra.mxu0 %v7562
        %7871 = vmatprep.subr.bf16.mxu0 %v7567
        %7872 = vmatpush1.bf16.msra.mxu0 %v7566
        %7873 = vmatprep.subr.bf16.mxu0 %v7571
        %7874 = vmatpush1.bf16.msra.mxu0 %v7570
        %7875 = vmatprep.subr.bf16.mxu0 %v7575
        %7876 = vmatpush1.bf16.msra.mxu0 %v7574
        %7877 = vmatprep.subr.bf16.mxu0 %v7579
        %7878 = vmatpush1.bf16.msra.mxu0 %v7578
        %7879 = vmatprep.subr.bf16.mxu0 %v7583
        %7880 = vmatpush1.bf16.msra.mxu0 %v7582
        %7881 = vmatprep.subr.bf16.mxu0 %v7587
        %7882 = vmatpush1.bf16.msra.mxu0 %v7586
        %7883 = vmatprep.subr.bf16.mxu0 %v7591
        %7884 = vmatpush1.bf16.msra.mxu0 %v7590
        %7885 = vmatprep.subr.bf16.mxu0 %v7595
        %7886 = vmatpush1.bf16.msra.mxu0 %v7594
        %7887 = vmatprep.subr.bf16.mxu0 %v7599
        %7888 = vmatpush1.bf16.msra.mxu0 %v7598
        %7889 = vmatprep.subr.bf16.mxu0 %v7603
        %7890 = vmatpush1.bf16.msra.mxu0 %v7602
        %7891 = vmatprep.subr.bf16.mxu0 %v7607
        %7892 = vmatpush1.bf16.msra.mxu0 %v7606
        %7893 = vmatprep.subr.bf16.mxu0 %v7611
        %7894 = vmatpush1.bf16.msra.mxu0 %v7610
        %7895 = vmatprep.mubr.bf16.mxu0 %v6970
        %7896 = vmatmul.mubr.bf16.gmra.mrb[0].mxu0 %v6969
        %v7897 = vpop.f32.mrb[0].mxu0
        %v7898 = vadd.f32 %v7857, %v7897
        %v7899 = vpop.f32.mrb[0].mxu0
        %v7900 = vadd.f32 %v7859, %v7899
        %v7901 = vpop.f32.mrb[0].mxu0
        %v7902 = vpop.f32.mrb[0].mxu0
        %7903 = vdwg.mxu0
        %v7905 = vshrl.u32 %v6831, 16
        %v7907 = vrot.slane %v7905, 3
        %v7908 = vshll.u32 %v6831, 16
        %v7910 = vrot.slane %v7908, 4
        %v7911 = vor.u32 %v7907, %v7910
        %v7913 = vshrl.u32 %v6832, 16
        %v7915 = vrot.slane %v7913, 3
        %v7916 = vshll.u32 %v6832, 16
        %v7918 = vrot.slane %v7916, 4
        %v7919 = vor.u32 %v7915, %v7918
        %v7921 = vshrl.u32 %v6833, 16
        %v7923 = vrot.slane %v7921, 3
        %v7924 = vshll.u32 %v6833, 16
        %v7926 = vrot.slane %v7924, 4
        %v7927 = vor.u32 %v7923, %v7926
        %v7929 = vshrl.u32 %v6834, 16
        %v7931 = vrot.slane %v7929, 3
        %v7932 = vshll.u32 %v6834, 16
        %v7934 = vrot.slane %v7932, 4
        %v7935 = vor.u32 %v7931, %v7934
        %v8068 = vunpack.c.l.b16 %v6835
        %v8069 = vunpack.c.h.b16 %v6835
        %v8070 = vunpack.c.l.b16 %v6836
        %v8071 = vunpack.c.h.b16 %v6836
        %v8072 = vunpack.c.l.b16 %v6837
        %v8073 = vunpack.c.h.b16 %v6837
        %v8074 = vunpack.c.l.b16 %v6838
        %v8075 = vunpack.c.h.b16 %v6838
        %v8076 = vunpack.c.l.b16 %v6839
        %v8077 = vunpack.c.h.b16 %v6839
        %v8078 = vunpack.c.l.b16 %v6840
        %v8079 = vunpack.c.h.b16 %v6840
        %v8080 = vunpack.c.l.b16 %v6841
        %v8081 = vunpack.c.h.b16 %v6841
        %v8082 = vunpack.c.l.b16 %v6842
        %v8083 = vunpack.c.h.b16 %v6842
        %v8084 = vunpack.c.l.b16 %v6843
        %v8085 = vunpack.c.h.b16 %v6843
        %v8086 = vunpack.c.l.b16 %v6844
        %v8087 = vunpack.c.h.b16 %v6844
        %v8088 = vunpack.c.l.b16 %v6845
        %v8089 = vunpack.c.h.b16 %v6845
        %v8090 = vunpack.c.l.b16 %v6846
        %v8091 = vunpack.c.h.b16 %v6846
        %v8092 = vunpack.c.l.b16 %v6847
        %v8093 = vunpack.c.h.b16 %v6847
        %v8094 = vunpack.c.l.b16 %v6848
        %v8095 = vunpack.c.h.b16 %v6848
        %v8096 = vunpack.c.l.b16 %v6849
        %v8097 = vunpack.c.h.b16 %v6849
        %v8098 = vunpack.c.l.b16 %v6850
        %v8099 = vunpack.c.h.b16 %v6850
        %v8100 = vunpack.c.l.b16 %v6851
        %v8101 = vunpack.c.h.b16 %v6851
        %v8102 = vunpack.c.l.b16 %v6852
        %v8103 = vunpack.c.h.b16 %v6852
        %v8104 = vunpack.c.l.b16 %v6853
        %v8105 = vunpack.c.h.b16 %v6853
        %v8106 = vunpack.c.l.b16 %v6854
        %v8107 = vunpack.c.h.b16 %v6854
        %v8108 = vunpack.c.l.b16 %v6855
        %v8109 = vunpack.c.h.b16 %v6855
        %v8110 = vunpack.c.l.b16 %v6856
        %v8111 = vunpack.c.h.b16 %v6856
        %v8112 = vunpack.c.l.b16 %v6857
        %v8113 = vunpack.c.h.b16 %v6857
        %v8114 = vunpack.c.l.b16 %v6858
        %v8115 = vunpack.c.h.b16 %v6858
        %v8116 = vunpack.c.l.b16 %v6859
        %v8117 = vunpack.c.h.b16 %v6859
        %v8118 = vunpack.c.l.b16 %v6860
        %v8119 = vunpack.c.h.b16 %v6860
        %v8120 = vunpack.c.l.b16 %v6861
        %v8121 = vunpack.c.h.b16 %v6861
        %v8122 = vunpack.c.l.b16 %v6862
        %v8123 = vunpack.c.h.b16 %v6862
        %v8124 = vunpack.c.l.b16 %v6863
        %v8125 = vunpack.c.h.b16 %v6863
        %v8126 = vunpack.c.l.b16 %v6864
        %v8127 = vunpack.c.h.b16 %v6864
        %v8128 = vunpack.c.l.b16 %v6865
        %v8129 = vunpack.c.h.b16 %v6865
        %v8130 = vunpack.c.l.b16 %v6866
        %v8131 = vunpack.c.h.b16 %v6866
        %v8132 = vunpack.c.l.b16 %v6867
        %v8133 = vunpack.c.h.b16 %v6867
        %v8134 = vunpack.c.l.b16 %v6868
        %v8135 = vunpack.c.h.b16 %v6868
        %v8136 = vunpack.c.l.b16 %v6869
        %v8137 = vunpack.c.h.b16 %v6869
        %v8138 = vunpack.c.l.b16 %v6870
        %v8139 = vunpack.c.h.b16 %v6870
        %v8140 = vunpack.c.l.b16 %v6871
        %v8141 = vunpack.c.h.b16 %v6871
        %v8142 = vunpack.c.l.b16 %v6872
        %v8143 = vunpack.c.h.b16 %v6872
        %v8144 = vunpack.c.l.b16 %v6873
        %v8145 = vunpack.c.h.b16 %v6873
        %v8146 = vunpack.c.l.b16 %v6874
        %v8147 = vunpack.c.h.b16 %v6874
        %v8148 = vunpack.c.l.b16 %v6875
        %v8149 = vunpack.c.h.b16 %v6875
        %v8150 = vunpack.c.l.b16 %v6876
        %v8151 = vunpack.c.h.b16 %v6876
        %v8152 = vunpack.c.l.b16 %v6877
        %v8153 = vunpack.c.h.b16 %v6877
        %v8154 = vunpack.c.l.b16 %v6878
        %v8155 = vunpack.c.h.b16 %v6878
        %v8156 = vunpack.c.l.b16 %v6879
        %v8157 = vunpack.c.h.b16 %v6879
        %v8158 = vunpack.c.l.b16 %v6880
        %v8159 = vunpack.c.h.b16 %v6880
        %v8160 = vunpack.c.l.b16 %v6881
        %v8161 = vunpack.c.h.b16 %v6881
        %v8162 = vunpack.c.l.b16 %v6882
        %v8163 = vunpack.c.h.b16 %v6882
        %v8164 = vunpack.c.l.b16 %v6883
        %v8165 = vunpack.c.h.b16 %v6883
        %v8166 = vunpack.c.l.b16 %v6884
        %v8167 = vunpack.c.h.b16 %v6884
        %v8168 = vunpack.c.l.b16 %v6885
        %v8169 = vunpack.c.h.b16 %v6885
        %v8170 = vunpack.c.l.b16 %v6886
        %v8171 = vunpack.c.h.b16 %v6886
        %v8172 = vunpack.c.l.b16 %v6887
        %v8173 = vunpack.c.h.b16 %v6887
        %v8174 = vunpack.c.l.b16 %v6888
        %v8175 = vunpack.c.h.b16 %v6888
        %v8176 = vunpack.c.l.b16 %v6889
        %v8177 = vunpack.c.h.b16 %v6889
        %v8178 = vunpack.c.l.b16 %v6890
        %v8179 = vunpack.c.h.b16 %v6890
        %v8180 = vunpack.c.l.b16 %v6891
        %v8181 = vunpack.c.h.b16 %v6891
        %v8182 = vunpack.c.l.b16 %v6892
        %v8183 = vunpack.c.h.b16 %v6892
        %v8184 = vunpack.c.l.b16 %v6893
        %v8185 = vunpack.c.h.b16 %v6893
        %v8186 = vunpack.c.l.b16 %v6894
        %v8187 = vunpack.c.h.b16 %v6894
        %v8188 = vunpack.c.l.b16 %v6895
        %v8189 = vunpack.c.h.b16 %v6895
        %v8190 = vunpack.c.l.b16 %v6896
        %v8191 = vunpack.c.h.b16 %v6896
        %v8192 = vunpack.c.l.b16 %v6897
        %v8193 = vunpack.c.h.b16 %v6897
        %v8194 = vunpack.c.l.b16 %v6898
        %v8195 = vunpack.c.h.b16 %v6898
        %v8196 = vunpack.c.l.b16 %v6899
        %v8197 = vunpack.c.h.b16 %v6899
        %v8198 = vunpack.c.l.b16 %v6900
        %v8199 = vunpack.c.h.b16 %v6900
        %v8200 = vunpack.c.l.b16 %v6901
        %v8201 = vunpack.c.h.b16 %v6901
        %v8202 = vunpack.c.l.b16 %v6902
        %v8203 = vunpack.c.h.b16 %v6902
        %v8204 = vunpack.c.l.b16 %v6903
        %v8205 = vunpack.c.h.b16 %v6903
        %v8206 = vunpack.c.l.b16 %v6904
        %v8207 = vunpack.c.h.b16 %v6904
        %v8208 = vunpack.c.l.b16 %v6905
        %v8209 = vunpack.c.h.b16 %v6905
        %v8210 = vunpack.c.l.b16 %v6906
        %v8211 = vunpack.c.h.b16 %v6906
        %v8212 = vunpack.c.l.b16 %v6907
        %v8213 = vunpack.c.h.b16 %v6907
        %v8214 = vunpack.c.l.b16 %v6908
        %v8215 = vunpack.c.h.b16 %v6908
        %v8216 = vunpack.c.l.b16 %v6909
        %v8217 = vunpack.c.h.b16 %v6909
        %v8218 = vunpack.c.l.b16 %v6910
        %v8219 = vunpack.c.h.b16 %v6910
        %v8220 = vunpack.c.l.b16 %v6911
        %v8221 = vunpack.c.h.b16 %v6911
        %v8222 = vunpack.c.l.b16 %v6912
        %v8223 = vunpack.c.h.b16 %v6912
        %v8224 = vunpack.c.l.b16 %v6913
        %v8225 = vunpack.c.h.b16 %v6913
        %v8226 = vunpack.c.l.b16 %v6914
        %v8227 = vunpack.c.h.b16 %v6914
        %v8228 = vunpack.c.l.b16 %v6915
        %v8229 = vunpack.c.h.b16 %v6915
        %v8230 = vunpack.c.l.b16 %v6916
        %v8231 = vunpack.c.h.b16 %v6916
        %v8232 = vunpack.c.l.b16 %v6917
        %v8233 = vunpack.c.h.b16 %v6917
        %v8234 = vunpack.c.l.b16 %v6918
        %v8235 = vunpack.c.h.b16 %v6918
        %v8236 = vunpack.c.l.b16 %v6919
        %v8237 = vunpack.c.h.b16 %v6919
        %v8238 = vunpack.c.l.b16 %v6920
        %v8239 = vunpack.c.h.b16 %v6920
        %v8240 = vunpack.c.l.b16 %v6921
        %v8241 = vunpack.c.h.b16 %v6921
        %v8242 = vunpack.c.l.b16 %v6922
        %v8243 = vunpack.c.h.b16 %v6922
        %v8244 = vunpack.c.l.b16 %v6923
        %v8245 = vunpack.c.h.b16 %v6923
        %v8246 = vunpack.c.l.b16 %v6924
        %v8247 = vunpack.c.h.b16 %v6924
        %v8248 = vunpack.c.l.b16 %v6925
        %v8249 = vunpack.c.h.b16 %v6925
        %v8250 = vunpack.c.l.b16 %v6926
        %v8251 = vunpack.c.h.b16 %v6926
        %v8252 = vunpack.c.l.b16 %v6927
        %v8253 = vunpack.c.h.b16 %v6927
        %v8254 = vunpack.c.l.b16 %v6928
        %v8255 = vunpack.c.h.b16 %v6928
        %v8256 = vunpack.c.l.b16 %v6929
        %v8257 = vunpack.c.h.b16 %v6929
        %v8258 = vunpack.c.l.b16 %v6930
        %v8259 = vunpack.c.h.b16 %v6930
        %v8260 = vunpack.c.l.b16 %v6931
        %v8261 = vunpack.c.h.b16 %v6931
        %v8262 = vunpack.c.l.b16 %v6932
        %v8263 = vunpack.c.h.b16 %v6932
        %v8264 = vunpack.c.l.b16 %v6933
        %v8265 = vunpack.c.h.b16 %v6933
        %v8266 = vunpack.c.l.b16 %v6934
        %v8267 = vunpack.c.h.b16 %v6934
        %v8268 = vunpack.c.l.b16 %v6935
        %v8269 = vunpack.c.h.b16 %v6935
        %v8270 = vunpack.c.l.b16 %v6936
        %v8271 = vunpack.c.h.b16 %v6936
        %v8272 = vunpack.c.l.b16 %v6937
        %v8273 = vunpack.c.h.b16 %v6937
        %v8274 = vunpack.c.l.b16 %v6938
        %v8275 = vunpack.c.h.b16 %v6938
        %v8276 = vunpack.c.l.b16 %v6939
        %v8277 = vunpack.c.h.b16 %v6939
        %v8278 = vunpack.c.l.b16 %v6940
        %v8279 = vunpack.c.h.b16 %v6940
        %v8280 = vunpack.c.l.b16 %v6941
        %v8281 = vunpack.c.h.b16 %v6941
        %v8282 = vunpack.c.l.b16 %v6942
        %v8283 = vunpack.c.h.b16 %v6942
        %v8284 = vunpack.c.l.b16 %v6943
        %v8285 = vunpack.c.h.b16 %v6943
        %v8286 = vunpack.c.l.b16 %v6944
        %v8287 = vunpack.c.h.b16 %v6944
        %v8288 = vunpack.c.l.b16 %v6945
        %v8289 = vunpack.c.h.b16 %v6945
        %v8290 = vunpack.c.l.b16 %v6946
        %v8291 = vunpack.c.h.b16 %v6946
        %v8292 = vunpack.c.l.b16 %v6947
        %v8293 = vunpack.c.h.b16 %v6947
        %v8294 = vunpack.c.l.b16 %v6948
        %v8295 = vunpack.c.h.b16 %v6948
        %v8296 = vunpack.c.l.b16 %v6949
        %v8297 = vunpack.c.h.b16 %v6949
        %v8298 = vunpack.c.l.b16 %v6950
        %v8299 = vunpack.c.h.b16 %v6950
        %v8300 = vunpack.c.l.b16 %v6951
        %v8301 = vunpack.c.h.b16 %v6951
        %v8302 = vunpack.c.l.b16 %v6952
        %v8303 = vunpack.c.h.b16 %v6952
        %v8304 = vunpack.c.l.b16 %v6953
        %v8305 = vunpack.c.h.b16 %v6953
        %v8306 = vunpack.c.l.b16 %v6954
        %v8307 = vunpack.c.h.b16 %v6954
        %v8308 = vunpack.c.l.b16 %v6955
        %v8309 = vunpack.c.h.b16 %v6955
        %v8310 = vunpack.c.l.b16 %v6956
        %v8311 = vunpack.c.h.b16 %v6956
        %v8312 = vunpack.c.l.b16 %v6957
        %v8313 = vunpack.c.h.b16 %v6957
        %v8314 = vunpack.c.l.b16 %v6958
        %v8315 = vunpack.c.h.b16 %v6958
        %v8316 = vunpack.c.l.b16 %v6959
        %v8317 = vunpack.c.h.b16 %v6959
        %v8318 = vunpack.c.l.b16 %v6960
        %v8319 = vunpack.c.h.b16 %v6960
        %v8320 = vunpack.c.l.b16 %v6961
        %v8321 = vunpack.c.h.b16 %v6961
        %v8322 = vunpack.c.l.b16 %v6962
        %v8323 = vunpack.c.h.b16 %v6962
        %v8324 = vpack.c.b16 %v8072, %v8068
        %v8325 = vpack.c.b16 %v8073, %v8069
        %v8326 = vpack.c.b16 %v8074, %v8070
        %v8327 = vpack.c.b16 %v8075, %v8071
        %v8328 = vpack.c.b16 %v8080, %v8076
        %v8329 = vpack.c.b16 %v8081, %v8077
        %v8330 = vpack.c.b16 %v8082, %v8078
        %v8331 = vpack.c.b16 %v8083, %v8079
        %v8332 = vpack.c.b16 %v8088, %v8084
        %v8333 = vpack.c.b16 %v8089, %v8085
        %v8334 = vpack.c.b16 %v8090, %v8086
        %v8335 = vpack.c.b16 %v8091, %v8087
        %v8336 = vpack.c.b16 %v8096, %v8092
        %v8337 = vpack.c.b16 %v8097, %v8093
        %v8338 = vpack.c.b16 %v8098, %v8094
        %v8339 = vpack.c.b16 %v8099, %v8095
        %v8340 = vpack.c.b16 %v8104, %v8100
        %v8341 = vpack.c.b16 %v8105, %v8101
        %v8342 = vpack.c.b16 %v8106, %v8102
        %v8343 = vpack.c.b16 %v8107, %v8103
        %v8344 = vpack.c.b16 %v8112, %v8108
        %v8345 = vpack.c.b16 %v8113, %v8109
        %v8346 = vpack.c.b16 %v8114, %v8110
        %v8347 = vpack.c.b16 %v8115, %v8111
        %v8348 = vpack.c.b16 %v8120, %v8116
        %v8349 = vpack.c.b16 %v8121, %v8117
        %v8350 = vpack.c.b16 %v8122, %v8118
        %v8351 = vpack.c.b16 %v8123, %v8119
        %v8352 = vpack.c.b16 %v8128, %v8124
        %v8353 = vpack.c.b16 %v8129, %v8125
        %v8354 = vpack.c.b16 %v8130, %v8126
        %v8355 = vpack.c.b16 %v8131, %v8127
        %v8356 = vpack.c.b16 %v8136, %v8132
        %v8357 = vpack.c.b16 %v8137, %v8133
        %v8358 = vpack.c.b16 %v8138, %v8134
        %v8359 = vpack.c.b16 %v8139, %v8135
        %v8360 = vpack.c.b16 %v8144, %v8140
        %v8361 = vpack.c.b16 %v8145, %v8141
        %v8362 = vpack.c.b16 %v8146, %v8142
        %v8363 = vpack.c.b16 %v8147, %v8143
        %v8364 = vpack.c.b16 %v8152, %v8148
        %v8365 = vpack.c.b16 %v8153, %v8149
        %v8366 = vpack.c.b16 %v8154, %v8150
        %v8367 = vpack.c.b16 %v8155, %v8151
        %v8368 = vpack.c.b16 %v8160, %v8156
        %v8369 = vpack.c.b16 %v8161, %v8157
        %v8370 = vpack.c.b16 %v8162, %v8158
        %v8371 = vpack.c.b16 %v8163, %v8159
        %v8372 = vpack.c.b16 %v8168, %v8164
        %v8373 = vpack.c.b16 %v8169, %v8165
        %v8374 = vpack.c.b16 %v8170, %v8166
        %v8375 = vpack.c.b16 %v8171, %v8167
        %v8376 = vpack.c.b16 %v8176, %v8172
        %v8377 = vpack.c.b16 %v8177, %v8173
        %v8378 = vpack.c.b16 %v8178, %v8174
        %v8379 = vpack.c.b16 %v8179, %v8175
        %v8380 = vpack.c.b16 %v8184, %v8180
        %v8381 = vpack.c.b16 %v8185, %v8181
        %v8382 = vpack.c.b16 %v8186, %v8182
        %v8383 = vpack.c.b16 %v8187, %v8183
        %v8384 = vpack.c.b16 %v8192, %v8188
        %v8385 = vpack.c.b16 %v8193, %v8189
        %v8386 = vpack.c.b16 %v8194, %v8190
        %v8387 = vpack.c.b16 %v8195, %v8191
        %v8388 = vpack.c.b16 %v8200, %v8196
        %v8389 = vpack.c.b16 %v8201, %v8197
        %v8390 = vpack.c.b16 %v8202, %v8198
        %v8391 = vpack.c.b16 %v8203, %v8199
        %v8392 = vpack.c.b16 %v8208, %v8204
        %v8393 = vpack.c.b16 %v8209, %v8205
        %v8394 = vpack.c.b16 %v8210, %v8206
        %v8395 = vpack.c.b16 %v8211, %v8207
        %v8396 = vpack.c.b16 %v8216, %v8212
        %v8397 = vpack.c.b16 %v8217, %v8213
        %v8398 = vpack.c.b16 %v8218, %v8214
        %v8399 = vpack.c.b16 %v8219, %v8215
        %v8400 = vpack.c.b16 %v8224, %v8220
        %v8401 = vpack.c.b16 %v8225, %v8221
        %v8402 = vpack.c.b16 %v8226, %v8222
        %v8403 = vpack.c.b16 %v8227, %v8223
        %v8404 = vpack.c.b16 %v8232, %v8228
        %v8405 = vpack.c.b16 %v8233, %v8229
        %v8406 = vpack.c.b16 %v8234, %v8230
        %v8407 = vpack.c.b16 %v8235, %v8231
        %v8408 = vpack.c.b16 %v8240, %v8236
        %v8409 = vpack.c.b16 %v8241, %v8237
        %v8410 = vpack.c.b16 %v8242, %v8238
        %v8411 = vpack.c.b16 %v8243, %v8239
        %v8412 = vpack.c.b16 %v8248, %v8244
        %v8413 = vpack.c.b16 %v8249, %v8245
        %v8414 = vpack.c.b16 %v8250, %v8246
        %v8415 = vpack.c.b16 %v8251, %v8247
        %v8416 = vpack.c.b16 %v8256, %v8252
        %v8417 = vpack.c.b16 %v8257, %v8253
        %v8418 = vpack.c.b16 %v8258, %v8254
        %v8419 = vpack.c.b16 %v8259, %v8255
        %v8420 = vpack.c.b16 %v8264, %v8260
        %v8421 = vpack.c.b16 %v8265, %v8261
        %v8422 = vpack.c.b16 %v8266, %v8262
        %v8423 = vpack.c.b16 %v8267, %v8263
        %v8424 = vpack.c.b16 %v8272, %v8268
        %v8425 = vpack.c.b16 %v8273, %v8269
        %v8426 = vpack.c.b16 %v8274, %v8270
        %v8427 = vpack.c.b16 %v8275, %v8271
        %v8428 = vpack.c.b16 %v8280, %v8276
        %v8429 = vpack.c.b16 %v8281, %v8277
        %v8430 = vpack.c.b16 %v8282, %v8278
        %v8431 = vpack.c.b16 %v8283, %v8279
        %v8432 = vpack.c.b16 %v8288, %v8284
        %v8433 = vpack.c.b16 %v8289, %v8285
        %v8434 = vpack.c.b16 %v8290, %v8286
        %v8435 = vpack.c.b16 %v8291, %v8287
        %v8436 = vpack.c.b16 %v8296, %v8292
        %v8437 = vpack.c.b16 %v8297, %v8293
        %v8438 = vpack.c.b16 %v8298, %v8294
        %v8439 = vpack.c.b16 %v8299, %v8295
        %v8440 = vpack.c.b16 %v8304, %v8300
        %v8441 = vpack.c.b16 %v8305, %v8301
        %v8442 = vpack.c.b16 %v8306, %v8302
        %v8443 = vpack.c.b16 %v8307, %v8303
        %v8444 = vpack.c.b16 %v8312, %v8308
        %v8445 = vpack.c.b16 %v8313, %v8309
        %v8446 = vpack.c.b16 %v8314, %v8310
        %v8447 = vpack.c.b16 %v8315, %v8311
        %v8448 = vpack.c.b16 %v8320, %v8316
        %v8449 = vpack.c.b16 %v8321, %v8317
        %v8450 = vpack.c.b16 %v8322, %v8318
        %v8451 = vpack.c.b16 %v8323, %v8319
        %8580 = vmatprep.subr.bf16.mxu0 %v8325
        %8581 = vmatpush1.bf16.msra.mxu0 %v8324
        %8582 = vmatprep.subr.bf16.mxu0 %v8329
        %8583 = vmatpush1.bf16.msra.mxu0 %v8328
        %8584 = vmatprep.subr.bf16.mxu0 %v8333
        %8585 = vmatpush1.bf16.msra.mxu0 %v8332
        %8586 = vmatprep.subr.bf16.mxu0 %v8337
        %8587 = vmatpush1.bf16.msra.mxu0 %v8336
        %8588 = vmatprep.subr.bf16.mxu0 %v8341
        %8589 = vmatpush1.bf16.msra.mxu0 %v8340
        %8590 = vmatprep.subr.bf16.mxu0 %v8345
        %8591 = vmatpush1.bf16.msra.mxu0 %v8344
        %8592 = vmatprep.subr.bf16.mxu0 %v8349
        %8593 = vmatpush1.bf16.msra.mxu0 %v8348
        %8594 = vmatprep.subr.bf16.mxu0 %v8353
        %8595 = vmatpush1.bf16.msra.mxu0 %v8352
        %8596 = vmatprep.subr.bf16.mxu0 %v8357
        %8597 = vmatpush1.bf16.msra.mxu0 %v8356
        %8598 = vmatprep.subr.bf16.mxu0 %v8361
        %8599 = vmatpush1.bf16.msra.mxu0 %v8360
        %8600 = vmatprep.subr.bf16.mxu0 %v8365
        %8601 = vmatpush1.bf16.msra.mxu0 %v8364
        %8602 = vmatprep.subr.bf16.mxu0 %v8369
        %8603 = vmatpush1.bf16.msra.mxu0 %v8368
        %8604 = vmatprep.subr.bf16.mxu0 %v8373
        %8605 = vmatpush1.bf16.msra.mxu0 %v8372
        %8606 = vmatprep.subr.bf16.mxu0 %v8377
        %8607 = vmatpush1.bf16.msra.mxu0 %v8376
        %8608 = vmatprep.subr.bf16.mxu0 %v8381
        %8609 = vmatpush1.bf16.msra.mxu0 %v8380
        %8610 = vmatprep.subr.bf16.mxu0 %v8385
        %8611 = vmatpush1.bf16.msra.mxu0 %v8384
        %8612 = vmatprep.mubr.bf16.mxu0 %v7919
        %8613 = vmatmul.mubr.bf16.gmra.mrb[0].mxu0 %v7911
        %v8614 = vpop.f32.mrb[0].mxu0
        %v8615 = vadd.f32 %v7816, %v8614
        %v8616 = vpop.f32.mrb[0].mxu0
        %v8617 = vadd.f32 %v7818, %v8616
        %v8618 = vpop.f32.mrb[0].mxu0
        %v8619 = vpop.f32.mrb[0].mxu0
        %8620 = vdwg.mxu0
        %8621 = vmatprep.subr.bf16.mxu0 %v8389
        %8622 = vmatpush1.bf16.msra.mxu0 %v8388
        %8623 = vmatprep.subr.bf16.mxu0 %v8393
        %8624 = vmatpush1.bf16.msra.mxu0 %v8392
        %8625 = vmatprep.subr.bf16.mxu0 %v8397
        %8626 = vmatpush1.bf16.msra.mxu0 %v8396
        %8627 = vmatprep.subr.bf16.mxu0 %v8401
        %8628 = vmatpush1.bf16.msra.mxu0 %v8400
        %8629 = vmatprep.subr.bf16.mxu0 %v8405
        %8630 = vmatpush1.bf16.msra.mxu0 %v8404
        %8631 = vmatprep.subr.bf16.mxu0 %v8409
        %8632 = vmatpush1.bf16.msra.mxu0 %v8408
        %8633 = vmatprep.subr.bf16.mxu0 %v8413
        %8634 = vmatpush1.bf16.msra.mxu0 %v8412
        %8635 = vmatprep.subr.bf16.mxu0 %v8417
        %8636 = vmatpush1.bf16.msra.mxu0 %v8416
        %8637 = vmatprep.subr.bf16.mxu0 %v8421
        %8638 = vmatpush1.bf16.msra.mxu0 %v8420
        %8639 = vmatprep.subr.bf16.mxu0 %v8425
        %8640 = vmatpush1.bf16.msra.mxu0 %v8424
        %8641 = vmatprep.subr.bf16.mxu0 %v8429
        %8642 = vmatpush1.bf16.msra.mxu0 %v8428
        %8643 = vmatprep.subr.bf16.mxu0 %v8433
        %8644 = vmatpush1.bf16.msra.mxu0 %v8432
        %8645 = vmatprep.subr.bf16.mxu0 %v8437
        %8646 = vmatpush1.bf16.msra.mxu0 %v8436
        %8647 = vmatprep.subr.bf16.mxu0 %v8441
        %8648 = vmatpush1.bf16.msra.mxu0 %v8440
        %8649 = vmatprep.subr.bf16.mxu0 %v8445
        %8650 = vmatpush1.bf16.msra.mxu0 %v8444
        %8651 = vmatprep.subr.bf16.mxu0 %v8449
        %8652 = vmatpush1.bf16.msra.mxu0 %v8448
        %8653 = vmatprep.mubr.bf16.mxu0 %v7935
        %8654 = vmatmul.mubr.bf16.gmra.mrb[0].mxu0 %v7927
        %v8655 = vpop.f32.mrb[0].mxu0
        %v8656 = vadd.f32 %v8615, %v8655
        %v8657 = vpop.f32.mrb[0].mxu0
        %v8658 = vadd.f32 %v8617, %v8657
        %v8659 = vpop.f32.mrb[0].mxu0
        %v8660 = vpop.f32.mrb[0].mxu0
        %8661 = vdwg.mxu0
        %8662 = vmatprep.subr.bf16.mxu0 %v8327
        %8663 = vmatpush1.bf16.msra.mxu0 %v8326
        %8664 = vmatprep.subr.bf16.mxu0 %v8331
        %8665 = vmatpush1.bf16.msra.mxu0 %v8330
        %8666 = vmatprep.subr.bf16.mxu0 %v8335
        %8667 = vmatpush1.bf16.msra.mxu0 %v8334
        %8668 = vmatprep.subr.bf16.mxu0 %v8339
        %8669 = vmatpush1.bf16.msra.mxu0 %v8338
        %8670 = vmatprep.subr.bf16.mxu0 %v8343
        %8671 = vmatpush1.bf16.msra.mxu0 %v8342
        %8672 = vmatprep.subr.bf16.mxu0 %v8347
        %8673 = vmatpush1.bf16.msra.mxu0 %v8346
        %8674 = vmatprep.subr.bf16.mxu0 %v8351
        %8675 = vmatpush1.bf16.msra.mxu0 %v8350
        %8676 = vmatprep.subr.bf16.mxu0 %v8355
        %8677 = vmatpush1.bf16.msra.mxu0 %v8354
        %8678 = vmatprep.subr.bf16.mxu0 %v8359
        %8679 = vmatpush1.bf16.msra.mxu0 %v8358
        %8680 = vmatprep.subr.bf16.mxu0 %v8363
        %8681 = vmatpush1.bf16.msra.mxu0 %v8362
        %8682 = vmatprep.subr.bf16.mxu0 %v8367
        %8683 = vmatpush1.bf16.msra.mxu0 %v8366
        %8684 = vmatprep.subr.bf16.mxu0 %v8371
        %8685 = vmatpush1.bf16.msra.mxu0 %v8370
        %8686 = vmatprep.subr.bf16.mxu0 %v8375
        %8687 = vmatpush1.bf16.msra.mxu0 %v8374
        %8688 = vmatprep.subr.bf16.mxu0 %v8379
        %8689 = vmatpush1.bf16.msra.mxu0 %v8378
        %8690 = vmatprep.subr.bf16.mxu0 %v8383
        %8691 = vmatpush1.bf16.msra.mxu0 %v8382
        %8692 = vmatprep.subr.bf16.mxu0 %v8387
        %8693 = vmatpush1.bf16.msra.mxu0 %v8386
        %8694 = vmatprep.mubr.bf16.mxu0 %v7919
        %8695 = vmatmul.mubr.bf16.gmra.mrb[0].mxu0 %v7911
        %v8696 = vpop.f32.mrb[0].mxu0
        %v8697 = vadd.f32 %v7898, %v8696
        %v8698 = vpop.f32.mrb[0].mxu0
        %v8699 = vadd.f32 %v7900, %v8698
        %v8700 = vpop.f32.mrb[0].mxu0
        %v8701 = vpop.f32.mrb[0].mxu0
        %8702 = vdwg.mxu0
        %8703 = vmatprep.subr.bf16.mxu0 %v8391
        %8704 = vmatpush1.bf16.msra.mxu0 %v8390
        %8705 = vmatprep.subr.bf16.mxu0 %v8395
        %8706 = vmatpush1.bf16.msra.mxu0 %v8394
        %8707 = vmatprep.subr.bf16.mxu0 %v8399
        %8708 = vmatpush1.bf16.msra.mxu0 %v8398
        %8709 = vmatprep.subr.bf16.mxu0 %v8403
        %8710 = vmatpush1.bf16.msra.mxu0 %v8402
        %8711 = vmatprep.subr.bf16.mxu0 %v8407
        %8712 = vmatpush1.bf16.msra.mxu0 %v8406
        %8713 = vmatprep.subr.bf16.mxu0 %v8411
        %8714 = vmatpush1.bf16.msra.mxu0 %v8410
        %8715 = vmatprep.subr.bf16.mxu0 %v8415
        %8716 = vmatpush1.bf16.msra.mxu0 %v8414
        %8717 = vmatprep.subr.bf16.mxu0 %v8419
        %8718 = vmatpush1.bf16.msra.mxu0 %v8418
        %8719 = vmatprep.subr.bf16.mxu0 %v8423
        %8720 = vmatpush1.bf16.msra.mxu0 %v8422
        %8721 = vmatprep.subr.bf16.mxu0 %v8427
        %8722 = vmatpush1.bf16.msra.mxu0 %v8426
        %8723 = vmatprep.subr.bf16.mxu0 %v8431
        %8724 = vmatpush1.bf16.msra.mxu0 %v8430
        %8725 = vmatprep.subr.bf16.mxu0 %v8435
        %8726 = vmatpush1.bf16.msra.mxu0 %v8434
        %8727 = vmatprep.subr.bf16.mxu0 %v8439
        %8728 = vmatpush1.bf16.msra.mxu0 %v8438
        %8729 = vmatprep.subr.bf16.mxu0 %v8443
        %8730 = vmatpush1.bf16.msra.mxu0 %v8442
        %8731 = vmatprep.subr.bf16.mxu0 %v8447
        %8732 = vmatpush1.bf16.msra.mxu0 %v8446
        %8733 = vmatprep.subr.bf16.mxu0 %v8451
        %8734 = vmatpush1.bf16.msra.mxu0 %v8450
        %8735 = vmatprep.mubr.bf16.mxu0 %v7935
        %8736 = vmatmul.mubr.bf16.gmra.mrb[0].mxu0 %v7927
        %v8737 = vpop.f32.mrb[0].mxu0
        %v8738 = vadd.f32 %v8697, %v8737
        %v8739 = vpop.f32.mrb[0].mxu0
        %v8740 = vadd.f32 %v8699, %v8739
        %v8741 = vpop.f32.mrb[0].mxu0
        %v8742 = vpop.f32.mrb[0].mxu0
        %8743 = vdwg.mxu0
        %v8744 = vld [vmem:[#allocation2 + $0x20] sm:$0x6]
        %v8745 = vld [vmem:[#allocation2 + $0x28] sm:$0x6]
        %v8746 = vld [vmem:[#allocation2 + $0x30] sm:$0x6]
        %v8747 = vld [vmem:[#allocation2 + $0x38] sm:$0x6]
        %v8748 = vpack.c.bf16 %v8744, %v8744
        %v8749 = vpack.c.bf16 %v8745, %v8745
        %v8750 = vpack.c.bf16 %v8746, %v8746
        %v8751 = vpack.c.bf16 %v8747, %v8747
        %s8752 = scalar_lea.vmem [#allocation23], 2048
        %v8753 = vld [vmem:[%s8752] sm:$0xff]
        %v8754 = vld [vmem:[%s8752 + $0x8] sm:$0xff]
        %v8755 = vld [vmem:[%s8752 + $0x10] sm:$0xff]
        %v8756 = vld [vmem:[%s8752 + $0x18] sm:$0xff]
        %v8757 = vld [vmem:[%s8752 + $0x20] sm:$0xff]
        %v8758 = vld [vmem:[%s8752 + $0x28] sm:$0xff]
        %v8759 = vld [vmem:[%s8752 + $0x30] sm:$0xff]
        %v8760 = vld [vmem:[%s8752 + $0x38] sm:$0xff]
        %v8761 = vld [vmem:[%s8752 + $0x40] sm:$0xff]
        %v8762 = vld [vmem:[%s8752 + $0x48] sm:$0xff]
        %v8763 = vld [vmem:[%s8752 + $0x50] sm:$0xff]
        %v8764 = vld [vmem:[%s8752 + $0x58] sm:$0xff]
        %v8765 = vld [vmem:[%s8752 + $0x60] sm:$0xff]
        %v8766 = vld [vmem:[%s8752 + $0x68] sm:$0xff]
        %v8767 = vld [vmem:[%s8752 + $0x70] sm:$0xff]
        %v8768 = vld [vmem:[%s8752 + $0x78] sm:$0xff]
        %v8769 = vld [vmem:[%s8752 + $0x80] sm:$0xff]
        %v8770 = vld [vmem:[%s8752 + $0x88] sm:$0xff]
        %v8771 = vld [vmem:[%s8752 + $0x90] sm:$0xff]
        %v8772 = vld [vmem:[%s8752 + $0x98] sm:$0xff]
        %v8773 = vld [vmem:[%s8752 + $0xa0] sm:$0xff]
        %v8774 = vld [vmem:[%s8752 + $0xa8] sm:$0xff]
        %v8775 = vld [vmem:[%s8752 + $0xb0] sm:$0xff]
        %v8776 = vld [vmem:[%s8752 + $0xb8] sm:$0xff]
        %v8777 = vld [vmem:[%s8752 + $0xc0] sm:$0xff]
        %v8778 = vld [vmem:[%s8752 + $0xc8] sm:$0xff]
        %v8779 = vld [vmem:[%s8752 + $0xd0] sm:$0xff]
        %v8780 = vld [vmem:[%s8752 + $0xd8] sm:$0xff]
        %v8781 = vld [vmem:[%s8752 + $0xe0] sm:$0xff]
        %v8782 = vld [vmem:[%s8752 + $0xe8] sm:$0xff]
        %v8783 = vld [vmem:[%s8752 + $0xf0] sm:$0xff]
        %v8784 = vld [vmem:[%s8752 + $0xf8] sm:$0xff]
        %v8785 = vld [vmem:[%s8752 + $0x100] sm:$0xff]
        %v8786 = vld [vmem:[%s8752 + $0x108] sm:$0xff]
        %v8787 = vld [vmem:[%s8752 + $0x110] sm:$0xff]
        %v8788 = vld [vmem:[%s8752 + $0x118] sm:$0xff]
        %v8789 = vld [vmem:[%s8752 + $0x120] sm:$0xff]
        %v8790 = vld [vmem:[%s8752 + $0x128] sm:$0xff]
        %v8791 = vld [vmem:[%s8752 + $0x130] sm:$0xff]
        %v8792 = vld [vmem:[%s8752 + $0x138] sm:$0xff]
        %v8793 = vld [vmem:[%s8752 + $0x140] sm:$0xff]
        %v8794 = vld [vmem:[%s8752 + $0x148] sm:$0xff]
        %v8795 = vld [vmem:[%s8752 + $0x150] sm:$0xff]
        %v8796 = vld [vmem:[%s8752 + $0x158] sm:$0xff]
        %v8797 = vld [vmem:[%s8752 + $0x160] sm:$0xff]
        %v8798 = vld [vmem:[%s8752 + $0x168] sm:$0xff]
        %v8799 = vld [vmem:[%s8752 + $0x170] sm:$0xff]
        %v8800 = vld [vmem:[%s8752 + $0x178] sm:$0xff]
        %v8801 = vld [vmem:[%s8752 + $0x180] sm:$0xff]
        %v8802 = vld [vmem:[%s8752 + $0x188] sm:$0xff]
        %v8803 = vld [vmem:[%s8752 + $0x190] sm:$0xff]
        %v8804 = vld [vmem:[%s8752 + $0x198] sm:$0xff]
        %v8805 = vld [vmem:[%s8752 + $0x1a0] sm:$0xff]
        %v8806 = vld [vmem:[%s8752 + $0x1a8] sm:$0xff]
        %v8807 = vld [vmem:[%s8752 + $0x1b0] sm:$0xff]
        %v8808 = vld [vmem:[%s8752 + $0x1b8] sm:$0xff]
        %v8809 = vld [vmem:[%s8752 + $0x1c0] sm:$0xff]
        %v8810 = vld [vmem:[%s8752 + $0x1c8] sm:$0xff]
        %v8811 = vld [vmem:[%s8752 + $0x1d0] sm:$0xff]
        %v8812 = vld [vmem:[%s8752 + $0x1d8] sm:$0xff]
        %v8813 = vld [vmem:[%s8752 + $0x1e0] sm:$0xff]
        %v8814 = vld [vmem:[%s8752 + $0x1e8] sm:$0xff]
        %v8815 = vld [vmem:[%s8752 + $0x1f0] sm:$0xff]
        %v8816 = vld [vmem:[%s8752 + $0x1f8] sm:$0xff]
        %v8817 = vld [vmem:[%s8752 + $0x200] sm:$0xff]
        %v8818 = vld [vmem:[%s8752 + $0x208] sm:$0xff]
        %v8819 = vld [vmem:[%s8752 + $0x210] sm:$0xff]
        %v8820 = vld [vmem:[%s8752 + $0x218] sm:$0xff]
        %v8821 = vld [vmem:[%s8752 + $0x220] sm:$0xff]
        %v8822 = vld [vmem:[%s8752 + $0x228] sm:$0xff]
        %v8823 = vld [vmem:[%s8752 + $0x230] sm:$0xff]
        %v8824 = vld [vmem:[%s8752 + $0x238] sm:$0xff]
        %v8825 = vld [vmem:[%s8752 + $0x240] sm:$0xff]
        %v8826 = vld [vmem:[%s8752 + $0x248] sm:$0xff]
        %v8827 = vld [vmem:[%s8752 + $0x250] sm:$0xff]
        %v8828 = vld [vmem:[%s8752 + $0x258] sm:$0xff]
        %v8829 = vld [vmem:[%s8752 + $0x260] sm:$0xff]
        %v8830 = vld [vmem:[%s8752 + $0x268] sm:$0xff]
        %v8831 = vld [vmem:[%s8752 + $0x270] sm:$0xff]
        %v8832 = vld [vmem:[%s8752 + $0x278] sm:$0xff]
        %v8833 = vld [vmem:[%s8752 + $0x280] sm:$0xff]
        %v8834 = vld [vmem:[%s8752 + $0x288] sm:$0xff]
        %v8835 = vld [vmem:[%s8752 + $0x290] sm:$0xff]
        %v8836 = vld [vmem:[%s8752 + $0x298] sm:$0xff]
        %v8837 = vld [vmem:[%s8752 + $0x2a0] sm:$0xff]
        %v8838 = vld [vmem:[%s8752 + $0x2a8] sm:$0xff]
        %v8839 = vld [vmem:[%s8752 + $0x2b0] sm:$0xff]
        %v8840 = vld [vmem:[%s8752 + $0x2b8] sm:$0xff]
        %v8841 = vld [vmem:[%s8752 + $0x2c0] sm:$0xff]
        %v8842 = vld [vmem:[%s8752 + $0x2c8] sm:$0xff]
        %v8843 = vld [vmem:[%s8752 + $0x2d0] sm:$0xff]
        %v8844 = vld [vmem:[%s8752 + $0x2d8] sm:$0xff]
        %v8845 = vld [vmem:[%s8752 + $0x2e0] sm:$0xff]
        %v8846 = vld [vmem:[%s8752 + $0x2e8] sm:$0xff]
        %v8847 = vld [vmem:[%s8752 + $0x2f0] sm:$0xff]
        %v8848 = vld [vmem:[%s8752 + $0x2f8] sm:$0xff]
        %v8849 = vld [vmem:[%s8752 + $0x300] sm:$0xff]
        %v8850 = vld [vmem:[%s8752 + $0x308] sm:$0xff]
        %v8851 = vld [vmem:[%s8752 + $0x310] sm:$0xff]
        %v8852 = vld [vmem:[%s8752 + $0x318] sm:$0xff]
        %v8853 = vld [vmem:[%s8752 + $0x320] sm:$0xff]
        %v8854 = vld [vmem:[%s8752 + $0x328] sm:$0xff]
        %v8855 = vld [vmem:[%s8752 + $0x330] sm:$0xff]
        %v8856 = vld [vmem:[%s8752 + $0x338] sm:$0xff]
        %v8857 = vld [vmem:[%s8752 + $0x340] sm:$0xff]
        %v8858 = vld [vmem:[%s8752 + $0x348] sm:$0xff]
        %v8859 = vld [vmem:[%s8752 + $0x350] sm:$0xff]
        %v8860 = vld [vmem:[%s8752 + $0x358] sm:$0xff]
        %v8861 = vld [vmem:[%s8752 + $0x360] sm:$0xff]
        %v8862 = vld [vmem:[%s8752 + $0x368] sm:$0xff]
        %v8863 = vld [vmem:[%s8752 + $0x370] sm:$0xff]
        %v8864 = vld [vmem:[%s8752 + $0x378] sm:$0xff]
        %v8865 = vld [vmem:[%s8752 + $0x380] sm:$0xff]
        %v8866 = vld [vmem:[%s8752 + $0x388] sm:$0xff]
        %v8867 = vld [vmem:[%s8752 + $0x390] sm:$0xff]
        %v8868 = vld [vmem:[%s8752 + $0x398] sm:$0xff]
        %v8869 = vld [vmem:[%s8752 + $0x3a0] sm:$0xff]
        %v8870 = vld [vmem:[%s8752 + $0x3a8] sm:$0xff]
        %v8871 = vld [vmem:[%s8752 + $0x3b0] sm:$0xff]
        %v8872 = vld [vmem:[%s8752 + $0x3b8] sm:$0xff]
        %v8873 = vld [vmem:[%s8752 + $0x3c0] sm:$0xff]
        %v8874 = vld [vmem:[%s8752 + $0x3c8] sm:$0xff]
        %v8875 = vld [vmem:[%s8752 + $0x3d0] sm:$0xff]
        %v8876 = vld [vmem:[%s8752 + $0x3d8] sm:$0xff]
        %v8877 = vld [vmem:[%s8752 + $0x3e0] sm:$0xff]
        %v8878 = vld [vmem:[%s8752 + $0x3e8] sm:$0xff]
        %v8879 = vld [vmem:[%s8752 + $0x3f0] sm:$0xff]
        %v8880 = vld [vmem:[%s8752 + $0x3f8] sm:$0xff]
        %v8882 = vshrl.u32 %v8748, 16
        %v8884 = vshll.u32 %v8748, 16
        %v8886 = vrot.slane %v8884, 1
        %v8887 = vor.u32 %v8882, %v8886
        %v8889 = vshrl.u32 %v8749, 16
        %v8891 = vshll.u32 %v8749, 16
        %v8893 = vrot.slane %v8891, 1
        %v8894 = vor.u32 %v8889, %v8893
        %v8896 = vshrl.u32 %v8750, 16
        %v8898 = vshll.u32 %v8750, 16
        %v8900 = vrot.slane %v8898, 1
        %v8901 = vor.u32 %v8896, %v8900
        %v8903 = vshrl.u32 %v8751, 16
        %v8905 = vshll.u32 %v8751, 16
        %v8907 = vrot.slane %v8905, 1
        %v8908 = vor.u32 %v8903, %v8907
        %v9041 = vunpack.c.l.b16 %v8753
        %v9042 = vunpack.c.h.b16 %v8753
        %v9043 = vunpack.c.l.b16 %v8754
        %v9044 = vunpack.c.h.b16 %v8754
        %v9045 = vunpack.c.l.b16 %v8755
        %v9046 = vunpack.c.h.b16 %v8755
        %v9047 = vunpack.c.l.b16 %v8756
        %v9048 = vunpack.c.h.b16 %v8756
        %v9049 = vunpack.c.l.b16 %v8757
        %v9050 = vunpack.c.h.b16 %v8757
        %v9051 = vunpack.c.l.b16 %v8758
        %v9052 = vunpack.c.h.b16 %v8758
        %v9053 = vunpack.c.l.b16 %v8759
        %v9054 = vunpack.c.h.b16 %v8759
        %v9055 = vunpack.c.l.b16 %v8760
        %v9056 = vunpack.c.h.b16 %v8760
        %v9057 = vunpack.c.l.b16 %v8761
        %v9058 = vunpack.c.h.b16 %v8761
        %v9059 = vunpack.c.l.b16 %v8762
        %v9060 = vunpack.c.h.b16 %v8762
        %v9061 = vunpack.c.l.b16 %v8763
        %v9062 = vunpack.c.h.b16 %v8763
        %v9063 = vunpack.c.l.b16 %v8764
        %v9064 = vunpack.c.h.b16 %v8764
        %v9065 = vunpack.c.l.b16 %v8765
        %v9066 = vunpack.c.h.b16 %v8765
        %v9067 = vunpack.c.l.b16 %v8766
        %v9068 = vunpack.c.h.b16 %v8766
        %v9069 = vunpack.c.l.b16 %v8767
        %v9070 = vunpack.c.h.b16 %v8767
        %v9071 = vunpack.c.l.b16 %v8768
        %v9072 = vunpack.c.h.b16 %v8768
        %v9073 = vunpack.c.l.b16 %v8769
        %v9074 = vunpack.c.h.b16 %v8769
        %v9075 = vunpack.c.l.b16 %v8770
        %v9076 = vunpack.c.h.b16 %v8770
        %v9077 = vunpack.c.l.b16 %v8771
        %v9078 = vunpack.c.h.b16 %v8771
        %v9079 = vunpack.c.l.b16 %v8772
        %v9080 = vunpack.c.h.b16 %v8772
        %v9081 = vunpack.c.l.b16 %v8773
        %v9082 = vunpack.c.h.b16 %v8773
        %v9083 = vunpack.c.l.b16 %v8774
        %v9084 = vunpack.c.h.b16 %v8774
        %v9085 = vunpack.c.l.b16 %v8775
        %v9086 = vunpack.c.h.b16 %v8775
        %v9087 = vunpack.c.l.b16 %v8776
        %v9088 = vunpack.c.h.b16 %v8776
        %v9089 = vunpack.c.l.b16 %v8777
        %v9090 = vunpack.c.h.b16 %v8777
        %v9091 = vunpack.c.l.b16 %v8778
        %v9092 = vunpack.c.h.b16 %v8778
        %v9093 = vunpack.c.l.b16 %v8779
        %v9094 = vunpack.c.h.b16 %v8779
        %v9095 = vunpack.c.l.b16 %v8780
        %v9096 = vunpack.c.h.b16 %v8780
        %v9097 = vunpack.c.l.b16 %v8781
        %v9098 = vunpack.c.h.b16 %v8781
        %v9099 = vunpack.c.l.b16 %v8782
        %v9100 = vunpack.c.h.b16 %v8782
        %v9101 = vunpack.c.l.b16 %v8783
        %v9102 = vunpack.c.h.b16 %v8783
        %v9103 = vunpack.c.l.b16 %v8784
        %v9104 = vunpack.c.h.b16 %v8784
        %v9105 = vunpack.c.l.b16 %v8785
        %v9106 = vunpack.c.h.b16 %v8785
        %v9107 = vunpack.c.l.b16 %v8786
        %v9108 = vunpack.c.h.b16 %v8786
        %v9109 = vunpack.c.l.b16 %v8787
        %v9110 = vunpack.c.h.b16 %v8787
        %v9111 = vunpack.c.l.b16 %v8788
        %v9112 = vunpack.c.h.b16 %v8788
        %v9113 = vunpack.c.l.b16 %v8789
        %v9114 = vunpack.c.h.b16 %v8789
        %v9115 = vunpack.c.l.b16 %v8790
        %v9116 = vunpack.c.h.b16 %v8790
        %v9117 = vunpack.c.l.b16 %v8791
        %v9118 = vunpack.c.h.b16 %v8791
        %v9119 = vunpack.c.l.b16 %v8792
        %v9120 = vunpack.c.h.b16 %v8792
        %v9121 = vunpack.c.l.b16 %v8793
        %v9122 = vunpack.c.h.b16 %v8793
        %v9123 = vunpack.c.l.b16 %v8794
        %v9124 = vunpack.c.h.b16 %v8794
        %v9125 = vunpack.c.l.b16 %v8795
        %v9126 = vunpack.c.h.b16 %v8795
        %v9127 = vunpack.c.l.b16 %v8796
        %v9128 = vunpack.c.h.b16 %v8796
        %v9129 = vunpack.c.l.b16 %v8797
        %v9130 = vunpack.c.h.b16 %v8797
        %v9131 = vunpack.c.l.b16 %v8798
        %v9132 = vunpack.c.h.b16 %v8798
        %v9133 = vunpack.c.l.b16 %v8799
        %v9134 = vunpack.c.h.b16 %v8799
        %v9135 = vunpack.c.l.b16 %v8800
        %v9136 = vunpack.c.h.b16 %v8800
        %v9137 = vunpack.c.l.b16 %v8801
        %v9138 = vunpack.c.h.b16 %v8801
        %v9139 = vunpack.c.l.b16 %v8802
        %v9140 = vunpack.c.h.b16 %v8802
        %v9141 = vunpack.c.l.b16 %v8803
        %v9142 = vunpack.c.h.b16 %v8803
        %v9143 = vunpack.c.l.b16 %v8804
        %v9144 = vunpack.c.h.b16 %v8804
        %v9145 = vunpack.c.l.b16 %v8805
        %v9146 = vunpack.c.h.b16 %v8805
        %v9147 = vunpack.c.l.b16 %v8806
        %v9148 = vunpack.c.h.b16 %v8806
        %v9149 = vunpack.c.l.b16 %v8807
        %v9150 = vunpack.c.h.b16 %v8807
        %v9151 = vunpack.c.l.b16 %v8808
        %v9152 = vunpack.c.h.b16 %v8808
        %v9153 = vunpack.c.l.b16 %v8809
        %v9154 = vunpack.c.h.b16 %v8809
        %v9155 = vunpack.c.l.b16 %v8810
        %v9156 = vunpack.c.h.b16 %v8810
        %v9157 = vunpack.c.l.b16 %v8811
        %v9158 = vunpack.c.h.b16 %v8811
        %v9159 = vunpack.c.l.b16 %v8812
        %v9160 = vunpack.c.h.b16 %v8812
        %v9161 = vunpack.c.l.b16 %v8813
        %v9162 = vunpack.c.h.b16 %v8813
        %v9163 = vunpack.c.l.b16 %v8814
        %v9164 = vunpack.c.h.b16 %v8814
        %v9165 = vunpack.c.l.b16 %v8815
        %v9166 = vunpack.c.h.b16 %v8815
        %v9167 = vunpack.c.l.b16 %v8816
        %v9168 = vunpack.c.h.b16 %v8816
        %v9169 = vunpack.c.l.b16 %v8817
        %v9170 = vunpack.c.h.b16 %v8817
        %v9171 = vunpack.c.l.b16 %v8818
        %v9172 = vunpack.c.h.b16 %v8818
        %v9173 = vunpack.c.l.b16 %v8819
        %v9174 = vunpack.c.h.b16 %v8819
        %v9175 = vunpack.c.l.b16 %v8820
        %v9176 = vunpack.c.h.b16 %v8820
        %v9177 = vunpack.c.l.b16 %v8821
        %v9178 = vunpack.c.h.b16 %v8821
        %v9179 = vunpack.c.l.b16 %v8822
        %v9180 = vunpack.c.h.b16 %v8822
        %v9181 = vunpack.c.l.b16 %v8823
        %v9182 = vunpack.c.h.b16 %v8823
        %v9183 = vunpack.c.l.b16 %v8824
        %v9184 = vunpack.c.h.b16 %v8824
        %v9185 = vunpack.c.l.b16 %v8825
        %v9186 = vunpack.c.h.b16 %v8825
        %v9187 = vunpack.c.l.b16 %v8826
        %v9188 = vunpack.c.h.b16 %v8826
        %v9189 = vunpack.c.l.b16 %v8827
        %v9190 = vunpack.c.h.b16 %v8827
        %v9191 = vunpack.c.l.b16 %v8828
        %v9192 = vunpack.c.h.b16 %v8828
        %v9193 = vunpack.c.l.b16 %v8829
        %v9194 = vunpack.c.h.b16 %v8829
        %v9195 = vunpack.c.l.b16 %v8830
        %v9196 = vunpack.c.h.b16 %v8830
        %v9197 = vunpack.c.l.b16 %v8831
        %v9198 = vunpack.c.h.b16 %v8831
        %v9199 = vunpack.c.l.b16 %v8832
        %v9200 = vunpack.c.h.b16 %v8832
        %v9201 = vunpack.c.l.b16 %v8833
        %v9202 = vunpack.c.h.b16 %v8833
        %v9203 = vunpack.c.l.b16 %v8834
        %v9204 = vunpack.c.h.b16 %v8834
        %v9205 = vunpack.c.l.b16 %v8835
        %v9206 = vunpack.c.h.b16 %v8835
        %v9207 = vunpack.c.l.b16 %v8836
        %v9208 = vunpack.c.h.b16 %v8836
        %v9209 = vunpack.c.l.b16 %v8837
        %v9210 = vunpack.c.h.b16 %v8837
        %v9211 = vunpack.c.l.b16 %v8838
        %v9212 = vunpack.c.h.b16 %v8838
        %v9213 = vunpack.c.l.b16 %v8839
        %v9214 = vunpack.c.h.b16 %v8839
        %v9215 = vunpack.c.l.b16 %v8840
        %v9216 = vunpack.c.h.b16 %v8840
        %v9217 = vunpack.c.l.b16 %v8841
        %v9218 = vunpack.c.h.b16 %v8841
        %v9219 = vunpack.c.l.b16 %v8842
        %v9220 = vunpack.c.h.b16 %v8842
        %v9221 = vunpack.c.l.b16 %v8843
        %v9222 = vunpack.c.h.b16 %v8843
        %v9223 = vunpack.c.l.b16 %v8844
        %v9224 = vunpack.c.h.b16 %v8844
        %v9225 = vunpack.c.l.b16 %v8845
        %v9226 = vunpack.c.h.b16 %v8845
        %v9227 = vunpack.c.l.b16 %v8846
        %v9228 = vunpack.c.h.b16 %v8846
        %v9229 = vunpack.c.l.b16 %v8847
        %v9230 = vunpack.c.h.b16 %v8847
        %v9231 = vunpack.c.l.b16 %v8848
        %v9232 = vunpack.c.h.b16 %v8848
        %v9233 = vunpack.c.l.b16 %v8849
        %v9234 = vunpack.c.h.b16 %v8849
        %v9235 = vunpack.c.l.b16 %v8850
        %v9236 = vunpack.c.h.b16 %v8850
        %v9237 = vunpack.c.l.b16 %v8851
        %v9238 = vunpack.c.h.b16 %v8851
        %v9239 = vunpack.c.l.b16 %v8852
        %v9240 = vunpack.c.h.b16 %v8852
        %v9241 = vunpack.c.l.b16 %v8853
        %v9242 = vunpack.c.h.b16 %v8853
        %v9243 = vunpack.c.l.b16 %v8854
        %v9244 = vunpack.c.h.b16 %v8854
        %v9245 = vunpack.c.l.b16 %v8855
        %v9246 = vunpack.c.h.b16 %v8855
        %v9247 = vunpack.c.l.b16 %v8856
        %v9248 = vunpack.c.h.b16 %v8856
        %v9249 = vunpack.c.l.b16 %v8857
        %v9250 = vunpack.c.h.b16 %v8857
        %v9251 = vunpack.c.l.b16 %v8858
        %v9252 = vunpack.c.h.b16 %v8858
        %v9253 = vunpack.c.l.b16 %v8859
        %v9254 = vunpack.c.h.b16 %v8859
        %v9255 = vunpack.c.l.b16 %v8860
        %v9256 = vunpack.c.h.b16 %v8860
        %v9257 = vunpack.c.l.b16 %v8861
        %v9258 = vunpack.c.h.b16 %v8861
        %v9259 = vunpack.c.l.b16 %v8862
        %v9260 = vunpack.c.h.b16 %v8862
        %v9261 = vunpack.c.l.b16 %v8863
        %v9262 = vunpack.c.h.b16 %v8863
        %v9263 = vunpack.c.l.b16 %v8864
        %v9264 = vunpack.c.h.b16 %v8864
        %v9265 = vunpack.c.l.b16 %v8865
        %v9266 = vunpack.c.h.b16 %v8865
        %v9267 = vunpack.c.l.b16 %v8866
        %v9268 = vunpack.c.h.b16 %v8866
        %v9269 = vunpack.c.l.b16 %v8867
        %v9270 = vunpack.c.h.b16 %v8867
        %v9271 = vunpack.c.l.b16 %v8868
        %v9272 = vunpack.c.h.b16 %v8868
        %v9273 = vunpack.c.l.b16 %v8869
        %v9274 = vunpack.c.h.b16 %v8869
        %v9275 = vunpack.c.l.b16 %v8870
        %v9276 = vunpack.c.h.b16 %v8870
        %v9277 = vunpack.c.l.b16 %v8871
        %v9278 = vunpack.c.h.b16 %v8871
        %v9279 = vunpack.c.l.b16 %v8872
        %v9280 = vunpack.c.h.b16 %v8872
        %v9281 = vunpack.c.l.b16 %v8873
        %v9282 = vunpack.c.h.b16 %v8873
        %v9283 = vunpack.c.l.b16 %v8874
        %v9284 = vunpack.c.h.b16 %v8874
        %v9285 = vunpack.c.l.b16 %v8875
        %v9286 = vunpack.c.h.b16 %v8875
        %v9287 = vunpack.c.l.b16 %v8876
        %v9288 = vunpack.c.h.b16 %v8876
        %v9289 = vunpack.c.l.b16 %v8877
        %v9290 = vunpack.c.h.b16 %v8877
        %v9291 = vunpack.c.l.b16 %v8878
        %v9292 = vunpack.c.h.b16 %v8878
        %v9293 = vunpack.c.l.b16 %v8879
        %v9294 = vunpack.c.h.b16 %v8879
        %v9295 = vunpack.c.l.b16 %v8880
        %v9296 = vunpack.c.h.b16 %v8880
        %v9297 = vpack.c.b16 %v9045, %v9041
        %v9298 = vpack.c.b16 %v9046, %v9042
        %v9299 = vpack.c.b16 %v9047, %v9043
        %v9300 = vpack.c.b16 %v9048, %v9044
        %v9301 = vpack.c.b16 %v9053, %v9049
        %v9302 = vpack.c.b16 %v9054, %v9050
        %v9303 = vpack.c.b16 %v9055, %v9051
        %v9304 = vpack.c.b16 %v9056, %v9052
        %v9305 = vpack.c.b16 %v9061, %v9057
        %v9306 = vpack.c.b16 %v9062, %v9058
        %v9307 = vpack.c.b16 %v9063, %v9059
        %v9308 = vpack.c.b16 %v9064, %v9060
        %v9309 = vpack.c.b16 %v9069, %v9065
        %v9310 = vpack.c.b16 %v9070, %v9066
        %v9311 = vpack.c.b16 %v9071, %v9067
        %v9312 = vpack.c.b16 %v9072, %v9068
        %v9313 = vpack.c.b16 %v9077, %v9073
        %v9314 = vpack.c.b16 %v9078, %v9074
        %v9315 = vpack.c.b16 %v9079, %v9075
        %v9316 = vpack.c.b16 %v9080, %v9076
        %v9317 = vpack.c.b16 %v9085, %v9081
        %v9318 = vpack.c.b16 %v9086, %v9082
        %v9319 = vpack.c.b16 %v9087, %v9083
        %v9320 = vpack.c.b16 %v9088, %v9084
        %v9321 = vpack.c.b16 %v9093, %v9089
        %v9322 = vpack.c.b16 %v9094, %v9090
        %v9323 = vpack.c.b16 %v9095, %v9091
        %v9324 = vpack.c.b16 %v9096, %v9092
        %v9325 = vpack.c.b16 %v9101, %v9097
        %v9326 = vpack.c.b16 %v9102, %v9098
        %v9327 = vpack.c.b16 %v9103, %v9099
        %v9328 = vpack.c.b16 %v9104, %v9100
        %v9329 = vpack.c.b16 %v9109, %v9105
        %v9330 = vpack.c.b16 %v9110, %v9106
        %v9331 = vpack.c.b16 %v9111, %v9107
        %v9332 = vpack.c.b16 %v9112, %v9108
        %v9333 = vpack.c.b16 %v9117, %v9113
        %v9334 = vpack.c.b16 %v9118, %v9114
        %v9335 = vpack.c.b16 %v9119, %v9115
        %v9336 = vpack.c.b16 %v9120, %v9116
        %v9337 = vpack.c.b16 %v9125, %v9121
        %v9338 = vpack.c.b16 %v9126, %v9122
        %v9339 = vpack.c.b16 %v9127, %v9123
        %v9340 = vpack.c.b16 %v9128, %v9124
        %v9341 = vpack.c.b16 %v9133, %v9129
        %v9342 = vpack.c.b16 %v9134, %v9130
        %v9343 = vpack.c.b16 %v9135, %v9131
        %v9344 = vpack.c.b16 %v9136, %v9132
        %v9345 = vpack.c.b16 %v9141, %v9137
        %v9346 = vpack.c.b16 %v9142, %v9138
        %v9347 = vpack.c.b16 %v9143, %v9139
        %v9348 = vpack.c.b16 %v9144, %v9140
        %v9349 = vpack.c.b16 %v9149, %v9145
        %v9350 = vpack.c.b16 %v9150, %v9146
        %v9351 = vpack.c.b16 %v9151, %v9147
        %v9352 = vpack.c.b16 %v9152, %v9148
        %v9353 = vpack.c.b16 %v9157, %v9153
        %v9354 = vpack.c.b16 %v9158, %v9154
        %v9355 = vpack.c.b16 %v9159, %v9155
        %v9356 = vpack.c.b16 %v9160, %v9156
        %v9357 = vpack.c.b16 %v9165, %v9161
        %v9358 = vpack.c.b16 %v9166, %v9162
        %v9359 = vpack.c.b16 %v9167, %v9163
        %v9360 = vpack.c.b16 %v9168, %v9164
        %v9361 = vpack.c.b16 %v9173, %v9169
        %v9362 = vpack.c.b16 %v9174, %v9170
        %v9363 = vpack.c.b16 %v9175, %v9171
        %v9364 = vpack.c.b16 %v9176, %v9172
        %v9365 = vpack.c.b16 %v9181, %v9177
        %v9366 = vpack.c.b16 %v9182, %v9178
        %v9367 = vpack.c.b16 %v9183, %v9179
        %v9368 = vpack.c.b16 %v9184, %v9180
        %v9369 = vpack.c.b16 %v9189, %v9185
        %v9370 = vpack.c.b16 %v9190, %v9186
        %v9371 = vpack.c.b16 %v9191, %v9187
        %v9372 = vpack.c.b16 %v9192, %v9188
        %v9373 = vpack.c.b16 %v9197, %v9193
        %v9374 = vpack.c.b16 %v9198, %v9194
        %v9375 = vpack.c.b16 %v9199, %v9195
        %v9376 = vpack.c.b16 %v9200, %v9196
        %v9377 = vpack.c.b16 %v9205, %v9201
        %v9378 = vpack.c.b16 %v9206, %v9202
        %v9379 = vpack.c.b16 %v9207, %v9203
        %v9380 = vpack.c.b16 %v9208, %v9204
        %v9381 = vpack.c.b16 %v9213, %v9209
        %v9382 = vpack.c.b16 %v9214, %v9210
        %v9383 = vpack.c.b16 %v9215, %v9211
        %v9384 = vpack.c.b16 %v9216, %v9212
        %v9385 = vpack.c.b16 %v9221, %v9217
        %v9386 = vpack.c.b16 %v9222, %v9218
        %v9387 = vpack.c.b16 %v9223, %v9219
        %v9388 = vpack.c.b16 %v9224, %v9220
        %v9389 = vpack.c.b16 %v9229, %v9225
        %v9390 = vpack.c.b16 %v9230, %v9226
        %v9391 = vpack.c.b16 %v9231, %v9227
        %v9392 = vpack.c.b16 %v9232, %v9228
        %v9393 = vpack.c.b16 %v9237, %v9233
        %v9394 = vpack.c.b16 %v9238, %v9234
        %v9395 = vpack.c.b16 %v9239, %v9235
        %v9396 = vpack.c.b16 %v9240, %v9236
        %v9397 = vpack.c.b16 %v9245, %v9241
        %v9398 = vpack.c.b16 %v9246, %v9242
        %v9399 = vpack.c.b16 %v9247, %v9243
        %v9400 = vpack.c.b16 %v9248, %v9244
        %v9401 = vpack.c.b16 %v9253, %v9249
        %v9402 = vpack.c.b16 %v9254, %v9250
        %v9403 = vpack.c.b16 %v9255, %v9251
        %v9404 = vpack.c.b16 %v9256, %v9252
        %v9405 = vpack.c.b16 %v9261, %v9257
        %v9406 = vpack.c.b16 %v9262, %v9258
        %v9407 = vpack.c.b16 %v9263, %v9259
        %v9408 = vpack.c.b16 %v9264, %v9260
        %v9409 = vpack.c.b16 %v9269, %v9265
        %v9410 = vpack.c.b16 %v9270, %v9266
        %v9411 = vpack.c.b16 %v9271, %v9267
        %v9412 = vpack.c.b16 %v9272, %v9268
        %v9413 = vpack.c.b16 %v9277, %v9273
        %v9414 = vpack.c.b16 %v9278, %v9274
        %v9415 = vpack.c.b16 %v9279, %v9275
        %v9416 = vpack.c.b16 %v9280, %v9276
        %v9417 = vpack.c.b16 %v9285, %v9281
        %v9418 = vpack.c.b16 %v9286, %v9282
        %v9419 = vpack.c.b16 %v9287, %v9283
        %v9420 = vpack.c.b16 %v9288, %v9284
        %v9421 = vpack.c.b16 %v9293, %v9289
        %v9422 = vpack.c.b16 %v9294, %v9290
        %v9423 = vpack.c.b16 %v9295, %v9291
        %v9424 = vpack.c.b16 %v9296, %v9292
        %9553 = vmatprep.subr.bf16.mxu0 %v9298
        %9554 = vmatpush1.bf16.msra.mxu0 %v9297
        %9555 = vmatprep.subr.bf16.mxu0 %v9302
        %9556 = vmatpush1.bf16.msra.mxu0 %v9301
        %9557 = vmatprep.subr.bf16.mxu0 %v9306
        %9558 = vmatpush1.bf16.msra.mxu0 %v9305
        %9559 = vmatprep.subr.bf16.mxu0 %v9310
        %9560 = vmatpush1.bf16.msra.mxu0 %v9309
        %9561 = vmatprep.subr.bf16.mxu0 %v9314
        %9562 = vmatpush1.bf16.msra.mxu0 %v9313
        %9563 = vmatprep.subr.bf16.mxu0 %v9318
        %9564 = vmatpush1.bf16.msra.mxu0 %v9317
        %9565 = vmatprep.subr.bf16.mxu0 %v9322
        %9566 = vmatpush1.bf16.msra.mxu0 %v9321
        %9567 = vmatprep.subr.bf16.mxu0 %v9326
        %9568 = vmatpush1.bf16.msra.mxu0 %v9325
        %9569 = vmatprep.subr.bf16.mxu0 %v9330
        %9570 = vmatpush1.bf16.msra.mxu0 %v9329
        %9571 = vmatprep.subr.bf16.mxu0 %v9334
        %9572 = vmatpush1.bf16.msra.mxu0 %v9333
        %9573 = vmatprep.subr.bf16.mxu0 %v9338
        %9574 = vmatpush1.bf16.msra.mxu0 %v9337
        %9575 = vmatprep.subr.bf16.mxu0 %v9342
        %9576 = vmatpush1.bf16.msra.mxu0 %v9341
        %9577 = vmatprep.subr.bf16.mxu0 %v9346
        %9578 = vmatpush1.bf16.msra.mxu0 %v9345
        %9579 = vmatprep.subr.bf16.mxu0 %v9350
        %9580 = vmatpush1.bf16.msra.mxu0 %v9349
        %9581 = vmatprep.subr.bf16.mxu0 %v9354
        %9582 = vmatpush1.bf16.msra.mxu0 %v9353
        %9583 = vmatprep.subr.bf16.mxu0 %v9358
        %9584 = vmatpush1.bf16.msra.mxu0 %v9357
        %9585 = vmatprep.mubr.bf16.mxu0 %v8894
        %9586 = vmatmul.mubr.bf16.gmra.mrb[0].mxu0 %v8887
        %v9587 = vpop.f32.mrb[0].mxu0
        %v9588 = vadd.f32 0.0, %v9587
        %v9589 = vpop.f32.mrb[0].mxu0
        %v9590 = vadd.f32 0.0, %v9589
        %v9591 = vpop.f32.mrb[0].mxu0
        %v9592 = vpop.f32.mrb[0].mxu0
        %9593 = vdwg.mxu0
        %9594 = vmatprep.subr.bf16.mxu0 %v9362
        %9595 = vmatpush1.bf16.msra.mxu0 %v9361
        %9596 = vmatprep.subr.bf16.mxu0 %v9366
        %9597 = vmatpush1.bf16.msra.mxu0 %v9365
        %9598 = vmatprep.subr.bf16.mxu0 %v9370
        %9599 = vmatpush1.bf16.msra.mxu0 %v9369
        %9600 = vmatprep.subr.bf16.mxu0 %v9374
        %9601 = vmatpush1.bf16.msra.mxu0 %v9373
        %9602 = vmatprep.subr.bf16.mxu0 %v9378
        %9603 = vmatpush1.bf16.msra.mxu0 %v9377
        %9604 = vmatprep.subr.bf16.mxu0 %v9382
        %9605 = vmatpush1.bf16.msra.mxu0 %v9381
        %9606 = vmatprep.subr.bf16.mxu0 %v9386
        %9607 = vmatpush1.bf16.msra.mxu0 %v9385
        %9608 = vmatprep.subr.bf16.mxu0 %v9390
        %9609 = vmatpush1.bf16.msra.mxu0 %v9389
        %9610 = vmatprep.subr.bf16.mxu0 %v9394
        %9611 = vmatpush1.bf16.msra.mxu0 %v9393
        %9612 = vmatprep.subr.bf16.mxu0 %v9398
        %9613 = vmatpush1.bf16.msra.mxu0 %v9397
        %9614 = vmatprep.subr.bf16.mxu0 %v9402
        %9615 = vmatpush1.bf16.msra.mxu0 %v9401
        %9616 = vmatprep.subr.bf16.mxu0 %v9406
        %9617 = vmatpush1.bf16.msra.mxu0 %v9405
        %9618 = vmatprep.subr.bf16.mxu0 %v9410
        %9619 = vmatpush1.bf16.msra.mxu0 %v9409
        %9620 = vmatprep.subr.bf16.mxu0 %v9414
        %9621 = vmatpush1.bf16.msra.mxu0 %v9413
        %9622 = vmatprep.subr.bf16.mxu0 %v9418
        %9623 = vmatpush1.bf16.msra.mxu0 %v9417
        %9624 = vmatprep.subr.bf16.mxu0 %v9422
        %9625 = vmatpush1.bf16.msra.mxu0 %v9421
        %9626 = vmatprep.mubr.bf16.mxu0 %v8908
        %9627 = vmatmul.mubr.bf16.gmra.mrb[0].mxu0 %v8901
        %v9628 = vpop.f32.mrb[0].mxu0
        %v9629 = vadd.f32 %v9588, %v9628
        %v9630 = vpop.f32.mrb[0].mxu0
        %v9631 = vadd.f32 %v9590, %v9630
        %v9632 = vpop.f32.mrb[0].mxu0
        %v9633 = vpop.f32.mrb[0].mxu0
        %9634 = vdwg.mxu0
        %9635 = vmatprep.subr.bf16.mxu0 %v9300
        %9636 = vmatpush1.bf16.msra.mxu0 %v9299
        %9637 = vmatprep.subr.bf16.mxu0 %v9304
        %9638 = vmatpush1.bf16.msra.mxu0 %v9303
        %9639 = vmatprep.subr.bf16.mxu0 %v9308
        %9640 = vmatpush1.bf16.msra.mxu0 %v9307
        %9641 = vmatprep.subr.bf16.mxu0 %v9312
        %9642 = vmatpush1.bf16.msra.mxu0 %v9311
        %9643 = vmatprep.subr.bf16.mxu0 %v9316
        %9644 = vmatpush1.bf16.msra.mxu0 %v9315
        %9645 = vmatprep.subr.bf16.mxu0 %v9320
        %9646 = vmatpush1.bf16.msra.mxu0 %v9319
        %9647 = vmatprep.subr.bf16.mxu0 %v9324
        %9648 = vmatpush1.bf16.msra.mxu0 %v9323
        %9649 = vmatprep.subr.bf16.mxu0 %v9328
        %9650 = vmatpush1.bf16.msra.mxu0 %v9327
        %9651 = vmatprep.subr.bf16.mxu0 %v9332
        %9652 = vmatpush1.bf16.msra.mxu0 %v9331
        %9653 = vmatprep.subr.bf16.mxu0 %v9336
        %9654 = vmatpush1.bf16.msra.mxu0 %v9335
        %9655 = vmatprep.subr.bf16.mxu0 %v9340
        %9656 = vmatpush1.bf16.msra.mxu0 %v9339
        %9657 = vmatprep.subr.bf16.mxu0 %v9344
        %9658 = vmatpush1.bf16.msra.mxu0 %v9343
        %9659 = vmatprep.subr.bf16.mxu0 %v9348
        %9660 = vmatpush1.bf16.msra.mxu0 %v9347
        %9661 = vmatprep.subr.bf16.mxu0 %v9352
        %9662 = vmatpush1.bf16.msra.mxu0 %v9351
        %9663 = vmatprep.subr.bf16.mxu0 %v9356
        %9664 = vmatpush1.bf16.msra.mxu0 %v9355
        %9665 = vmatprep.subr.bf16.mxu0 %v9360
        %9666 = vmatpush1.bf16.msra.mxu0 %v9359
        %9667 = vmatprep.mubr.bf16.mxu0 %v8894
        %9668 = vmatmul.mubr.bf16.gmra.mrb[0].mxu0 %v8887
        %v9669 = vpop.f32.mrb[0].mxu0
        %v9670 = vadd.f32 0.0, %v9669
        %v9671 = vpop.f32.mrb[0].mxu0
        %v9672 = vadd.f32 0.0, %v9671
        %v9673 = vpop.f32.mrb[0].mxu0
        %v9674 = vpop.f32.mrb[0].mxu0
        %9675 = vdwg.mxu0
        %9676 = vmatprep.subr.bf16.mxu0 %v9364
        %9677 = vmatpush1.bf16.msra.mxu0 %v9363
        %9678 = vmatprep.subr.bf16.mxu0 %v9368
        %9679 = vmatpush1.bf16.msra.mxu0 %v9367
        %9680 = vmatprep.subr.bf16.mxu0 %v9372
        %9681 = vmatpush1.bf16.msra.mxu0 %v9371
        %9682 = vmatprep.subr.bf16.mxu0 %v9376
        %9683 = vmatpush1.bf16.msra.mxu0 %v9375
        %9684 = vmatprep.subr.bf16.mxu0 %v9380
        %9685 = vmatpush1.bf16.msra.mxu0 %v9379
        %9686 = vmatprep.subr.bf16.mxu0 %v9384
        %9687 = vmatpush1.bf16.msra.mxu0 %v9383
        %9688 = vmatprep.subr.bf16.mxu0 %v9388
        %9689 = vmatpush1.bf16.msra.mxu0 %v9387
        %9690 = vmatprep.subr.bf16.mxu0 %v9392
        %9691 = vmatpush1.bf16.msra.mxu0 %v9391
        %9692 = vmatprep.subr.bf16.mxu0 %v9396
        %9693 = vmatpush1.bf16.msra.mxu0 %v9395
        %9694 = vmatprep.subr.bf16.mxu0 %v9400
        %9695 = vmatpush1.bf16.msra.mxu0 %v9399
        %9696 = vmatprep.subr.bf16.mxu0 %v9404
        %9697 = vmatpush1.bf16.msra.mxu0 %v9403
        %9698 = vmatprep.subr.bf16.mxu0 %v9408
        %9699 = vmatpush1.bf16.msra.mxu0 %v9407
        %9700 = vmatprep.subr.bf16.mxu0 %v9412
        %9701 = vmatpush1.bf16.msra.mxu0 %v9411
        %9702 = vmatprep.subr.bf16.mxu0 %v9416
        %9703 = vmatpush1.bf16.msra.mxu0 %v9415
        %9704 = vmatprep.subr.bf16.mxu0 %v9420
        %9705 = vmatpush1.bf16.msra.mxu0 %v9419
        %9706 = vmatprep.subr.bf16.mxu0 %v9424
        %9707 = vmatpush1.bf16.msra.mxu0 %v9423
        %9708 = vmatprep.mubr.bf16.mxu0 %v8908
        %9709 = vmatmul.mubr.bf16.gmra.mrb[0].mxu0 %v8901
        %v9710 = vpop.f32.mrb[0].mxu0
        %v9711 = vadd.f32 %v9670, %v9710
        %v9712 = vpop.f32.mrb[0].mxu0
        %v9713 = vadd.f32 %v9672, %v9712
        %v9714 = vpop.f32.mrb[0].mxu0
        %v9715 = vpop.f32.mrb[0].mxu0
        %9716 = vdwg.mxu0
        %v9717 = vadd.f32 %v8656, %v9629
        %v9718 = vadd.f32 %v8658, %v9631
        %v9719 = vadd.f32 %v8738, %v9711
        %v9720 = vadd.f32 %v8740, %v9713
        %v9721 = vpack.c.bf16 %v5190, %v5190
        %v9722 = vpack.c.bf16 %v5191, %v5191
        %v9723 = vld [vmem:[#allocation24] sm:$0xff]
        %v9724 = vld [vmem:[#allocation24 + $0x8] sm:$0xff]
        %v9725 = vld [vmem:[#allocation24 + $0x10] sm:$0xff]
        %v9726 = vld [vmem:[#allocation24 + $0x18] sm:$0xff]
        %v9727 = vld [vmem:[#allocation24 + $0x20] sm:$0xff]
        %v9728 = vld [vmem:[#allocation24 + $0x28] sm:$0xff]
        %v9729 = vld [vmem:[#allocation24 + $0x30] sm:$0xff]
        %v9730 = vld [vmem:[#allocation24 + $0x38] sm:$0xff]
        %v9731 = vld [vmem:[#allocation24 + $0x40] sm:$0xff]
        %v9732 = vld [vmem:[#allocation24 + $0x48] sm:$0xff]
        %v9733 = vld [vmem:[#allocation24 + $0x50] sm:$0xff]
        %v9734 = vld [vmem:[#allocation24 + $0x58] sm:$0xff]
        %v9735 = vld [vmem:[#allocation24 + $0x60] sm:$0xff]
        %v9736 = vld [vmem:[#allocation24 + $0x68] sm:$0xff]
        %v9737 = vld [vmem:[#allocation24 + $0x70] sm:$0xff]
        %v9738 = vld [vmem:[#allocation24 + $0x78] sm:$0xff]
        %v9739 = vld [vmem:[#allocation24 + $0x80] sm:$0xff]
        %v9740 = vld [vmem:[#allocation24 + $0x88] sm:$0xff]
        %v9741 = vld [vmem:[#allocation24 + $0x90] sm:$0xff]
        %v9742 = vld [vmem:[#allocation24 + $0x98] sm:$0xff]
        %v9743 = vld [vmem:[#allocation24 + $0xa0] sm:$0xff]
        %v9744 = vld [vmem:[#allocation24 + $0xa8] sm:$0xff]
        %v9745 = vld [vmem:[#allocation24 + $0xb0] sm:$0xff]
        %v9746 = vld [vmem:[#allocation24 + $0xb8] sm:$0xff]
        %v9747 = vld [vmem:[#allocation24 + $0xc0] sm:$0xff]
        %v9748 = vld [vmem:[#allocation24 + $0xc8] sm:$0xff]
        %v9749 = vld [vmem:[#allocation24 + $0xd0] sm:$0xff]
        %v9750 = vld [vmem:[#allocation24 + $0xd8] sm:$0xff]
        %v9751 = vld [vmem:[#allocation24 + $0xe0] sm:$0xff]
        %v9752 = vld [vmem:[#allocation24 + $0xe8] sm:$0xff]
        %v9753 = vld [vmem:[#allocation24 + $0xf0] sm:$0xff]
        %v9754 = vld [vmem:[#allocation24 + $0xf8] sm:$0xff]
        %v9755 = vld [vmem:[#allocation24 + $0x100] sm:$0xff]
        %v9756 = vld [vmem:[#allocation24 + $0x108] sm:$0xff]
        %v9757 = vld [vmem:[#allocation24 + $0x110] sm:$0xff]
        %v9758 = vld [vmem:[#allocation24 + $0x118] sm:$0xff]
        %v9759 = vld [vmem:[#allocation24 + $0x120] sm:$0xff]
        %v9760 = vld [vmem:[#allocation24 + $0x128] sm:$0xff]
        %v9761 = vld [vmem:[#allocation24 + $0x130] sm:$0xff]
        %v9762 = vld [vmem:[#allocation24 + $0x138] sm:$0xff]
        %v9763 = vld [vmem:[#allocation24 + $0x140] sm:$0xff]
        %v9764 = vld [vmem:[#allocation24 + $0x148] sm:$0xff]
        %v9765 = vld [vmem:[#allocation24 + $0x150] sm:$0xff]
        %v9766 = vld [vmem:[#allocation24 + $0x158] sm:$0xff]
        %v9767 = vld [vmem:[#allocation24 + $0x160] sm:$0xff]
        %v9768 = vld [vmem:[#allocation24 + $0x168] sm:$0xff]
        %v9769 = vld [vmem:[#allocation24 + $0x170] sm:$0xff]
        %v9770 = vld [vmem:[#allocation24 + $0x178] sm:$0xff]
        %v9771 = vld [vmem:[#allocation24 + $0x180] sm:$0xff]
        %v9772 = vld [vmem:[#allocation24 + $0x188] sm:$0xff]
        %v9773 = vld [vmem:[#allocation24 + $0x190] sm:$0xff]
        %v9774 = vld [vmem:[#allocation24 + $0x198] sm:$0xff]
        %v9775 = vld [vmem:[#allocation24 + $0x1a0] sm:$0xff]
        %v9776 = vld [vmem:[#allocation24 + $0x1a8] sm:$0xff]
        %v9777 = vld [vmem:[#allocation24 + $0x1b0] sm:$0xff]
        %v9778 = vld [vmem:[#allocation24 + $0x1b8] sm:$0xff]
        %v9779 = vld [vmem:[#allocation24 + $0x1c0] sm:$0xff]
        %v9780 = vld [vmem:[#allocation24 + $0x1c8] sm:$0xff]
        %v9781 = vld [vmem:[#allocation24 + $0x1d0] sm:$0xff]
        %v9782 = vld [vmem:[#allocation24 + $0x1d8] sm:$0xff]
        %v9783 = vld [vmem:[#allocation24 + $0x1e0] sm:$0xff]
        %v9784 = vld [vmem:[#allocation24 + $0x1e8] sm:$0xff]
        %v9785 = vld [vmem:[#allocation24 + $0x1f0] sm:$0xff]
        %v9786 = vld [vmem:[#allocation24 + $0x1f8] sm:$0xff]
        %v9851 = vunpack.c.l.b16 %v9723
        %v9852 = vunpack.c.h.b16 %v9723
        %v9853 = vunpack.c.l.b16 %v9724
        %v9854 = vunpack.c.h.b16 %v9724
        %v9855 = vunpack.c.l.b16 %v9725
        %v9856 = vunpack.c.h.b16 %v9725
        %v9857 = vunpack.c.l.b16 %v9726
        %v9858 = vunpack.c.h.b16 %v9726
        %v9859 = vunpack.c.l.b16 %v9727
        %v9860 = vunpack.c.h.b16 %v9727
        %v9861 = vunpack.c.l.b16 %v9728
        %v9862 = vunpack.c.h.b16 %v9728
        %v9863 = vunpack.c.l.b16 %v9729
        %v9864 = vunpack.c.h.b16 %v9729
        %v9865 = vunpack.c.l.b16 %v9730
        %v9866 = vunpack.c.h.b16 %v9730
        %v9867 = vunpack.c.l.b16 %v9731
        %v9868 = vunpack.c.h.b16 %v9731
        %v9869 = vunpack.c.l.b16 %v9732
        %v9870 = vunpack.c.h.b16 %v9732
        %v9871 = vunpack.c.l.b16 %v9733
        %v9872 = vunpack.c.h.b16 %v9733
        %v9873 = vunpack.c.l.b16 %v9734
        %v9874 = vunpack.c.h.b16 %v9734
        %v9875 = vunpack.c.l.b16 %v9735
        %v9876 = vunpack.c.h.b16 %v9735
        %v9877 = vunpack.c.l.b16 %v9736
        %v9878 = vunpack.c.h.b16 %v9736
        %v9879 = vunpack.c.l.b16 %v9737
        %v9880 = vunpack.c.h.b16 %v9737
        %v9881 = vunpack.c.l.b16 %v9738
        %v9882 = vunpack.c.h.b16 %v9738
        %v9883 = vunpack.c.l.b16 %v9739
        %v9884 = vunpack.c.h.b16 %v9739
        %v9885 = vunpack.c.l.b16 %v9740
        %v9886 = vunpack.c.h.b16 %v9740
        %v9887 = vunpack.c.l.b16 %v9741
        %v9888 = vunpack.c.h.b16 %v9741
        %v9889 = vunpack.c.l.b16 %v9742
        %v9890 = vunpack.c.h.b16 %v9742
        %v9891 = vunpack.c.l.b16 %v9743
        %v9892 = vunpack.c.h.b16 %v9743
        %v9893 = vunpack.c.l.b16 %v9744
        %v9894 = vunpack.c.h.b16 %v9744
        %v9895 = vunpack.c.l.b16 %v9745
        %v9896 = vunpack.c.h.b16 %v9745
        %v9897 = vunpack.c.l.b16 %v9746
        %v9898 = vunpack.c.h.b16 %v9746
        %v9899 = vunpack.c.l.b16 %v9747
        %v9900 = vunpack.c.h.b16 %v9747
        %v9901 = vunpack.c.l.b16 %v9748
        %v9902 = vunpack.c.h.b16 %v9748
        %v9903 = vunpack.c.l.b16 %v9749
        %v9904 = vunpack.c.h.b16 %v9749
        %v9905 = vunpack.c.l.b16 %v9750
        %v9906 = vunpack.c.h.b16 %v9750
        %v9907 = vunpack.c.l.b16 %v9751
        %v9908 = vunpack.c.h.b16 %v9751
        %v9909 = vunpack.c.l.b16 %v9752
        %v9910 = vunpack.c.h.b16 %v9752
        %v9911 = vunpack.c.l.b16 %v9753
        %v9912 = vunpack.c.h.b16 %v9753
        %v9913 = vunpack.c.l.b16 %v9754
        %v9914 = vunpack.c.h.b16 %v9754
        %v9915 = vunpack.c.l.b16 %v9755
        %v9916 = vunpack.c.h.b16 %v9755
        %v9917 = vunpack.c.l.b16 %v9756
        %v9918 = vunpack.c.h.b16 %v9756
        %v9919 = vunpack.c.l.b16 %v9757
        %v9920 = vunpack.c.h.b16 %v9757
        %v9921 = vunpack.c.l.b16 %v9758
        %v9922 = vunpack.c.h.b16 %v9758
        %v9923 = vunpack.c.l.b16 %v9759
        %v9924 = vunpack.c.h.b16 %v9759
        %v9925 = vunpack.c.l.b16 %v9760
        %v9926 = vunpack.c.h.b16 %v9760
        %v9927 = vunpack.c.l.b16 %v9761
        %v9928 = vunpack.c.h.b16 %v9761
        %v9929 = vunpack.c.l.b16 %v9762
        %v9930 = vunpack.c.h.b16 %v9762
        %v9931 = vunpack.c.l.b16 %v9763
        %v9932 = vunpack.c.h.b16 %v9763
        %v9933 = vunpack.c.l.b16 %v9764
        %v9934 = vunpack.c.h.b16 %v9764
        %v9935 = vunpack.c.l.b16 %v9765
        %v9936 = vunpack.c.h.b16 %v9765
        %v9937 = vunpack.c.l.b16 %v9766
        %v9938 = vunpack.c.h.b16 %v9766
        %v9939 = vunpack.c.l.b16 %v9767
        %v9940 = vunpack.c.h.b16 %v9767
        %v9941 = vunpack.c.l.b16 %v9768
        %v9942 = vunpack.c.h.b16 %v9768
        %v9943 = vunpack.c.l.b16 %v9769
        %v9944 = vunpack.c.h.b16 %v9769
        %v9945 = vunpack.c.l.b16 %v9770
        %v9946 = vunpack.c.h.b16 %v9770
        %v9947 = vunpack.c.l.b16 %v9771
        %v9948 = vunpack.c.h.b16 %v9771
        %v9949 = vunpack.c.l.b16 %v9772
        %v9950 = vunpack.c.h.b16 %v9772
        %v9951 = vunpack.c.l.b16 %v9773
        %v9952 = vunpack.c.h.b16 %v9773
        %v9953 = vunpack.c.l.b16 %v9774
        %v9954 = vunpack.c.h.b16 %v9774
        %v9955 = vunpack.c.l.b16 %v9775
        %v9956 = vunpack.c.h.b16 %v9775
        %v9957 = vunpack.c.l.b16 %v9776
        %v9958 = vunpack.c.h.b16 %v9776
        %v9959 = vunpack.c.l.b16 %v9777
        %v9960 = vunpack.c.h.b16 %v9777
        %v9961 = vunpack.c.l.b16 %v9778
        %v9962 = vunpack.c.h.b16 %v9778
        %v9963 = vunpack.c.l.b16 %v9779
        %v9964 = vunpack.c.h.b16 %v9779
        %v9965 = vunpack.c.l.b16 %v9780
        %v9966 = vunpack.c.h.b16 %v9780
        %v9967 = vunpack.c.l.b16 %v9781
        %v9968 = vunpack.c.h.b16 %v9781
        %v9969 = vunpack.c.l.b16 %v9782
        %v9970 = vunpack.c.h.b16 %v9782
        %v9971 = vunpack.c.l.b16 %v9783
        %v9972 = vunpack.c.h.b16 %v9783
        %v9973 = vunpack.c.l.b16 %v9784
        %v9974 = vunpack.c.h.b16 %v9784
        %v9975 = vunpack.c.l.b16 %v9785
        %v9976 = vunpack.c.h.b16 %v9785
        %v9977 = vunpack.c.l.b16 %v9786
        %v9978 = vunpack.c.h.b16 %v9786
        %v9979 = vpack.c.b16 %v9855, %v9851
        %v9980 = vpack.c.b16 %v9856, %v9852
        %v9981 = vpack.c.b16 %v9857, %v9853
        %v9982 = vpack.c.b16 %v9858, %v9854
        %v9983 = vpack.c.b16 %v9863, %v9859
        %v9984 = vpack.c.b16 %v9864, %v9860
        %v9985 = vpack.c.b16 %v9865, %v9861
        %v9986 = vpack.c.b16 %v9866, %v9862
        %v9987 = vpack.c.b16 %v9871, %v9867
        %v9988 = vpack.c.b16 %v9872, %v9868
        %v9989 = vpack.c.b16 %v9873, %v9869
        %v9990 = vpack.c.b16 %v9874, %v9870
        %v9991 = vpack.c.b16 %v9879, %v9875
        %v9992 = vpack.c.b16 %v9880, %v9876
        %v9993 = vpack.c.b16 %v9881, %v9877
        %v9994 = vpack.c.b16 %v9882, %v9878
        %v9995 = vpack.c.b16 %v9887, %v9883
        %v9996 = vpack.c.b16 %v9888, %v9884
        %v9997 = vpack.c.b16 %v9889, %v9885
        %v9998 = vpack.c.b16 %v9890, %v9886
        %v9999 = vpack.c.b16 %v9895, %v9891
        %v10000 = vpack.c.b16 %v9896, %v9892
        %v10001 = vpack.c.b16 %v9897, %v9893
        %v10002 = vpack.c.b16 %v9898, %v9894
        %v10003 = vpack.c.b16 %v9903, %v9899
        %v10004 = vpack.c.b16 %v9904, %v9900
        %v10005 = vpack.c.b16 %v9905, %v9901
        %v10006 = vpack.c.b16 %v9906, %v9902
        %v10007 = vpack.c.b16 %v9911, %v9907
        %v10008 = vpack.c.b16 %v9912, %v9908
        %v10009 = vpack.c.b16 %v9913, %v9909
        %v10010 = vpack.c.b16 %v9914, %v9910
        %v10011 = vpack.c.b16 %v9919, %v9915
        %v10012 = vpack.c.b16 %v9920, %v9916
        %v10013 = vpack.c.b16 %v9921, %v9917
        %v10014 = vpack.c.b16 %v9922, %v9918
        %v10015 = vpack.c.b16 %v9927, %v9923
        %v10016 = vpack.c.b16 %v9928, %v9924
        %v10017 = vpack.c.b16 %v9929, %v9925
        %v10018 = vpack.c.b16 %v9930, %v9926
        %v10019 = vpack.c.b16 %v9935, %v9931
        %v10020 = vpack.c.b16 %v9936, %v9932
        %v10021 = vpack.c.b16 %v9937, %v9933
        %v10022 = vpack.c.b16 %v9938, %v9934
        %v10023 = vpack.c.b16 %v9943, %v9939
        %v10024 = vpack.c.b16 %v9944, %v9940
        %v10025 = vpack.c.b16 %v9945, %v9941
        %v10026 = vpack.c.b16 %v9946, %v9942
        %v10027 = vpack.c.b16 %v9951, %v9947
        %v10028 = vpack.c.b16 %v9952, %v9948
        %v10029 = vpack.c.b16 %v9953, %v9949
        %v10030 = vpack.c.b16 %v9954, %v9950
        %v10031 = vpack.c.b16 %v9959, %v9955
        %v10032 = vpack.c.b16 %v9960, %v9956
        %v10033 = vpack.c.b16 %v9961, %v9957
        %v10034 = vpack.c.b16 %v9962, %v9958
        %v10035 = vpack.c.b16 %v9967, %v9963
        %v10036 = vpack.c.b16 %v9968, %v9964
        %v10037 = vpack.c.b16 %v9969, %v9965
        %v10038 = vpack.c.b16 %v9970, %v9966
        %v10039 = vpack.c.b16 %v9975, %v9971
        %v10040 = vpack.c.b16 %v9976, %v9972
        %v10041 = vpack.c.b16 %v9977, %v9973
        %v10042 = vpack.c.b16 %v9978, %v9974
        %10107 = vmatprep.subr.bf16.mxu0 %v9980
        %10108 = vmatpush1.bf16.msra.mxu0 %v9979
        %10109 = vmatprep.subr.bf16.mxu0 %v9984
        %10110 = vmatpush1.bf16.msra.mxu0 %v9983
        %10111 = vmatprep.subr.bf16.mxu0 %v9988
        %10112 = vmatpush1.bf16.msra.mxu0 %v9987
        %10113 = vmatprep.subr.bf16.mxu0 %v9992
        %10114 = vmatpush1.bf16.msra.mxu0 %v9991
        %10115 = vmatprep.subr.bf16.mxu0 %v9996
        %10116 = vmatpush1.bf16.msra.mxu0 %v9995
        %10117 = vmatprep.subr.bf16.mxu0 %v10000
        %10118 = vmatpush1.bf16.msra.mxu0 %v9999
        %10119 = vmatprep.subr.bf16.mxu0 %v10004
        %10120 = vmatpush1.bf16.msra.mxu0 %v10003
        %10121 = vmatprep.subr.bf16.mxu0 %v10008
        %10122 = vmatpush1.bf16.msra.mxu0 %v10007
        %10123 = vmatprep.subr.bf16.mxu0 %v10012
        %10124 = vmatpush1.bf16.msra.mxu0 %v10011
        %10125 = vmatprep.subr.bf16.mxu0 %v10016
        %10126 = vmatpush1.bf16.msra.mxu0 %v10015
        %10127 = vmatprep.subr.bf16.mxu0 %v10020
        %10128 = vmatpush1.bf16.msra.mxu0 %v10019
        %10129 = vmatprep.subr.bf16.mxu0 %v10024
        %10130 = vmatpush1.bf16.msra.mxu0 %v10023
        %10131 = vmatprep.subr.bf16.mxu0 %v10028
        %10132 = vmatpush1.bf16.msra.mxu0 %v10027
        %10133 = vmatprep.subr.bf16.mxu0 %v10032
        %10134 = vmatpush1.bf16.msra.mxu0 %v10031
        %10135 = vmatprep.subr.bf16.mxu0 %v10036
        %10136 = vmatpush1.bf16.msra.mxu0 %v10035
        %10137 = vmatprep.subr.bf16.mxu0 %v10040
        %10138 = vmatpush1.bf16.msra.mxu0 %v10039
        %10139 = vmatprep.mubr.bf16.mxu0 %v9722
        %10140 = vmatmul.mubr.bf16.gmra.mrb[0].mxu0 %v9721
        %v10141 = vpop.f32.mrb[0].mxu0
        %v10142 = vadd.f32 0.0, %v10141
        %v10143 = vpop.f32.mrb[0].mxu0
        %v10144 = vadd.f32 0.0, %v10143
        %v10145 = vpop.f32.mrb[0].mxu0
        %v10146 = vpop.f32.mrb[0].mxu0
        %10147 = vdwg.mxu0
        %10148 = vmatprep.subr.bf16.mxu0 %v9982
        %10149 = vmatpush1.bf16.msra.mxu0 %v9981
        %10150 = vmatprep.subr.bf16.mxu0 %v9986
        %10151 = vmatpush1.bf16.msra.mxu0 %v9985
        %10152 = vmatprep.subr.bf16.mxu0 %v9990
        %10153 = vmatpush1.bf16.msra.mxu0 %v9989
        %10154 = vmatprep.subr.bf16.mxu0 %v9994
        %10155 = vmatpush1.bf16.msra.mxu0 %v9993
        %10156 = vmatprep.subr.bf16.mxu0 %v9998
        %10157 = vmatpush1.bf16.msra.mxu0 %v9997
        %10158 = vmatprep.subr.bf16.mxu0 %v10002
        %10159 = vmatpush1.bf16.msra.mxu0 %v10001
        %10160 = vmatprep.subr.bf16.mxu0 %v10006
        %10161 = vmatpush1.bf16.msra.mxu0 %v10005
        %10162 = vmatprep.subr.bf16.mxu0 %v10010
        %10163 = vmatpush1.bf16.msra.mxu0 %v10009
        %10164 = vmatprep.subr.bf16.mxu0 %v10014
        %10165 = vmatpush1.bf16.msra.mxu0 %v10013
        %10166 = vmatprep.subr.bf16.mxu0 %v10018
        %10167 = vmatpush1.bf16.msra.mxu0 %v10017
        %10168 = vmatprep.subr.bf16.mxu0 %v10022
        %10169 = vmatpush1.bf16.msra.mxu0 %v10021
        %10170 = vmatprep.subr.bf16.mxu0 %v10026
        %10171 = vmatpush1.bf16.msra.mxu0 %v10025
        %10172 = vmatprep.subr.bf16.mxu0 %v10030
        %10173 = vmatpush1.bf16.msra.mxu0 %v10029
        %10174 = vmatprep.subr.bf16.mxu0 %v10034
        %10175 = vmatpush1.bf16.msra.mxu0 %v10033
        %10176 = vmatprep.subr.bf16.mxu0 %v10038
        %10177 = vmatpush1.bf16.msra.mxu0 %v10037
        %10178 = vmatprep.subr.bf16.mxu0 %v10042
        %10179 = vmatpush1.bf16.msra.mxu0 %v10041
        %10180 = vmatprep.mubr.bf16.mxu0 %v9722
        %10181 = vmatmul.mubr.bf16.gmra.mrb[0].mxu0 %v9721
        %v10182 = vpop.f32.mrb[0].mxu0
        %v10183 = vadd.f32 0.0, %v10182
        %v10184 = vpop.f32.mrb[0].mxu0
        %v10185 = vadd.f32 0.0, %v10184
        %v10186 = vpop.f32.mrb[0].mxu0
        %v10187 = vpop.f32.mrb[0].mxu0
        %10188 = vdwg.mxu0
        %vm10189 = vcmask 31744
        %v10190 = vsel %vm10189, %v2022, 0
        %vm10192 = vcmask 1043456
        %v10194 = vsel %vm10192, %v10142, 0
        %v10197 = vsel %vm10192, %v10144, 0
        %v10200 = vsel %vm10192, %v10183, 0
        %v10203 = vsel %vm10192, %v10185, 0
        %10205 = vmatprep.subr.mxu0 %v10197
        %10206 = vmatpush1.msra.mxu0 %v10194
        %10207 = vmatprep.subr.mxu0 0.0
        %10208 = vmatpush1.msra.mxu0 0.0
        %10209 = vmatprep.subr.mxu0 0.0
        %10210 = vmatpush1.msra.mxu0 0.0
        %10211 = vmatprep.subr.mxu0 0.0
        %10212 = vmatpush1.msra.mxu0 0.0
        %10213 = vmatprep.subr.mxu0 0.0
        %10214 = vmatpush1.msra.mxu0 0.0
        %10215 = vmatprep.subr.mxu0 0.0
        %10216 = vmatpush1.msra.mxu0 0.0
        %10217 = vmatprep.subr.mxu0 0.0
        %10218 = vmatpush1.msra.mxu0 0.0
        %10219 = vmatprep.subr.mxu0 0.0
        %10220 = vmatpush1.msra.mxu0 0.0
        %10221 = vmatprep.subr.mxu0 0.0
        %10222 = vmatpush1.msra.mxu0 0.0
        %10223 = vmatprep.subr.mxu0 0.0
        %10224 = vmatpush1.msra.mxu0 0.0
        %10225 = vmatprep.subr.mxu0 0.0
        %10226 = vmatpush1.msra.mxu0 0.0
        %10227 = vmatprep.subr.mxu0 0.0
        %10228 = vmatpush1.msra.mxu0 0.0
        %10229 = vmatprep.subr.mxu0 0.0
        %10230 = vmatpush1.msra.mxu0 0.0
        %10231 = vmatprep.subr.mxu0 0.0
        %10232 = vmatpush1.msra.mxu0 0.0
        %10233 = vmatprep.subr.mxu0 0.0
        %10234 = vmatpush1.msra.mxu0 0.0
        %10235 = vmatprep.subr.mxu0 0.0
        %10236 = vmatpush1.msra.mxu0 0.0
        %10237 = vmatprep.subr.mxu0 0.0
        %10238 = vmatpush1.msra.mxu0 0.0
        %10239 = vmatprep.subr.mxu0 0.0
        %10240 = vmatpush1.msra.mxu0 0.0
        %10241 = vmatprep.subr.mxu0 0.0
        %10242 = vmatpush1.msra.mxu0 0.0
        %10243 = vmatprep.subr.mxu0 0.0
        %10244 = vmatpush1.msra.mxu0 0.0
        %10245 = vmatprep.subr.mxu0 0.0
        %10246 = vmatpush1.msra.mxu0 0.0
        %10247 = vmatprep.subr.mxu0 0.0
        %10248 = vmatpush1.msra.mxu0 0.0
        %10249 = vmatprep.subr.mxu0 0.0
        %10250 = vmatpush1.msra.mxu0 0.0
        %10251 = vmatprep.subr.mxu0 0.0
        %10252 = vmatpush1.msra.mxu0 0.0
        %10253 = vmatprep.subr.mxu0 0.0
        %10254 = vmatpush1.msra.mxu0 0.0
        %10255 = vmatprep.subr.mxu0 0.0
        %10256 = vmatpush1.msra.mxu0 0.0
        %10257 = vmatprep.subr.mxu0 0.0
        %10258 = vmatpush1.msra.mxu0 0.0
        %10259 = vmatprep.subr.mxu0 0.0
        %10260 = vmatpush1.msra.mxu0 0.0
        %10261 = vmatprep.subr.mxu0 0.0
        %10262 = vmatpush1.msra.mxu0 0.0
        %10263 = vmatprep.subr.mxu0 0.0
        %10264 = vmatpush1.msra.mxu0 0.0
        %10265 = vmatprep.subr.mxu0 0.0
        %10266 = vmatpush1.msra.mxu0 0.0
        %10267 = vmatprep.subr.mxu0 0.0
        %10268 = vmatpush1.msra.mxu0 0.0
        %10269 = vmatprep.mubr.f32.mxu0 0.0
        %10270 = vmatmul.mubr.f32.gmra.mrb[0].mxu0 %v10190
        %v10271 = vpop.f32.mrb[0].mxu0
        %v10272 = vadd.f32 0.0, %v10271
        %v10273 = vpop.f32.mrb[0].mxu0
        %v10274 = vadd.f32 0.0, %v10273
        %10275 = vdwg.mxu0
        %10276 = vmatprep.subr.mxu0 %v10203
        %10277 = vmatpush1.msra.mxu0 %v10200
        %10278 = vmatprep.subr.mxu0 0.0
        %10279 = vmatpush1.msra.mxu0 0.0
        %10280 = vmatprep.subr.mxu0 0.0
        %10281 = vmatpush1.msra.mxu0 0.0
        %10282 = vmatprep.subr.mxu0 0.0
        %10283 = vmatpush1.msra.mxu0 0.0
        %10284 = vmatprep.subr.mxu0 0.0
        %10285 = vmatpush1.msra.mxu0 0.0
        %10286 = vmatprep.subr.mxu0 0.0
        %10287 = vmatpush1.msra.mxu0 0.0
        %10288 = vmatprep.subr.mxu0 0.0
        %10289 = vmatpush1.msra.mxu0 0.0
        %10290 = vmatprep.subr.mxu0 0.0
        %10291 = vmatpush1.msra.mxu0 0.0
        %10292 = vmatprep.subr.mxu0 0.0
        %10293 = vmatpush1.msra.mxu0 0.0
        %10294 = vmatprep.subr.mxu0 0.0
        %10295 = vmatpush1.msra.mxu0 0.0
        %10296 = vmatprep.subr.mxu0 0.0
        %10297 = vmatpush1.msra.mxu0 0.0
        %10298 = vmatprep.subr.mxu0 0.0
        %10299 = vmatpush1.msra.mxu0 0.0
        %10300 = vmatprep.subr.mxu0 0.0
        %10301 = vmatpush1.msra.mxu0 0.0
        %10302 = vmatprep.subr.mxu0 0.0
        %10303 = vmatpush1.msra.mxu0 0.0
        %10304 = vmatprep.subr.mxu0 0.0
        %10305 = vmatpush1.msra.mxu0 0.0
        %10306 = vmatprep.subr.mxu0 0.0
        %10307 = vmatpush1.msra.mxu0 0.0
        %10308 = vmatprep.subr.mxu0 0.0
        %10309 = vmatpush1.msra.mxu0 0.0
        %10310 = vmatprep.subr.mxu0 0.0
        %10311 = vmatpush1.msra.mxu0 0.0
        %10312 = vmatprep.subr.mxu0 0.0
        %10313 = vmatpush1.msra.mxu0 0.0
        %10314 = vmatprep.subr.mxu0 0.0
        %10315 = vmatpush1.msra.mxu0 0.0
        %10316 = vmatprep.subr.mxu0 0.0
        %10317 = vmatpush1.msra.mxu0 0.0
        %10318 = vmatprep.subr.mxu0 0.0
        %10319 = vmatpush1.msra.mxu0 0.0
        %10320 = vmatprep.subr.mxu0 0.0
        %10321 = vmatpush1.msra.mxu0 0.0
        %10322 = vmatprep.subr.mxu0 0.0
        %10323 = vmatpush1.msra.mxu0 0.0
        %10324 = vmatprep.subr.mxu0 0.0
        %10325 = vmatpush1.msra.mxu0 0.0
        %10326 = vmatprep.subr.mxu0 0.0
        %10327 = vmatpush1.msra.mxu0 0.0
        %10328 = vmatprep.subr.mxu0 0.0
        %10329 = vmatpush1.msra.mxu0 0.0
        %10330 = vmatprep.subr.mxu0 0.0
        %10331 = vmatpush1.msra.mxu0 0.0
        %10332 = vmatprep.subr.mxu0 0.0
        %10333 = vmatpush1.msra.mxu0 0.0
        %10334 = vmatprep.subr.mxu0 0.0
        %10335 = vmatpush1.msra.mxu0 0.0
        %10336 = vmatprep.subr.mxu0 0.0
        %10337 = vmatpush1.msra.mxu0 0.0
        %10338 = vmatprep.subr.mxu0 0.0
        %10339 = vmatpush1.msra.mxu0 0.0
        %10340 = vmatprep.mubr.f32.mxu0 0.0
        %10341 = vmatmul.mubr.f32.gmra.mrb[0].mxu0 %v10190
        %v10342 = vpop.f32.mrb[0].mxu0
        %v10343 = vadd.f32 0.0, %v10342
        %v10344 = vpop.f32.mrb[0].mxu0
        %v10345 = vadd.f32 0.0, %v10344
        %10346 = vdwg.mxu0
        %v10347 = vadd.f32 %v9717, %v10272
        %v10348 = vadd.f32 %v9718, %v10274
        %v10349 = vadd.f32 %v9719, %v10343
        %v10350 = vadd.f32 %v9720, %v10345
        %v10351 = vmax.f32 %v10347, 0.0
        %v10352 = vmax.f32 %v10348, 0.0
        %v10353 = vmax.f32 %v10349, 0.0
        %v10354 = vmax.f32 %v10350, 0.0
        %vm10355 = vcmask 1041408
        %v10356 = vsel %vm10355, %v10351, 0.0
        %v10357 = vrot.slane %v10356, 4
        %v10358 = vadd.f32 %v10356, %v10357
        %v10359 = vrot.slane %v10358, 2
        %v10360 = vadd.f32 %v10358, %v10359
        %v10361 = vrot.slane %v10360, 1
        %v10362 = vadd.f32 %v10360, %v10361
        %v10363 = vsel %vm10355, %v10352, 0.0
        %v10364 = vrot.slane %v10363, 4
        %v10365 = vadd.f32 %v10363, %v10364
        %v10366 = vrot.slane %v10365, 2
        %v10367 = vadd.f32 %v10365, %v10366
        %v10368 = vrot.slane %v10367, 1
        %v10369 = vadd.f32 %v10367, %v10368
        %v10370 = vsel %vm10355, %v10353, 0.0
        %v10371 = vrot.slane %v10370, 4
        %v10372 = vadd.f32 %v10370, %v10371
        %v10373 = vrot.slane %v10372, 2
        %v10374 = vadd.f32 %v10372, %v10373
        %v10375 = vrot.slane %v10374, 1
        %v10376 = vadd.f32 %v10374, %v10375
        %v10377 = vsel %vm10355, %v10354, 0.0
        %v10378 = vrot.slane %v10377, 4
        %v10379 = vadd.f32 %v10377, %v10378
        %v10380 = vrot.slane %v10379, 2
        %v10381 = vadd.f32 %v10379, %v10380
        %v10382 = vrot.slane %v10381, 1
        %v10383 = vadd.f32 %v10381, %v10382
        %v10384 = vrcp.pop 2.0
        %v10385 = vmul.f32 %v10362, %v10384
        %v10386 = vmul.f32 %v10369, %v10384
        %v10387 = vmul.f32 %v10376, %v10384
        %v10388 = vmul.f32 %v10383, %v10384
        %v10389 = vld [vmem:[%s767] sm:$0x1]
        %v10390 = vld [vmem:[#allocation26] sm:$0x1f]
        %v10391 = vld [vmem:[#allocation27] sm:$0x1]
        %vm10392 = vcmask 39936
        %v10394 = vsel %vm10392, %v10389, 0
        %vm10396 = vcmask 1044480
        %v10398 = vsel %vm10396, %v10390, 0
        %10400 = vmatprep.subr.mxu0 0.0
        %10401 = vmatpush1.msra.mxu0 %v10398
        %10402 = vmatprep.subr.mxu0 0.0
        %10403 = vmatpush1.msra.mxu0 0.0
        %10404 = vmatprep.subr.mxu0 0.0
        %10405 = vmatpush1.msra.mxu0 0.0
        %10406 = vmatprep.subr.mxu0 0.0
        %10407 = vmatpush1.msra.mxu0 0.0
        %10408 = vmatprep.subr.mxu0 0.0
        %10409 = vmatpush1.msra.mxu0 0.0
        %10410 = vmatprep.subr.mxu0 0.0
        %10411 = vmatpush1.msra.mxu0 0.0
        %10412 = vmatprep.subr.mxu0 0.0
        %10413 = vmatpush1.msra.mxu0 0.0
        %10414 = vmatprep.subr.mxu0 0.0
        %10415 = vmatpush1.msra.mxu0 0.0
        %10416 = vmatprep.subr.mxu0 0.0
        %10417 = vmatpush1.msra.mxu0 0.0
        %10418 = vmatprep.subr.mxu0 0.0
        %10419 = vmatpush1.msra.mxu0 0.0
        %10420 = vmatprep.subr.mxu0 0.0
        %10421 = vmatpush1.msra.mxu0 0.0
        %10422 = vmatprep.subr.mxu0 0.0
        %10423 = vmatpush1.msra.mxu0 0.0
        %10424 = vmatprep.subr.mxu0 0.0
        %10425 = vmatpush1.msra.mxu0 0.0
        %10426 = vmatprep.subr.mxu0 0.0
        %10427 = vmatpush1.msra.mxu0 0.0
        %10428 = vmatprep.subr.mxu0 0.0
        %10429 = vmatpush1.msra.mxu0 0.0
        %10430 = vmatprep.subr.mxu0 0.0
        %10431 = vmatpush1.msra.mxu0 0.0
        %10432 = vmatprep.subr.mxu0 0.0
        %10433 = vmatpush1.msra.mxu0 0.0
        %10434 = vmatprep.subr.mxu0 0.0
        %10435 = vmatpush1.msra.mxu0 0.0
        %10436 = vmatprep.subr.mxu0 0.0
        %10437 = vmatpush1.msra.mxu0 0.0
        %10438 = vmatprep.subr.mxu0 0.0
        %10439 = vmatpush1.msra.mxu0 0.0
        %10440 = vmatprep.subr.mxu0 0.0
        %10441 = vmatpush1.msra.mxu0 0.0
        %10442 = vmatprep.subr.mxu0 0.0
        %10443 = vmatpush1.msra.mxu0 0.0
        %10444 = vmatprep.subr.mxu0 0.0
        %10445 = vmatpush1.msra.mxu0 0.0
        %10446 = vmatprep.subr.mxu0 0.0
        %10447 = vmatpush1.msra.mxu0 0.0
        %10448 = vmatprep.subr.mxu0 0.0
        %10449 = vmatpush1.msra.mxu0 0.0
        %10450 = vmatprep.subr.mxu0 0.0
        %10451 = vmatpush1.msra.mxu0 0.0
        %10452 = vmatprep.subr.mxu0 0.0
        %10453 = vmatpush1.msra.mxu0 0.0
        %10454 = vmatprep.subr.mxu0 0.0
        %10455 = vmatpush1.msra.mxu0 0.0
        %10456 = vmatprep.subr.mxu0 0.0
        %10457 = vmatpush1.msra.mxu0 0.0
        %10458 = vmatprep.subr.mxu0 0.0
        %10459 = vmatpush1.msra.mxu0 0.0
        %10460 = vmatprep.subr.mxu0 0.0
        %10461 = vmatpush1.msra.mxu0 0.0
        %10462 = vmatprep.subr.mxu0 0.0
        %10463 = vmatpush1.msra.mxu0 0.0
        %10464 = vmatprep.mubr.f32.mxu0 0.0
        %10465 = vmatmul.mubr.f32.gmra.mrb[0].mxu0 %v10394
        %v10466 = vpop.f32.mrb[0].mxu0
        %v10467 = vadd.f32 %v10391, %v10466
        %v10468 = vpop.f32.mrb[0].mxu0
        %10469 = vdwg.mxu0
        %v10470 = vld [vmem:[#allocation29] sm:$0xff]
        %v10471 = vld [vmem:[#allocation29 + $0x8] sm:$0x3]
        %v10472 = vld [vmem:[%s18] sm:$0xff]
        %v10473 = vld [vmem:[%s18 + $0x8] sm:$0xff]
        %v10474 = vld [vmem:[%s18 + $0x10] sm:$0xff]
        %v10475 = vld [vmem:[%s18 + $0x18] sm:$0xff]
        %v10476 = vld [vmem:[%s18 + $0x20] sm:$0xff]
        %v10477 = vld [vmem:[%s18 + $0x28] sm:$0xff]
        %v10478 = vld [vmem:[%s18 + $0x30] sm:$0xff]
        %v10479 = vld [vmem:[%s18 + $0x38] sm:$0xff]
        %v10480 = vld [vmem:[%s18 + $0x40] sm:$0xff]
        %v10481 = vld [vmem:[%s18 + $0x48] sm:$0xff]
        %v10482 = vld [vmem:[%s18 + $0x50] sm:$0xff]
        %v10483 = vld [vmem:[%s18 + $0x58] sm:$0xff]
        %v10484 = vld [vmem:[%s18 + $0x60] sm:$0xff]
        %v10485 = vld [vmem:[%s18 + $0x68] sm:$0xff]
        %v10486 = vld [vmem:[%s18 + $0x70] sm:$0xff]
        %v10487 = vld [vmem:[%s18 + $0x78] sm:$0xff]
        %v10488 = vld [vmem:[%s18 + $0x80] sm:$0xff]
        %v10489 = vld [vmem:[%s18 + $0x88] sm:$0xff]
        %v10490 = vld [vmem:[%s18 + $0x90] sm:$0xff]
        %v10491 = vld [vmem:[%s18 + $0x98] sm:$0xff]
        %v10492 = vld [vmem:[%s18 + $0xa0] sm:$0xff]
        %v10493 = vld [vmem:[%s18 + $0xa8] sm:$0xff]
        %v10494 = vld [vmem:[%s18 + $0xb0] sm:$0xff]
        %v10495 = vld [vmem:[%s18 + $0xb8] sm:$0xff]
        %v10496 = vld [vmem:[%s18 + $0xc0] sm:$0xff]
        %v10497 = vld [vmem:[%s18 + $0xc8] sm:$0xff]
        %v10498 = vld [vmem:[%s18 + $0xd0] sm:$0xff]
        %v10499 = vld [vmem:[%s18 + $0xd8] sm:$0xff]
        %v10500 = vld [vmem:[%s18 + $0xe0] sm:$0xff]
        %v10501 = vld [vmem:[%s18 + $0xe8] sm:$0xff]
        %v10502 = vld [vmem:[%s18 + $0xf0] sm:$0xff]
        %v10503 = vld [vmem:[%s18 + $0xf8] sm:$0xff]
        %v10504 = vld [vmem:[%s18 + $0x100] sm:$0xff]
        %v10505 = vld [vmem:[%s18 + $0x108] sm:$0xff]
        %v10506 = vld [vmem:[%s18 + $0x110] sm:$0xff]
        %v10507 = vld [vmem:[%s18 + $0x118] sm:$0xff]
        %v10508 = vld [vmem:[%s18 + $0x120] sm:$0xff]
        %v10509 = vld [vmem:[%s18 + $0x128] sm:$0xff]
        %v10510 = vld [vmem:[%s18 + $0x130] sm:$0xff]
        %v10511 = vld [vmem:[%s18 + $0x138] sm:$0xff]
        %v10512 = vld [vmem:[%s18 + $0x140] sm:$0xff]
        %v10513 = vld [vmem:[%s18 + $0x148] sm:$0xff]
        %v10514 = vld [vmem:[%s18 + $0x150] sm:$0xff]
        %v10515 = vld [vmem:[%s18 + $0x158] sm:$0xff]
        %v10516 = vld [vmem:[%s18 + $0x160] sm:$0xff]
        %v10517 = vld [vmem:[%s18 + $0x168] sm:$0xff]
        %v10518 = vld [vmem:[%s18 + $0x170] sm:$0xff]
        %v10519 = vld [vmem:[%s18 + $0x178] sm:$0xff]
        %v10520 = vld [vmem:[%s18 + $0x180] sm:$0xff]
        %v10521 = vld [vmem:[%s18 + $0x188] sm:$0xff]
        %v10522 = vld [vmem:[%s18 + $0x190] sm:$0xff]
        %v10523 = vld [vmem:[%s18 + $0x198] sm:$0xff]
        %v10524 = vld [vmem:[%s18 + $0x1a0] sm:$0xff]
        %v10525 = vld [vmem:[%s18 + $0x1a8] sm:$0xff]
        %v10526 = vld [vmem:[%s18 + $0x1b0] sm:$0xff]
        %v10527 = vld [vmem:[%s18 + $0x1b8] sm:$0xff]
        %v10528 = vld [vmem:[%s18 + $0x1c0] sm:$0xff]
        %v10529 = vld [vmem:[%s18 + $0x1c8] sm:$0xff]
        %v10530 = vld [vmem:[%s18 + $0x1d0] sm:$0xff]
        %v10531 = vld [vmem:[%s18 + $0x1d8] sm:$0xff]
        %v10532 = vld [vmem:[%s18 + $0x1e0] sm:$0xff]
        %v10533 = vld [vmem:[%s18 + $0x1e8] sm:$0xff]
        %v10534 = vld [vmem:[%s18 + $0x1f0] sm:$0xff]
        %v10535 = vld [vmem:[%s18 + $0x1f8] sm:$0xff]
        %10536 = vmatprep.subr.mxu0 0.0
        %10537 = vmatpush1.msra.mxu0 %v10472
        %10538 = vmatprep.subr.mxu0 0.0
        %10539 = vmatpush1.msra.mxu0 %v10473
        %10540 = vmatprep.subr.mxu0 0.0
        %10541 = vmatpush1.msra.mxu0 %v10474
        %10542 = vmatprep.subr.mxu0 0.0
        %10543 = vmatpush1.msra.mxu0 %v10475
        %10544 = vmatprep.subr.mxu0 0.0
        %10545 = vmatpush1.msra.mxu0 %v10476
        %10546 = vmatprep.subr.mxu0 0.0
        %10547 = vmatpush1.msra.mxu0 %v10477
        %10548 = vmatprep.subr.mxu0 0.0
        %10549 = vmatpush1.msra.mxu0 %v10478
        %10550 = vmatprep.subr.mxu0 0.0
        %10551 = vmatpush1.msra.mxu0 %v10479
        %10552 = vmatprep.subr.mxu0 0.0
        %10553 = vmatpush1.msra.mxu0 %v10480
        %10554 = vmatprep.subr.mxu0 0.0
        %10555 = vmatpush1.msra.mxu0 %v10481
        %10556 = vmatprep.subr.mxu0 0.0
        %10557 = vmatpush1.msra.mxu0 %v10482
        %10558 = vmatprep.subr.mxu0 0.0
        %10559 = vmatpush1.msra.mxu0 %v10483
        %10560 = vmatprep.subr.mxu0 0.0
        %10561 = vmatpush1.msra.mxu0 %v10484
        %10562 = vmatprep.subr.mxu0 0.0
        %10563 = vmatpush1.msra.mxu0 %v10485
        %10564 = vmatprep.subr.mxu0 0.0
        %10565 = vmatpush1.msra.mxu0 %v10486
        %10566 = vmatprep.subr.mxu0 0.0
        %10567 = vmatpush1.msra.mxu0 %v10487
        %10568 = vmatprep.subr.mxu0 0.0
        %10569 = vmatpush1.msra.mxu0 %v10488
        %10570 = vmatprep.subr.mxu0 0.0
        %10571 = vmatpush1.msra.mxu0 %v10489
        %10572 = vmatprep.subr.mxu0 0.0
        %10573 = vmatpush1.msra.mxu0 %v10490
        %10574 = vmatprep.subr.mxu0 0.0
        %10575 = vmatpush1.msra.mxu0 %v10491
        %10576 = vmatprep.subr.mxu0 0.0
        %10577 = vmatpush1.msra.mxu0 %v10492
        %10578 = vmatprep.subr.mxu0 0.0
        %10579 = vmatpush1.msra.mxu0 %v10493
        %10580 = vmatprep.subr.mxu0 0.0
        %10581 = vmatpush1.msra.mxu0 %v10494
        %10582 = vmatprep.subr.mxu0 0.0
        %10583 = vmatpush1.msra.mxu0 %v10495
        %10584 = vmatprep.subr.mxu0 0.0
        %10585 = vmatpush1.msra.mxu0 %v10496
        %10586 = vmatprep.subr.mxu0 0.0
        %10587 = vmatpush1.msra.mxu0 %v10497
        %10588 = vmatprep.subr.mxu0 0.0
        %10589 = vmatpush1.msra.mxu0 %v10498
        %10590 = vmatprep.subr.mxu0 0.0
        %10591 = vmatpush1.msra.mxu0 %v10499
        %10592 = vmatprep.subr.mxu0 0.0
        %10593 = vmatpush1.msra.mxu0 %v10500
        %10594 = vmatprep.subr.mxu0 0.0
        %10595 = vmatpush1.msra.mxu0 %v10501
        %10596 = vmatprep.subr.mxu0 0.0
        %10597 = vmatpush1.msra.mxu0 %v10502
        %10598 = vmatprep.subr.mxu0 0.0
        %10599 = vmatpush1.msra.mxu0 %v10503
        %10600 = vmatprep.mubr.f32.mxu0 %v10386
        %10601 = vmatmul.mubr.f32.gmra.mrb[0].mxu0 %v10385
        %v10602 = vpop.f32.mrb[0].mxu0
        %v10603 = vadd.f32 0.0, %v10602
        %v10604 = vpop.f32.mrb[0].mxu0
        %10605 = vdwg.mxu0
        %10606 = vmatprep.subr.mxu0 0.0
        %10607 = vmatpush1.msra.mxu0 %v10504
        %10608 = vmatprep.subr.mxu0 0.0
        %10609 = vmatpush1.msra.mxu0 %v10505
        %10610 = vmatprep.subr.mxu0 0.0
        %10611 = vmatpush1.msra.mxu0 %v10506
        %10612 = vmatprep.subr.mxu0 0.0
        %10613 = vmatpush1.msra.mxu0 %v10507
        %10614 = vmatprep.subr.mxu0 0.0
        %10615 = vmatpush1.msra.mxu0 %v10508
        %10616 = vmatprep.subr.mxu0 0.0
        %10617 = vmatpush1.msra.mxu0 %v10509
        %10618 = vmatprep.subr.mxu0 0.0
        %10619 = vmatpush1.msra.mxu0 %v10510
        %10620 = vmatprep.subr.mxu0 0.0
        %10621 = vmatpush1.msra.mxu0 %v10511
        %10622 = vmatprep.subr.mxu0 0.0
        %10623 = vmatpush1.msra.mxu0 %v10512
        %10624 = vmatprep.subr.mxu0 0.0
        %10625 = vmatpush1.msra.mxu0 %v10513
        %10626 = vmatprep.subr.mxu0 0.0
        %10627 = vmatpush1.msra.mxu0 %v10514
        %10628 = vmatprep.subr.mxu0 0.0
        %10629 = vmatpush1.msra.mxu0 %v10515
        %10630 = vmatprep.subr.mxu0 0.0
        %10631 = vmatpush1.msra.mxu0 %v10516
        %10632 = vmatprep.subr.mxu0 0.0
        %10633 = vmatpush1.msra.mxu0 %v10517
        %10634 = vmatprep.subr.mxu0 0.0
        %10635 = vmatpush1.msra.mxu0 %v10518
        %10636 = vmatprep.subr.mxu0 0.0
        %10637 = vmatpush1.msra.mxu0 %v10519
        %10638 = vmatprep.subr.mxu0 0.0
        %10639 = vmatpush1.msra.mxu0 %v10520
        %10640 = vmatprep.subr.mxu0 0.0
        %10641 = vmatpush1.msra.mxu0 %v10521
        %10642 = vmatprep.subr.mxu0 0.0
        %10643 = vmatpush1.msra.mxu0 %v10522
        %10644 = vmatprep.subr.mxu0 0.0
        %10645 = vmatpush1.msra.mxu0 %v10523
        %10646 = vmatprep.subr.mxu0 0.0
        %10647 = vmatpush1.msra.mxu0 %v10524
        %10648 = vmatprep.subr.mxu0 0.0
        %10649 = vmatpush1.msra.mxu0 %v10525
        %10650 = vmatprep.subr.mxu0 0.0
        %10651 = vmatpush1.msra.mxu0 %v10526
        %10652 = vmatprep.subr.mxu0 0.0
        %10653 = vmatpush1.msra.mxu0 %v10527
        %10654 = vmatprep.subr.mxu0 0.0
        %10655 = vmatpush1.msra.mxu0 %v10528
        %10656 = vmatprep.subr.mxu0 0.0
        %10657 = vmatpush1.msra.mxu0 %v10529
        %10658 = vmatprep.subr.mxu0 0.0
        %10659 = vmatpush1.msra.mxu0 %v10530
        %10660 = vmatprep.subr.mxu0 0.0
        %10661 = vmatpush1.msra.mxu0 %v10531
        %10662 = vmatprep.subr.mxu0 0.0
        %10663 = vmatpush1.msra.mxu0 %v10532
        %10664 = vmatprep.subr.mxu0 0.0
        %10665 = vmatpush1.msra.mxu0 %v10533
        %10666 = vmatprep.subr.mxu0 0.0
        %10667 = vmatpush1.msra.mxu0 %v10534
        %10668 = vmatprep.subr.mxu0 0.0
        %10669 = vmatpush1.msra.mxu0 %v10535
        %10670 = vmatprep.mubr.f32.mxu0 %v10388
        %10671 = vmatmul.mubr.f32.gmra.mrb[0].mxu0 %v10387
        %v10672 = vpop.f32.mrb[0].mxu0
        %v10673 = vadd.f32 %v10603, %v10672
        %v10674 = vpop.f32.mrb[0].mxu0
        %10675 = vdwg.mxu0
        %vm10676 = vcmask 80896
        %v10678 = vsel %vm10676, %v10467, 0
        %v10681 = vsel %vm10355, %v10471, 0
        %10683 = vmatprep.subr.mxu0 0.0
        %10684 = vmatpush1.msra.mxu0 %v10470
        %10685 = vmatprep.subr.mxu0 0.0
        %10686 = vmatpush1.msra.mxu0 %v10681
        %10687 = vmatprep.subr.mxu0 0.0
        %10688 = vmatpush1.msra.mxu0 0.0
        %10689 = vmatprep.subr.mxu0 0.0
        %10690 = vmatpush1.msra.mxu0 0.0
        %10691 = vmatprep.subr.mxu0 0.0
        %10692 = vmatpush1.msra.mxu0 0.0
        %10693 = vmatprep.subr.mxu0 0.0
        %10694 = vmatpush1.msra.mxu0 0.0
        %10695 = vmatprep.subr.mxu0 0.0
        %10696 = vmatpush1.msra.mxu0 0.0
        %10697 = vmatprep.subr.mxu0 0.0
        %10698 = vmatpush1.msra.mxu0 0.0
        %10699 = vmatprep.subr.mxu0 0.0
        %10700 = vmatpush1.msra.mxu0 0.0
        %10701 = vmatprep.subr.mxu0 0.0
        %10702 = vmatpush1.msra.mxu0 0.0
        %10703 = vmatprep.subr.mxu0 0.0
        %10704 = vmatpush1.msra.mxu0 0.0
        %10705 = vmatprep.subr.mxu0 0.0
        %10706 = vmatpush1.msra.mxu0 0.0
        %10707 = vmatprep.subr.mxu0 0.0
        %10708 = vmatpush1.msra.mxu0 0.0
        %10709 = vmatprep.subr.mxu0 0.0
        %10710 = vmatpush1.msra.mxu0 0.0
        %10711 = vmatprep.subr.mxu0 0.0
        %10712 = vmatpush1.msra.mxu0 0.0
        %10713 = vmatprep.subr.mxu0 0.0
        %10714 = vmatpush1.msra.mxu0 0.0
        %10715 = vmatprep.subr.mxu0 0.0
        %10716 = vmatpush1.msra.mxu0 0.0
        %10717 = vmatprep.subr.mxu0 0.0
        %10718 = vmatpush1.msra.mxu0 0.0
        %10719 = vmatprep.subr.mxu0 0.0
        %10720 = vmatpush1.msra.mxu0 0.0
        %10721 = vmatprep.subr.mxu0 0.0
        %10722 = vmatpush1.msra.mxu0 0.0
        %10723 = vmatprep.subr.mxu0 0.0
        %10724 = vmatpush1.msra.mxu0 0.0
        %10725 = vmatprep.subr.mxu0 0.0
        %10726 = vmatpush1.msra.mxu0 0.0
        %10727 = vmatprep.subr.mxu0 0.0
        %10728 = vmatpush1.msra.mxu0 0.0
        %10729 = vmatprep.subr.mxu0 0.0
        %10730 = vmatpush1.msra.mxu0 0.0
        %10731 = vmatprep.subr.mxu0 0.0
        %10732 = vmatpush1.msra.mxu0 0.0
        %10733 = vmatprep.subr.mxu0 0.0
        %10734 = vmatpush1.msra.mxu0 0.0
        %10735 = vmatprep.subr.mxu0 0.0
        %10736 = vmatpush1.msra.mxu0 0.0
        %10737 = vmatprep.subr.mxu0 0.0
        %10738 = vmatpush1.msra.mxu0 0.0
        %10739 = vmatprep.subr.mxu0 0.0
        %10740 = vmatpush1.msra.mxu0 0.0
        %10741 = vmatprep.subr.mxu0 0.0
        %10742 = vmatpush1.msra.mxu0 0.0
        %10743 = vmatprep.subr.mxu0 0.0
        %10744 = vmatpush1.msra.mxu0 0.0
        %10745 = vmatprep.subr.mxu0 0.0
        %10746 = vmatpush1.msra.mxu0 0.0
        %10747 = vmatprep.mubr.f32.mxu0 0.0
        %10748 = vmatmul.mubr.f32.gmra.mrb[0].mxu0 %v10678
        %v10749 = vpop.f32.mrb[0].mxu0
        %v10750 = vadd.f32 %v10673, %v10749
        %v10751 = vpop.f32.mrb[0].mxu0
        %10752 = vdwg.mxu0
        %v10753 = vld [vmem:[#allocation30] sm:$0x1]
        %v10754 = vadd.f32 %v10750, %v10753
        %vm10755 = vcmask 73728
        %10756 = vst.msk [vmem:[%s894] sm:$0x1] %vm10755, %v10754
        %s10757 = sand.u32 %s484, 1
        %s10758 = scalar_lea.sflag [#allocation5], %s10757
        %s10759 = sand.u32 %s484, 1
        %s10760 = scalar_lea.vmem [#allocation32], %s10759
        // Predicated region
        $region173: #{resnet_forward.1} parent=99 // pred_check
          %p10761 = pneg %p494
        $region174: #{resnet_forward.1} parent=99 // pred_check_branch
          %10763 = sbr.rel (%p10761) target = $region176
        $region175: #{resnet_forward.1} parent=99 // pred_region
          %s10765 = ssub.s32 16, 16
          %10766 = vsyncadd %s10758, %s10765
          %s10767 = smul.addr %s46, 16
          %s10768 = scalar_lea.hbm %s20, %s10767
          %s10770 = sshll.u32 %s10760, 4
          %s10771 = int_to_ptr.vmem [resolvable:$true] %s10770
          %10773 = dma.vmem_to_hbm [thread:$0]  %s10771, 16, %s10768, %s10758
        $region176: #{resnet_forward.1} parent=99 // pred_fallthru
          _
      $region100: #{resnet_forward.1} parent=5 // pred_fallthru
        _
      %p10774 = scmp.le.s32.totalorder 2, %s41
      // Predicated region
      $region177: #{resnet_forward.1} parent=5 // pred_check
        %p10775 = pneg %p10774
      $region178: #{resnet_forward.1} parent=5 // pred_check_branch
        %10777 = sbr.rel (%p10775) target = $region180
      $region179: #{resnet_forward.1} parent=5 // pred_region
        %s10778 = ssub.s32 %s41, 2
        // Predicated region
        $region181: #{resnet_forward.1} parent=179 // pred_check
          %p10779 = pneg %p500
        $region182: #{resnet_forward.1} parent=179 // pred_check_branch
          %10781 = sbr.rel (%p10779) target = $region184
        $region183: #{resnet_forward.1} parent=179 // pred_region
          %s10782 = sand.u32 %s485, 1
          %s10783 = scalar_lea.sflag [#allocation5], %s10782
          %s10784 = sand.u32 %s485, 1
          %s10785 = scalar_lea.vmem [#allocation32], %s10784
          %10786 = dma.done %s10783, 16
        $region184: #{resnet_forward.1} parent=179 // pred_fallthru
          _
      $region180: #{resnet_forward.1} parent=5 // pred_fallthru
        _
    $region6: #{resnet_forward.1} parent=1 // loop_footer
      %s45 = sadd.s32 1, %s41
    $region7: #{resnet_forward.1} parent=1 // loop_footer_branch
      %40 = sbr.rel target = $region3
    $region8: #{resnet_forward.1} parent=1 // loop_exit
      _
    %10787 = vsyncpa [#allocation4], 1
    %s10788 = scalar_lea.sflag [#allocation4], 1
    %10789 = vsyncpa %s10788, 1
    %10790 = vsyncpa [#allocation7], 1
    %10791 = vsyncpa [#allocation10], 1
    %10792 = vsyncpa [#allocation13], 1
    %10793 = vsyncpa [#allocation16], 1
    %10794 = vsyncpa [#allocation19], 1
    %10795 = vsyncpa [#allocation22], 1
    %10796 = vsyncpa [#allocation25], 1
    %10797 = vsyncpa [#allocation28], 1
    %10798 = vsyncpa [#allocation31], 1
    %10799 = vsyncpa [#allocation5], 1
    %s10800 = scalar_lea.sflag [#allocation5], 1
    %10801 = vsyncpa %s10800, 1

</llo_original>
